<compile_context>
chip_gen: v6e
topology: v6e:2x2x1
jax: 0.10.0
libtpu: 0.0.40
codegen_flags: <defaults>
</compile_context>

<pallas_src>
import functools
import math

import jax
import jax.numpy as jnp
from jax import lax
from jax.experimental import pallas as pl
from jax.experimental.pallas import tpu as pltpu


# --------------------------------------------------------------------------
# helpers
# --------------------------------------------------------------------------
def _row_block(n):
    """Largest row tile that divides n, preferring >= 2 blocks (two v7x TensorCores)."""
    for bm in (512, 256, 128, 64, 32, 16, 8):
        if n % bm == 0 and n // bm >= 2:
            return bm
    return n


def _gelu(y):
    # tanh-approximate GELU (GPT-2 "gelu_new"), fp32 math.
    return 0.5 * y * (1.0 + jnp.tanh(0.7978845608028654 * (y + 0.044715 * y * y * y)))


def _ln_f32(x, g, b, eps):
    mu = jnp.mean(x, axis=-1, keepdims=True)
    xc = x - mu
    var = jnp.mean(xc * xc, axis=-1, keepdims=True)
    return xc * lax.rsqrt(var + eps) * g + b


_PARALLEL1 = pltpu.CompilerParams(dimension_semantics=("parallel",))


# --------------------------------------------------------------------------
# Kernel 1: row-tiled standalone LayerNorm (protein_layer_norm)
# --------------------------------------------------------------------------
def layernorm(x, gamma, beta, eps=1e-5):
    orig = x.shape
    d = orig[-1]
    x2 = x.reshape(-1, d)
    n = x2.shape[0]
    bm = _row_block(n)

    def kernel(x_ref, g_ref, b_ref, o_ref):
        xv = x_ref[...].astype(jnp.float32)
        y = _ln_f32(xv, g_ref[...].astype(jnp.float32), b_ref[...].astype(jnp.float32), eps)
        o_ref[...] = y.astype(o_ref.dtype)

    out = pl.pallas_call(
        kernel,
        out_shape=jax.ShapeDtypeStruct((n, d), x.dtype),
        grid=(n // bm,),
        in_specs=[
            pl.BlockSpec((bm, d), lambda i: (i, 0)),
            pl.BlockSpec((1, d), lambda i: (0, 0)),
            pl.BlockSpec((1, d), lambda i: (0, 0)),
        ],
        out_specs=pl.BlockSpec((bm, d), lambda i: (i, 0)),
        compiler_params=_PARALLEL1,
    )(x2, gamma.reshape(1, d), beta.reshape(1, d))
    return out.reshape(orig)


# --------------------------------------------------------------------------
# Kernel 2: fused (optional LayerNorm) + multiple linear projections
#           (reads the activation slab from HBM once, writes each projection once)
# --------------------------------------------------------------------------
def ln_linear(x, gamma, beta, weights, biases, activations, apply_ln=True, eps=1e-5):
    orig = x.shape
    d = orig[-1]
    x2 = x.reshape(-1, d)
    n = x2.shape[0]
    bm = _row_block(n)
    n_out = len(weights)
    douts = [w.shape[1] for w in weights]

    def kernel(*refs):
        it = iter(refs)
        x_ref = next(it)
        xv = x_ref[...].astype(jnp.float32)
        if apply_ln:
            g_ref = next(it)
            b_ref = next(it)
            xv = _ln_f32(xv, g_ref[...].astype(jnp.float32), b_ref[...].astype(jnp.float32), eps)
        xb = xv.astype(jnp.bfloat16)
        wb = [(next(it), next(it)) for _ in range(n_out)]
        outs = [next(it) for _ in range(n_out)]
        for (w_ref, bi_ref), o_ref, act in zip(wb, outs, activations):
            y = jnp.dot(xb, w_ref[...].astype(jnp.bfloat16),
                        preferred_element_type=jnp.float32) + bi_ref[...].astype(jnp.float32)
            if act == "gelu":
                y = _gelu(y)
            o_ref[...] = y.astype(o_ref.dtype)

    in_specs = [pl.BlockSpec((bm, d), lambda i: (i, 0))]
    inputs = [x2]
    if apply_ln:
        in_specs += [pl.BlockSpec((1, d), lambda i: (0, 0)),
                     pl.BlockSpec((1, d), lambda i: (0, 0))]
        inputs += [gamma.reshape(1, d), beta.reshape(1, d)]
    for w, b in zip(weights, biases):
        dout = w.shape[1]
        in_specs += [pl.BlockSpec((d, dout), lambda i: (0, 0)),
                     pl.BlockSpec((1, dout), lambda i: (0, 0))]
        inputs += [w, b.reshape(1, dout)]

    out_shape = [jax.ShapeDtypeStruct((n, dd), x.dtype) for dd in douts]
    out_specs = [pl.BlockSpec((bm, dd), lambda i: (i, 0)) for dd in douts]

    outs = pl.pallas_call(
        kernel,
        out_shape=out_shape,
        grid=(n // bm,),
        in_specs=in_specs,
        out_specs=out_specs,
        compiler_params=_PARALLEL1,
    )(*inputs)
    if not isinstance(outs, (list, tuple)):
        outs = (outs,)
    return tuple(o.reshape(orig[:-1] + (dd,)) for o, dd in zip(outs, douts))


# --------------------------------------------------------------------------
# Kernel 3: fused multi-head attention core + output projection + gate + residual
#           grid over batch ("parallel"); all heads handled inside one grid step;
#           causal / padding masks generated in-kernel (no dense mask DMA).
# --------------------------------------------------------------------------
def fused_attention(q, k, v, residual, wo, bo, num_heads,
                    gate=None, pad_mask=None, causal=False):
    B, Lq, D = q.shape
    Lk = k.shape[1]
    Dh = D // num_heads
    scale = 1.0 / math.sqrt(Dh)
    has_gate = gate is not None
    has_pad = pad_mask is not None

    def kernel(*refs):
        it = iter(refs)
        q_ref, k_ref, v_ref, res_ref, wo_ref, bo_ref = (next(it) for _ in range(6))
        gate_ref = next(it) if has_gate else None
        pad_ref = next(it) if has_pad else None
        o_ref = next(it)

        qb = q_ref[0].astype(jnp.float32)   # [Lq, D]
        kb = k_ref[0].astype(jnp.float32)   # [Lk, D]
        vb = v_ref[0].astype(jnp.float32)   # [Lk, D]

        # Build the combined boolean mask once (hoisted out of the head loop).
        mask = None
        if causal:
            rows = lax.broadcasted_iota(jnp.int32, (Lq, Lk), 0)
            cols = lax.broadcasted_iota(jnp.int32, (Lq, Lk), 1)
            mask = cols <= rows
        if has_pad:
            pad_ok = pad_ref[0] > 0.5                              # [1, Lk]
            pad_ok = jnp.broadcast_to(pad_ok, (Lq, Lk))
            mask = pad_ok if mask is None else jnp.logical_and(mask, pad_ok)

        proj = jnp.zeros((Lq, D), jnp.float32)
        for h in range(num_heads):                                 # static unroll over heads
            sl = slice(h * Dh, (h + 1) * Dh)
            qh = qb[:, sl].astype(jnp.bfloat16)
            kh = kb[:, sl].astype(jnp.bfloat16)
            vh = vb[:, sl].astype(jnp.bfloat16)
            # q @ k^T without materializing the transpose.
            s = lax.dot_general(qh, kh, (((1,), (1,)), ((), ())),
                                preferred_element_type=jnp.float32) * scale
            if mask is not None:
                s = jnp.where(mask, s, jnp.float32(-1e30))
            m = jnp.max(s, axis=-1, keepdims=True)
            p = jnp.exp(s - m)
            denom = jnp.sum(p, axis=-1, keepdims=True)
            p = p * pl.reciprocal(denom, approx=True)
            oh = jnp.dot(p.astype(jnp.bfloat16), vh, preferred_element_type=jnp.float32)
            proj = proj + jnp.dot(oh.astype(jnp.bfloat16),
                                  wo_ref[sl, :].astype(jnp.bfloat16),
                                  preferred_element_type=jnp.float32)

        y = proj + bo_ref[...].astype(jnp.float32)
        if has_gate:
            y = gate_ref[...] * y
        o_ref[0] = (res_ref[0].astype(jnp.float32) + y).astype(o_ref.dtype)

    in_specs = [
        pl.BlockSpec((1, Lq, D), lambda b: (b, 0, 0)),
        pl.BlockSpec((1, Lk, D), lambda b: (b, 0, 0)),
        pl.BlockSpec((1, Lk, D), lambda b: (b, 0, 0)),
        pl.BlockSpec((1, Lq, D), lambda b: (b, 0, 0)),
        pl.BlockSpec((D, D), lambda b: (0, 0)),
        pl.BlockSpec((1, D), lambda b: (0, 0)),
    ]
    inputs = [q, k, v, residual, wo, bo.reshape(1, D)]
    if has_gate:
        in_specs.append(pl.BlockSpec((1, 1), lambda b: (0, 0)))
        inputs.append(jnp.asarray(gate, jnp.float32).reshape(1, 1))
    if has_pad:
        in_specs.append(pl.BlockSpec((1, 1, Lk), lambda b: (b, 0, 0)))
        inputs.append(pad_mask.astype(jnp.float32).reshape(B, 1, Lk))

    return pl.pallas_call(
        kernel,
        out_shape=jax.ShapeDtypeStruct((B, Lq, D), q.dtype),
        grid=(B,),
        in_specs=in_specs,
        out_specs=pl.BlockSpec((1, Lq, D), lambda b: (b, 0, 0)),
        compiler_params=_PARALLEL1,
    )(*inputs)


# --------------------------------------------------------------------------
# Kernel 4: fused LayerNorm + W1 + GELU + W2 + gate + residual (FFN sub-layer)
# --------------------------------------------------------------------------
def fused_mlp(x, gamma, beta, w1, b1, w2, b2, gate=None, eps=1e-5):
    orig = x.shape
    d = orig[-1]
    dff = w1.shape[1]
    x2 = x.reshape(-1, d)
    n = x2.shape[0]
    bm = _row_block(n)
    has_gate = gate is not None

    def kernel(*refs):
        it = iter(refs)
        x_ref, g_ref, b_ref, w1_ref, b1_ref, w2_ref, b2_ref = (next(it) for _ in range(7))
        gate_ref = next(it) if has_gate else None
        o_ref = next(it)

        xv = x_ref[...].astype(jnp.float32)
        xn = _ln_f32(xv, g_ref[...].astype(jnp.float32), b_ref[...].astype(jnp.float32), eps)
        h = jnp.dot(xn.astype(jnp.bfloat16), w1_ref[...].astype(jnp.bfloat16),
                    preferred_element_type=jnp.float32) + b1_ref[...].astype(jnp.float32)
        h = _gelu(h)
        y = jnp.dot(h.astype(jnp.bfloat16), w2_ref[...].astype(jnp.bfloat16),
                    preferred_element_type=jnp.float32) + b2_ref[...].astype(jnp.float32)
        if has_gate:
            y = gate_ref[...] * y
        o_ref[...] = (xv + y).astype(o_ref.dtype)

    in_specs = [
        pl.BlockSpec((bm, d), lambda i: (i, 0)),
        pl.BlockSpec((1, d), lambda i: (0, 0)),
        pl.BlockSpec((1, d), lambda i: (0, 0)),
        pl.BlockSpec((d, dff), lambda i: (0, 0)),
        pl.BlockSpec((1, dff), lambda i: (0, 0)),
        pl.BlockSpec((dff, d), lambda i: (0, 0)),
        pl.BlockSpec((1, d), lambda i: (0, 0)),
    ]
    inputs = [x2, gamma.reshape(1, d), beta.reshape(1, d), w1, b1.reshape(1, dff), w2, b2.reshape(1, d)]
    if has_gate:
        in_specs.append(pl.BlockSpec((1, 1), lambda i: (0, 0)))
        inputs.append(jnp.asarray(gate, jnp.float32).reshape(1, 1))

    out = pl.pallas_call(
        kernel,
        out_shape=jax.ShapeDtypeStruct((n, d), x.dtype),
        grid=(n // bm,),
        in_specs=in_specs,
        out_specs=pl.BlockSpec((bm, d), lambda i: (i, 0)),
        compiler_params=_PARALLEL1,
    )(*inputs)
    return out.reshape(orig)


# --------------------------------------------------------------------------
# Module composition (glue in plain JAX; each sub-layer is one fused kernel)
# --------------------------------------------------------------------------
def perceiver_layer(latents, enc, p, num_heads):
    xa = p["xattn"]
    # TODO(synk): Flamingo-style resamplers often use kv = [protein; latents]; Pika's exact
    # recipe is not given, so keys/values come from the protein tokens only (as before).
    (q,) = ln_linear(latents, p["ln_q_g"], p["ln_q_b"], [xa["wq"]], [xa["bq"]], [None])
    k, v = ln_linear(enc, p["ln_kv_g"], p["ln_kv_b"],
                     [xa["wk"], xa["wv"]], [xa["bk"], xa["bv"]], [None, None])
    latents = fused_attention(q, k, v, latents, xa["wo"], xa["bo"], num_heads)
    latents = fused_mlp(latents, p["ln_ff_g"], p["ln_ff_b"], p["w1"], p["b1"], p["w2"], p["b2"])
    return latents


def perceiver(enc, params, num_heads):
    B = enc.shape[0]
    latents = jnp.broadcast_to(params["latents"][None], (B,) + params["latents"].shape)
    for lp in params["layers"]:
        latents = perceiver_layer(latents, enc, lp, num_heads)
    (out,) = ln_linear(latents, None, None, [params["out_w"]], [params["out_b"]], [None],
                       apply_ln=False)                      # protein_emb_dim -> text_emb_dim
    return out


def gated_cross_attention(hidden, latents, p, num_heads):
    xa = p["xattn"]
    # TODO(synk): attention_mask is not applied to the latent keys (latents are never padded).
    (q,) = ln_linear(hidden, p["ln_attn_g"], p["ln_attn_b"], [xa["wq"]], [xa["bq"]], [None])
    k, v = ln_linear(latents, None, None, [xa["wk"], xa["wv"]], [xa["bk"], xa["bv"]],
                     [None, None], apply_ln=False)
    hidden = fused_attention(q, k, v, hidden, xa["wo"], xa["bo"], num_heads,
                             gate=jnp.tanh(p["attn_gate"]))
    hidden = fused_mlp(hidden, p["ln_ff_g"], p["ln_ff_b"], p["w1"], p["b1"], p["w2"], p["b2"],
                       gate=jnp.tanh(p["ff_gate"]))
    return hidden


def gpt2_block(hidden, attention_mask, p, num_heads):
    at = p["attn"]
    q, k, v = ln_linear(hidden, p["ln1_g"], p["ln1_b"],
                        [at["wq"], at["wk"], at["wv"]], [at["bq"], at["bk"], at["bv"]],
                        [None, None, None])
    hidden = fused_attention(q, k, v, hidden, at["wo"], at["bo"], num_heads,
                             causal=True, pad_mask=attention_mask)
    hidden = fused_mlp(hidden, p["ln2_g"], p["ln2_b"],
                       p["mlp_w1"], p["mlp_b1"], p["mlp_w2"], p["mlp_b2"])
    return hidden


def cross_pika_attention_layer(hidden_states, attention_mask, encoder_hidden_states, params, cfg):
    """Forward of CrossPikaAttentionLayer (eval mode, use_cache=False, output_attentions=False)."""
    # 1. protein layer-norm
    enc = layernorm(encoder_hidden_states, params["prot_ln_g"], params["prot_ln_b"])
    # 2. Perceiver resampler: [B, Lp, Dp] -> [B, latent_size, Dt]
    protein_latents = perceiver(enc, params["perceiver"], cfg["num_perceiver_heads"])
    # 3. Gated cross-attention injection into the text stream
    hidden = gated_cross_attention(hidden_states, protein_latents, params["cross_attn"],
                                   cfg["num_decoder_heads"])
    # 4. Wrapped LLM decoder block (causal + padding mask built inside the attention kernel)
    return gpt2_block(hidden, attention_mask, params["decoder"], cfg["num_decoder_heads"])


# --------------------------------------------------------------------------
# Deterministic parameter initialization
# --------------------------------------------------------------------------
def _dense(key, din, dout, scale=0.02):
    return scale * jax.random.normal(key, (din, dout), jnp.float32), jnp.zeros((dout,), jnp.float32)


def _mha_params(key, d):
    ks = jax.random.split(key, 4)
    p = {}
    for name, k in zip(("q", "k", "v", "o"), ks):
        w, b = _dense(k, d, d)
        p["w" + name], p["b" + name] = w, b
    return p


def _ln(d):
    return jnp.ones((d,), jnp.float32), jnp.zeros((d,), jnp.float32)


def init_params(key, Dp, Dt, latent_size, n_perc_layers):
    keys = jax.random.split(key, 8)
    # perceiver
    layer_keys = jax.random.split(keys[0], n_perc_layers)
    layers = []
    for lk in layer_keys:
        k0, k1, k2 = jax.random.split(lk, 3)
        w1, b1 = _dense(k1, Dp, 4 * Dp)
        w2, b2 = _dense(k2, 4 * Dp, Dp)
        gq, bq = _ln(Dp)
        gkv, bkv = _ln(Dp)
        gff, bff = _ln(Dp)
        layers.append(dict(
            ln_q_g=gq, ln_q_b=bq, ln_kv_g=gkv, ln_kv_b=bkv, ln_ff_g=gff, ln_ff_b=bff,
            xattn=_mha_params(k0, Dp), w1=w1, b1=b1, w2=w2, b2=b2))
    out_w, out_b = _dense(keys[1], Dp, Dt)
    perc = dict(latents=0.02 * jax.random.normal(keys[2], (latent_size, Dp), jnp.float32),
                layers=layers, out_w=out_w, out_b=out_b)
    # gated cross-attention
    gw1, gb1 = _dense(keys[3], Dt, 4 * Dt)
    gw2, gb2 = _dense(keys[4], 4 * Dt, Dt)
    ga_g, ga_b = _ln(Dt)
    gf_g, gf_b = _ln(Dt)
    cross = dict(ln_attn_g=ga_g, ln_attn_b=ga_b, ln_ff_g=gf_g, ln_ff_b=gf_b,
                 xattn=_mha_params(keys[5], Dt),
                 attn_gate=jnp.float32(0.25), ff_gate=jnp.float32(0.25),
                 w1=gw1, b1=gb1, w2=gw2, b2=gb2)
    # decoder (GPT2Block-style)
    dw1, db1 = _dense(keys[6], Dt, 4 * Dt)
    dw2, db2 = _dense(keys[7], 4 * Dt, Dt)
    d1_g, d1_b = _ln(Dt)
    d2_g, d2_b = _ln(Dt)
    dec = dict(ln1_g=d1_g, ln1_b=d1_b, ln2_g=d2_g, ln2_b=d2_b,
               attn=_mha_params(jax.random.fold_in(key, 99), Dt),
               mlp_w1=dw1, mlp_b1=db1, mlp_w2=dw2, mlp_b2=db2)
    # protein layer norm
    pg, pb = _ln(Dp)
    return dict(prot_ln_g=pg, prot_ln_b=pb, perceiver=perc, cross_attn=cross, decoder=dec)


# --------------------------------------------------------------------------
# Example run
# --------------------------------------------------------------------------
if __name__ == "__main__":
    B, Lt, Lp = 2, 8, 16           # batch, text seq, protein seq
    Dp, Dt = 32, 32                # protein_emb_dim, text_emb_dim
    cfg = dict(num_decoder_heads=4, num_perceiver_heads=4,
               perceiver_latent_size=8, num_perceiver_layers=2)

    key = jax.random.PRNGKey(0)
    kp, kh, ke = jax.random.split(key, 3)
    params = init_params(kp, Dp, Dt, cfg["perceiver_latent_size"], cfg["num_perceiver_layers"])

    hidden_states = jax.random.normal(kh, (B, Lt, Dt), jnp.float32)
    encoder_hidden_states = jax.random.normal(ke, (B, Lp, Dp), jnp.float32)
    attention_mask = jnp.ones((B, Lt), jnp.float32)   # 1 = attend, 0 = padded

    fwd = jax.jit(functools.partial(cross_pika_attention_layer, cfg=cfg))
    out = fwd(hidden_states, attention_mask, encoder_hidden_states, params)
    jax.block_until_ready(out)
    assert out.shape == (B, Lt, Dt) and out.dtype == jnp.float32
    assert bool(jnp.all(jnp.isfinite(out)))
    print("KERNEL_OK")
</pallas_src>

<mosaic_0001>
module attributes {stable_mosaic.version = 11 : i64} {
  func.func @kernel(%arg0: i32, %arg1: memref<8x32xf32, #tpu.memory_space<vmem>>, %arg2: memref<1x32xf32, #tpu.memory_space<vmem>>, %arg3: memref<1x32xf32, #tpu.memory_space<vmem>>, %arg4: memref<32x32xf32, #tpu.memory_space<vmem>>, %arg5: memref<1x32xf32, #tpu.memory_space<vmem>>, %arg6: memref<8x32xf32, #tpu.memory_space<vmem>>) attributes {dimension_semantics = [#tpu.dimension_semantics<parallel>], iteration_bounds = array<i64: 2>, scalar_prefetch = 0 : i64, scratch_operands = 0 : i64, tpu.core_type = #tpu.core_type<tc>, window_params = [{transform_indices = @transform_0, window_bounds = array<i64: 8, 32>}, {pipeline_mode = #tpu.pipeline_mode<synchronous>, transform_indices = @transform_1, window_bounds = array<i64: 1, 32>}, {pipeline_mode = #tpu.pipeline_mode<synchronous>, transform_indices = @transform_2, window_bounds = array<i64: 1, 32>}, {pipeline_mode = #tpu.pipeline_mode<synchronous>, transform_indices = @transform_3, window_bounds = array<i64: 32, 32>}, {pipeline_mode = #tpu.pipeline_mode<synchronous>, transform_indices = @transform_4, window_bounds = array<i64: 1, 32>}, {transform_indices = @transform_5, window_bounds = array<i64: 8, 32>}]} {
    %c0 = arith.constant 0 : index
    %c0_0 = arith.constant 0 : index
    %0 = vector.load %arg1[%c0, %c0_0] : memref<8x32xf32, #tpu.memory_space<vmem>>, vector<8x32xf32>
    %c0_1 = arith.constant 0 : index
    %c0_2 = arith.constant 0 : index
    %1 = vector.load %arg2[%c0_1, %c0_2] : memref<1x32xf32, #tpu.memory_space<vmem>>, vector<1x32xf32>
    %c0_3 = arith.constant 0 : index
    %c0_4 = arith.constant 0 : index
    %2 = vector.load %arg3[%c0_3, %c0_4] : memref<1x32xf32, #tpu.memory_space<vmem>>, vector<1x32xf32>
    %cst = arith.constant dense<0.000000e+00> : vector<8xf32>
    %3 = vector.multi_reduction <add>, %0, %cst [1] : vector<8x32xf32> to vector<8xf32>
    %4 = vector.shape_cast %3 : vector<8xf32> to vector<8x1xf32>
    %cst_5 = arith.constant 3.200000e+01 : f32
    %5 = vector.broadcast %cst_5 : f32 to vector<8x1xf32>
    %6 = arith.divf %4, %5 : vector<8x1xf32>
    %7 = vector.broadcast %6 : vector<8x1xf32> to vector<8x32xf32>
    %8 = arith.subf %0, %7 : vector<8x32xf32>
    %9 = arith.mulf %8, %8 : vector<8x32xf32>
    %cst_6 = arith.constant dense<0.000000e+00> : vector<8xf32>
    %10 = vector.multi_reduction <add>, %9, %cst_6 [1] : vector<8x32xf32> to vector<8xf32>
    %11 = vector.shape_cast %10 : vector<8xf32> to vector<8x1xf32>
    %cst_7 = arith.constant 3.200000e+01 : f32
    %12 = vector.broadcast %cst_7 : f32 to vector<8x1xf32>
    %13 = arith.divf %11, %12 : vector<8x1xf32>
    %cst_8 = arith.constant 9.99999974E-6 : f32
    %14 = vector.broadcast %cst_8 : f32 to vector<8x1xf32>
    %15 = arith.addf %13, %14 : vector<8x1xf32>
    %16 = math.rsqrt %15 : vector<8x1xf32>
    %17 = vector.broadcast %16 : vector<8x1xf32> to vector<8x32xf32>
    %18 = arith.mulf %8, %17 : vector<8x32xf32>
    %19 = vector.broadcast %1 : vector<1x32xf32> to vector<8x32xf32>
    %20 = arith.mulf %18, %19 : vector<8x32xf32>
    %21 = vector.broadcast %2 : vector<1x32xf32> to vector<8x32xf32>
    %22 = arith.addf %20, %21 : vector<8x32xf32>
    %23 = arith.truncf %22 : vector<8x32xf32> to vector<8x32xbf16>
    %c0_9 = arith.constant 0 : index
    %c0_10 = arith.constant 0 : index
    %24 = vector.load %arg4[%c0_9, %c0_10] : memref<32x32xf32, #tpu.memory_space<vmem>>, vector<32x32xf32>
    %25 = arith.truncf %24 : vector<32x32xf32> to vector<32x32xbf16>
    %cst_11 = arith.constant dense<0.000000e+00> : vector<8x32xf32>
    %26 = tpu.matmul %23, %25, %cst_11 {dimension_numbers = #tpu.dot_dimension_numbers<[1], [0], [0], [1], [0, 0, 1, 1], [], []>} : vector<8x32xbf16>, vector<32x32xbf16>, vector<8x32xf32> -> vector<8x32xf32>
    %c0_12 = arith.constant 0 : index
    %c0_13 = arith.constant 0 : index
    %27 = vector.load %arg5[%c0_12, %c0_13] : memref<1x32xf32, #tpu.memory_space<vmem>>, vector<1x32xf32>
    %28 = vector.broadcast %27 : vector<1x32xf32> to vector<8x32xf32>
    %29 = arith.addf %26, %28 : vector<8x32xf32>
    %c0_14 = arith.constant 0 : index
    %c0_15 = arith.constant 0 : index
    %30 = vector.load %arg6[%c0_14, %c0_15] : memref<8x32xf32, #tpu.memory_space<vmem>>, vector<8x32xf32>
    tpu.vector_store %arg6[%c0_14, %c0_15], %29 {strides = array<i32>} : memref<8x32xf32, #tpu.memory_space<vmem>>, vector<8x32xf32>,
    return
  }
  func.func @transform_0(%arg0: i32) -> (i32, i32) {
    %c0_i32 = arith.constant 0 : i32
    %c0_i32_0 = arith.constant 0 : i32
    return %arg0, %c0_i32 : i32, i32
  }
  func.func @transform_1(%arg0: i32) -> (i32, i32) {
    %c0_i32 = arith.constant 0 : i32
    %c0_i32_0 = arith.constant 0 : i32
    %c0_i32_1 = arith.constant 0 : i32
    return %c0_i32, %c0_i32_0 : i32, i32
  }
  func.func @transform_2(%arg0: i32) -> (i32, i32) {
    %c0_i32 = arith.constant 0 : i32
    %c0_i32_0 = arith.constant 0 : i32
    %c0_i32_1 = arith.constant 0 : i32
    return %c0_i32, %c0_i32_0 : i32, i32
  }
  func.func @transform_3(%arg0: i32) -> (i32, i32) {
    %c0_i32 = arith.constant 0 : i32
    %c0_i32_0 = arith.constant 0 : i32
    %c0_i32_1 = arith.constant 0 : i32
    return %c0_i32, %c0_i32_0 : i32, i32
  }
  func.func @transform_4(%arg0: i32) -> (i32, i32) {
    %c0_i32 = arith.constant 0 : i32
    %c0_i32_0 = arith.constant 0 : i32
    %c0_i32_1 = arith.constant 0 : i32
    return %c0_i32, %c0_i32_0 : i32, i32
  }
  func.func @transform_5(%arg0: i32) -> (i32, i32) {
    %c0_i32 = arith.constant 0 : i32
    %c0_i32_0 = arith.constant 0 : i32
    return %arg0, %c0_i32 : i32, i32
  }
}

module attributes {stable_mosaic.version = 11 : i64} {
  func.func @kernel(%arg0: i32, %arg1: memref<16x32xf32, #tpu.memory_space<vmem>>, %arg2: memref<1x32xf32, #tpu.memory_space<vmem>>, %arg3: memref<1x32xf32, #tpu.memory_space<vmem>>, %arg4: memref<32x32xf32, #tpu.memory_space<vmem>>, %arg5: memref<1x32xf32, #tpu.memory_space<vmem>>, %arg6: memref<32x32xf32, #tpu.memory_space<vmem>>, %arg7: memref<1x32xf32, #tpu.memory_space<vmem>>, %arg8: memref<16x32xf32, #tpu.memory_space<vmem>>, %arg9: memref<16x32xf32, #tpu.memory_space<vmem>>) attributes {dimension_semantics = [#tpu.dimension_semantics<parallel>], iteration_bounds = array<i64: 2>, scalar_prefetch = 0 : i64, scratch_operands = 0 : i64, tpu.core_type = #tpu.core_type<tc>, window_params = [{transform_indices = @transform_0, window_bounds = array<i64: 16, 32>}, {pipeline_mode = #tpu.pipeline_mode<synchronous>, transform_indices = @transform_1, window_bounds = array<i64: 1, 32>}, {pipeline_mode = #tpu.pipeline_mode<synchronous>, transform_indices = @transform_2, window_bounds = array<i64: 1, 32>}, {pipeline_mode = #tpu.pipeline_mode<synchronous>, transform_indices = @transform_3, window_bounds = array<i64: 32, 32>}, {pipeline_mode = #tpu.pipeline_mode<synchronous>, transform_indices = @transform_4, window_bounds = array<i64: 1, 32>}, {pipeline_mode = #tpu.pipeline_mode<synchronous>, transform_indices = @transform_5, window_bounds = array<i64: 32, 32>}, {pipeline_mode = #tpu.pipeline_mode<synchronous>, transform_indices = @transform_6, window_bounds = array<i64: 1, 32>}, {transform_indices = @transform_7, window_bounds = array<i64: 16, 32>}, {transform_indices = @transform_8, window_bounds = array<i64: 16, 32>}]} {
    %c0 = arith.constant 0 : index
    %c0_0 = arith.constant 0 : index
    %0 = vector.load %arg1[%c0, %c0_0] : memref<16x32xf32, #tpu.memory_space<vmem>>, vector<16x32xf32>
    %c0_1 = arith.constant 0 : index
    %c0_2 = arith.constant 0 : index
    %1 = vector.load %arg2[%c0_1, %c0_2] : memref<1x32xf32, #tpu.memory_space<vmem>>, vector<1x32xf32>
    %c0_3 = arith.constant 0 : index
    %c0_4 = arith.constant 0 : index
    %2 = vector.load %arg3[%c0_3, %c0_4] : memref<1x32xf32, #tpu.memory_space<vmem>>, vector<1x32xf32>
    %cst = arith.constant dense<0.000000e+00> : vector<16xf32>
    %3 = vector.multi_reduction <add>, %0, %cst [1] : vector<16x32xf32> to vector<16xf32>
    %4 = vector.shape_cast %3 : vector<16xf32> to vector<16x1xf32>
    %cst_5 = arith.constant 3.200000e+01 : f32
    %5 = vector.broadcast %cst_5 : f32 to vector<16x1xf32>
    %6 = arith.divf %4, %5 : vector<16x1xf32>
    %7 = vector.broadcast %6 : vector<16x1xf32> to vector<16x32xf32>
    %8 = arith.subf %0, %7 : vector<16x32xf32>
    %9 = arith.mulf %8, %8 : vector<16x32xf32>
    %cst_6 = arith.constant dense<0.000000e+00> : vector<16xf32>
    %10 = vector.multi_reduction <add>, %9, %cst_6 [1] : vector<16x32xf32> to vector<16xf32>
    %11 = vector.shape_cast %10 : vector<16xf32> to vector<16x1xf32>
    %cst_7 = arith.constant 3.200000e+01 : f32
    %12 = vector.broadcast %cst_7 : f32 to vector<16x1xf32>
    %13 = arith.divf %11, %12 : vector<16x1xf32>
    %cst_8 = arith.constant 9.99999974E-6 : f32
    %14 = vector.broadcast %cst_8 : f32 to vector<16x1xf32>
    %15 = arith.addf %13, %14 : vector<16x1xf32>
    %16 = math.rsqrt %15 : vector<16x1xf32>
    %17 = vector.broadcast %16 : vector<16x1xf32> to vector<16x32xf32>
    %18 = arith.mulf %8, %17 : vector<16x32xf32>
    %19 = vector.broadcast %1 : vector<1x32xf32> to vector<16x32xf32>
    %20 = arith.mulf %18, %19 : vector<16x32xf32>
    %21 = vector.broadcast %2 : vector<1x32xf32> to vector<16x32xf32>
    %22 = arith.addf %20, %21 : vector<16x32xf32>
    %23 = arith.truncf %22 : vector<16x32xf32> to vector<16x32xbf16>
    %c0_9 = arith.constant 0 : index
    %c0_10 = arith.constant 0 : index
    %24 = vector.load %arg4[%c0_9, %c0_10] : memref<32x32xf32, #tpu.memory_space<vmem>>, vector<32x32xf32>
    %25 = arith.truncf %24 : vector<32x32xf32> to vector<32x32xbf16>
    %cst_11 = arith.constant dense<0.000000e+00> : vector<16x32xf32>
    %26 = tpu.matmul %23, %25, %cst_11 {dimension_numbers = #tpu.dot_dimension_numbers<[1], [0], [0], [1], [0, 0, 1, 1], [], []>} : vector<16x32xbf16>, vector<32x32xbf16>, vector<16x32xf32> -> vector<16x32xf32>
    %c0_12 = arith.constant 0 : index
    %c0_13 = arith.constant 0 : index
    %27 = vector.load %arg5[%c0_12, %c0_13] : memref<1x32xf32, #tpu.memory_space<vmem>>, vector<1x32xf32>
    %28 = vector.broadcast %27 : vector<1x32xf32> to vector<16x32xf32>
    %29 = arith.addf %26, %28 : vector<16x32xf32>
    %c0_14 = arith.constant 0 : index
    %c0_15 = arith.constant 0 : index
    %30 = vector.load %arg8[%c0_14, %c0_15] : memref<16x32xf32, #tpu.memory_space<vmem>>, vector<16x32xf32>
    tpu.vector_store %arg8[%c0_14, %c0_15], %29 {strides = array<i32>} : memref<16x32xf32, #tpu.memory_space<vmem>>, vector<16x32xf32>,
    %c0_16 = arith.constant 0 : index
    %c0_17 = arith.constant 0 : index
    %31 = vector.load %arg6[%c0_16, %c0_17] : memref<32x32xf32, #tpu.memory_space<vmem>>, vector<32x32xf32>
    %32 = arith.truncf %31 : vector<32x32xf32> to vector<32x32xbf16>
    %cst_18 = arith.constant dense<0.000000e+00> : vector<16x32xf32>
    %33 = tpu.matmul %23, %32, %cst_18 {dimension_numbers = #tpu.dot_dimension_numbers<[1], [0], [0], [1], [0, 0, 1, 1], [], []>} : vector<16x32xbf16>, vector<32x32xbf16>, vector<16x32xf32> -> vector<16x32xf32>
    %c0_19 = arith.constant 0 : index
    %c0_20 = arith.constant 0 : index
    %34 = vector.load %arg7[%c0_19, %c0_20] : memref<1x32xf32, #tpu.memory_space<vmem>>, vector<1x32xf32>
    %35 = vector.broadcast %34 : vector<1x32xf32> to vector<16x32xf32>
    %36 = arith.addf %33, %35 : vector<16x32xf32>
    %c0_21 = arith.constant 0 : index
    %c0_22 = arith.constant 0 : index
    %37 = vector.load %arg9[%c0_21, %c0_22] : memref<16x32xf32, #tpu.memory_space<vmem>>, vector<16x32xf32>
    tpu.vector_store %arg9[%c0_21, %c0_22], %36 {strides = array<i32>} : memref<16x32xf32, #tpu.memory_space<vmem>>, vector<16x32xf32>,
    return
  }
  func.func @transform_0(%arg0: i32) -> (i32, i32) {
    %c0_i32 = arith.constant 0 : i32
    %c0_i32_0 = arith.constant 0 : i32
    return %arg0, %c0_i32 : i32, i32
  }
  func.func @transform_1(%arg0: i32) -> (i32, i32) {
    %c0_i32 = arith.constant 0 : i32
    %c0_i32_0 = arith.constant 0 : i32
    %c0_i32_1 = arith.constant 0 : i32
    return %c0_i32, %c0_i32_0 : i32, i32
  }
  func.func @transform_2(%arg0: i32) -> (i32, i32) {
    %c0_i32 = arith.constant 0 : i32
    %c0_i32_0 = arith.constant 0 : i32
    %c0_i32_1 = arith.constant 0 : i32
    return %c0_i32, %c0_i32_0 : i32, i32
  }
  func.func @transform_3(%arg0: i32) -> (i32, i32) {
    %c0_i32 = arith.constant 0 : i32
    %c0_i32_0 = arith.constant 0 : i32
    %c0_i32_1 = arith.constant 0 : i32
    return %c0_i32, %c0_i32_0 : i32, i32
  }
  func.func @transform_4(%arg0: i32) -> (i32, i32) {
    %c0_i32 = arith.constant 0 : i32
    %c0_i32_0 = arith.constant 0 : i32
    %c0_i32_1 = arith.constant 0 : i32
    return %c0_i32, %c0_i32_0 : i32, i32
  }
  func.func @transform_5(%arg0: i32) -> (i32, i32) {
    %c0_i32 = arith.constant 0 : i32
    %c0_i32_0 = arith.constant 0 : i32
    %c0_i32_1 = arith.constant 0 : i32
    return %c0_i32, %c0_i32_0 : i32, i32
  }
  func.func @transform_6(%arg0: i32) -> (i32, i32) {
    %c0_i32 = arith.constant 0 : i32
    %c0_i32_0 = arith.constant 0 : i32
    %c0_i32_1 = arith.constant 0 : i32
    return %c0_i32, %c0_i32_0 : i32, i32
  }
  func.func @transform_7(%arg0: i32) -> (i32, i32) {
    %c0_i32 = arith.constant 0 : i32
    %c0_i32_0 = arith.constant 0 : i32
    return %arg0, %c0_i32 : i32, i32
  }
  func.func @transform_8(%arg0: i32) -> (i32, i32) {
    %c0_i32 = arith.constant 0 : i32
    %c0_i32_0 = arith.constant 0 : i32
    return %arg0, %c0_i32 : i32, i32
  }
}

module attributes {stable_mosaic.version = 11 : i64} {
  func.func @kernel(%arg0: i32, %arg1: memref<16x32xf32, #tpu.memory_space<vmem>>, %arg2: memref<1x32xf32, #tpu.memory_space<vmem>>, %arg3: memref<1x32xf32, #tpu.memory_space<vmem>>, %arg4: memref<16x32xf32, #tpu.memory_space<vmem>>) attributes {dimension_semantics = [#tpu.dimension_semantics<parallel>], iteration_bounds = array<i64: 2>, scalar_prefetch = 0 : i64, scratch_operands = 0 : i64, tpu.core_type = #tpu.core_type<tc>, window_params = [{transform_indices = @transform_0, window_bounds = array<i64: 16, 32>}, {pipeline_mode = #tpu.pipeline_mode<synchronous>, transform_indices = @transform_1, window_bounds = array<i64: 1, 32>}, {pipeline_mode = #tpu.pipeline_mode<synchronous>, transform_indices = @transform_2, window_bounds = array<i64: 1, 32>}, {transform_indices = @transform_3, window_bounds = array<i64: 16, 32>}]} {
    %c0 = arith.constant 0 : index
    %c0_0 = arith.constant 0 : index
    %0 = vector.load %arg1[%c0, %c0_0] : memref<16x32xf32, #tpu.memory_space<vmem>>, vector<16x32xf32>
    %c0_1 = arith.constant 0 : index
    %c0_2 = arith.constant 0 : index
    %1 = vector.load %arg2[%c0_1, %c0_2] : memref<1x32xf32, #tpu.memory_space<vmem>>, vector<1x32xf32>
    %c0_3 = arith.constant 0 : index
    %c0_4 = arith.constant 0 : index
    %2 = vector.load %arg3[%c0_3, %c0_4] : memref<1x32xf32, #tpu.memory_space<vmem>>, vector<1x32xf32>
    %cst = arith.constant dense<0.000000e+00> : vector<16xf32>
    %3 = vector.multi_reduction <add>, %0, %cst [1] : vector<16x32xf32> to vector<16xf32>
    %4 = vector.shape_cast %3 : vector<16xf32> to vector<16x1xf32>
    %cst_5 = arith.constant 3.200000e+01 : f32
    %5 = vector.broadcast %cst_5 : f32 to vector<16x1xf32>
    %6 = arith.divf %4, %5 : vector<16x1xf32>
    %7 = vector.broadcast %6 : vector<16x1xf32> to vector<16x32xf32>
    %8 = arith.subf %0, %7 : vector<16x32xf32>
    %9 = arith.mulf %8, %8 : vector<16x32xf32>
    %cst_6 = arith.constant dense<0.000000e+00> : vector<16xf32>
    %10 = vector.multi_reduction <add>, %9, %cst_6 [1] : vector<16x32xf32> to vector<16xf32>
    %11 = vector.shape_cast %10 : vector<16xf32> to vector<16x1xf32>
    %cst_7 = arith.constant 3.200000e+01 : f32
    %12 = vector.broadcast %cst_7 : f32 to vector<16x1xf32>
    %13 = arith.divf %11, %12 : vector<16x1xf32>
    %cst_8 = arith.constant 9.99999974E-6 : f32
    %14 = vector.broadcast %cst_8 : f32 to vector<16x1xf32>
    %15 = arith.addf %13, %14 : vector<16x1xf32>
    %16 = math.rsqrt %15 : vector<16x1xf32>
    %17 = vector.broadcast %16 : vector<16x1xf32> to vector<16x32xf32>
    %18 = arith.mulf %8, %17 : vector<16x32xf32>
    %19 = vector.broadcast %1 : vector<1x32xf32> to vector<16x32xf32>
    %20 = arith.mulf %18, %19 : vector<16x32xf32>
    %21 = vector.broadcast %2 : vector<1x32xf32> to vector<16x32xf32>
    %22 = arith.addf %20, %21 : vector<16x32xf32>
    %c0_9 = arith.constant 0 : index
    %c0_10 = arith.constant 0 : index
    %23 = vector.load %arg4[%c0_9, %c0_10] : memref<16x32xf32, #tpu.memory_space<vmem>>, vector<16x32xf32>
    tpu.vector_store %arg4[%c0_9, %c0_10], %22 {strides = array<i32>} : memref<16x32xf32, #tpu.memory_space<vmem>>, vector<16x32xf32>,
    return
  }
  func.func @transform_0(%arg0: i32) -> (i32, i32) {
    %c0_i32 = arith.constant 0 : i32
    %c0_i32_0 = arith.constant 0 : i32
    return %arg0, %c0_i32 : i32, i32
  }
  func.func @transform_1(%arg0: i32) -> (i32, i32) {
    %c0_i32 = arith.constant 0 : i32
    %c0_i32_0 = arith.constant 0 : i32
    %c0_i32_1 = arith.constant 0 : i32
    return %c0_i32, %c0_i32_0 : i32, i32
  }
  func.func @transform_2(%arg0: i32) -> (i32, i32) {
    %c0_i32 = arith.constant 0 : i32
    %c0_i32_0 = arith.constant 0 : i32
    %c0_i32_1 = arith.constant 0 : i32
    return %c0_i32, %c0_i32_0 : i32, i32
  }
  func.func @transform_3(%arg0: i32) -> (i32, i32) {
    %c0_i32 = arith.constant 0 : i32
    %c0_i32_0 = arith.constant 0 : i32
    return %arg0, %c0_i32 : i32, i32
  }
}

module attributes {stable_mosaic.version = 11 : i64} {
  func.func @kernel(%arg0: i32, %arg1: memref<1x8x32xf32, #tpu.memory_space<vmem>>, %arg2: memref<1x16x32xf32, #tpu.memory_space<vmem>>, %arg3: memref<1x16x32xf32, #tpu.memory_space<vmem>>, %arg4: memref<1x8x32xf32, #tpu.memory_space<vmem>>, %arg5: memref<32x32xf32, #tpu.memory_space<vmem>>, %arg6: memref<1x32xf32, #tpu.memory_space<vmem>>, %arg7: memref<1x8x32xf32, #tpu.memory_space<vmem>>) attributes {dimension_semantics = [#tpu.dimension_semantics<parallel>], iteration_bounds = array<i64: 2>, scalar_prefetch = 0 : i64, scratch_operands = 0 : i64, tpu.core_type = #tpu.core_type<tc>, window_params = [{transform_indices = @transform_0, window_bounds = array<i64: 1, 8, 32>}, {transform_indices = @transform_1, window_bounds = array<i64: 1, 16, 32>}, {transform_indices = @transform_2, window_bounds = array<i64: 1, 16, 32>}, {transform_indices = @transform_3, window_bounds = array<i64: 1, 8, 32>}, {pipeline_mode = #tpu.pipeline_mode<synchronous>, transform_indices = @transform_4, window_bounds = array<i64: 32, 32>}, {pipeline_mode = #tpu.pipeline_mode<synchronous>, transform_indices = @transform_5, window_bounds = array<i64: 1, 32>}, {transform_indices = @transform_6, window_bounds = array<i64: 1, 8, 32>}]} {
    %c0 = arith.constant 0 : index
    %c0_0 = arith.constant 0 : index
    %c0_1 = arith.constant 0 : index
    %0 = vector.load %arg1[%c0, %c0_0, %c0_1] : memref<1x8x32xf32, #tpu.memory_space<vmem>>, vector<1x8x32xf32>
    %1 = vector.shape_cast %0 : vector<1x8x32xf32> to vector<8x32xf32>
    %c0_2 = arith.constant 0 : index
    %c0_3 = arith.constant 0 : index
    %c0_4 = arith.constant 0 : index
    %2 = vector.load %arg2[%c0_2, %c0_3, %c0_4] : memref<1x16x32xf32, #tpu.memory_space<vmem>>, vector<1x16x32xf32>
    %3 = vector.shape_cast %2 : vector<1x16x32xf32> to vector<16x32xf32>
    %c0_5 = arith.constant 0 : index
    %c0_6 = arith.constant 0 : index
    %c0_7 = arith.constant 0 : index
    %4 = vector.load %arg3[%c0_5, %c0_6, %c0_7] : memref<1x16x32xf32, #tpu.memory_space<vmem>>, vector<1x16x32xf32>
    %5 = vector.shape_cast %4 : vector<1x16x32xf32> to vector<16x32xf32>
    %cst = arith.constant 0.000000e+00 : f32
    %6 = vector.broadcast %cst : f32 to vector<8x32xf32>
    %7 = vector.extract_strided_slice %1 {offsets = [0, 0], sizes = [8, 8], strides = [1, 1]} : vector<8x32xf32> to vector<8x8xf32>
    %8 = arith.truncf %7 : vector<8x8xf32> to vector<8x8xbf16>
    %9 = vector.extract_strided_slice %3 {offsets = [0, 0], sizes = [16, 8], strides = [1, 1]} : vector<16x32xf32> to vector<16x8xf32>
    %10 = arith.truncf %9 : vector<16x8xf32> to vector<16x8xbf16>
    %11 = vector.extract_strided_slice %5 {offsets = [0, 0], sizes = [16, 8], strides = [1, 1]} : vector<16x32xf32> to vector<16x8xf32>
    %12 = arith.truncf %11 : vector<16x8xf32> to vector<16x8xbf16>
    %cst_8 = arith.constant dense<0.000000e+00> : vector<8x16xf32>
    %13 = tpu.matmul %8, %10, %cst_8 {dimension_numbers = #tpu.dot_dimension_numbers<[1], [1], [0], [0], [0, 0, 1, 0], [], []>} : vector<8x8xbf16>, vector<16x8xbf16>, vector<8x16xf32> -> vector<8x16xf32>
    %cst_9 = arith.constant 0.353553385 : f32
    %14 = vector.broadcast %cst_9 : f32 to vector<8x16xf32>
    %15 = arith.mulf %13, %14 : vector<8x16xf32>
    %cst_10 = arith.constant dense<0xFF800000> : vector<8xf32>
    %16 = vector.multi_reduction <maximumf>, %15, %cst_10 [1] : vector<8x16xf32> to vector<8xf32>
    %17 = vector.shape_cast %16 : vector<8xf32> to vector<8x1xf32>
    %18 = vector.broadcast %17 : vector<8x1xf32> to vector<8x16xf32>
    %19 = arith.subf %15, %18 : vector<8x16xf32>
    %20 = math.exp %19 : vector<8x16xf32>
    %cst_11 = arith.constant dense<0.000000e+00> : vector<8xf32>
    %21 = vector.multi_reduction <add>, %20, %cst_11 [1] : vector<8x16xf32> to vector<8xf32>
    %22 = vector.shape_cast %21 : vector<8xf32> to vector<8x1xf32>
    %23 = tpu.reciprocal %22 {approx = true} : vector<8x1xf32> -> vector<8x1xf32>
    %24 = vector.broadcast %23 : vector<8x1xf32> to vector<8x16xf32>
    %25 = arith.mulf %20, %24 : vector<8x16xf32>
    %26 = arith.truncf %25 : vector<8x16xf32> to vector<8x16xbf16>
    %cst_12 = arith.constant dense<0.000000e+00> : vector<8x8xf32>
    %27 = tpu.matmul %26, %12, %cst_12 {dimension_numbers = #tpu.dot_dimension_numbers<[1], [0], [0], [1], [0, 0, 1, 1], [], []>} : vector<8x16xbf16>, vector<16x8xbf16>, vector<8x8xf32> -> vector<8x8xf32>
    %28 = arith.truncf %27 : vector<8x8xf32> to vector<8x8xbf16>
    %c0_13 = arith.constant 0 : index
    %c0_14 = arith.constant 0 : index
    %29 = vector.load %arg5[%c0_13, %c0_14] : memref<32x32xf32, #tpu.memory_space<vmem>>, vector<8x32xf32>
    %30 = arith.truncf %29 : vector<8x32xf32> to vector<8x32xbf16>
    %cst_15 = arith.constant dense<0.000000e+00> : vector<8x32xf32>
    %31 = tpu.matmul %28, %30, %cst_15 {dimension_numbers = #tpu.dot_dimension_numbers<[1], [0], [0], [1], [0, 0, 1, 1], [], []>} : vector<8x8xbf16>, vector<8x32xbf16>, vector<8x32xf32> -> vector<8x32xf32>
    %32 = arith.addf %6, %31 : vector<8x32xf32>
    %33 = vector.extract_strided_slice %1 {offsets = [0, 8], sizes = [8, 8], strides = [1, 1]} : vector<8x32xf32> to vector<8x8xf32>
    %34 = arith.truncf %33 : vector<8x8xf32> to vector<8x8xbf16>
    %35 = vector.extract_strided_slice %3 {offsets = [0, 8], sizes = [16, 8], strides = [1, 1]} : vector<16x32xf32> to vector<16x8xf32>
    %36 = arith.truncf %35 : vector<16x8xf32> to vector<16x8xbf16>
    %37 = vector.extract_strided_slice %5 {offsets = [0, 8], sizes = [16, 8], strides = [1, 1]} : vector<16x32xf32> to vector<16x8xf32>
    %38 = arith.truncf %37 : vector<16x8xf32> to vector<16x8xbf16>
    %cst_16 = arith.constant dense<0.000000e+00> : vector<8x16xf32>
    %39 = tpu.matmul %34, %36, %cst_16 {dimension_numbers = #tpu.dot_dimension_numbers<[1], [1], [0], [0], [0, 0, 1, 0], [], []>} : vector<8x8xbf16>, vector<16x8xbf16>, vector<8x16xf32> -> vector<8x16xf32>
    %cst_17 = arith.constant 0.353553385 : f32
    %40 = vector.broadcast %cst_17 : f32 to vector<8x16xf32>
    %41 = arith.mulf %39, %40 : vector<8x16xf32>
    %cst_18 = arith.constant dense<0xFF800000> : vector<8xf32>
    %42 = vector.multi_reduction <maximumf>, %41, %cst_18 [1] : vector<8x16xf32> to vector<8xf32>
    %43 = vector.shape_cast %42 : vector<8xf32> to vector<8x1xf32>
    %44 = vector.broadcast %43 : vector<8x1xf32> to vector<8x16xf32>
    %45 = arith.subf %41, %44 : vector<8x16xf32>
    %46 = math.exp %45 : vector<8x16xf32>
    %cst_19 = arith.constant dense<0.000000e+00> : vector<8xf32>
    %47 = vector.multi_reduction <add>, %46, %cst_19 [1] : vector<8x16xf32> to vector<8xf32>
    %48 = vector.shape_cast %47 : vector<8xf32> to vector<8x1xf32>
    %49 = tpu.reciprocal %48 {approx = true} : vector<8x1xf32> -> vector<8x1xf32>
    %50 = vector.broadcast %49 : vector<8x1xf32> to vector<8x16xf32>
    %51 = arith.mulf %46, %50 : vector<8x16xf32>
    %52 = arith.truncf %51 : vector<8x16xf32> to vector<8x16xbf16>
    %cst_20 = arith.constant dense<0.000000e+00> : vector<8x8xf32>
    %53 = tpu.matmul %52, %38, %cst_20 {dimension_numbers = #tpu.dot_dimension_numbers<[1], [0], [0], [1], [0, 0, 1, 1], [], []>} : vector<8x16xbf16>, vector<16x8xbf16>, vector<8x8xf32> -> vector<8x8xf32>
    %54 = arith.truncf %53 : vector<8x8xf32> to vector<8x8xbf16>
    %c8 = arith.constant 8 : index
    %c0_21 = arith.constant 0 : index
    %55 = vector.load %arg5[%c8, %c0_21] : memref<32x32xf32, #tpu.memory_space<vmem>>, vector<8x32xf32>
    %56 = arith.truncf %55 : vector<8x32xf32> to vector<8x32xbf16>
    %cst_22 = arith.constant dense<0.000000e+00> : vector<8x32xf32>
    %57 = tpu.matmul %54, %56, %cst_22 {dimension_numbers = #tpu.dot_dimension_numbers<[1], [0], [0], [1], [0, 0, 1, 1], [], []>} : vector<8x8xbf16>, vector<8x32xbf16>, vector<8x32xf32> -> vector<8x32xf32>
    %58 = arith.addf %32, %57 : vector<8x32xf32>
    %59 = vector.extract_strided_slice %1 {offsets = [0, 16], sizes = [8, 8], strides = [1, 1]} : vector<8x32xf32> to vector<8x8xf32>
    %60 = arith.truncf %59 : vector<8x8xf32> to vector<8x8xbf16>
    %61 = vector.extract_strided_slice %3 {offsets = [0, 16], sizes = [16, 8], strides = [1, 1]} : vector<16x32xf32> to vector<16x8xf32>
    %62 = arith.truncf %61 : vector<16x8xf32> to vector<16x8xbf16>
    %63 = vector.extract_strided_slice %5 {offsets = [0, 16], sizes = [16, 8], strides = [1, 1]} : vector<16x32xf32> to vector<16x8xf32>
    %64 = arith.truncf %63 : vector<16x8xf32> to vector<16x8xbf16>
    %cst_23 = arith.constant dense<0.000000e+00> : vector<8x16xf32>
    %65 = tpu.matmul %60, %62, %cst_23 {dimension_numbers = #tpu.dot_dimension_numbers<[1], [1], [0], [0], [0, 0, 1, 0], [], []>} : vector<8x8xbf16>, vector<16x8xbf16>, vector<8x16xf32> -> vector<8x16xf32>
    %cst_24 = arith.constant 0.353553385 : f32
    %66 = vector.broadcast %cst_24 : f32 to vector<8x16xf32>
    %67 = arith.mulf %65, %66 : vector<8x16xf32>
    %cst_25 = arith.constant dense<0xFF800000> : vector<8xf32>
    %68 = vector.multi_reduction <maximumf>, %67, %cst_25 [1] : vector<8x16xf32> to vector<8xf32>
    %69 = vector.shape_cast %68 : vector<8xf32> to vector<8x1xf32>
    %70 = vector.broadcast %69 : vector<8x1xf32> to vector<8x16xf32>
    %71 = arith.subf %67, %70 : vector<8x16xf32>
    %72 = math.exp %71 : vector<8x16xf32>
    %cst_26 = arith.constant dense<0.000000e+00> : vector<8xf32>
    %73 = vector.multi_reduction <add>, %72, %cst_26 [1] : vector<8x16xf32> to vector<8xf32>
    %74 = vector.shape_cast %73 : vector<8xf32> to vector<8x1xf32>
    %75 = tpu.reciprocal %74 {approx = true} : vector<8x1xf32> -> vector<8x1xf32>
    %76 = vector.broadcast %75 : vector<8x1xf32> to vector<8x16xf32>
    %77 = arith.mulf %72, %76 : vector<8x16xf32>
    %78 = arith.truncf %77 : vector<8x16xf32> to vector<8x16xbf16>
    %cst_27 = arith.constant dense<0.000000e+00> : vector<8x8xf32>
    %79 = tpu.matmul %78, %64, %cst_27 {dimension_numbers = #tpu.dot_dimension_numbers<[1], [0], [0], [1], [0, 0, 1, 1], [], []>} : vector<8x16xbf16>, vector<16x8xbf16>, vector<8x8xf32> -> vector<8x8xf32>
    %80 = arith.truncf %79 : vector<8x8xf32> to vector<8x8xbf16>
    %c16 = arith.constant 16 : index
    %c0_28 = arith.constant 0 : index
    %81 = vector.load %arg5[%c16, %c0_28] : memref<32x32xf32, #tpu.memory_space<vmem>>, vector<8x32xf32>
    %82 = arith.truncf %81 : vector<8x32xf32> to vector<8x32xbf16>
    %cst_29 = arith.constant dense<0.000000e+00> : vector<8x32xf32>
    %83 = tpu.matmul %80, %82, %cst_29 {dimension_numbers = #tpu.dot_dimension_numbers<[1], [0], [0], [1], [0, 0, 1, 1], [], []>} : vector<8x8xbf16>, vector<8x32xbf16>, vector<8x32xf32> -> vector<8x32xf32>
    %84 = arith.addf %58, %83 : vector<8x32xf32>
    %85 = vector.extract_strided_slice %1 {offsets = [0, 24], sizes = [8, 8], strides = [1, 1]} : vector<8x32xf32> to vector<8x8xf32>
    %86 = arith.truncf %85 : vector<8x8xf32> to vector<8x8xbf16>
    %87 = vector.extract_strided_slice %3 {offsets = [0, 24], sizes = [16, 8], strides = [1, 1]} : vector<16x32xf32> to vector<16x8xf32>
    %88 = arith.truncf %87 : vector<16x8xf32> to vector<16x8xbf16>
    %89 = vector.extract_strided_slice %5 {offsets = [0, 24], sizes = [16, 8], strides = [1, 1]} : vector<16x32xf32> to vector<16x8xf32>
    %90 = arith.truncf %89 : vector<16x8xf32> to vector<16x8xbf16>
    %cst_30 = arith.constant dense<0.000000e+00> : vector<8x16xf32>
    %91 = tpu.matmul %86, %88, %cst_30 {dimension_numbers = #tpu.dot_dimension_numbers<[1], [1], [0], [0], [0, 0, 1, 0], [], []>} : vector<8x8xbf16>, vector<16x8xbf16>, vector<8x16xf32> -> vector<8x16xf32>
    %cst_31 = arith.constant 0.353553385 : f32
    %92 = vector.broadcast %cst_31 : f32 to vector<8x16xf32>
    %93 = arith.mulf %91, %92 : vector<8x16xf32>
    %cst_32 = arith.constant dense<0xFF800000> : vector<8xf32>
    %94 = vector.multi_reduction <maximumf>, %93, %cst_32 [1] : vector<8x16xf32> to vector<8xf32>
    %95 = vector.shape_cast %94 : vector<8xf32> to vector<8x1xf32>
    %96 = vector.broadcast %95 : vector<8x1xf32> to vector<8x16xf32>
    %97 = arith.subf %93, %96 : vector<8x16xf32>
    %98 = math.exp %97 : vector<8x16xf32>
    %cst_33 = arith.constant dense<0.000000e+00> : vector<8xf32>
    %99 = vector.multi_reduction <add>, %98, %cst_33 [1] : vector<8x16xf32> to vector<8xf32>
    %100 = vector.shape_cast %99 : vector<8xf32> to vector<8x1xf32>
    %101 = tpu.reciprocal %100 {approx = true} : vector<8x1xf32> -> vector<8x1xf32>
    %102 = vector.broadcast %101 : vector<8x1xf32> to vector<8x16xf32>
    %103 = arith.mulf %98, %102 : vector<8x16xf32>
    %104 = arith.truncf %103 : vector<8x16xf32> to vector<8x16xbf16>
    %cst_34 = arith.constant dense<0.000000e+00> : vector<8x8xf32>
    %105 = tpu.matmul %104, %90, %cst_34 {dimension_numbers = #tpu.dot_dimension_numbers<[1], [0], [0], [1], [0, 0, 1, 1], [], []>} : vector<8x16xbf16>, vector<16x8xbf16>, vector<8x8xf32> -> vector<8x8xf32>
    %106 = arith.truncf %105 : vector<8x8xf32> to vector<8x8xbf16>
    %c24 = arith.constant 24 : index
    %c0_35 = arith.constant 0 : index
    %107 = vector.load %arg5[%c24, %c0_35] : memref<32x32xf32, #tpu.memory_space<vmem>>, vector<8x32xf32>
    %108 = arith.truncf %107 : vector<8x32xf32> to vector<8x32xbf16>
    %cst_36 = arith.constant dense<0.000000e+00> : vector<8x32xf32>
    %109 = tpu.matmul %106, %108, %cst_36 {dimension_numbers = #tpu.dot_dimension_numbers<[1], [0], [0], [1], [0, 0, 1, 1], [], []>} : vector<8x8xbf16>, vector<8x32xbf16>, vector<8x32xf32> -> vector<8x32xf32>
    %110 = arith.addf %84, %109 : vector<8x32xf32>
    %c0_37 = arith.constant 0 : index
    %c0_38 = arith.constant 0 : index
    %111 = vector.load %arg6[%c0_37, %c0_38] : memref<1x32xf32, #tpu.memory_space<vmem>>, vector<1x32xf32>
    %112 = vector.broadcast %111 : vector<1x32xf32> to vector<8x32xf32>
    %113 = arith.addf %110, %112 : vector<8x32xf32>
    %c0_39 = arith.constant 0 : index
    %c0_40 = arith.constant 0 : index
    %c0_41 = arith.constant 0 : index
    %114 = vector.load %arg4[%c0_39, %c0_40, %c0_41] : memref<1x8x32xf32, #tpu.memory_space<vmem>>, vector<1x8x32xf32>
    %115 = vector.shape_cast %114 : vector<1x8x32xf32> to vector<8x32xf32>
    %116 = arith.addf %115, %113 : vector<8x32xf32>
    %c0_42 = arith.constant 0 : index
    %c0_43 = arith.constant 0 : index
    %c0_44 = arith.constant 0 : index
    %117 = vector.load %arg7[%c0_42, %c0_43, %c0_44] : memref<1x8x32xf32, #tpu.memory_space<vmem>>, vector<1x8x32xf32>
    %118 = vector.shape_cast %117 : vector<1x8x32xf32> to vector<8x32xf32>
    %119 = vector.shape_cast %116 : vector<8x32xf32> to vector<1x8x32xf32>
    tpu.vector_store %arg7[%c0_42, %c0_43, %c0_44], %119 {strides = array<i32>} : memref<1x8x32xf32, #tpu.memory_space<vmem>>, vector<1x8x32xf32>,
    return
  }
  func.func @transform_0(%arg0: i32) -> (i32, i32, i32) {
    %c0_i32 = arith.constant 0 : i32
    %c0_i32_0 = arith.constant 0 : i32
    %c0_i32_1 = arith.constant 0 : i32
    return %arg0, %c0_i32, %c0_i32_0 : i32, i32, i32
  }
  func.func @transform_1(%arg0: i32) -> (i32, i32, i32) {
    %c0_i32 = arith.constant 0 : i32
    %c0_i32_0 = arith.constant 0 : i32
    %c0_i32_1 = arith.constant 0 : i32
    return %arg0, %c0_i32, %c0_i32_0 : i32, i32, i32
  }
  func.func @transform_2(%arg0: i32) -> (i32, i32, i32) {
    %c0_i32 = arith.constant 0 : i32
    %c0_i32_0 = arith.constant 0 : i32
    %c0_i32_1 = arith.constant 0 : i32
    return %arg0, %c0_i32, %c0_i32_0 : i32, i32, i32
  }
  func.func @transform_3(%arg0: i32) -> (i32, i32, i32) {
    %c0_i32 = arith.constant 0 : i32
    %c0_i32_0 = arith.constant 0 : i32
    %c0_i32_1 = arith.constant 0 : i32
    return %arg0, %c0_i32, %c0_i32_0 : i32, i32, i32
  }
  func.func @transform_4(%arg0: i32) -> (i32, i32) {
    %c0_i32 = arith.constant 0 : i32
    %c0_i32_0 = arith.constant 0 : i32
    %c0_i32_1 = arith.constant 0 : i32
    return %c0_i32, %c0_i32_0 : i32, i32
  }
  func.func @transform_5(%arg0: i32) -> (i32, i32) {
    %c0_i32 = arith.constant 0 : i32
    %c0_i32_0 = arith.constant 0 : i32
    %c0_i32_1 = arith.constant 0 : i32
    return %c0_i32, %c0_i32_0 : i32, i32
  }
  func.func @transform_6(%arg0: i32) -> (i32, i32, i32) {
    %c0_i32 = arith.constant 0 : i32
    %c0_i32_0 = arith.constant 0 : i32
    %c0_i32_1 = arith.constant 0 : i32
    return %arg0, %c0_i32, %c0_i32_0 : i32, i32, i32
  }
}

module attributes {stable_mosaic.version = 11 : i64} {
  func.func @kernel(%arg0: i32, %arg1: memref<8x32xf32, #tpu.memory_space<vmem>>, %arg2: memref<1x32xf32, #tpu.memory_space<vmem>>, %arg3: memref<1x32xf32, #tpu.memory_space<vmem>>, %arg4: memref<32x128xf32, #tpu.memory_space<vmem>>, %arg5: memref<1x128xf32, #tpu.memory_space<vmem>>, %arg6: memref<128x32xf32, #tpu.memory_space<vmem>>, %arg7: memref<1x32xf32, #tpu.memory_space<vmem>>, %arg8: memref<8x32xf32, #tpu.memory_space<vmem>>) attributes {dimension_semantics = [#tpu.dimension_semantics<parallel>], iteration_bounds = array<i64: 2>, scalar_prefetch = 0 : i64, scratch_operands = 0 : i64, tpu.core_type = #tpu.core_type<tc>, window_params = [{transform_indices = @transform_0, window_bounds = array<i64: 8, 32>}, {pipeline_mode = #tpu.pipeline_mode<synchronous>, transform_indices = @transform_1, window_bounds = array<i64: 1, 32>}, {pipeline_mode = #tpu.pipeline_mode<synchronous>, transform_indices = @transform_2, window_bounds = array<i64: 1, 32>}, {pipeline_mode = #tpu.pipeline_mode<synchronous>, transform_indices = @transform_3, window_bounds = array<i64: 32, 128>}, {pipeline_mode = #tpu.pipeline_mode<synchronous>, transform_indices = @transform_4, window_bounds = array<i64: 1, 128>}, {pipeline_mode = #tpu.pipeline_mode<synchronous>, transform_indices = @transform_5, window_bounds = array<i64: 128, 32>}, {pipeline_mode = #tpu.pipeline_mode<synchronous>, transform_indices = @transform_6, window_bounds = array<i64: 1, 32>}, {transform_indices = @transform_7, window_bounds = array<i64: 8, 32>}]} {
    %c0 = arith.constant 0 : index
    %c0_0 = arith.constant 0 : index
    %0 = vector.load %arg1[%c0, %c0_0] : memref<8x32xf32, #tpu.memory_space<vmem>>, vector<8x32xf32>
    %c0_1 = arith.constant 0 : index
    %c0_2 = arith.constant 0 : index
    %1 = vector.load %arg2[%c0_1, %c0_2] : memref<1x32xf32, #tpu.memory_space<vmem>>, vector<1x32xf32>
    %c0_3 = arith.constant 0 : index
    %c0_4 = arith.constant 0 : index
    %2 = vector.load %arg3[%c0_3, %c0_4] : memref<1x32xf32, #tpu.memory_space<vmem>>, vector<1x32xf32>
    %cst = arith.constant dense<0.000000e+00> : vector<8xf32>
    %3 = vector.multi_reduction <add>, %0, %cst [1] : vector<8x32xf32> to vector<8xf32>
    %4 = vector.shape_cast %3 : vector<8xf32> to vector<8x1xf32>
    %cst_5 = arith.constant 3.200000e+01 : f32
    %5 = vector.broadcast %cst_5 : f32 to vector<8x1xf32>
    %6 = arith.divf %4, %5 : vector<8x1xf32>
    %7 = vector.broadcast %6 : vector<8x1xf32> to vector<8x32xf32>
    %8 = arith.subf %0, %7 : vector<8x32xf32>
    %9 = arith.mulf %8, %8 : vector<8x32xf32>
    %cst_6 = arith.constant dense<0.000000e+00> : vector<8xf32>
    %10 = vector.multi_reduction <add>, %9, %cst_6 [1] : vector<8x32xf32> to vector<8xf32>
    %11 = vector.shape_cast %10 : vector<8xf32> to vector<8x1xf32>
    %cst_7 = arith.constant 3.200000e+01 : f32
    %12 = vector.broadcast %cst_7 : f32 to vector<8x1xf32>
    %13 = arith.divf %11, %12 : vector<8x1xf32>
    %cst_8 = arith.constant 9.99999974E-6 : f32
    %14 = vector.broadcast %cst_8 : f32 to vector<8x1xf32>
    %15 = arith.addf %13, %14 : vector<8x1xf32>
    %16 = math.rsqrt %15 : vector<8x1xf32>
    %17 = vector.broadcast %16 : vector<8x1xf32> to vector<8x32xf32>
    %18 = arith.mulf %8, %17 : vector<8x32xf32>
    %19 = vector.broadcast %1 : vector<1x32xf32> to vector<8x32xf32>
    %20 = arith.mulf %18, %19 : vector<8x32xf32>
    %21 = vector.broadcast %2 : vector<1x32xf32> to vector<8x32xf32>
    %22 = arith.addf %20, %21 : vector<8x32xf32>
    %23 = arith.truncf %22 : vector<8x32xf32> to vector<8x32xbf16>
    %c0_9 = arith.constant 0 : index
    %c0_10 = arith.constant 0 : index
    %24 = vector.load %arg4[%c0_9, %c0_10] : memref<32x128xf32, #tpu.memory_space<vmem>>, vector<32x128xf32>
    %25 = arith.truncf %24 : vector<32x128xf32> to vector<32x128xbf16>
    %cst_11 = arith.constant dense<0.000000e+00> : vector<8x128xf32>
    %26 = tpu.matmul %23, %25, %cst_11 {dimension_numbers = #tpu.dot_dimension_numbers<[1], [0], [0], [1], [0, 0, 1, 1], [], []>} : vector<8x32xbf16>, vector<32x128xbf16>, vector<8x128xf32> -> vector<8x128xf32>
    %c0_12 = arith.constant 0 : index
    %c0_13 = arith.constant 0 : index
    %27 = vector.load %arg5[%c0_12, %c0_13] : memref<1x128xf32, #tpu.memory_space<vmem>>, vector<1x128xf32>
    %28 = vector.broadcast %27 : vector<1x128xf32> to vector<8x128xf32>
    %29 = arith.addf %26, %28 : vector<8x128xf32>
    %cst_14 = arith.constant 5.000000e-01 : f32
    %30 = vector.broadcast %cst_14 : f32 to vector<8x128xf32>
    %31 = arith.mulf %30, %29 : vector<8x128xf32>
    %cst_15 = arith.constant 4.471500e-02 : f32
    %32 = vector.broadcast %cst_15 : f32 to vector<8x128xf32>
    %33 = arith.mulf %32, %29 : vector<8x128xf32>
    %34 = arith.mulf %33, %29 : vector<8x128xf32>
    %35 = arith.mulf %34, %29 : vector<8x128xf32>
    %36 = arith.addf %29, %35 : vector<8x128xf32>
    %cst_16 = arith.constant 0.797884583 : f32
    %37 = vector.broadcast %cst_16 : f32 to vector<8x128xf32>
    %38 = arith.mulf %37, %36 : vector<8x128xf32>
    %39 = math.tanh %38 : vector<8x128xf32>
    %cst_17 = arith.constant 1.000000e+00 : f32
    %40 = vector.broadcast %cst_17 : f32 to vector<8x128xf32>
    %41 = arith.addf %40, %39 : vector<8x128xf32>
    %42 = arith.mulf %31, %41 : vector<8x128xf32>
    %43 = arith.truncf %42 : vector<8x128xf32> to vector<8x128xbf16>
    %c0_18 = arith.constant 0 : index
    %c0_19 = arith.constant 0 : index
    %44 = vector.load %arg6[%c0_18, %c0_19] : memref<128x32xf32, #tpu.memory_space<vmem>>, vector<128x32xf32>
    %45 = arith.truncf %44 : vector<128x32xf32> to vector<128x32xbf16>
    %cst_20 = arith.constant dense<0.000000e+00> : vector<8x32xf32>
    %46 = tpu.matmul %43, %45, %cst_20 {dimension_numbers = #tpu.dot_dimension_numbers<[1], [0], [0], [1], [0, 0, 1, 1], [], []>} : vector<8x128xbf16>, vector<128x32xbf16>, vector<8x32xf32> -> vector<8x32xf32>
    %c0_21 = arith.constant 0 : index
    %c0_22 = arith.constant 0 : index
    %47 = vector.load %arg7[%c0_21, %c0_22] : memref<1x32xf32, #tpu.memory_space<vmem>>, vector<1x32xf32>
    %48 = vector.broadcast %47 : vector<1x32xf32> to vector<8x32xf32>
    %49 = arith.addf %46, %48 : vector<8x32xf32>
    %50 = arith.addf %0, %49 : vector<8x32xf32>
    %c0_23 = arith.constant 0 : index
    %c0_24 = arith.constant 0 : index
    %51 = vector.load %arg8[%c0_23, %c0_24] : memref<8x32xf32, #tpu.memory_space<vmem>>, vector<8x32xf32>
    tpu.vector_store %arg8[%c0_23, %c0_24], %50 {strides = array<i32>} : memref<8x32xf32, #tpu.memory_space<vmem>>, vector<8x32xf32>,
    return
  }
  func.func @transform_0(%arg0: i32) -> (i32, i32) {
    %c0_i32 = arith.constant 0 : i32
    %c0_i32_0 = arith.constant 0 : i32
    return %arg0, %c0_i32 : i32, i32
  }
  func.func @transform_1(%arg0: i32) -> (i32, i32) {
    %c0_i32 = arith.constant 0 : i32
    %c0_i32_0 = arith.constant 0 : i32
    %c0_i32_1 = arith.constant 0 : i32
    return %c0_i32, %c0_i32_0 : i32, i32
  }
  func.func @transform_2(%arg0: i32) -> (i32, i32) {
    %c0_i32 = arith.constant 0 : i32
    %c0_i32_0 = arith.constant 0 : i32
    %c0_i32_1 = arith.constant 0 : i32
    return %c0_i32, %c0_i32_0 : i32, i32
  }
  func.func @transform_3(%arg0: i32) -> (i32, i32) {
    %c0_i32 = arith.constant 0 : i32
    %c0_i32_0 = arith.constant 0 : i32
    %c0_i32_1 = arith.constant 0 : i32
    return %c0_i32, %c0_i32_0 : i32, i32
  }
  func.func @transform_4(%arg0: i32) -> (i32, i32) {
    %c0_i32 = arith.constant 0 : i32
    %c0_i32_0 = arith.constant 0 : i32
    %c0_i32_1 = arith.constant 0 : i32
    return %c0_i32, %c0_i32_0 : i32, i32
  }
  func.func @transform_5(%arg0: i32) -> (i32, i32) {
    %c0_i32 = arith.constant 0 : i32
    %c0_i32_0 = arith.constant 0 : i32
    %c0_i32_1 = arith.constant 0 : i32
    return %c0_i32, %c0_i32_0 : i32, i32
  }
  func.func @transform_6(%arg0: i32) -> (i32, i32) {
    %c0_i32 = arith.constant 0 : i32
    %c0_i32_0 = arith.constant 0 : i32
    %c0_i32_1 = arith.constant 0 : i32
    return %c0_i32, %c0_i32_0 : i32, i32
  }
  func.func @transform_7(%arg0: i32) -> (i32, i32) {
    %c0_i32 = arith.constant 0 : i32
    %c0_i32_0 = arith.constant 0 : i32
    return %arg0, %c0_i32 : i32, i32
  }
}

module attributes {stable_mosaic.version = 11 : i64} {
  func.func @kernel(%arg0: i32, %arg1: memref<8x32xf32, #tpu.memory_space<vmem>>, %arg2: memref<32x32xf32, #tpu.memory_space<vmem>>, %arg3: memref<1x32xf32, #tpu.memory_space<vmem>>, %arg4: memref<8x32xf32, #tpu.memory_space<vmem>>) attributes {dimension_semantics = [#tpu.dimension_semantics<parallel>], iteration_bounds = array<i64: 2>, scalar_prefetch = 0 : i64, scratch_operands = 0 : i64, tpu.core_type = #tpu.core_type<tc>, window_params = [{transform_indices = @transform_0, window_bounds = array<i64: 8, 32>}, {pipeline_mode = #tpu.pipeline_mode<synchronous>, transform_indices = @transform_1, window_bounds = array<i64: 32, 32>}, {pipeline_mode = #tpu.pipeline_mode<synchronous>, transform_indices = @transform_2, window_bounds = array<i64: 1, 32>}, {transform_indices = @transform_3, window_bounds = array<i64: 8, 32>}]} {
    %c0 = arith.constant 0 : index
    %c0_0 = arith.constant 0 : index
    %0 = vector.load %arg1[%c0, %c0_0] : memref<8x32xf32, #tpu.memory_space<vmem>>, vector<8x32xf32>
    %1 = arith.truncf %0 : vector<8x32xf32> to vector<8x32xbf16>
    %c0_1 = arith.constant 0 : index
    %c0_2 = arith.constant 0 : index
    %2 = vector.load %arg2[%c0_1, %c0_2] : memref<32x32xf32, #tpu.memory_space<vmem>>, vector<32x32xf32>
    %3 = arith.truncf %2 : vector<32x32xf32> to vector<32x32xbf16>
    %cst = arith.constant dense<0.000000e+00> : vector<8x32xf32>
    %4 = tpu.matmul %1, %3, %cst {dimension_numbers = #tpu.dot_dimension_numbers<[1], [0], [0], [1], [0, 0, 1, 1], [], []>} : vector<8x32xbf16>, vector<32x32xbf16>, vector<8x32xf32> -> vector<8x32xf32>
    %c0_3 = arith.constant 0 : index
    %c0_4 = arith.constant 0 : index
    %5 = vector.load %arg3[%c0_3, %c0_4] : memref<1x32xf32, #tpu.memory_space<vmem>>, vector<1x32xf32>
    %6 = vector.broadcast %5 : vector<1x32xf32> to vector<8x32xf32>
    %7 = arith.addf %4, %6 : vector<8x32xf32>
    %c0_5 = arith.constant 0 : index
    %c0_6 = arith.constant 0 : index
    %8 = vector.load %arg4[%c0_5, %c0_6] : memref<8x32xf32, #tpu.memory_space<vmem>>, vector<8x32xf32>
    tpu.vector_store %arg4[%c0_5, %c0_6], %7 {strides = array<i32>} : memref<8x32xf32, #tpu.memory_space<vmem>>, vector<8x32xf32>,
    return
  }
  func.func @transform_0(%arg0: i32) -> (i32, i32) {
    %c0_i32 = arith.constant 0 : i32
    %c0_i32_0 = arith.constant 0 : i32
    return %arg0, %c0_i32 : i32, i32
  }
  func.func @transform_1(%arg0: i32) -> (i32, i32) {
    %c0_i32 = arith.constant 0 : i32
    %c0_i32_0 = arith.constant 0 : i32
    %c0_i32_1 = arith.constant 0 : i32
    return %c0_i32, %c0_i32_0 : i32, i32
  }
  func.func @transform_2(%arg0: i32) -> (i32, i32) {
    %c0_i32 = arith.constant 0 : i32
    %c0_i32_0 = arith.constant 0 : i32
    %c0_i32_1 = arith.constant 0 : i32
    return %c0_i32, %c0_i32_0 : i32, i32
  }
  func.func @transform_3(%arg0: i32) -> (i32, i32) {
    %c0_i32 = arith.constant 0 : i32
    %c0_i32_0 = arith.constant 0 : i32
    return %arg0, %c0_i32 : i32, i32
  }
}

module attributes {stable_mosaic.version = 11 : i64} {
  func.func @kernel(%arg0: i32, %arg1: memref<8x32xf32, #tpu.memory_space<vmem>>, %arg2: memref<32x32xf32, #tpu.memory_space<vmem>>, %arg3: memref<1x32xf32, #tpu.memory_space<vmem>>, %arg4: memref<32x32xf32, #tpu.memory_space<vmem>>, %arg5: memref<1x32xf32, #tpu.memory_space<vmem>>, %arg6: memref<8x32xf32, #tpu.memory_space<vmem>>, %arg7: memref<8x32xf32, #tpu.memory_space<vmem>>) attributes {dimension_semantics = [#tpu.dimension_semantics<parallel>], iteration_bounds = array<i64: 2>, scalar_prefetch = 0 : i64, scratch_operands = 0 : i64, tpu.core_type = #tpu.core_type<tc>, window_params = [{transform_indices = @transform_0, window_bounds = array<i64: 8, 32>}, {pipeline_mode = #tpu.pipeline_mode<synchronous>, transform_indices = @transform_1, window_bounds = array<i64: 32, 32>}, {pipeline_mode = #tpu.pipeline_mode<synchronous>, transform_indices = @transform_2, window_bounds = array<i64: 1, 32>}, {pipeline_mode = #tpu.pipeline_mode<synchronous>, transform_indices = @transform_3, window_bounds = array<i64: 32, 32>}, {pipeline_mode = #tpu.pipeline_mode<synchronous>, transform_indices = @transform_4, window_bounds = array<i64: 1, 32>}, {transform_indices = @transform_5, window_bounds = array<i64: 8, 32>}, {transform_indices = @transform_6, window_bounds = array<i64: 8, 32>}]} {
    %c0 = arith.constant 0 : index
    %c0_0 = arith.constant 0 : index
    %0 = vector.load %arg1[%c0, %c0_0] : memref<8x32xf32, #tpu.memory_space<vmem>>, vector<8x32xf32>
    %1 = arith.truncf %0 : vector<8x32xf32> to vector<8x32xbf16>
    %c0_1 = arith.constant 0 : index
    %c0_2 = arith.constant 0 : index
    %2 = vector.load %arg2[%c0_1, %c0_2] : memref<32x32xf32, #tpu.memory_space<vmem>>, vector<32x32xf32>
    %3 = arith.truncf %2 : vector<32x32xf32> to vector<32x32xbf16>
    %cst = arith.constant dense<0.000000e+00> : vector<8x32xf32>
    %4 = tpu.matmul %1, %3, %cst {dimension_numbers = #tpu.dot_dimension_numbers<[1], [0], [0], [1], [0, 0, 1, 1], [], []>} : vector<8x32xbf16>, vector<32x32xbf16>, vector<8x32xf32> -> vector<8x32xf32>
    %c0_3 = arith.constant 0 : index
    %c0_4 = arith.constant 0 : index
    %5 = vector.load %arg3[%c0_3, %c0_4] : memref<1x32xf32, #tpu.memory_space<vmem>>, vector<1x32xf32>
    %6 = vector.broadcast %5 : vector<1x32xf32> to vector<8x32xf32>
    %7 = arith.addf %4, %6 : vector<8x32xf32>
    %c0_5 = arith.constant 0 : index
    %c0_6 = arith.constant 0 : index
    %8 = vector.load %arg6[%c0_5, %c0_6] : memref<8x32xf32, #tpu.memory_space<vmem>>, vector<8x32xf32>
    tpu.vector_store %arg6[%c0_5, %c0_6], %7 {strides = array<i32>} : memref<8x32xf32, #tpu.memory_space<vmem>>, vector<8x32xf32>,
    %c0_7 = arith.constant 0 : index
    %c0_8 = arith.constant 0 : index
    %9 = vector.load %arg4[%c0_7, %c0_8] : memref<32x32xf32, #tpu.memory_space<vmem>>, vector<32x32xf32>
    %10 = arith.truncf %9 : vector<32x32xf32> to vector<32x32xbf16>
    %cst_9 = arith.constant dense<0.000000e+00> : vector<8x32xf32>
    %11 = tpu.matmul %1, %10, %cst_9 {dimension_numbers = #tpu.dot_dimension_numbers<[1], [0], [0], [1], [0, 0, 1, 1], [], []>} : vector<8x32xbf16>, vector<32x32xbf16>, vector<8x32xf32> -> vector<8x32xf32>
    %c0_10 = arith.constant 0 : index
    %c0_11 = arith.constant 0 : index
    %12 = vector.load %arg5[%c0_10, %c0_11] : memref<1x32xf32, #tpu.memory_space<vmem>>, vector<1x32xf32>
    %13 = vector.broadcast %12 : vector<1x32xf32> to vector<8x32xf32>
    %14 = arith.addf %11, %13 : vector<8x32xf32>
    %c0_12 = arith.constant 0 : index
    %c0_13 = arith.constant 0 : index
    %15 = vector.load %arg7[%c0_12, %c0_13] : memref<8x32xf32, #tpu.memory_space<vmem>>, vector<8x32xf32>
    tpu.vector_store %arg7[%c0_12, %c0_13], %14 {strides = array<i32>} : memref<8x32xf32, #tpu.memory_space<vmem>>, vector<8x32xf32>,
    return
  }
  func.func @transform_0(%arg0: i32) -> (i32, i32) {
    %c0_i32 = arith.constant 0 : i32
    %c0_i32_0 = arith.constant 0 : i32
    return %arg0, %c0_i32 : i32, i32
  }
  func.func @transform_1(%arg0: i32) -> (i32, i32) {
    %c0_i32 = arith.constant 0 : i32
    %c0_i32_0 = arith.constant 0 : i32
    %c0_i32_1 = arith.constant 0 : i32
    return %c0_i32, %c0_i32_0 : i32, i32
  }
  func.func @transform_2(%arg0: i32) -> (i32, i32) {
    %c0_i32 = arith.constant 0 : i32
    %c0_i32_0 = arith.constant 0 : i32
    %c0_i32_1 = arith.constant 0 : i32
    return %c0_i32, %c0_i32_0 : i32, i32
  }
  func.func @transform_3(%arg0: i32) -> (i32, i32) {
    %c0_i32 = arith.constant 0 : i32
    %c0_i32_0 = arith.constant 0 : i32
    %c0_i32_1 = arith.constant 0 : i32
    return %c0_i32, %c0_i32_0 : i32, i32
  }
  func.func @transform_4(%arg0: i32) -> (i32, i32) {
    %c0_i32 = arith.constant 0 : i32
    %c0_i32_0 = arith.constant 0 : i32
    %c0_i32_1 = arith.constant 0 : i32
    return %c0_i32, %c0_i32_0 : i32, i32
  }
  func.func @transform_5(%arg0: i32) -> (i32, i32) {
    %c0_i32 = arith.constant 0 : i32
    %c0_i32_0 = arith.constant 0 : i32
    return %arg0, %c0_i32 : i32, i32
  }
  func.func @transform_6(%arg0: i32) -> (i32, i32) {
    %c0_i32 = arith.constant 0 : i32
    %c0_i32_0 = arith.constant 0 : i32
    return %arg0, %c0_i32 : i32, i32
  }
}

module attributes {stable_mosaic.version = 11 : i64} {
  func.func @kernel(%arg0: i32, %arg1: memref<8x32xf32, #tpu.memory_space<vmem>>, %arg2: memref<1x32xf32, #tpu.memory_space<vmem>>, %arg3: memref<1x32xf32, #tpu.memory_space<vmem>>, %arg4: memref<32x128xf32, #tpu.memory_space<vmem>>, %arg5: memref<1x128xf32, #tpu.memory_space<vmem>>, %arg6: memref<128x32xf32, #tpu.memory_space<vmem>>, %arg7: memref<1x32xf32, #tpu.memory_space<vmem>>, %arg8: memref<1x1xf32, #tpu.memory_space<vmem>>, %arg9: memref<8x32xf32, #tpu.memory_space<vmem>>) attributes {dimension_semantics = [#tpu.dimension_semantics<parallel>], iteration_bounds = array<i64: 2>, scalar_prefetch = 0 : i64, scratch_operands = 0 : i64, tpu.core_type = #tpu.core_type<tc>, window_params = [{transform_indices = @transform_0, window_bounds = array<i64: 8, 32>}, {pipeline_mode = #tpu.pipeline_mode<synchronous>, transform_indices = @transform_1, window_bounds = array<i64: 1, 32>}, {pipeline_mode = #tpu.pipeline_mode<synchronous>, transform_indices = @transform_2, window_bounds = array<i64: 1, 32>}, {pipeline_mode = #tpu.pipeline_mode<synchronous>, transform_indices = @transform_3, window_bounds = array<i64: 32, 128>}, {pipeline_mode = #tpu.pipeline_mode<synchronous>, transform_indices = @transform_4, window_bounds = array<i64: 1, 128>}, {pipeline_mode = #tpu.pipeline_mode<synchronous>, transform_indices = @transform_5, window_bounds = array<i64: 128, 32>}, {pipeline_mode = #tpu.pipeline_mode<synchronous>, transform_indices = @transform_6, window_bounds = array<i64: 1, 32>}, {pipeline_mode = #tpu.pipeline_mode<synchronous>, transform_indices = @transform_7, window_bounds = array<i64: 1, 1>}, {transform_indices = @transform_8, window_bounds = array<i64: 8, 32>}]} {
    %c0 = arith.constant 0 : index
    %c0_0 = arith.constant 0 : index
    %0 = vector.load %arg1[%c0, %c0_0] : memref<8x32xf32, #tpu.memory_space<vmem>>, vector<8x32xf32>
    %c0_1 = arith.constant 0 : index
    %c0_2 = arith.constant 0 : index
    %1 = vector.load %arg2[%c0_1, %c0_2] : memref<1x32xf32, #tpu.memory_space<vmem>>, vector<1x32xf32>
    %c0_3 = arith.constant 0 : index
    %c0_4 = arith.constant 0 : index
    %2 = vector.load %arg3[%c0_3, %c0_4] : memref<1x32xf32, #tpu.memory_space<vmem>>, vector<1x32xf32>
    %cst = arith.constant dense<0.000000e+00> : vector<8xf32>
    %3 = vector.multi_reduction <add>, %0, %cst [1] : vector<8x32xf32> to vector<8xf32>
    %4 = vector.shape_cast %3 : vector<8xf32> to vector<8x1xf32>
    %cst_5 = arith.constant 3.200000e+01 : f32
    %5 = vector.broadcast %cst_5 : f32 to vector<8x1xf32>
    %6 = arith.divf %4, %5 : vector<8x1xf32>
    %7 = vector.broadcast %6 : vector<8x1xf32> to vector<8x32xf32>
    %8 = arith.subf %0, %7 : vector<8x32xf32>
    %9 = arith.mulf %8, %8 : vector<8x32xf32>
    %cst_6 = arith.constant dense<0.000000e+00> : vector<8xf32>
    %10 = vector.multi_reduction <add>, %9, %cst_6 [1] : vector<8x32xf32> to vector<8xf32>
    %11 = vector.shape_cast %10 : vector<8xf32> to vector<8x1xf32>
    %cst_7 = arith.constant 3.200000e+01 : f32
    %12 = vector.broadcast %cst_7 : f32 to vector<8x1xf32>
    %13 = arith.divf %11, %12 : vector<8x1xf32>
    %cst_8 = arith.constant 9.99999974E-6 : f32
    %14 = vector.broadcast %cst_8 : f32 to vector<8x1xf32>
    %15 = arith.addf %13, %14 : vector<8x1xf32>
    %16 = math.rsqrt %15 : vector<8x1xf32>
    %17 = vector.broadcast %16 : vector<8x1xf32> to vector<8x32xf32>
    %18 = arith.mulf %8, %17 : vector<8x32xf32>
    %19 = vector.broadcast %1 : vector<1x32xf32> to vector<8x32xf32>
    %20 = arith.mulf %18, %19 : vector<8x32xf32>
    %21 = vector.broadcast %2 : vector<1x32xf32> to vector<8x32xf32>
    %22 = arith.addf %20, %21 : vector<8x32xf32>
    %23 = arith.truncf %22 : vector<8x32xf32> to vector<8x32xbf16>
    %c0_9 = arith.constant 0 : index
    %c0_10 = arith.constant 0 : index
    %24 = vector.load %arg4[%c0_9, %c0_10] : memref<32x128xf32, #tpu.memory_space<vmem>>, vector<32x128xf32>
    %25 = arith.truncf %24 : vector<32x128xf32> to vector<32x128xbf16>
    %cst_11 = arith.constant dense<0.000000e+00> : vector<8x128xf32>
    %26 = tpu.matmul %23, %25, %cst_11 {dimension_numbers = #tpu.dot_dimension_numbers<[1], [0], [0], [1], [0, 0, 1, 1], [], []>} : vector<8x32xbf16>, vector<32x128xbf16>, vector<8x128xf32> -> vector<8x128xf32>
    %c0_12 = arith.constant 0 : index
    %c0_13 = arith.constant 0 : index
    %27 = vector.load %arg5[%c0_12, %c0_13] : memref<1x128xf32, #tpu.memory_space<vmem>>, vector<1x128xf32>
    %28 = vector.broadcast %27 : vector<1x128xf32> to vector<8x128xf32>
    %29 = arith.addf %26, %28 : vector<8x128xf32>
    %cst_14 = arith.constant 5.000000e-01 : f32
    %30 = vector.broadcast %cst_14 : f32 to vector<8x128xf32>
    %31 = arith.mulf %30, %29 : vector<8x128xf32>
    %cst_15 = arith.constant 4.471500e-02 : f32
    %32 = vector.broadcast %cst_15 : f32 to vector<8x128xf32>
    %33 = arith.mulf %32, %29 : vector<8x128xf32>
    %34 = arith.mulf %33, %29 : vector<8x128xf32>
    %35 = arith.mulf %34, %29 : vector<8x128xf32>
    %36 = arith.addf %29, %35 : vector<8x128xf32>
    %cst_16 = arith.constant 0.797884583 : f32
    %37 = vector.broadcast %cst_16 : f32 to vector<8x128xf32>
    %38 = arith.mulf %37, %36 : vector<8x128xf32>
    %39 = math.tanh %38 : vector<8x128xf32>
    %cst_17 = arith.constant 1.000000e+00 : f32
    %40 = vector.broadcast %cst_17 : f32 to vector<8x128xf32>
    %41 = arith.addf %40, %39 : vector<8x128xf32>
    %42 = arith.mulf %31, %41 : vector<8x128xf32>
    %43 = arith.truncf %42 : vector<8x128xf32> to vector<8x128xbf16>
    %c0_18 = arith.constant 0 : index
    %c0_19 = arith.constant 0 : index
    %44 = vector.load %arg6[%c0_18, %c0_19] : memref<128x32xf32, #tpu.memory_space<vmem>>, vector<128x32xf32>
    %45 = arith.truncf %44 : vector<128x32xf32> to vector<128x32xbf16>
    %cst_20 = arith.constant dense<0.000000e+00> : vector<8x32xf32>
    %46 = tpu.matmul %43, %45, %cst_20 {dimension_numbers = #tpu.dot_dimension_numbers<[1], [0], [0], [1], [0, 0, 1, 1], [], []>} : vector<8x128xbf16>, vector<128x32xbf16>, vector<8x32xf32> -> vector<8x32xf32>
    %c0_21 = arith.constant 0 : index
    %c0_22 = arith.constant 0 : index
    %47 = vector.load %arg7[%c0_21, %c0_22] : memref<1x32xf32, #tpu.memory_space<vmem>>, vector<1x32xf32>
    %48 = vector.broadcast %47 : vector<1x32xf32> to vector<8x32xf32>
    %49 = arith.addf %46, %48 : vector<8x32xf32>
    %c0_23 = arith.constant 0 : index
    %c0_24 = arith.constant 0 : index
    %50 = vector.load %arg8[%c0_23, %c0_24] : memref<1x1xf32, #tpu.memory_space<vmem>>, vector<1x1xf32>
    %51 = vector.broadcast %50 : vector<1x1xf32> to vector<8x32xf32>
    %52 = arith.mulf %51, %49 : vector<8x32xf32>
    %53 = arith.addf %0, %52 : vector<8x32xf32>
    %c0_25 = arith.constant 0 : index
    %c0_26 = arith.constant 0 : index
    %54 = vector.load %arg9[%c0_25, %c0_26] : memref<8x32xf32, #tpu.memory_space<vmem>>, vector<8x32xf32>
    tpu.vector_store %arg9[%c0_25, %c0_26], %53 {strides = array<i32>} : memref<8x32xf32, #tpu.memory_space<vmem>>, vector<8x32xf32>,
    return
  }
  func.func @transform_0(%arg0: i32) -> (i32, i32) {
    %c0_i32 = arith.constant 0 : i32
    %c0_i32_0 = arith.constant 0 : i32
    return %arg0, %c0_i32 : i32, i32
  }
  func.func @transform_1(%arg0: i32) -> (i32, i32) {
    %c0_i32 = arith.constant 0 : i32
    %c0_i32_0 = arith.constant 0 : i32
    %c0_i32_1 = arith.constant 0 : i32
    return %c0_i32, %c0_i32_0 : i32, i32
  }
  func.func @transform_2(%arg0: i32) -> (i32, i32) {
    %c0_i32 = arith.constant 0 : i32
    %c0_i32_0 = arith.constant 0 : i32
    %c0_i32_1 = arith.constant 0 : i32
    return %c0_i32, %c0_i32_0 : i32, i32
  }
  func.func @transform_3(%arg0: i32) -> (i32, i32) {
    %c0_i32 = arith.constant 0 : i32
    %c0_i32_0 = arith.constant 0 : i32
    %c0_i32_1 = arith.constant 0 : i32
    return %c0_i32, %c0_i32_0 : i32, i32
  }
  func.func @transform_4(%arg0: i32) -> (i32, i32) {
    %c0_i32 = arith.constant 0 : i32
    %c0_i32_0 = arith.constant 0 : i32
    %c0_i32_1 = arith.constant 0 : i32
    return %c0_i32, %c0_i32_0 : i32, i32
  }
  func.func @transform_5(%arg0: i32) -> (i32, i32) {
    %c0_i32 = arith.constant 0 : i32
    %c0_i32_0 = arith.constant 0 : i32
    %c0_i32_1 = arith.constant 0 : i32
    return %c0_i32, %c0_i32_0 : i32, i32
  }
  func.func @transform_6(%arg0: i32) -> (i32, i32) {
    %c0_i32 = arith.constant 0 : i32
    %c0_i32_0 = arith.constant 0 : i32
    %c0_i32_1 = arith.constant 0 : i32
    return %c0_i32, %c0_i32_0 : i32, i32
  }
  func.func @transform_7(%arg0: i32) -> (i32, i32) {
    %c0_i32 = arith.constant 0 : i32
    %c0_i32_0 = arith.constant 0 : i32
    %c0_i32_1 = arith.constant 0 : i32
    return %c0_i32, %c0_i32_0 : i32, i32
  }
  func.func @transform_8(%arg0: i32) -> (i32, i32) {
    %c0_i32 = arith.constant 0 : i32
    %c0_i32_0 = arith.constant 0 : i32
    return %arg0, %c0_i32 : i32, i32
  }
}

module attributes {stable_mosaic.version = 11 : i64} {
  func.func @kernel(%arg0: i32, %arg1: memref<8x32xf32, #tpu.memory_space<vmem>>, %arg2: memref<1x32xf32, #tpu.memory_space<vmem>>, %arg3: memref<1x32xf32, #tpu.memory_space<vmem>>, %arg4: memref<32x32xf32, #tpu.memory_space<vmem>>, %arg5: memref<1x32xf32, #tpu.memory_space<vmem>>, %arg6: memref<32x32xf32, #tpu.memory_space<vmem>>, %arg7: memref<1x32xf32, #tpu.memory_space<vmem>>, %arg8: memref<32x32xf32, #tpu.memory_space<vmem>>, %arg9: memref<1x32xf32, #tpu.memory_space<vmem>>, %arg10: memref<8x32xf32, #tpu.memory_space<vmem>>, %arg11: memref<8x32xf32, #tpu.memory_space<vmem>>, %arg12: memref<8x32xf32, #tpu.memory_space<vmem>>) attributes {dimension_semantics = [#tpu.dimension_semantics<parallel>], iteration_bounds = array<i64: 2>, scalar_prefetch = 0 : i64, scratch_operands = 0 : i64, tpu.core_type = #tpu.core_type<tc>, window_params = [{transform_indices = @transform_0, window_bounds = array<i64: 8, 32>}, {pipeline_mode = #tpu.pipeline_mode<synchronous>, transform_indices = @transform_1, window_bounds = array<i64: 1, 32>}, {pipeline_mode = #tpu.pipeline_mode<synchronous>, transform_indices = @transform_2, window_bounds = array<i64: 1, 32>}, {pipeline_mode = #tpu.pipeline_mode<synchronous>, transform_indices = @transform_3, window_bounds = array<i64: 32, 32>}, {pipeline_mode = #tpu.pipeline_mode<synchronous>, transform_indices = @transform_4, window_bounds = array<i64: 1, 32>}, {pipeline_mode = #tpu.pipeline_mode<synchronous>, transform_indices = @transform_5, window_bounds = array<i64: 32, 32>}, {pipeline_mode = #tpu.pipeline_mode<synchronous>, transform_indices = @transform_6, window_bounds = array<i64: 1, 32>}, {pipeline_mode = #tpu.pipeline_mode<synchronous>, transform_indices = @transform_7, window_bounds = array<i64: 32, 32>}, {pipeline_mode = #tpu.pipeline_mode<synchronous>, transform_indices = @transform_8, window_bounds = array<i64: 1, 32>}, {transform_indices = @transform_9, window_bounds = array<i64: 8, 32>}, {transform_indices = @transform_10, window_bounds = array<i64: 8, 32>}, {transform_indices = @transform_11, window_bounds = array<i64: 8, 32>}]} {
    %c0 = arith.constant 0 : index
    %c0_0 = arith.constant 0 : index
    %0 = vector.load %arg1[%c0, %c0_0] : memref<8x32xf32, #tpu.memory_space<vmem>>, vector<8x32xf32>
    %c0_1 = arith.constant 0 : index
    %c0_2 = arith.constant 0 : index
    %1 = vector.load %arg2[%c0_1, %c0_2] : memref<1x32xf32, #tpu.memory_space<vmem>>, vector<1x32xf32>
    %c0_3 = arith.constant 0 : index
    %c0_4 = arith.constant 0 : index
    %2 = vector.load %arg3[%c0_3, %c0_4] : memref<1x32xf32, #tpu.memory_space<vmem>>, vector<1x32xf32>
    %cst = arith.constant dense<0.000000e+00> : vector<8xf32>
    %3 = vector.multi_reduction <add>, %0, %cst [1] : vector<8x32xf32> to vector<8xf32>
    %4 = vector.shape_cast %3 : vector<8xf32> to vector<8x1xf32>
    %cst_5 = arith.constant 3.200000e+01 : f32
    %5 = vector.broadcast %cst_5 : f32 to vector<8x1xf32>
    %6 = arith.divf %4, %5 : vector<8x1xf32>
    %7 = vector.broadcast %6 : vector<8x1xf32> to vector<8x32xf32>
    %8 = arith.subf %0, %7 : vector<8x32xf32>
    %9 = arith.mulf %8, %8 : vector<8x32xf32>
    %cst_6 = arith.constant dense<0.000000e+00> : vector<8xf32>
    %10 = vector.multi_reduction <add>, %9, %cst_6 [1] : vector<8x32xf32> to vector<8xf32>
    %11 = vector.shape_cast %10 : vector<8xf32> to vector<8x1xf32>
    %cst_7 = arith.constant 3.200000e+01 : f32
    %12 = vector.broadcast %cst_7 : f32 to vector<8x1xf32>
    %13 = arith.divf %11, %12 : vector<8x1xf32>
    %cst_8 = arith.constant 9.99999974E-6 : f32
    %14 = vector.broadcast %cst_8 : f32 to vector<8x1xf32>
    %15 = arith.addf %13, %14 : vector<8x1xf32>
    %16 = math.rsqrt %15 : vector<8x1xf32>
    %17 = vector.broadcast %16 : vector<8x1xf32> to vector<8x32xf32>
    %18 = arith.mulf %8, %17 : vector<8x32xf32>
    %19 = vector.broadcast %1 : vector<1x32xf32> to vector<8x32xf32>
    %20 = arith.mulf %18, %19 : vector<8x32xf32>
    %21 = vector.broadcast %2 : vector<1x32xf32> to vector<8x32xf32>
    %22 = arith.addf %20, %21 : vector<8x32xf32>
    %23 = arith.truncf %22 : vector<8x32xf32> to vector<8x32xbf16>
    %c0_9 = arith.constant 0 : index
    %c0_10 = arith.constant 0 : index
    %24 = vector.load %arg4[%c0_9, %c0_10] : memref<32x32xf32, #tpu.memory_space<vmem>>, vector<32x32xf32>
    %25 = arith.truncf %24 : vector<32x32xf32> to vector<32x32xbf16>
    %cst_11 = arith.constant dense<0.000000e+00> : vector<8x32xf32>
    %26 = tpu.matmul %23, %25, %cst_11 {dimension_numbers = #tpu.dot_dimension_numbers<[1], [0], [0], [1], [0, 0, 1, 1], [], []>} : vector<8x32xbf16>, vector<32x32xbf16>, vector<8x32xf32> -> vector<8x32xf32>
    %c0_12 = arith.constant 0 : index
    %c0_13 = arith.constant 0 : index
    %27 = vector.load %arg5[%c0_12, %c0_13] : memref<1x32xf32, #tpu.memory_space<vmem>>, vector<1x32xf32>
    %28 = vector.broadcast %27 : vector<1x32xf32> to vector<8x32xf32>
    %29 = arith.addf %26, %28 : vector<8x32xf32>
    %c0_14 = arith.constant 0 : index
    %c0_15 = arith.constant 0 : index
    %30 = vector.load %arg10[%c0_14, %c0_15] : memref<8x32xf32, #tpu.memory_space<vmem>>, vector<8x32xf32>
    tpu.vector_store %arg10[%c0_14, %c0_15], %29 {strides = array<i32>} : memref<8x32xf32, #tpu.memory_space<vmem>>, vector<8x32xf32>,
    %c0_16 = arith.constant 0 : index
    %c0_17 = arith.constant 0 : index
    %31 = vector.load %arg6[%c0_16, %c0_17] : memref<32x32xf32, #tpu.memory_space<vmem>>, vector<32x32xf32>
    %32 = arith.truncf %31 : vector<32x32xf32> to vector<32x32xbf16>
    %cst_18 = arith.constant dense<0.000000e+00> : vector<8x32xf32>
    %33 = tpu.matmul %23, %32, %cst_18 {dimension_numbers = #tpu.dot_dimension_numbers<[1], [0], [0], [1], [0, 0, 1, 1], [], []>} : vector<8x32xbf16>, vector<32x32xbf16>, vector<8x32xf32> -> vector<8x32xf32>
    %c0_19 = arith.constant 0 : index
    %c0_20 = arith.constant 0 : index
    %34 = vector.load %arg7[%c0_19, %c0_20] : memref<1x32xf32, #tpu.memory_space<vmem>>, vector<1x32xf32>
    %35 = vector.broadcast %34 : vector<1x32xf32> to vector<8x32xf32>
    %36 = arith.addf %33, %35 : vector<8x32xf32>
    %c0_21 = arith.constant 0 : index
    %c0_22 = arith.constant 0 : index
    %37 = vector.load %arg11[%c0_21, %c0_22] : memref<8x32xf32, #tpu.memory_space<vmem>>, vector<8x32xf32>
    tpu.vector_store %arg11[%c0_21, %c0_22], %36 {strides = array<i32>} : memref<8x32xf32, #tpu.memory_space<vmem>>, vector<8x32xf32>,
    %c0_23 = arith.constant 0 : index
    %c0_24 = arith.constant 0 : index
    %38 = vector.load %arg8[%c0_23, %c0_24] : memref<32x32xf32, #tpu.memory_space<vmem>>, vector<32x32xf32>
    %39 = arith.truncf %38 : vector<32x32xf32> to vector<32x32xbf16>
    %cst_25 = arith.constant dense<0.000000e+00> : vector<8x32xf32>
    %40 = tpu.matmul %23, %39, %cst_25 {dimension_numbers = #tpu.dot_dimension_numbers<[1], [0], [0], [1], [0, 0, 1, 1], [], []>} : vector<8x32xbf16>, vector<32x32xbf16>, vector<8x32xf32> -> vector<8x32xf32>
    %c0_26 = arith.constant 0 : index
    %c0_27 = arith.constant 0 : index
    %41 = vector.load %arg9[%c0_26, %c0_27] : memref<1x32xf32, #tpu.memory_space<vmem>>, vector<1x32xf32>
    %42 = vector.broadcast %41 : vector<1x32xf32> to vector<8x32xf32>
    %43 = arith.addf %40, %42 : vector<8x32xf32>
    %c0_28 = arith.constant 0 : index
    %c0_29 = arith.constant 0 : index
    %44 = vector.load %arg12[%c0_28, %c0_29] : memref<8x32xf32, #tpu.memory_space<vmem>>, vector<8x32xf32>
    tpu.vector_store %arg12[%c0_28, %c0_29], %43 {strides = array<i32>} : memref<8x32xf32, #tpu.memory_space<vmem>>, vector<8x32xf32>,
    return
  }
  func.func @transform_0(%arg0: i32) -> (i32, i32) {
    %c0_i32 = arith.constant 0 : i32
    %c0_i32_0 = arith.constant 0 : i32
    return %arg0, %c0_i32 : i32, i32
  }
  func.func @transform_1(%arg0: i32) -> (i32, i32) {
    %c0_i32 = arith.constant 0 : i32
    %c0_i32_0 = arith.constant 0 : i32
    %c0_i32_1 = arith.constant 0 : i32
    return %c0_i32, %c0_i32_0 : i32, i32
  }
  func.func @transform_2(%arg0: i32) -> (i32, i32) {
    %c0_i32 = arith.constant 0 : i32
    %c0_i32_0 = arith.constant 0 : i32
    %c0_i32_1 = arith.constant 0 : i32
    return %c0_i32, %c0_i32_0 : i32, i32
  }
  func.func @transform_3(%arg0: i32) -> (i32, i32) {
    %c0_i32 = arith.constant 0 : i32
    %c0_i32_0 = arith.constant 0 : i32
    %c0_i32_1 = arith.constant 0 : i32
    return %c0_i32, %c0_i32_0 : i32, i32
  }
  func.func @transform_4(%arg0: i32) -> (i32, i32) {
    %c0_i32 = arith.constant 0 : i32
    %c0_i32_0 = arith.constant 0 : i32
    %c0_i32_1 = arith.constant 0 : i32
    return %c0_i32, %c0_i32_0 : i32, i32
  }
  func.func @transform_5(%arg0: i32) -> (i32, i32) {
    %c0_i32 = arith.constant 0 : i32
    %c0_i32_0 = arith.constant 0 : i32
    %c0_i32_1 = arith.constant 0 : i32
    return %c0_i32, %c0_i32_0 : i32, i32
  }
  func.func @transform_6(%arg0: i32) -> (i32, i32) {
    %c0_i32 = arith.constant 0 : i32
    %c0_i32_0 = arith.constant 0 : i32
    %c0_i32_1 = arith.constant 0 : i32
    return %c0_i32, %c0_i32_0 : i32, i32
  }
  func.func @transform_7(%arg0: i32) -> (i32, i32) {
    %c0_i32 = arith.constant 0 : i32
    %c0_i32_0 = arith.constant 0 : i32
    %c0_i32_1 = arith.constant 0 : i32
    return %c0_i32, %c0_i32_0 : i32, i32
  }
  func.func @transform_8(%arg0: i32) -> (i32, i32) {
    %c0_i32 = arith.constant 0 : i32
    %c0_i32_0 = arith.constant 0 : i32
    %c0_i32_1 = arith.constant 0 : i32
    return %c0_i32, %c0_i32_0 : i32, i32
  }
  func.func @transform_9(%arg0: i32) -> (i32, i32) {
    %c0_i32 = arith.constant 0 : i32
    %c0_i32_0 = arith.constant 0 : i32
    return %arg0, %c0_i32 : i32, i32
  }
  func.func @transform_10(%arg0: i32) -> (i32, i32) {
    %c0_i32 = arith.constant 0 : i32
    %c0_i32_0 = arith.constant 0 : i32
    return %arg0, %c0_i32 : i32, i32
  }
  func.func @transform_11(%arg0: i32) -> (i32, i32) {
    %c0_i32 = arith.constant 0 : i32
    %c0_i32_0 = arith.constant 0 : i32
    return %arg0, %c0_i32 : i32, i32
  }
}

module attributes {stable_mosaic.version = 11 : i64} {
  func.func @kernel(%arg0: i32, %arg1: memref<1x8x32xf32, #tpu.memory_space<vmem>>, %arg2: memref<1x8x32xf32, #tpu.memory_space<vmem>>, %arg3: memref<1x8x32xf32, #tpu.memory_space<vmem>>, %arg4: memref<1x8x32xf32, #tpu.memory_space<vmem>>, %arg5: memref<32x32xf32, #tpu.memory_space<vmem>>, %arg6: memref<1x32xf32, #tpu.memory_space<vmem>>, %arg7: memref<1x1xf32, #tpu.memory_space<vmem>>, %arg8: memref<1x8x32xf32, #tpu.memory_space<vmem>>) attributes {dimension_semantics = [#tpu.dimension_semantics<parallel>], iteration_bounds = array<i64: 2>, scalar_prefetch = 0 : i64, scratch_operands = 0 : i64, tpu.core_type = #tpu.core_type<tc>, window_params = [{transform_indices = @transform_0, window_bounds = array<i64: 1, 8, 32>}, {transform_indices = @transform_1, window_bounds = array<i64: 1, 8, 32>}, {transform_indices = @transform_2, window_bounds = array<i64: 1, 8, 32>}, {transform_indices = @transform_3, window_bounds = array<i64: 1, 8, 32>}, {pipeline_mode = #tpu.pipeline_mode<synchronous>, transform_indices = @transform_4, window_bounds = array<i64: 32, 32>}, {pipeline_mode = #tpu.pipeline_mode<synchronous>, transform_indices = @transform_5, window_bounds = array<i64: 1, 32>}, {pipeline_mode = #tpu.pipeline_mode<synchronous>, transform_indices = @transform_6, window_bounds = array<i64: 1, 1>}, {transform_indices = @transform_7, window_bounds = array<i64: 1, 8, 32>}]} {
    %c0 = arith.constant 0 : index
    %c0_0 = arith.constant 0 : index
    %c0_1 = arith.constant 0 : index
    %0 = vector.load %arg1[%c0, %c0_0, %c0_1] : memref<1x8x32xf32, #tpu.memory_space<vmem>>, vector<1x8x32xf32>
    %1 = vector.shape_cast %0 : vector<1x8x32xf32> to vector<8x32xf32>
    %c0_2 = arith.constant 0 : index
    %c0_3 = arith.constant 0 : index
    %c0_4 = arith.constant 0 : index
    %2 = vector.load %arg2[%c0_2, %c0_3, %c0_4] : memref<1x8x32xf32, #tpu.memory_space<vmem>>, vector<1x8x32xf32>
    %3 = vector.shape_cast %2 : vector<1x8x32xf32> to vector<8x32xf32>
    %c0_5 = arith.constant 0 : index
    %c0_6 = arith.constant 0 : index
    %c0_7 = arith.constant 0 : index
    %4 = vector.load %arg3[%c0_5, %c0_6, %c0_7] : memref<1x8x32xf32, #tpu.memory_space<vmem>>, vector<1x8x32xf32>
    %5 = vector.shape_cast %4 : vector<1x8x32xf32> to vector<8x32xf32>
    %cst = arith.constant 0.000000e+00 : f32
    %6 = vector.broadcast %cst : f32 to vector<8x32xf32>
    %7 = vector.extract_strided_slice %1 {offsets = [0, 0], sizes = [8, 8], strides = [1, 1]} : vector<8x32xf32> to vector<8x8xf32>
    %8 = arith.truncf %7 : vector<8x8xf32> to vector<8x8xbf16>
    %9 = vector.extract_strided_slice %3 {offsets = [0, 0], sizes = [8, 8], strides = [1, 1]} : vector<8x32xf32> to vector<8x8xf32>
    %10 = arith.truncf %9 : vector<8x8xf32> to vector<8x8xbf16>
    %11 = vector.extract_strided_slice %5 {offsets = [0, 0], sizes = [8, 8], strides = [1, 1]} : vector<8x32xf32> to vector<8x8xf32>
    %12 = arith.truncf %11 : vector<8x8xf32> to vector<8x8xbf16>
    %cst_8 = arith.constant dense<0.000000e+00> : vector<8x8xf32>
    %13 = tpu.matmul %8, %10, %cst_8 {dimension_numbers = #tpu.dot_dimension_numbers<[1], [1], [0], [0], [0, 0, 1, 0], [], []>} : vector<8x8xbf16>, vector<8x8xbf16>, vector<8x8xf32> -> vector<8x8xf32>
    %cst_9 = arith.constant 0.353553385 : f32
    %14 = vector.broadcast %cst_9 : f32 to vector<8x8xf32>
    %15 = arith.mulf %13, %14 : vector<8x8xf32>
    %cst_10 = arith.constant dense<0xFF800000> : vector<8xf32>
    %16 = vector.multi_reduction <maximumf>, %15, %cst_10 [1] : vector<8x8xf32> to vector<8xf32>
    %17 = vector.shape_cast %16 : vector<8xf32> to vector<8x1xf32>
    %18 = vector.broadcast %17 : vector<8x1xf32> to vector<8x8xf32>
    %19 = arith.subf %15, %18 : vector<8x8xf32>
    %20 = math.exp %19 : vector<8x8xf32>
    %cst_11 = arith.constant dense<0.000000e+00> : vector<8xf32>
    %21 = vector.multi_reduction <add>, %20, %cst_11 [1] : vector<8x8xf32> to vector<8xf32>
    %22 = vector.shape_cast %21 : vector<8xf32> to vector<8x1xf32>
    %23 = tpu.reciprocal %22 {approx = true} : vector<8x1xf32> -> vector<8x1xf32>
    %24 = vector.broadcast %23 : vector<8x1xf32> to vector<8x8xf32>
    %25 = arith.mulf %20, %24 : vector<8x8xf32>
    %26 = arith.truncf %25 : vector<8x8xf32> to vector<8x8xbf16>
    %cst_12 = arith.constant dense<0.000000e+00> : vector<8x8xf32>
    %27 = tpu.matmul %26, %12, %cst_12 {dimension_numbers = #tpu.dot_dimension_numbers<[1], [0], [0], [1], [0, 0, 1, 1], [], []>} : vector<8x8xbf16>, vector<8x8xbf16>, vector<8x8xf32> -> vector<8x8xf32>
    %28 = arith.truncf %27 : vector<8x8xf32> to vector<8x8xbf16>
    %c0_13 = arith.constant 0 : index
    %c0_14 = arith.constant 0 : index
    %29 = vector.load %arg5[%c0_13, %c0_14] : memref<32x32xf32, #tpu.memory_space<vmem>>, vector<8x32xf32>
    %30 = arith.truncf %29 : vector<8x32xf32> to vector<8x32xbf16>
    %cst_15 = arith.constant dense<0.000000e+00> : vector<8x32xf32>
    %31 = tpu.matmul %28, %30, %cst_15 {dimension_numbers = #tpu.dot_dimension_numbers<[1], [0], [0], [1], [0, 0, 1, 1], [], []>} : vector<8x8xbf16>, vector<8x32xbf16>, vector<8x32xf32> -> vector<8x32xf32>
    %32 = arith.addf %6, %31 : vector<8x32xf32>
    %33 = vector.extract_strided_slice %1 {offsets = [0, 8], sizes = [8, 8], strides = [1, 1]} : vector<8x32xf32> to vector<8x8xf32>
    %34 = arith.truncf %33 : vector<8x8xf32> to vector<8x8xbf16>
    %35 = vector.extract_strided_slice %3 {offsets = [0, 8], sizes = [8, 8], strides = [1, 1]} : vector<8x32xf32> to vector<8x8xf32>
    %36 = arith.truncf %35 : vector<8x8xf32> to vector<8x8xbf16>
    %37 = vector.extract_strided_slice %5 {offsets = [0, 8], sizes = [8, 8], strides = [1, 1]} : vector<8x32xf32> to vector<8x8xf32>
    %38 = arith.truncf %37 : vector<8x8xf32> to vector<8x8xbf16>
    %cst_16 = arith.constant dense<0.000000e+00> : vector<8x8xf32>
    %39 = tpu.matmul %34, %36, %cst_16 {dimension_numbers = #tpu.dot_dimension_numbers<[1], [1], [0], [0], [0, 0, 1, 0], [], []>} : vector<8x8xbf16>, vector<8x8xbf16>, vector<8x8xf32> -> vector<8x8xf32>
    %cst_17 = arith.constant 0.353553385 : f32
    %40 = vector.broadcast %cst_17 : f32 to vector<8x8xf32>
    %41 = arith.mulf %39, %40 : vector<8x8xf32>
    %cst_18 = arith.constant dense<0xFF800000> : vector<8xf32>
    %42 = vector.multi_reduction <maximumf>, %41, %cst_18 [1] : vector<8x8xf32> to vector<8xf32>
    %43 = vector.shape_cast %42 : vector<8xf32> to vector<8x1xf32>
    %44 = vector.broadcast %43 : vector<8x1xf32> to vector<8x8xf32>
    %45 = arith.subf %41, %44 : vector<8x8xf32>
    %46 = math.exp %45 : vector<8x8xf32>
    %cst_19 = arith.constant dense<0.000000e+00> : vector<8xf32>
    %47 = vector.multi_reduction <add>, %46, %cst_19 [1] : vector<8x8xf32> to vector<8xf32>
    %48 = vector.shape_cast %47 : vector<8xf32> to vector<8x1xf32>
    %49 = tpu.reciprocal %48 {approx = true} : vector<8x1xf32> -> vector<8x1xf32>
    %50 = vector.broadcast %49 : vector<8x1xf32> to vector<8x8xf32>
    %51 = arith.mulf %46, %50 : vector<8x8xf32>
    %52 = arith.truncf %51 : vector<8x8xf32> to vector<8x8xbf16>
    %cst_20 = arith.constant dense<0.000000e+00> : vector<8x8xf32>
    %53 = tpu.matmul %52, %38, %cst_20 {dimension_numbers = #tpu.dot_dimension_numbers<[1], [0], [0], [1], [0, 0, 1, 1], [], []>} : vector<8x8xbf16>, vector<8x8xbf16>, vector<8x8xf32> -> vector<8x8xf32>
    %54 = arith.truncf %53 : vector<8x8xf32> to vector<8x8xbf16>
    %c8 = arith.constant 8 : index
    %c0_21 = arith.constant 0 : index
    %55 = vector.load %arg5[%c8, %c0_21] : memref<32x32xf32, #tpu.memory_space<vmem>>, vector<8x32xf32>
    %56 = arith.truncf %55 : vector<8x32xf32> to vector<8x32xbf16>
    %cst_22 = arith.constant dense<0.000000e+00> : vector<8x32xf32>
    %57 = tpu.matmul %54, %56, %cst_22 {dimension_numbers = #tpu.dot_dimension_numbers<[1], [0], [0], [1], [0, 0, 1, 1], [], []>} : vector<8x8xbf16>, vector<8x32xbf16>, vector<8x32xf32> -> vector<8x32xf32>
    %58 = arith.addf %32, %57 : vector<8x32xf32>
    %59 = vector.extract_strided_slice %1 {offsets = [0, 16], sizes = [8, 8], strides = [1, 1]} : vector<8x32xf32> to vector<8x8xf32>
    %60 = arith.truncf %59 : vector<8x8xf32> to vector<8x8xbf16>
    %61 = vector.extract_strided_slice %3 {offsets = [0, 16], sizes = [8, 8], strides = [1, 1]} : vector<8x32xf32> to vector<8x8xf32>
    %62 = arith.truncf %61 : vector<8x8xf32> to vector<8x8xbf16>
    %63 = vector.extract_strided_slice %5 {offsets = [0, 16], sizes = [8, 8], strides = [1, 1]} : vector<8x32xf32> to vector<8x8xf32>
    %64 = arith.truncf %63 : vector<8x8xf32> to vector<8x8xbf16>
    %cst_23 = arith.constant dense<0.000000e+00> : vector<8x8xf32>
    %65 = tpu.matmul %60, %62, %cst_23 {dimension_numbers = #tpu.dot_dimension_numbers<[1], [1], [0], [0], [0, 0, 1, 0], [], []>} : vector<8x8xbf16>, vector<8x8xbf16>, vector<8x8xf32> -> vector<8x8xf32>
    %cst_24 = arith.constant 0.353553385 : f32
    %66 = vector.broadcast %cst_24 : f32 to vector<8x8xf32>
    %67 = arith.mulf %65, %66 : vector<8x8xf32>
    %cst_25 = arith.constant dense<0xFF800000> : vector<8xf32>
    %68 = vector.multi_reduction <maximumf>, %67, %cst_25 [1] : vector<8x8xf32> to vector<8xf32>
    %69 = vector.shape_cast %68 : vector<8xf32> to vector<8x1xf32>
    %70 = vector.broadcast %69 : vector<8x1xf32> to vector<8x8xf32>
    %71 = arith.subf %67, %70 : vector<8x8xf32>
    %72 = math.exp %71 : vector<8x8xf32>
    %cst_26 = arith.constant dense<0.000000e+00> : vector<8xf32>
    %73 = vector.multi_reduction <add>, %72, %cst_26 [1] : vector<8x8xf32> to vector<8xf32>
    %74 = vector.shape_cast %73 : vector<8xf32> to vector<8x1xf32>
    %75 = tpu.reciprocal %74 {approx = true} : vector<8x1xf32> -> vector<8x1xf32>
    %76 = vector.broadcast %75 : vector<8x1xf32> to vector<8x8xf32>
    %77 = arith.mulf %72, %76 : vector<8x8xf32>
    %78 = arith.truncf %77 : vector<8x8xf32> to vector<8x8xbf16>
    %cst_27 = arith.constant dense<0.000000e+00> : vector<8x8xf32>
    %79 = tpu.matmul %78, %64, %cst_27 {dimension_numbers = #tpu.dot_dimension_numbers<[1], [0], [0], [1], [0, 0, 1, 1], [], []>} : vector<8x8xbf16>, vector<8x8xbf16>, vector<8x8xf32> -> vector<8x8xf32>
    %80 = arith.truncf %79 : vector<8x8xf32> to vector<8x8xbf16>
    %c16 = arith.constant 16 : index
    %c0_28 = arith.constant 0 : index
    %81 = vector.load %arg5[%c16, %c0_28] : memref<32x32xf32, #tpu.memory_space<vmem>>, vector<8x32xf32>
    %82 = arith.truncf %81 : vector<8x32xf32> to vector<8x32xbf16>
    %cst_29 = arith.constant dense<0.000000e+00> : vector<8x32xf32>
    %83 = tpu.matmul %80, %82, %cst_29 {dimension_numbers = #tpu.dot_dimension_numbers<[1], [0], [0], [1], [0, 0, 1, 1], [], []>} : vector<8x8xbf16>, vector<8x32xbf16>, vector<8x32xf32> -> vector<8x32xf32>
    %84 = arith.addf %58, %83 : vector<8x32xf32>
    %85 = vector.extract_strided_slice %1 {offsets = [0, 24], sizes = [8, 8], strides = [1, 1]} : vector<8x32xf32> to vector<8x8xf32>
    %86 = arith.truncf %85 : vector<8x8xf32> to vector<8x8xbf16>
    %87 = vector.extract_strided_slice %3 {offsets = [0, 24], sizes = [8, 8], strides = [1, 1]} : vector<8x32xf32> to vector<8x8xf32>
    %88 = arith.truncf %87 : vector<8x8xf32> to vector<8x8xbf16>
    %89 = vector.extract_strided_slice %5 {offsets = [0, 24], sizes = [8, 8], strides = [1, 1]} : vector<8x32xf32> to vector<8x8xf32>
    %90 = arith.truncf %89 : vector<8x8xf32> to vector<8x8xbf16>
    %cst_30 = arith.constant dense<0.000000e+00> : vector<8x8xf32>
    %91 = tpu.matmul %86, %88, %cst_30 {dimension_numbers = #tpu.dot_dimension_numbers<[1], [1], [0], [0], [0, 0, 1, 0], [], []>} : vector<8x8xbf16>, vector<8x8xbf16>, vector<8x8xf32> -> vector<8x8xf32>
    %cst_31 = arith.constant 0.353553385 : f32
    %92 = vector.broadcast %cst_31 : f32 to vector<8x8xf32>
    %93 = arith.mulf %91, %92 : vector<8x8xf32>
    %cst_32 = arith.constant dense<0xFF800000> : vector<8xf32>
    %94 = vector.multi_reduction <maximumf>, %93, %cst_32 [1] : vector<8x8xf32> to vector<8xf32>
    %95 = vector.shape_cast %94 : vector<8xf32> to vector<8x1xf32>
    %96 = vector.broadcast %95 : vector<8x1xf32> to vector<8x8xf32>
    %97 = arith.subf %93, %96 : vector<8x8xf32>
    %98 = math.exp %97 : vector<8x8xf32>
    %cst_33 = arith.constant dense<0.000000e+00> : vector<8xf32>
    %99 = vector.multi_reduction <add>, %98, %cst_33 [1] : vector<8x8xf32> to vector<8xf32>
    %100 = vector.shape_cast %99 : vector<8xf32> to vector<8x1xf32>
    %101 = tpu.reciprocal %100 {approx = true} : vector<8x1xf32> -> vector<8x1xf32>
    %102 = vector.broadcast %101 : vector<8x1xf32> to vector<8x8xf32>
    %103 = arith.mulf %98, %102 : vector<8x8xf32>
    %104 = arith.truncf %103 : vector<8x8xf32> to vector<8x8xbf16>
    %cst_34 = arith.constant dense<0.000000e+00> : vector<8x8xf32>
    %105 = tpu.matmul %104, %90, %cst_34 {dimension_numbers = #tpu.dot_dimension_numbers<[1], [0], [0], [1], [0, 0, 1, 1], [], []>} : vector<8x8xbf16>, vector<8x8xbf16>, vector<8x8xf32> -> vector<8x8xf32>
    %106 = arith.truncf %105 : vector<8x8xf32> to vector<8x8xbf16>
    %c24 = arith.constant 24 : index
    %c0_35 = arith.constant 0 : index
    %107 = vector.load %arg5[%c24, %c0_35] : memref<32x32xf32, #tpu.memory_space<vmem>>, vector<8x32xf32>
    %108 = arith.truncf %107 : vector<8x32xf32> to vector<8x32xbf16>
    %cst_36 = arith.constant dense<0.000000e+00> : vector<8x32xf32>
    %109 = tpu.matmul %106, %108, %cst_36 {dimension_numbers = #tpu.dot_dimension_numbers<[1], [0], [0], [1], [0, 0, 1, 1], [], []>} : vector<8x8xbf16>, vector<8x32xbf16>, vector<8x32xf32> -> vector<8x32xf32>
    %110 = arith.addf %84, %109 : vector<8x32xf32>
    %c0_37 = arith.constant 0 : index
    %c0_38 = arith.constant 0 : index
    %111 = vector.load %arg6[%c0_37, %c0_38] : memref<1x32xf32, #tpu.memory_space<vmem>>, vector<1x32xf32>
    %112 = vector.broadcast %111 : vector<1x32xf32> to vector<8x32xf32>
    %113 = arith.addf %110, %112 : vector<8x32xf32>
    %c0_39 = arith.constant 0 : index
    %c0_40 = arith.constant 0 : index
    %114 = vector.load %arg7[%c0_39, %c0_40] : memref<1x1xf32, #tpu.memory_space<vmem>>, vector<1x1xf32>
    %115 = vector.broadcast %114 : vector<1x1xf32> to vector<8x32xf32>
    %116 = arith.mulf %115, %113 : vector<8x32xf32>
    %c0_41 = arith.constant 0 : index
    %c0_42 = arith.constant 0 : index
    %c0_43 = arith.constant 0 : index
    %117 = vector.load %arg4[%c0_41, %c0_42, %c0_43] : memref<1x8x32xf32, #tpu.memory_space<vmem>>, vector<1x8x32xf32>
    %118 = vector.shape_cast %117 : vector<1x8x32xf32> to vector<8x32xf32>
    %119 = arith.addf %118, %116 : vector<8x32xf32>
    %c0_44 = arith.constant 0 : index
    %c0_45 = arith.constant 0 : index
    %c0_46 = arith.constant 0 : index
    %120 = vector.load %arg8[%c0_44, %c0_45, %c0_46] : memref<1x8x32xf32, #tpu.memory_space<vmem>>, vector<1x8x32xf32>
    %121 = vector.shape_cast %120 : vector<1x8x32xf32> to vector<8x32xf32>
    %122 = vector.shape_cast %119 : vector<8x32xf32> to vector<1x8x32xf32>
    tpu.vector_store %arg8[%c0_44, %c0_45, %c0_46], %122 {strides = array<i32>} : memref<1x8x32xf32, #tpu.memory_space<vmem>>, vector<1x8x32xf32>,
    return
  }
  func.func @transform_0(%arg0: i32) -> (i32, i32, i32) {
    %c0_i32 = arith.constant 0 : i32
    %c0_i32_0 = arith.constant 0 : i32
    %c0_i32_1 = arith.constant 0 : i32
    return %arg0, %c0_i32, %c0_i32_0 : i32, i32, i32
  }
  func.func @transform_1(%arg0: i32) -> (i32, i32, i32) {
    %c0_i32 = arith.constant 0 : i32
    %c0_i32_0 = arith.constant 0 : i32
    %c0_i32_1 = arith.constant 0 : i32
    return %arg0, %c0_i32, %c0_i32_0 : i32, i32, i32
  }
  func.func @transform_2(%arg0: i32) -> (i32, i32, i32) {
    %c0_i32 = arith.constant 0 : i32
    %c0_i32_0 = arith.constant 0 : i32
    %c0_i32_1 = arith.constant 0 : i32
    return %arg0, %c0_i32, %c0_i32_0 : i32, i32, i32
  }
  func.func @transform_3(%arg0: i32) -> (i32, i32, i32) {
    %c0_i32 = arith.constant 0 : i32
    %c0_i32_0 = arith.constant 0 : i32
    %c0_i32_1 = arith.constant 0 : i32
    return %arg0, %c0_i32, %c0_i32_0 : i32, i32, i32
  }
  func.func @transform_4(%arg0: i32) -> (i32, i32) {
    %c0_i32 = arith.constant 0 : i32
    %c0_i32_0 = arith.constant 0 : i32
    %c0_i32_1 = arith.constant 0 : i32
    return %c0_i32, %c0_i32_0 : i32, i32
  }
  func.func @transform_5(%arg0: i32) -> (i32, i32) {
    %c0_i32 = arith.constant 0 : i32
    %c0_i32_0 = arith.constant 0 : i32
    %c0_i32_1 = arith.constant 0 : i32
    return %c0_i32, %c0_i32_0 : i32, i32
  }
  func.func @transform_6(%arg0: i32) -> (i32, i32) {
    %c0_i32 = arith.constant 0 : i32
    %c0_i32_0 = arith.constant 0 : i32
    %c0_i32_1 = arith.constant 0 : i32
    return %c0_i32, %c0_i32_0 : i32, i32
  }
  func.func @transform_7(%arg0: i32) -> (i32, i32, i32) {
    %c0_i32 = arith.constant 0 : i32
    %c0_i32_0 = arith.constant 0 : i32
    %c0_i32_1 = arith.constant 0 : i32
    return %arg0, %c0_i32, %c0_i32_0 : i32, i32, i32
  }
}

module attributes {stable_mosaic.version = 11 : i64} {
  func.func @kernel(%arg0: i32, %arg1: memref<1x8x32xf32, #tpu.memory_space<vmem>>, %arg2: memref<1x8x32xf32, #tpu.memory_space<vmem>>, %arg3: memref<1x8x32xf32, #tpu.memory_space<vmem>>, %arg4: memref<1x8x32xf32, #tpu.memory_space<vmem>>, %arg5: memref<32x32xf32, #tpu.memory_space<vmem>>, %arg6: memref<1x32xf32, #tpu.memory_space<vmem>>, %arg7: memref<1x1x8xf32, #tpu.memory_space<vmem>>, %arg8: memref<1x8x32xf32, #tpu.memory_space<vmem>>) attributes {dimension_semantics = [#tpu.dimension_semantics<parallel>], iteration_bounds = array<i64: 2>, scalar_prefetch = 0 : i64, scratch_operands = 0 : i64, tpu.core_type = #tpu.core_type<tc>, window_params = [{transform_indices = @transform_0, window_bounds = array<i64: 1, 8, 32>}, {transform_indices = @transform_1, window_bounds = array<i64: 1, 8, 32>}, {transform_indices = @transform_2, window_bounds = array<i64: 1, 8, 32>}, {transform_indices = @transform_3, window_bounds = array<i64: 1, 8, 32>}, {pipeline_mode = #tpu.pipeline_mode<synchronous>, transform_indices = @transform_4, window_bounds = array<i64: 32, 32>}, {pipeline_mode = #tpu.pipeline_mode<synchronous>, transform_indices = @transform_5, window_bounds = array<i64: 1, 32>}, {transform_indices = @transform_6, window_bounds = array<i64: 1, 1, 8>}, {transform_indices = @transform_7, window_bounds = array<i64: 1, 8, 32>}]} {
    %c0 = arith.constant 0 : index
    %c0_0 = arith.constant 0 : index
    %c0_1 = arith.constant 0 : index
    %0 = vector.load %arg1[%c0, %c0_0, %c0_1] : memref<1x8x32xf32, #tpu.memory_space<vmem>>, vector<1x8x32xf32>
    %1 = vector.shape_cast %0 : vector<1x8x32xf32> to vector<8x32xf32>
    %c0_2 = arith.constant 0 : index
    %c0_3 = arith.constant 0 : index
    %c0_4 = arith.constant 0 : index
    %2 = vector.load %arg2[%c0_2, %c0_3, %c0_4] : memref<1x8x32xf32, #tpu.memory_space<vmem>>, vector<1x8x32xf32>
    %3 = vector.shape_cast %2 : vector<1x8x32xf32> to vector<8x32xf32>
    %c0_5 = arith.constant 0 : index
    %c0_6 = arith.constant 0 : index
    %c0_7 = arith.constant 0 : index
    %4 = vector.load %arg3[%c0_5, %c0_6, %c0_7] : memref<1x8x32xf32, #tpu.memory_space<vmem>>, vector<1x8x32xf32>
    %5 = vector.shape_cast %4 : vector<1x8x32xf32> to vector<8x32xf32>
    %6 = tpu.iota {dimensions = array<i32: 0>} : vector<8x8xi32>
    %7 = tpu.iota {dimensions = array<i32: 1>} : vector<8x8xi32>
    %8 = arith.cmpi sle, %7, %6 : vector<8x8xi32>
    %c0_8 = arith.constant 0 : index
    %c0_9 = arith.constant 0 : index
    %c0_10 = arith.constant 0 : index
    %9 = vector.load %arg7[%c0_8, %c0_9, %c0_10] : memref<1x1x8xf32, #tpu.memory_space<vmem>>, vector<1x1x8xf32>
    %10 = vector.shape_cast %9 : vector<1x1x8xf32> to vector<1x8xf32>
    %cst = arith.constant 5.000000e-01 : f32
    %11 = vector.broadcast %cst : f32 to vector<1x8xf32>
    %12 = arith.cmpf ogt, %10, %11 : vector<1x8xf32>
    %13 = vector.shape_cast %12 : vector<1x8xi1> to vector<1x8xi1>
    %14 = vector.broadcast %13 : vector<1x8xi1> to vector<8x8xi1>
    %15 = arith.andi %8, %14 : vector<8x8xi1>
    %cst_11 = arith.constant 0.000000e+00 : f32
    %16 = vector.broadcast %cst_11 : f32 to vector<8x32xf32>
    %17 = vector.extract_strided_slice %1 {offsets = [0, 0], sizes = [8, 8], strides = [1, 1]} : vector<8x32xf32> to vector<8x8xf32>
    %18 = arith.truncf %17 : vector<8x8xf32> to vector<8x8xbf16>
    %19 = vector.extract_strided_slice %3 {offsets = [0, 0], sizes = [8, 8], strides = [1, 1]} : vector<8x32xf32> to vector<8x8xf32>
    %20 = arith.truncf %19 : vector<8x8xf32> to vector<8x8xbf16>
    %21 = vector.extract_strided_slice %5 {offsets = [0, 0], sizes = [8, 8], strides = [1, 1]} : vector<8x32xf32> to vector<8x8xf32>
    %22 = arith.truncf %21 : vector<8x8xf32> to vector<8x8xbf16>
    %cst_12 = arith.constant dense<0.000000e+00> : vector<8x8xf32>
    %23 = tpu.matmul %18, %20, %cst_12 {dimension_numbers = #tpu.dot_dimension_numbers<[1], [1], [0], [0], [0, 0, 1, 0], [], []>} : vector<8x8xbf16>, vector<8x8xbf16>, vector<8x8xf32> -> vector<8x8xf32>
    %cst_13 = arith.constant 0.353553385 : f32
    %24 = vector.broadcast %cst_13 : f32 to vector<8x8xf32>
    %25 = arith.mulf %23, %24 : vector<8x8xf32>
    %cst_14 = arith.constant -1.000000e+30 : f32
    %26 = vector.broadcast %cst_14 : f32 to vector<8x8xf32>
    %27 = arith.select %15, %25, %26 : vector<8x8xi1>, vector<8x8xf32>
    %cst_15 = arith.constant dense<0xFF800000> : vector<8xf32>
    %28 = vector.multi_reduction <maximumf>, %27, %cst_15 [1] : vector<8x8xf32> to vector<8xf32>
    %29 = vector.shape_cast %28 : vector<8xf32> to vector<8x1xf32>
    %30 = vector.broadcast %29 : vector<8x1xf32> to vector<8x8xf32>
    %31 = arith.subf %27, %30 : vector<8x8xf32>
    %32 = math.exp %31 : vector<8x8xf32>
    %cst_16 = arith.constant dense<0.000000e+00> : vector<8xf32>
    %33 = vector.multi_reduction <add>, %32, %cst_16 [1] : vector<8x8xf32> to vector<8xf32>
    %34 = vector.shape_cast %33 : vector<8xf32> to vector<8x1xf32>
    %35 = tpu.reciprocal %34 {approx = true} : vector<8x1xf32> -> vector<8x1xf32>
    %36 = vector.broadcast %35 : vector<8x1xf32> to vector<8x8xf32>
    %37 = arith.mulf %32, %36 : vector<8x8xf32>
    %38 = arith.truncf %37 : vector<8x8xf32> to vector<8x8xbf16>
    %cst_17 = arith.constant dense<0.000000e+00> : vector<8x8xf32>
    %39 = tpu.matmul %38, %22, %cst_17 {dimension_numbers = #tpu.dot_dimension_numbers<[1], [0], [0], [1], [0, 0, 1, 1], [], []>} : vector<8x8xbf16>, vector<8x8xbf16>, vector<8x8xf32> -> vector<8x8xf32>
    %40 = arith.truncf %39 : vector<8x8xf32> to vector<8x8xbf16>
    %c0_18 = arith.constant 0 : index
    %c0_19 = arith.constant 0 : index
    %41 = vector.load %arg5[%c0_18, %c0_19] : memref<32x32xf32, #tpu.memory_space<vmem>>, vector<8x32xf32>
    %42 = arith.truncf %41 : vector<8x32xf32> to vector<8x32xbf16>
    %cst_20 = arith.constant dense<0.000000e+00> : vector<8x32xf32>
    %43 = tpu.matmul %40, %42, %cst_20 {dimension_numbers = #tpu.dot_dimension_numbers<[1], [0], [0], [1], [0, 0, 1, 1], [], []>} : vector<8x8xbf16>, vector<8x32xbf16>, vector<8x32xf32> -> vector<8x32xf32>
    %44 = arith.addf %16, %43 : vector<8x32xf32>
    %45 = vector.extract_strided_slice %1 {offsets = [0, 8], sizes = [8, 8], strides = [1, 1]} : vector<8x32xf32> to vector<8x8xf32>
    %46 = arith.truncf %45 : vector<8x8xf32> to vector<8x8xbf16>
    %47 = vector.extract_strided_slice %3 {offsets = [0, 8], sizes = [8, 8], strides = [1, 1]} : vector<8x32xf32> to vector<8x8xf32>
    %48 = arith.truncf %47 : vector<8x8xf32> to vector<8x8xbf16>
    %49 = vector.extract_strided_slice %5 {offsets = [0, 8], sizes = [8, 8], strides = [1, 1]} : vector<8x32xf32> to vector<8x8xf32>
    %50 = arith.truncf %49 : vector<8x8xf32> to vector<8x8xbf16>
    %cst_21 = arith.constant dense<0.000000e+00> : vector<8x8xf32>
    %51 = tpu.matmul %46, %48, %cst_21 {dimension_numbers = #tpu.dot_dimension_numbers<[1], [1], [0], [0], [0, 0, 1, 0], [], []>} : vector<8x8xbf16>, vector<8x8xbf16>, vector<8x8xf32> -> vector<8x8xf32>
    %cst_22 = arith.constant 0.353553385 : f32
    %52 = vector.broadcast %cst_22 : f32 to vector<8x8xf32>
    %53 = arith.mulf %51, %52 : vector<8x8xf32>
    %cst_23 = arith.constant -1.000000e+30 : f32
    %54 = vector.broadcast %cst_23 : f32 to vector<8x8xf32>
    %55 = arith.select %15, %53, %54 : vector<8x8xi1>, vector<8x8xf32>
    %cst_24 = arith.constant dense<0xFF800000> : vector<8xf32>
    %56 = vector.multi_reduction <maximumf>, %55, %cst_24 [1] : vector<8x8xf32> to vector<8xf32>
    %57 = vector.shape_cast %56 : vector<8xf32> to vector<8x1xf32>
    %58 = vector.broadcast %57 : vector<8x1xf32> to vector<8x8xf32>
    %59 = arith.subf %55, %58 : vector<8x8xf32>
    %60 = math.exp %59 : vector<8x8xf32>
    %cst_25 = arith.constant dense<0.000000e+00> : vector<8xf32>
    %61 = vector.multi_reduction <add>, %60, %cst_25 [1] : vector<8x8xf32> to vector<8xf32>
    %62 = vector.shape_cast %61 : vector<8xf32> to vector<8x1xf32>
    %63 = tpu.reciprocal %62 {approx = true} : vector<8x1xf32> -> vector<8x1xf32>
    %64 = vector.broadcast %63 : vector<8x1xf32> to vector<8x8xf32>
    %65 = arith.mulf %60, %64 : vector<8x8xf32>
    %66 = arith.truncf %65 : vector<8x8xf32> to vector<8x8xbf16>
    %cst_26 = arith.constant dense<0.000000e+00> : vector<8x8xf32>
    %67 = tpu.matmul %66, %50, %cst_26 {dimension_numbers = #tpu.dot_dimension_numbers<[1], [0], [0], [1], [0, 0, 1, 1], [], []>} : vector<8x8xbf16>, vector<8x8xbf16>, vector<8x8xf32> -> vector<8x8xf32>
    %68 = arith.truncf %67 : vector<8x8xf32> to vector<8x8xbf16>
    %c8 = arith.constant 8 : index
    %c0_27 = arith.constant 0 : index
    %69 = vector.load %arg5[%c8, %c0_27] : memref<32x32xf32, #tpu.memory_space<vmem>>, vector<8x32xf32>
    %70 = arith.truncf %69 : vector<8x32xf32> to vector<8x32xbf16>
    %cst_28 = arith.constant dense<0.000000e+00> : vector<8x32xf32>
    %71 = tpu.matmul %68, %70, %cst_28 {dimension_numbers = #tpu.dot_dimension_numbers<[1], [0], [0], [1], [0, 0, 1, 1], [], []>} : vector<8x8xbf16>, vector<8x32xbf16>, vector<8x32xf32> -> vector<8x32xf32>
    %72 = arith.addf %44, %71 : vector<8x32xf32>
    %73 = vector.extract_strided_slice %1 {offsets = [0, 16], sizes = [8, 8], strides = [1, 1]} : vector<8x32xf32> to vector<8x8xf32>
    %74 = arith.truncf %73 : vector<8x8xf32> to vector<8x8xbf16>
    %75 = vector.extract_strided_slice %3 {offsets = [0, 16], sizes = [8, 8], strides = [1, 1]} : vector<8x32xf32> to vector<8x8xf32>
    %76 = arith.truncf %75 : vector<8x8xf32> to vector<8x8xbf16>
    %77 = vector.extract_strided_slice %5 {offsets = [0, 16], sizes = [8, 8], strides = [1, 1]} : vector<8x32xf32> to vector<8x8xf32>
    %78 = arith.truncf %77 : vector<8x8xf32> to vector<8x8xbf16>
    %cst_29 = arith.constant dense<0.000000e+00> : vector<8x8xf32>
    %79 = tpu.matmul %74, %76, %cst_29 {dimension_numbers = #tpu.dot_dimension_numbers<[1], [1], [0], [0], [0, 0, 1, 0], [], []>} : vector<8x8xbf16>, vector<8x8xbf16>, vector<8x8xf32> -> vector<8x8xf32>
    %cst_30 = arith.constant 0.353553385 : f32
    %80 = vector.broadcast %cst_30 : f32 to vector<8x8xf32>
    %81 = arith.mulf %79, %80 : vector<8x8xf32>
    %cst_31 = arith.constant -1.000000e+30 : f32
    %82 = vector.broadcast %cst_31 : f32 to vector<8x8xf32>
    %83 = arith.select %15, %81, %82 : vector<8x8xi1>, vector<8x8xf32>
    %cst_32 = arith.constant dense<0xFF800000> : vector<8xf32>
    %84 = vector.multi_reduction <maximumf>, %83, %cst_32 [1] : vector<8x8xf32> to vector<8xf32>
    %85 = vector.shape_cast %84 : vector<8xf32> to vector<8x1xf32>
    %86 = vector.broadcast %85 : vector<8x1xf32> to vector<8x8xf32>
    %87 = arith.subf %83, %86 : vector<8x8xf32>
    %88 = math.exp %87 : vector<8x8xf32>
    %cst_33 = arith.constant dense<0.000000e+00> : vector<8xf32>
    %89 = vector.multi_reduction <add>, %88, %cst_33 [1] : vector<8x8xf32> to vector<8xf32>
    %90 = vector.shape_cast %89 : vector<8xf32> to vector<8x1xf32>
    %91 = tpu.reciprocal %90 {approx = true} : vector<8x1xf32> -> vector<8x1xf32>
    %92 = vector.broadcast %91 : vector<8x1xf32> to vector<8x8xf32>
    %93 = arith.mulf %88, %92 : vector<8x8xf32>
    %94 = arith.truncf %93 : vector<8x8xf32> to vector<8x8xbf16>
    %cst_34 = arith.constant dense<0.000000e+00> : vector<8x8xf32>
    %95 = tpu.matmul %94, %78, %cst_34 {dimension_numbers = #tpu.dot_dimension_numbers<[1], [0], [0], [1], [0, 0, 1, 1], [], []>} : vector<8x8xbf16>, vector<8x8xbf16>, vector<8x8xf32> -> vector<8x8xf32>
    %96 = arith.truncf %95 : vector<8x8xf32> to vector<8x8xbf16>
    %c16 = arith.constant 16 : index
    %c0_35 = arith.constant 0 : index
    %97 = vector.load %arg5[%c16, %c0_35] : memref<32x32xf32, #tpu.memory_space<vmem>>, vector<8x32xf32>
    %98 = arith.truncf %97 : vector<8x32xf32> to vector<8x32xbf16>
    %cst_36 = arith.constant dense<0.000000e+00> : vector<8x32xf32>
    %99 = tpu.matmul %96, %98, %cst_36 {dimension_numbers = #tpu.dot_dimension_numbers<[1], [0], [0], [1], [0, 0, 1, 1], [], []>} : vector<8x8xbf16>, vector<8x32xbf16>, vector<8x32xf32> -> vector<8x32xf32>
    %100 = arith.addf %72, %99 : vector<8x32xf32>
    %101 = vector.extract_strided_slice %1 {offsets = [0, 24], sizes = [8, 8], strides = [1, 1]} : vector<8x32xf32> to vector<8x8xf32>
    %102 = arith.truncf %101 : vector<8x8xf32> to vector<8x8xbf16>
    %103 = vector.extract_strided_slice %3 {offsets = [0, 24], sizes = [8, 8], strides = [1, 1]} : vector<8x32xf32> to vector<8x8xf32>
    %104 = arith.truncf %103 : vector<8x8xf32> to vector<8x8xbf16>
    %105 = vector.extract_strided_slice %5 {offsets = [0, 24], sizes = [8, 8], strides = [1, 1]} : vector<8x32xf32> to vector<8x8xf32>
    %106 = arith.truncf %105 : vector<8x8xf32> to vector<8x8xbf16>
    %cst_37 = arith.constant dense<0.000000e+00> : vector<8x8xf32>
    %107 = tpu.matmul %102, %104, %cst_37 {dimension_numbers = #tpu.dot_dimension_numbers<[1], [1], [0], [0], [0, 0, 1, 0], [], []>} : vector<8x8xbf16>, vector<8x8xbf16>, vector<8x8xf32> -> vector<8x8xf32>
    %cst_38 = arith.constant 0.353553385 : f32
    %108 = vector.broadcast %cst_38 : f32 to vector<8x8xf32>
    %109 = arith.mulf %107, %108 : vector<8x8xf32>
    %cst_39 = arith.constant -1.000000e+30 : f32
    %110 = vector.broadcast %cst_39 : f32 to vector<8x8xf32>
    %111 = arith.select %15, %109, %110 : vector<8x8xi1>, vector<8x8xf32>
    %cst_40 = arith.constant dense<0xFF800000> : vector<8xf32>
    %112 = vector.multi_reduction <maximumf>, %111, %cst_40 [1] : vector<8x8xf32> to vector<8xf32>
    %113 = vector.shape_cast %112 : vector<8xf32> to vector<8x1xf32>
    %114 = vector.broadcast %113 : vector<8x1xf32> to vector<8x8xf32>
    %115 = arith.subf %111, %114 : vector<8x8xf32>
    %116 = math.exp %115 : vector<8x8xf32>
    %cst_41 = arith.constant dense<0.000000e+00> : vector<8xf32>
    %117 = vector.multi_reduction <add>, %116, %cst_41 [1] : vector<8x8xf32> to vector<8xf32>
    %118 = vector.shape_cast %117 : vector<8xf32> to vector<8x1xf32>
    %119 = tpu.reciprocal %118 {approx = true} : vector<8x1xf32> -> vector<8x1xf32>
    %120 = vector.broadcast %119 : vector<8x1xf32> to vector<8x8xf32>
    %121 = arith.mulf %116, %120 : vector<8x8xf32>
    %122 = arith.truncf %121 : vector<8x8xf32> to vector<8x8xbf16>
    %cst_42 = arith.constant dense<0.000000e+00> : vector<8x8xf32>
    %123 = tpu.matmul %122, %106, %cst_42 {dimension_numbers = #tpu.dot_dimension_numbers<[1], [0], [0], [1], [0, 0, 1, 1], [], []>} : vector<8x8xbf16>, vector<8x8xbf16>, vector<8x8xf32> -> vector<8x8xf32>
    %124 = arith.truncf %123 : vector<8x8xf32> to vector<8x8xbf16>
    %c24 = arith.constant 24 : index
    %c0_43 = arith.constant 0 : index
    %125 = vector.load %arg5[%c24, %c0_43] : memref<32x32xf32, #tpu.memory_space<vmem>>, vector<8x32xf32>
    %126 = arith.truncf %125 : vector<8x32xf32> to vector<8x32xbf16>
    %cst_44 = arith.constant dense<0.000000e+00> : vector<8x32xf32>
    %127 = tpu.matmul %124, %126, %cst_44 {dimension_numbers = #tpu.dot_dimension_numbers<[1], [0], [0], [1], [0, 0, 1, 1], [], []>} : vector<8x8xbf16>, vector<8x32xbf16>, vector<8x32xf32> -> vector<8x32xf32>
    %128 = arith.addf %100, %127 : vector<8x32xf32>
    %c0_45 = arith.constant 0 : index
    %c0_46 = arith.constant 0 : index
    %129 = vector.load %arg6[%c0_45, %c0_46] : memref<1x32xf32, #tpu.memory_space<vmem>>, vector<1x32xf32>
    %130 = vector.broadcast %129 : vector<1x32xf32> to vector<8x32xf32>
    %131 = arith.addf %128, %130 : vector<8x32xf32>
    %c0_47 = arith.constant 0 : index
    %c0_48 = arith.constant 0 : index
    %c0_49 = arith.constant 0 : index
    %132 = vector.load %arg4[%c0_47, %c0_48, %c0_49] : memref<1x8x32xf32, #tpu.memory_space<vmem>>, vector<1x8x32xf32>
    %133 = vector.shape_cast %132 : vector<1x8x32xf32> to vector<8x32xf32>
    %134 = arith.addf %133, %131 : vector<8x32xf32>
    %c0_50 = arith.constant 0 : index
    %c0_51 = arith.constant 0 : index
    %c0_52 = arith.constant 0 : index
    %135 = vector.load %arg8[%c0_50, %c0_51, %c0_52] : memref<1x8x32xf32, #tpu.memory_space<vmem>>, vector<1x8x32xf32>
    %136 = vector.shape_cast %135 : vector<1x8x32xf32> to vector<8x32xf32>
    %137 = vector.shape_cast %134 : vector<8x32xf32> to vector<1x8x32xf32>
    tpu.vector_store %arg8[%c0_50, %c0_51, %c0_52], %137 {strides = array<i32>} : memref<1x8x32xf32, #tpu.memory_space<vmem>>, vector<1x8x32xf32>,
    return
  }
  func.func @transform_0(%arg0: i32) -> (i32, i32, i32) {
    %c0_i32 = arith.constant 0 : i32
    %c0_i32_0 = arith.constant 0 : i32
    %c0_i32_1 = arith.constant 0 : i32
    return %arg0, %c0_i32, %c0_i32_0 : i32, i32, i32
  }
  func.func @transform_1(%arg0: i32) -> (i32, i32, i32) {
    %c0_i32 = arith.constant 0 : i32
    %c0_i32_0 = arith.constant 0 : i32
    %c0_i32_1 = arith.constant 0 : i32
    return %arg0, %c0_i32, %c0_i32_0 : i32, i32, i32
  }
  func.func @transform_2(%arg0: i32) -> (i32, i32, i32) {
    %c0_i32 = arith.constant 0 : i32
    %c0_i32_0 = arith.constant 0 : i32
    %c0_i32_1 = arith.constant 0 : i32
    return %arg0, %c0_i32, %c0_i32_0 : i32, i32, i32
  }
  func.func @transform_3(%arg0: i32) -> (i32, i32, i32) {
    %c0_i32 = arith.constant 0 : i32
    %c0_i32_0 = arith.constant 0 : i32
    %c0_i32_1 = arith.constant 0 : i32
    return %arg0, %c0_i32, %c0_i32_0 : i32, i32, i32
  }
  func.func @transform_4(%arg0: i32) -> (i32, i32) {
    %c0_i32 = arith.constant 0 : i32
    %c0_i32_0 = arith.constant 0 : i32
    %c0_i32_1 = arith.constant 0 : i32
    return %c0_i32, %c0_i32_0 : i32, i32
  }
  func.func @transform_5(%arg0: i32) -> (i32, i32) {
    %c0_i32 = arith.constant 0 : i32
    %c0_i32_0 = arith.constant 0 : i32
    %c0_i32_1 = arith.constant 0 : i32
    return %c0_i32, %c0_i32_0 : i32, i32
  }
  func.func @transform_6(%arg0: i32) -> (i32, i32, i32) {
    %c0_i32 = arith.constant 0 : i32
    %c0_i32_0 = arith.constant 0 : i32
    %c0_i32_1 = arith.constant 0 : i32
    return %arg0, %c0_i32, %c0_i32_0 : i32, i32, i32
  }
  func.func @transform_7(%arg0: i32) -> (i32, i32, i32) {
    %c0_i32 = arith.constant 0 : i32
    %c0_i32_0 = arith.constant 0 : i32
    %c0_i32_1 = arith.constant 0 : i32
    return %arg0, %c0_i32, %c0_i32_0 : i32, i32, i32
  }
}

module attributes {stable_mosaic.version = 11 : i64} {
  func.func @kernel(%arg0: i32, %arg1: memref<8x32xf32, #tpu.memory_space<vmem>>, %arg2: memref<1x32xf32, #tpu.memory_space<vmem>>, %arg3: memref<1x32xf32, #tpu.memory_space<vmem>>, %arg4: memref<32x128xf32, #tpu.memory_space<vmem>>, %arg5: memref<1x128xf32, #tpu.memory_space<vmem>>, %arg6: memref<128x32xf32, #tpu.memory_space<vmem>>, %arg7: memref<1x32xf32, #tpu.memory_space<vmem>>, %arg8: memref<8x32xf32, #tpu.memory_space<vmem>>) attributes {dimension_semantics = [#tpu.dimension_semantics<parallel>], iteration_bounds = array<i64: 2>, scalar_prefetch = 0 : i64, scratch_operands = 0 : i64, tpu.core_type = #tpu.core_type<tc>, window_params = [{transform_indices = @transform_0, window_bounds = array<i64: 8, 32>}, {pipeline_mode = #tpu.pipeline_mode<synchronous>, transform_indices = @transform_1, window_bounds = array<i64: 1, 32>}, {pipeline_mode = #tpu.pipeline_mode<synchronous>, transform_indices = @transform_2, window_bounds = array<i64: 1, 32>}, {pipeline_mode = #tpu.pipeline_mode<synchronous>, transform_indices = @transform_3, window_bounds = array<i64: 32, 128>}, {pipeline_mode = #tpu.pipeline_mode<synchronous>, transform_indices = @transform_4, window_bounds = array<i64: 1, 128>}, {pipeline_mode = #tpu.pipeline_mode<synchronous>, transform_indices = @transform_5, window_bounds = array<i64: 128, 32>}, {pipeline_mode = #tpu.pipeline_mode<synchronous>, transform_indices = @transform_6, window_bounds = array<i64: 1, 32>}, {transform_indices = @transform_7, window_bounds = array<i64: 8, 32>}]} {
    %c0 = arith.constant 0 : index
    %c0_0 = arith.constant 0 : index
    %0 = vector.load %arg1[%c0, %c0_0] : memref<8x32xf32, #tpu.memory_space<vmem>>, vector<8x32xf32>
    %c0_1 = arith.constant 0 : index
    %c0_2 = arith.constant 0 : index
    %1 = vector.load %arg2[%c0_1, %c0_2] : memref<1x32xf32, #tpu.memory_space<vmem>>, vector<1x32xf32>
    %c0_3 = arith.constant 0 : index
    %c0_4 = arith.constant 0 : index
    %2 = vector.load %arg3[%c0_3, %c0_4] : memref<1x32xf32, #tpu.memory_space<vmem>>, vector<1x32xf32>
    %cst = arith.constant dense<0.000000e+00> : vector<8xf32>
    %3 = vector.multi_reduction <add>, %0, %cst [1] : vector<8x32xf32> to vector<8xf32>
    %4 = vector.shape_cast %3 : vector<8xf32> to vector<8x1xf32>
    %cst_5 = arith.constant 3.200000e+01 : f32
    %5 = vector.broadcast %cst_5 : f32 to vector<8x1xf32>
    %6 = arith.divf %4, %5 : vector<8x1xf32>
    %7 = vector.broadcast %6 : vector<8x1xf32> to vector<8x32xf32>
    %8 = arith.subf %0, %7 : vector<8x32xf32>
    %9 = arith.mulf %8, %8 : vector<8x32xf32>
    %cst_6 = arith.constant dense<0.000000e+00> : vector<8xf32>
    %10 = vector.multi_reduction <add>, %9, %cst_6 [1] : vector<8x32xf32> to vector<8xf32>
    %11 = vector.shape_cast %10 : vector<8xf32> to vector<8x1xf32>
    %cst_7 = arith.constant 3.200000e+01 : f32
    %12 = vector.broadcast %cst_7 : f32 to vector<8x1xf32>
    %13 = arith.divf %11, %12 : vector<8x1xf32>
    %cst_8 = arith.constant 9.99999974E-6 : f32
    %14 = vector.broadcast %cst_8 : f32 to vector<8x1xf32>
    %15 = arith.addf %13, %14 : vector<8x1xf32>
    %16 = math.rsqrt %15 : vector<8x1xf32>
    %17 = vector.broadcast %16 : vector<8x1xf32> to vector<8x32xf32>
    %18 = arith.mulf %8, %17 : vector<8x32xf32>
    %19 = vector.broadcast %1 : vector<1x32xf32> to vector<8x32xf32>
    %20 = arith.mulf %18, %19 : vector<8x32xf32>
    %21 = vector.broadcast %2 : vector<1x32xf32> to vector<8x32xf32>
    %22 = arith.addf %20, %21 : vector<8x32xf32>
    %23 = arith.truncf %22 : vector<8x32xf32> to vector<8x32xbf16>
    %c0_9 = arith.constant 0 : index
    %c0_10 = arith.constant 0 : index
    %24 = vector.load %arg4[%c0_9, %c0_10] : memref<32x128xf32, #tpu.memory_space<vmem>>, vector<32x128xf32>
    %25 = arith.truncf %24 : vector<32x128xf32> to vector<32x128xbf16>
    %cst_11 = arith.constant dense<0.000000e+00> : vector<8x128xf32>
    %26 = tpu.matmul %23, %25, %cst_11 {dimension_numbers = #tpu.dot_dimension_numbers<[1], [0], [0], [1], [0, 0, 1, 1], [], []>} : vector<8x32xbf16>, vector<32x128xbf16>, vector<8x128xf32> -> vector<8x128xf32>
    %c0_12 = arith.constant 0 : index
    %c0_13 = arith.constant 0 : index
    %27 = vector.load %arg5[%c0_12, %c0_13] : memref<1x128xf32, #tpu.memory_space<vmem>>, vector<1x128xf32>
    %28 = vector.broadcast %27 : vector<1x128xf32> to vector<8x128xf32>
    %29 = arith.addf %26, %28 : vector<8x128xf32>
    %cst_14 = arith.constant 5.000000e-01 : f32
    %30 = vector.broadcast %cst_14 : f32 to vector<8x128xf32>
    %31 = arith.mulf %30, %29 : vector<8x128xf32>
    %cst_15 = arith.constant 4.471500e-02 : f32
    %32 = vector.broadcast %cst_15 : f32 to vector<8x128xf32>
    %33 = arith.mulf %32, %29 : vector<8x128xf32>
    %34 = arith.mulf %33, %29 : vector<8x128xf32>
    %35 = arith.mulf %34, %29 : vector<8x128xf32>
    %36 = arith.addf %29, %35 : vector<8x128xf32>
    %cst_16 = arith.constant 0.797884583 : f32
    %37 = vector.broadcast %cst_16 : f32 to vector<8x128xf32>
    %38 = arith.mulf %37, %36 : vector<8x128xf32>
    %39 = math.tanh %38 : vector<8x128xf32>
    %cst_17 = arith.constant 1.000000e+00 : f32
    %40 = vector.broadcast %cst_17 : f32 to vector<8x128xf32>
    %41 = arith.addf %40, %39 : vector<8x128xf32>
    %42 = arith.mulf %31, %41 : vector<8x128xf32>
    %43 = arith.truncf %42 : vector<8x128xf32> to vector<8x128xbf16>
    %c0_18 = arith.constant 0 : index
    %c0_19 = arith.constant 0 : index
    %44 = vector.load %arg6[%c0_18, %c0_19] : memref<128x32xf32, #tpu.memory_space<vmem>>, vector<128x32xf32>
    %45 = arith.truncf %44 : vector<128x32xf32> to vector<128x32xbf16>
    %cst_20 = arith.constant dense<0.000000e+00> : vector<8x32xf32>
    %46 = tpu.matmul %43, %45, %cst_20 {dimension_numbers = #tpu.dot_dimension_numbers<[1], [0], [0], [1], [0, 0, 1, 1], [], []>} : vector<8x128xbf16>, vector<128x32xbf16>, vector<8x32xf32> -> vector<8x32xf32>
    %c0_21 = arith.constant 0 : index
    %c0_22 = arith.constant 0 : index
    %47 = vector.load %arg7[%c0_21, %c0_22] : memref<1x32xf32, #tpu.memory_space<vmem>>, vector<1x32xf32>
    %48 = vector.broadcast %47 : vector<1x32xf32> to vector<8x32xf32>
    %49 = arith.addf %46, %48 : vector<8x32xf32>
    %50 = arith.addf %0, %49 : vector<8x32xf32>
    %c0_23 = arith.constant 0 : index
    %c0_24 = arith.constant 0 : index
    %51 = vector.load %arg8[%c0_23, %c0_24] : memref<8x32xf32, #tpu.memory_space<vmem>>, vector<8x32xf32>
    tpu.vector_store %arg8[%c0_23, %c0_24], %50 {strides = array<i32>} : memref<8x32xf32, #tpu.memory_space<vmem>>, vector<8x32xf32>,
    return
  }
  func.func @transform_0(%arg0: i32) -> (i32, i32) {
    %c0_i32 = arith.constant 0 : i32
    %c0_i32_0 = arith.constant 0 : i32
    return %arg0, %c0_i32 : i32, i32
  }
  func.func @transform_1(%arg0: i32) -> (i32, i32) {
    %c0_i32 = arith.constant 0 : i32
    %c0_i32_0 = arith.constant 0 : i32
    %c0_i32_1 = arith.constant 0 : i32
    return %c0_i32, %c0_i32_0 : i32, i32
  }
  func.func @transform_2(%arg0: i32) -> (i32, i32) {
    %c0_i32 = arith.constant 0 : i32
    %c0_i32_0 = arith.constant 0 : i32
    %c0_i32_1 = arith.constant 0 : i32
    return %c0_i32, %c0_i32_0 : i32, i32
  }
  func.func @transform_3(%arg0: i32) -> (i32, i32) {
    %c0_i32 = arith.constant 0 : i32
    %c0_i32_0 = arith.constant 0 : i32
    %c0_i32_1 = arith.constant 0 : i32
    return %c0_i32, %c0_i32_0 : i32, i32
  }
  func.func @transform_4(%arg0: i32) -> (i32, i32) {
    %c0_i32 = arith.constant 0 : i32
    %c0_i32_0 = arith.constant 0 : i32
    %c0_i32_1 = arith.constant 0 : i32
    return %c0_i32, %c0_i32_0 : i32, i32
  }
  func.func @transform_5(%arg0: i32) -> (i32, i32) {
    %c0_i32 = arith.constant 0 : i32
    %c0_i32_0 = arith.constant 0 : i32
    %c0_i32_1 = arith.constant 0 : i32
    return %c0_i32, %c0_i32_0 : i32, i32
  }
  func.func @transform_6(%arg0: i32) -> (i32, i32) {
    %c0_i32 = arith.constant 0 : i32
    %c0_i32_0 = arith.constant 0 : i32
    %c0_i32_1 = arith.constant 0 : i32
    return %c0_i32, %c0_i32_0 : i32, i32
  }
  func.func @transform_7(%arg0: i32) -> (i32, i32) {
    %c0_i32 = arith.constant 0 : i32
    %c0_i32_0 = arith.constant 0 : i32
    return %arg0, %c0_i32 : i32, i32
  }
}

</mosaic_0001>

<llo_original>
// kernel: cross_pika_attention_layer.18
$region0: #{cross_pika_attention_layer.18}
  #allocation0 [shape = 'u32[]', space=smem, size = 0x4, offset = 0x4, fixed_abs, tag = 'smem constant byte address 0x4 - core index']
  #allocation1 [shape = 'u32[144,128]{1,0:T(1,128)}', space=vmem, size = 0x12000, scoped, tag = 'internal scratch']
  %s0 = inlined_call_operand.vmem [shape: f32[16,32], index: 0, kind: input, shape index: {}]
  %s1 = inlined_call_operand.vmem [shape: f32[1,32], index: 1, kind: input, shape index: {}]
  %s2 = inlined_call_operand.vmem [shape: f32[1,32], index: 2, kind: input, shape index: {}]
  %s3 = inlined_call_operand.vmem [shape: f32[32,32], index: 3, kind: input, shape index: {}]
  %s4 = inlined_call_operand.vmem [shape: f32[1,32], index: 4, kind: input, shape index: {}]
  %s5 = inlined_call_operand.vmem [shape: f32[16,32], index: 5, kind: output, shape index: {}]
  %s6 = sld [smem:[#allocation0]]
  $region53: #{cross_pika_attention_layer.18} parent=0
    _
  %s8 = ssub.s32 1, %s6
  %s9 = scalar_select 0, %s8, %s6
  loop: start=0, step=1, limit=4
  $region2: #{cross_pika_attention_layer.18} parent=0 // loop_pre_header
    _
  $region3: #{cross_pika_attention_layer.18} parent=0 // loop_header
    %s11 = sphi 0, %s15
    %p12 = scmp.ge.s32.totalorder %s11, 4
    %s21 = sphi 0, %s23
    %s24 = sphi 0, %s21
    %s25 = sphi 0, %s24
    %s41 = sphi 0, %s25
    %s45 = sphi 0, %s45
    %s47 = sphi 0, %s45
    %s48 = sphi 0, %s47
    %s62 = sphi 0, %s48
    %s66 = sphi 0, %s66
    %s68 = sphi 0, %s66
    %s69 = sphi 0, %s68
    %s83 = sphi 0, %s69
    %s87 = sphi 0, %s87
    %s89 = sphi 0, %s87
    %s90 = sphi 0, %s89
    %s104 = sphi 0, %s90
    %s108 = sphi 0, %s108
    %s110 = sphi 0, %s108
    %s111 = sphi 0, %s110
    %s125 = sphi 0, %s111
    %s131 = sphi 0, %s133
    %s134 = sphi 0, %s131
    %s135 = sphi 0, %s134
    %s151 = sphi 0, %s135
  $region4: #{cross_pika_attention_layer.18} parent=0 // loop_header_branch
    %14 = sbr.rel (%p12) target = $region8
  $region5: #{cross_pika_attention_layer.18} parent=0 // loop_body
    %s16 = ssub.s32 %s11, 1
    %s17 = ssub.s32 %s11, 2
    %s18 = sadd.s32 %s11, 1
    %s19 = ssub.s32 %s11, %s18
    %p20 = scmp.eq.s32.totalorder %s19, 0
    %s22 = sadd.s32 %s21, 1
    %s23 = scalar_select %p20, %s21, %s22
    %p26 = pneg %p20
    %p27 = scmp.eq.s32.totalorder %s11, 1
    %p28 = por %p26, %p27
    %p29 = scmp.ne.s32.totalorder %s21, %s24
    %p30 = scmp.eq.s32.totalorder %s11, 0
    %p31 = por %p29, %p30
    %p32 = scmp.ne.s32.totalorder %s21, %s24
    %p33 = scmp.eq.s32.totalorder %s16, 1
    %p34 = por %p32, %p33
    %p35 = scmp.ne.s32.totalorder %s24, %s25
    %p36 = scmp.eq.s32.totalorder %s16, 0
    %p37 = por %p35, %p36
    %p38 = scmp.ne.s32.totalorder %s24, %s25
    %p39 = scmp.eq.s32.totalorder %s17, 1
    %p40 = por %p38, %p39
    %p42 = scmp.ne.s32.totalorder %s25, %s41
    %p43 = scmp.eq.s32.totalorder %s17, 0
    %p44 = por %p42, %p43
    %s46 = sadd.s32 %s45, 1
    %p49 = scmp.eq.s32.totalorder %s11, 1
    %p50 = scmp.ne.s32.totalorder %s45, %s47
    %p51 = scmp.eq.s32.totalorder %s11, 0
    %p52 = por %p50, %p51
    %p53 = scmp.ne.s32.totalorder %s45, %s47
    %p54 = scmp.eq.s32.totalorder %s16, 1
    %p55 = por %p53, %p54
    %p56 = scmp.ne.s32.totalorder %s47, %s48
    %p57 = scmp.eq.s32.totalorder %s16, 0
    %p58 = por %p56, %p57
    %p59 = scmp.ne.s32.totalorder %s47, %s48
    %p60 = scmp.eq.s32.totalorder %s17, 1
    %p61 = por %p59, %p60
    %p63 = scmp.ne.s32.totalorder %s48, %s62
    %p64 = scmp.eq.s32.totalorder %s17, 0
    %p65 = por %p63, %p64
    %s67 = sadd.s32 %s66, 1
    %p70 = scmp.eq.s32.totalorder %s11, 1
    %p71 = scmp.ne.s32.totalorder %s66, %s68
    %p72 = scmp.eq.s32.totalorder %s11, 0
    %p73 = por %p71, %p72
    %p74 = scmp.ne.s32.totalorder %s66, %s68
    %p75 = scmp.eq.s32.totalorder %s16, 1
    %p76 = por %p74, %p75
    %p77 = scmp.ne.s32.totalorder %s68, %s69
    %p78 = scmp.eq.s32.totalorder %s16, 0
    %p79 = por %p77, %p78
    %p80 = scmp.ne.s32.totalorder %s68, %s69
    %p81 = scmp.eq.s32.totalorder %s17, 1
    %p82 = por %p80, %p81
    %p84 = scmp.ne.s32.totalorder %s69, %s83
    %p85 = scmp.eq.s32.totalorder %s17, 0
    %p86 = por %p84, %p85
    %s88 = sadd.s32 %s87, 1
    %p91 = scmp.eq.s32.totalorder %s11, 1
    %p92 = scmp.ne.s32.totalorder %s87, %s89
    %p93 = scmp.eq.s32.totalorder %s11, 0
    %p94 = por %p92, %p93
    %p95 = scmp.ne.s32.totalorder %s87, %s89
    %p96 = scmp.eq.s32.totalorder %s16, 1
    %p97 = por %p95, %p96
    %p98 = scmp.ne.s32.totalorder %s89, %s90
    %p99 = scmp.eq.s32.totalorder %s16, 0
    %p100 = por %p98, %p99
    %p101 = scmp.ne.s32.totalorder %s89, %s90
    %p102 = scmp.eq.s32.totalorder %s17, 1
    %p103 = por %p101, %p102
    %p105 = scmp.ne.s32.totalorder %s90, %s104
    %p106 = scmp.eq.s32.totalorder %s17, 0
    %p107 = por %p105, %p106
    %s109 = sadd.s32 %s108, 1
    %p112 = scmp.eq.s32.totalorder %s11, 1
    %p113 = scmp.ne.s32.totalorder %s108, %s110
    %p114 = scmp.eq.s32.totalorder %s11, 0
    %p115 = por %p113, %p114
    %p116 = scmp.ne.s32.totalorder %s108, %s110
    %p117 = scmp.eq.s32.totalorder %s16, 1
    %p118 = por %p116, %p117
    %p119 = scmp.ne.s32.totalorder %s110, %s111
    %p120 = scmp.eq.s32.totalorder %s16, 0
    %p121 = por %p119, %p120
    %p122 = scmp.ne.s32.totalorder %s110, %s111
    %p123 = scmp.eq.s32.totalorder %s17, 1
    %p124 = por %p122, %p123
    %p126 = scmp.ne.s32.totalorder %s111, %s125
    %p127 = scmp.eq.s32.totalorder %s17, 0
    %p128 = por %p126, %p127
    %s129 = ssub.s32 %s11, %s18
    %p130 = scmp.eq.s32.totalorder %s129, 0
    %s132 = sadd.s32 %s131, 1
    %s133 = scalar_select %p130, %s131, %s132
    %p136 = pneg %p130
    %p137 = scmp.eq.s32.totalorder %s11, 1
    %p138 = por %p136, %p137
    %p139 = scmp.ne.s32.totalorder %s131, %s134
    %p140 = scmp.eq.s32.totalorder %s11, 0
    %p141 = por %p139, %p140
    %p142 = scmp.ne.s32.totalorder %s131, %s134
    %p143 = scmp.eq.s32.totalorder %s16, 1
    %p144 = por %p142, %p143
    %p145 = scmp.ne.s32.totalorder %s134, %s135
    %p146 = scmp.eq.s32.totalorder %s16, 0
    %p147 = por %p145, %p146
    %p148 = scmp.ne.s32.totalorder %s134, %s135
    %p149 = scmp.eq.s32.totalorder %s17, 1
    %p150 = por %p148, %p149
    %p152 = scmp.ne.s32.totalorder %s135, %s151
    %p153 = scmp.eq.s32.totalorder %s17, 0
    %p154 = por %p152, %p153
    %p155 = scmp.le.s32.totalorder 1, %s11
    %p156 = scmp.lt.s32.totalorder %s11, 3
    %p157 = pnand %p155, %p156
    %p158 = pneg %p157
    // Predicated region
    $region9: #{cross_pika_attention_layer.18} parent=5 // pred_check
      _
    $region10: #{cross_pika_attention_layer.18} parent=5 // pred_check_branch
      %160 = sbr.rel (%p157) target = $region12
    $region11: #{cross_pika_attention_layer.18} parent=5 // pred_region
      %s161 = ssub.s32 %s11, 1
      // Predicated region
      $region13: #{cross_pika_attention_layer.18} parent=11 // pred_check
        %p162 = pneg %p58
      $region14: #{cross_pika_attention_layer.18} parent=11 // pred_check_branch
        %164 = sbr.rel (%p162) target = $region16
      $region15: #{cross_pika_attention_layer.18} parent=11 // pred_region
        _
      $region16: #{cross_pika_attention_layer.18} parent=11 // pred_fallthru
        _
      // Predicated region
      $region17: #{cross_pika_attention_layer.18} parent=11 // pred_check
        %p165 = pneg %p79
      $region18: #{cross_pika_attention_layer.18} parent=11 // pred_check_branch
        %167 = sbr.rel (%p165) target = $region20
      $region19: #{cross_pika_attention_layer.18} parent=11 // pred_region
        _
      $region20: #{cross_pika_attention_layer.18} parent=11 // pred_fallthru
        _
      // Predicated region
      $region21: #{cross_pika_attention_layer.18} parent=11 // pred_check
        %p168 = pneg %p100
      $region22: #{cross_pika_attention_layer.18} parent=11 // pred_check_branch
        %170 = sbr.rel (%p168) target = $region24
      $region23: #{cross_pika_attention_layer.18} parent=11 // pred_region
        _
      $region24: #{cross_pika_attention_layer.18} parent=11 // pred_fallthru
        _
      // Predicated region
      $region25: #{cross_pika_attention_layer.18} parent=11 // pred_check
        %p171 = pneg %p121
      $region26: #{cross_pika_attention_layer.18} parent=11 // pred_check_branch
        %173 = sbr.rel (%p171) target = $region28
      $region27: #{cross_pika_attention_layer.18} parent=11 // pred_region
        _
      $region28: #{cross_pika_attention_layer.18} parent=11 // pred_fallthru
        _
    $region12: #{cross_pika_attention_layer.18} parent=5 // pred_fallthru
      _
    %p174 = scmp.lt.s32.totalorder %s11, 2
    // Predicated region
    $region29: #{cross_pika_attention_layer.18} parent=5 // pred_check
      %p175 = pneg %p174
    $region30: #{cross_pika_attention_layer.18} parent=5 // pred_check_branch
      %177 = sbr.rel (%p175) target = $region32
    $region31: #{cross_pika_attention_layer.18} parent=5 // pred_region
      // Predicated region
      $region33: #{cross_pika_attention_layer.18} parent=31 // pred_check
        %p178 = pneg %p31
      $region34: #{cross_pika_attention_layer.18} parent=31 // pred_check_branch
        %180 = sbr.rel (%p178) target = $region36
      $region35: #{cross_pika_attention_layer.18} parent=31 // pred_region
        %p181 = scmp.lt.s32.totalorder %s11, 1
        %s182 = scalar_select %p181, %s11, 1
        %s183 = smul.addr %s182, 8
        %s184 = scalar_lea.vmem %s0, %s183
      $region36: #{cross_pika_attention_layer.18} parent=31 // pred_fallthru
        _
    $region32: #{cross_pika_attention_layer.18} parent=5 // pred_fallthru
      _
    %p185 = scmp.le.s32.totalorder 1, %s11
    %p186 = scmp.lt.s32.totalorder %s11, 3
    %p187 = pnand %p185, %p186
    %p188 = pneg %p187
    // Predicated region
    $region37: #{cross_pika_attention_layer.18} parent=5 // pred_check
      _
    $region38: #{cross_pika_attention_layer.18} parent=5 // pred_check_branch
      %190 = sbr.rel (%p187) target = $region40
    $region39: #{cross_pika_attention_layer.18} parent=5 // pred_region
      %s191 = ssub.s32 %s11, 1
      %p192 = scmp.lt.s32.totalorder %s16, 1
      %s193 = scalar_select %p192, %s16, 1
      %s194 = smul.addr %s193, 8
      %s195 = scalar_lea.vmem %s0, %s194
      %p196 = pneg %p37
      %p197 = pneg %p34
      %p198 = pneg %p58
      %p199 = pneg %p55
      %p200 = pneg %p79
      %p201 = pneg %p76
      %p202 = pneg %p100
      %p203 = pneg %p97
      %p204 = pneg %p121
      %p205 = pneg %p118
      %p206 = pneg %p147
      %p207 = pneg %p144
      %p208 = scmp.lt.s32.totalorder %s16, 1
      %s209 = scalar_select %p208, %s16, 1
      %s210 = smul.addr %s209, 8
      %s211 = scalar_lea.vmem %s5, %s210
      %p212 = scmp.lt.s32.totalorder %s16, 1
      %s213 = scalar_select %p212, %s16, 1
      %s214 = smul.addr %s213, 8
      %s215 = scalar_lea.vmem %s0, %s214
      %p216 = scmp.lt.s32.totalorder %s16, 1
      %s217 = scalar_select %p216, %s16, 1
      %s218 = smul.addr %s217, 8
      %s219 = scalar_lea.vmem %s5, %s218
      %v221 = vld [vmem:[%s215] sm:$0xff]
      %v222 = vld [vmem:[%s1] sm:$0x1]
      %v223 = vld [vmem:[%s2] sm:$0x1]
      %vm224 = vcmask 261120
      %v225 = vsel %vm224, %v221, 0.0
      %226 = vadd.xlane.f32.xlu0 %v225
      %v227 = vpop.xlane.xlu0 %226
      %v228 = vrcp.pop 32.0
      %v229 = vmul.f32 %v227, %v228
      %v230 = vsub.f32 %v221, %v229
      %v231 = vmul.f32 %v230, %v230
      %v232 = vsel %vm224, %v231, 0.0
      %233 = vadd.xlane.f32.xlu0 %v232
      %v234 = vpop.xlane.xlu0 %233
      %v235 = vmul.f32 %v234, %v228
      %v236 = vadd.f32 %v235, 1e-05
      %v237 = vrsqrt.pop %v236
      %v238 = vmul.f32 %v230, %v237
      %v240 = vlaneseq
      %v241 = vshrl.u32 %v240, 7
      %v242 = vsub.s32 0, %v241
      %v243 = vrot.slane %v222, %v242
      %v245 = vmul.f32 %v238, %v243
      %v247 = vlaneseq
      %v248 = vshrl.u32 %v247, 7
      %v249 = vsub.s32 0, %v248
      %v250 = vrot.slane %v223, %v249
      %v252 = vadd.f32 %v245, %v250
      %v253 = vpack.c.bf16 %v252, %v252
      %v254 = vld [vmem:[%s3] sm:$0xff]
      %v255 = vld [vmem:[%s3 + $0x8] sm:$0xff]
      %v256 = vld [vmem:[%s3 + $0x10] sm:$0xff]
      %v257 = vld [vmem:[%s3 + $0x18] sm:$0xff]
      %v258 = vpack.c.bf16 %v255, %v254
      %v259 = vpack.c.bf16 %v257, %v256
      %v260 = vld [vmem:[%s4] sm:$0x1]
      %v262 = vlaneseq
      %v263 = vshrl.u32 %v262, 7
      %v264 = vsub.s32 0, %v263
      %v265 = vrot.slane %v260, %v264
      %v268 = vsel %vm224, %v253, 0
      %270 = vmatprep.subr.bf16.mxu0 0
      %271 = vmatpush1.bf16.msra.mxu0 0
      %272 = vmatprep.subr.bf16.mxu0 0
      %273 = vmatpush1.bf16.msra.mxu0 0
      %274 = vmatprep.subr.bf16.mxu0 0
      %275 = vmatpush1.bf16.msra.mxu0 0
      %276 = vmatprep.subr.bf16.mxu0 0
      %277 = vmatpush1.bf16.msra.mxu0 0
      %278 = vmatprep.subr.bf16.mxu0 0
      %279 = vmatpush1.bf16.msra.mxu0 0
      %280 = vmatprep.subr.bf16.mxu0 0
      %281 = vmatpush1.bf16.msra.mxu0 0
      %282 = vmatprep.subr.bf16.mxu0 0
      %283 = vmatpush1.bf16.msra.mxu0 %v259
      %284 = vmatprep.subr.bf16.mxu0 0
      %285 = vmatpush1.bf16.msra.mxu0 %v258
      %286 = vmatprep.subr.bf16.mxu0 0
      %287 = vmatpush2.bf16.msra.mxu0 0
      %288 = vmatprep.subr.bf16.mxu0 0
      %289 = vmatpush2.bf16.msra.mxu0 0
      %290 = vmatprep.subr.bf16.mxu0 0
      %291 = vmatpush2.bf16.msra.mxu0 0
      %292 = vmatprep.subr.bf16.mxu0 0
      %293 = vmatpush2.bf16.msra.mxu0 0
      %294 = vmatprep.subr.bf16.mxu0 0
      %295 = vmatpush2.bf16.msra.mxu0 0
      %296 = vmatprep.subr.bf16.mxu0 0
      %297 = vmatpush2.bf16.msra.mxu0 0
      %298 = vmatprep.subr.bf16.mxu0 0
      %299 = vmatpush2.bf16.msra.mxu0 0
      %300 = vmatprep.subr.bf16.mxu0 0
      %301 = vmatpush2.bf16.msra.mxu0 0
      %302 = vmatprep.mubr.bf16.mxu0 0
      %303 = vmatmul.mubr.bf16.gmra.mxu0 %v268
      %v304 = vpop.f32.mrf.mxu0
      %v305 = vadd.f32 %v265, %v304
      %v306 = vpop.f32.mrf.mxu0
      %v307 = vpop.f32.mrf.mxu0
      %v308 = vpop.f32.mrf.mxu0
      %309 = vdwg.mxu0
      %310 = vst.msk [vmem:[%s219] sm:$0xff] %vm224, %v305
      %p311 = scmp.lt.s32.totalorder %s16, 1
      %s312 = scalar_select %p311, %s16, 1
      %s313 = smul.addr %s312, 8
      %s314 = scalar_lea.vmem %s5, %s313
      // Predicated region
      $region41: #{cross_pika_attention_layer.18} parent=39 // pred_check
        %p315 = pneg %p144
      $region42: #{cross_pika_attention_layer.18} parent=39 // pred_check_branch
        %317 = sbr.rel (%p315) target = $region44
      $region43: #{cross_pika_attention_layer.18} parent=39 // pred_region
        _
      $region44: #{cross_pika_attention_layer.18} parent=39 // pred_fallthru
        _
    $region40: #{cross_pika_attention_layer.18} parent=5 // pred_fallthru
      _
    %p318 = scmp.le.s32.totalorder 2, %s11
    // Predicated region
    $region45: #{cross_pika_attention_layer.18} parent=5 // pred_check
      %p319 = pneg %p318
    $region46: #{cross_pika_attention_layer.18} parent=5 // pred_check_branch
      %321 = sbr.rel (%p319) target = $region48
    $region47: #{cross_pika_attention_layer.18} parent=5 // pred_region
      %s322 = ssub.s32 %s11, 2
      // Predicated region
      $region49: #{cross_pika_attention_layer.18} parent=47 // pred_check
        %p323 = pneg %p150
      $region50: #{cross_pika_attention_layer.18} parent=47 // pred_check_branch
        %325 = sbr.rel (%p323) target = $region52
      $region51: #{cross_pika_attention_layer.18} parent=47 // pred_region
        %p326 = scmp.lt.s32.totalorder %s17, 1
        %s327 = scalar_select %p326, %s17, 1
        %s328 = smul.addr %s327, 8
        %s329 = scalar_lea.vmem %s5, %s328
      $region52: #{cross_pika_attention_layer.18} parent=47 // pred_fallthru
        _
    $region48: #{cross_pika_attention_layer.18} parent=5 // pred_fallthru
      _
  $region6: #{cross_pika_attention_layer.18} parent=0 // loop_footer
    %s15 = sadd.s32 1, %s11
  $region7: #{cross_pika_attention_layer.18} parent=0 // loop_footer_branch
    %10 = sbr.rel target = $region3
  $region8: #{cross_pika_attention_layer.18} parent=0 // loop_exit
    _

// kernel: cross_pika_attention_layer.17
$region0: #{cross_pika_attention_layer.17}
  #allocation0 [shape = 'u32[]', space=smem, size = 0x4, offset = 0x4, fixed_abs, tag = 'smem constant byte address 0x4 - core index']
  #allocation1 [shape = 'u32[144,128]{1,0:T(1,128)}', space=vmem, size = 0x12000, scoped, tag = 'internal scratch']
  %s0 = inlined_call_operand.vmem [shape: f32[32,32], index: 0, kind: input, shape index: {}]
  %s1 = inlined_call_operand.vmem [shape: f32[1,32], index: 1, kind: input, shape index: {}]
  %s2 = inlined_call_operand.vmem [shape: f32[1,32], index: 2, kind: input, shape index: {}]
  %s3 = inlined_call_operand.vmem [shape: f32[32,32], index: 3, kind: output, shape index: {}]
  %s4 = sld [smem:[#allocation0]]
  $region45: #{cross_pika_attention_layer.17} parent=0
    _
  %s6 = ssub.s32 1, %s4
  %s7 = scalar_select 0, %s6, %s4
  loop: start=0, step=1, limit=4
  $region2: #{cross_pika_attention_layer.17} parent=0 // loop_pre_header
    _
  $region3: #{cross_pika_attention_layer.17} parent=0 // loop_header
    %s9 = sphi 0, %s13
    %p10 = scmp.ge.s32.totalorder %s9, 4
    %s19 = sphi 0, %s21
    %s22 = sphi 0, %s19
    %s23 = sphi 0, %s22
    %s39 = sphi 0, %s23
    %s43 = sphi 0, %s43
    %s45 = sphi 0, %s43
    %s46 = sphi 0, %s45
    %s60 = sphi 0, %s46
    %s64 = sphi 0, %s64
    %s66 = sphi 0, %s64
    %s67 = sphi 0, %s66
    %s81 = sphi 0, %s67
    %s87 = sphi 0, %s89
    %s90 = sphi 0, %s87
    %s91 = sphi 0, %s90
    %s107 = sphi 0, %s91
  $region4: #{cross_pika_attention_layer.17} parent=0 // loop_header_branch
    %12 = sbr.rel (%p10) target = $region8
  $region5: #{cross_pika_attention_layer.17} parent=0 // loop_body
    %s14 = ssub.s32 %s9, 1
    %s15 = ssub.s32 %s9, 2
    %s16 = sadd.s32 %s9, 1
    %s17 = ssub.s32 %s9, %s16
    %p18 = scmp.eq.s32.totalorder %s17, 0
    %s20 = sadd.s32 %s19, 1
    %s21 = scalar_select %p18, %s19, %s20
    %p24 = pneg %p18
    %p25 = scmp.eq.s32.totalorder %s9, 1
    %p26 = por %p24, %p25
    %p27 = scmp.ne.s32.totalorder %s19, %s22
    %p28 = scmp.eq.s32.totalorder %s9, 0
    %p29 = por %p27, %p28
    %p30 = scmp.ne.s32.totalorder %s19, %s22
    %p31 = scmp.eq.s32.totalorder %s14, 1
    %p32 = por %p30, %p31
    %p33 = scmp.ne.s32.totalorder %s22, %s23
    %p34 = scmp.eq.s32.totalorder %s14, 0
    %p35 = por %p33, %p34
    %p36 = scmp.ne.s32.totalorder %s22, %s23
    %p37 = scmp.eq.s32.totalorder %s15, 1
    %p38 = por %p36, %p37
    %p40 = scmp.ne.s32.totalorder %s23, %s39
    %p41 = scmp.eq.s32.totalorder %s15, 0
    %p42 = por %p40, %p41
    %s44 = sadd.s32 %s43, 1
    %p47 = scmp.eq.s32.totalorder %s9, 1
    %p48 = scmp.ne.s32.totalorder %s43, %s45
    %p49 = scmp.eq.s32.totalorder %s9, 0
    %p50 = por %p48, %p49
    %p51 = scmp.ne.s32.totalorder %s43, %s45
    %p52 = scmp.eq.s32.totalorder %s14, 1
    %p53 = por %p51, %p52
    %p54 = scmp.ne.s32.totalorder %s45, %s46
    %p55 = scmp.eq.s32.totalorder %s14, 0
    %p56 = por %p54, %p55
    %p57 = scmp.ne.s32.totalorder %s45, %s46
    %p58 = scmp.eq.s32.totalorder %s15, 1
    %p59 = por %p57, %p58
    %p61 = scmp.ne.s32.totalorder %s46, %s60
    %p62 = scmp.eq.s32.totalorder %s15, 0
    %p63 = por %p61, %p62
    %s65 = sadd.s32 %s64, 1
    %p68 = scmp.eq.s32.totalorder %s9, 1
    %p69 = scmp.ne.s32.totalorder %s64, %s66
    %p70 = scmp.eq.s32.totalorder %s9, 0
    %p71 = por %p69, %p70
    %p72 = scmp.ne.s32.totalorder %s64, %s66
    %p73 = scmp.eq.s32.totalorder %s14, 1
    %p74 = por %p72, %p73
    %p75 = scmp.ne.s32.totalorder %s66, %s67
    %p76 = scmp.eq.s32.totalorder %s14, 0
    %p77 = por %p75, %p76
    %p78 = scmp.ne.s32.totalorder %s66, %s67
    %p79 = scmp.eq.s32.totalorder %s15, 1
    %p80 = por %p78, %p79
    %p82 = scmp.ne.s32.totalorder %s67, %s81
    %p83 = scmp.eq.s32.totalorder %s15, 0
    %p84 = por %p82, %p83
    %s85 = ssub.s32 %s9, %s16
    %p86 = scmp.eq.s32.totalorder %s85, 0
    %s88 = sadd.s32 %s87, 1
    %s89 = scalar_select %p86, %s87, %s88
    %p92 = pneg %p86
    %p93 = scmp.eq.s32.totalorder %s9, 1
    %p94 = por %p92, %p93
    %p95 = scmp.ne.s32.totalorder %s87, %s90
    %p96 = scmp.eq.s32.totalorder %s9, 0
    %p97 = por %p95, %p96
    %p98 = scmp.ne.s32.totalorder %s87, %s90
    %p99 = scmp.eq.s32.totalorder %s14, 1
    %p100 = por %p98, %p99
    %p101 = scmp.ne.s32.totalorder %s90, %s91
    %p102 = scmp.eq.s32.totalorder %s14, 0
    %p103 = por %p101, %p102
    %p104 = scmp.ne.s32.totalorder %s90, %s91
    %p105 = scmp.eq.s32.totalorder %s15, 1
    %p106 = por %p104, %p105
    %p108 = scmp.ne.s32.totalorder %s91, %s107
    %p109 = scmp.eq.s32.totalorder %s15, 0
    %p110 = por %p108, %p109
    %p111 = scmp.le.s32.totalorder 1, %s9
    %p112 = scmp.lt.s32.totalorder %s9, 3
    %p113 = pnand %p111, %p112
    %p114 = pneg %p113
    // Predicated region
    $region9: #{cross_pika_attention_layer.17} parent=5 // pred_check
      _
    $region10: #{cross_pika_attention_layer.17} parent=5 // pred_check_branch
      %116 = sbr.rel (%p113) target = $region12
    $region11: #{cross_pika_attention_layer.17} parent=5 // pred_region
      %s117 = ssub.s32 %s9, 1
      // Predicated region
      $region13: #{cross_pika_attention_layer.17} parent=11 // pred_check
        %p118 = pneg %p56
      $region14: #{cross_pika_attention_layer.17} parent=11 // pred_check_branch
        %120 = sbr.rel (%p118) target = $region16
      $region15: #{cross_pika_attention_layer.17} parent=11 // pred_region
        _
      $region16: #{cross_pika_attention_layer.17} parent=11 // pred_fallthru
        _
      // Predicated region
      $region17: #{cross_pika_attention_layer.17} parent=11 // pred_check
        %p121 = pneg %p77
      $region18: #{cross_pika_attention_layer.17} parent=11 // pred_check_branch
        %123 = sbr.rel (%p121) target = $region20
      $region19: #{cross_pika_attention_layer.17} parent=11 // pred_region
        _
      $region20: #{cross_pika_attention_layer.17} parent=11 // pred_fallthru
        _
    $region12: #{cross_pika_attention_layer.17} parent=5 // pred_fallthru
      _
    %p124 = scmp.lt.s32.totalorder %s9, 2
    // Predicated region
    $region21: #{cross_pika_attention_layer.17} parent=5 // pred_check
      %p125 = pneg %p124
    $region22: #{cross_pika_attention_layer.17} parent=5 // pred_check_branch
      %127 = sbr.rel (%p125) target = $region24
    $region23: #{cross_pika_attention_layer.17} parent=5 // pred_region
      // Predicated region
      $region25: #{cross_pika_attention_layer.17} parent=23 // pred_check
        %p128 = pneg %p29
      $region26: #{cross_pika_attention_layer.17} parent=23 // pred_check_branch
        %130 = sbr.rel (%p128) target = $region28
      $region27: #{cross_pika_attention_layer.17} parent=23 // pred_region
        %s131 = smul.u32 2, %s9
        %p132 = scmp.lt.s32.totalorder %s131, 3
        %s133 = scalar_select %p132, %s131, 3
        %s134 = smul.addr %s133, 8
        %s135 = scalar_lea.vmem %s0, %s134
        %s136 = smul.u32 2, %s9
      $region28: #{cross_pika_attention_layer.17} parent=23 // pred_fallthru
        _
    $region24: #{cross_pika_attention_layer.17} parent=5 // pred_fallthru
      _
    %p137 = scmp.le.s32.totalorder 1, %s9
    %p138 = scmp.lt.s32.totalorder %s9, 3
    %p139 = pnand %p137, %p138
    %p140 = pneg %p139
    // Predicated region
    $region29: #{cross_pika_attention_layer.17} parent=5 // pred_check
      _
    $region30: #{cross_pika_attention_layer.17} parent=5 // pred_check_branch
      %142 = sbr.rel (%p139) target = $region32
    $region31: #{cross_pika_attention_layer.17} parent=5 // pred_region
      %s143 = ssub.s32 %s9, 1
      %s144 = smul.u32 2, %s14
      %p145 = scmp.lt.s32.totalorder %s144, 3
      %s146 = scalar_select %p145, %s144, 3
      %s147 = smul.addr %s146, 8
      %s148 = scalar_lea.vmem %s0, %s147
      %p149 = pneg %p35
      %p150 = pneg %p32
      %p151 = pneg %p56
      %p152 = pneg %p53
      %p153 = pneg %p77
      %p154 = pneg %p74
      %p155 = pneg %p103
      %p156 = pneg %p100
      %s157 = smul.u32 2, %s14
      %p158 = scmp.lt.s32.totalorder %s157, 3
      %s159 = scalar_select %p158, %s157, 3
      %s160 = smul.addr %s159, 8
      %s161 = scalar_lea.vmem %s3, %s160
      %s162 = smul.u32 2, %s14
      %p163 = scmp.lt.s32.totalorder %s162, 3
      %s164 = scalar_select %p163, %s162, 3
      %s165 = smul.addr %s164, 8
      %s166 = scalar_lea.vmem %s0, %s165
      %s167 = smul.u32 2, %s14
      %s168 = smul.u32 2, %s14
      %p169 = scmp.lt.s32.totalorder %s168, 3
      %s170 = scalar_select %p169, %s168, 3
      %s171 = smul.addr %s170, 8
      %s172 = scalar_lea.vmem %s3, %s171
      %s173 = smul.u32 2, %s14
      %v174 = vld [vmem:[%s166] sm:$0xff]
      %v175 = vld [vmem:[%s166 + $0x8] sm:$0xff]
      %v176 = vld [vmem:[%s1] sm:$0x1]
      %v177 = vld [vmem:[%s2] sm:$0x1]
      %vm178 = vcmask 261120
      %v179 = vsel %vm178, %v174, 0.0
      %180 = vadd.xlane.f32.xlu0 %v179
      %v181 = vpop.xlane.xlu0 %180
      %v182 = vsel %vm178, %v175, 0.0
      %183 = vadd.xlane.f32.xlu0 %v182
      %v184 = vpop.xlane.xlu0 %183
      %v185 = vrcp.pop 32.0
      %v186 = vmul.f32 %v181, %v185
      %v187 = vmul.f32 %v184, %v185
      %v188 = vsub.f32 %v174, %v186
      %v189 = vsub.f32 %v175, %v187
      %v190 = vmul.f32 %v188, %v188
      %v191 = vmul.f32 %v189, %v189
      %v192 = vsel %vm178, %v190, 0.0
      %193 = vadd.xlane.f32.xlu0 %v192
      %v194 = vpop.xlane.xlu0 %193
      %v195 = vsel %vm178, %v191, 0.0
      %196 = vadd.xlane.f32.xlu0 %v195
      %v197 = vpop.xlane.xlu0 %196
      %v198 = vmul.f32 %v194, %v185
      %v199 = vmul.f32 %v197, %v185
      %v200 = vadd.f32 %v198, 1e-05
      %v201 = vadd.f32 %v199, 1e-05
      %v202 = vrsqrt.pop %v200
      %v203 = vrsqrt.pop %v201
      %v204 = vmul.f32 %v188, %v202
      %v205 = vmul.f32 %v189, %v203
      %v207 = vlaneseq
      %v208 = vshrl.u32 %v207, 7
      %v209 = vsub.s32 0, %v208
      %v210 = vrot.slane %v176, %v209
      %v212 = vmul.f32 %v204, %v210
      %v213 = vmul.f32 %v205, %v210
      %v215 = vlaneseq
      %v216 = vshrl.u32 %v215, 7
      %v217 = vsub.s32 0, %v216
      %v218 = vrot.slane %v177, %v217
      %v220 = vadd.f32 %v212, %v218
      %v221 = vadd.f32 %v213, %v218
      %222 = vst.msk [vmem:[%s172] sm:$0xff] %vm178, %v220
      %223 = vst.msk [vmem:[%s172 + $0x8] sm:$0xff] %vm178, %v221
      %s224 = smul.u32 2, %s14
      %p225 = scmp.lt.s32.totalorder %s224, 3
      %s226 = scalar_select %p225, %s224, 3
      %s227 = smul.addr %s226, 8
      %s228 = scalar_lea.vmem %s3, %s227
      // Predicated region
      $region33: #{cross_pika_attention_layer.17} parent=31 // pred_check
        %p229 = pneg %p100
      $region34: #{cross_pika_attention_layer.17} parent=31 // pred_check_branch
        %231 = sbr.rel (%p229) target = $region36
      $region35: #{cross_pika_attention_layer.17} parent=31 // pred_region
        %s232 = smul.u32 2, %s14
      $region36: #{cross_pika_attention_layer.17} parent=31 // pred_fallthru
        _
    $region32: #{cross_pika_attention_layer.17} parent=5 // pred_fallthru
      _
    %p233 = scmp.le.s32.totalorder 2, %s9
    // Predicated region
    $region37: #{cross_pika_attention_layer.17} parent=5 // pred_check
      %p234 = pneg %p233
    $region38: #{cross_pika_attention_layer.17} parent=5 // pred_check_branch
      %236 = sbr.rel (%p234) target = $region40
    $region39: #{cross_pika_attention_layer.17} parent=5 // pred_region
      %s237 = ssub.s32 %s9, 2
      // Predicated region
      $region41: #{cross_pika_attention_layer.17} parent=39 // pred_check
        %p238 = pneg %p106
      $region42: #{cross_pika_attention_layer.17} parent=39 // pred_check_branch
        %240 = sbr.rel (%p238) target = $region44
      $region43: #{cross_pika_attention_layer.17} parent=39 // pred_region
        %s241 = smul.u32 2, %s15
        %p242 = scmp.lt.s32.totalorder %s241, 3
        %s243 = scalar_select %p242, %s241, 3
        %s244 = smul.addr %s243, 8
        %s245 = scalar_lea.vmem %s3, %s244
      $region44: #{cross_pika_attention_layer.17} parent=39 // pred_fallthru
        _
    $region40: #{cross_pika_attention_layer.17} parent=5 // pred_fallthru
      _
  $region6: #{cross_pika_attention_layer.17} parent=0 // loop_footer
    %s13 = sadd.s32 1, %s9
  $region7: #{cross_pika_attention_layer.17} parent=0 // loop_footer_branch
    %8 = sbr.rel target = $region3
  $region8: #{cross_pika_attention_layer.17} parent=0 // loop_exit
    _

// kernel: cross_pika_attention_layer.19
$region0: #{cross_pika_attention_layer.19}
  #allocation0 [shape = 'u32[]', space=smem, size = 0x4, offset = 0x4, fixed_abs, tag = 'smem constant byte address 0x4 - core index']
  #allocation1 [shape = 'u32[144,128]{1,0:T(1,128)}', space=vmem, size = 0x12000, scoped, tag = 'internal scratch']
  %s0 = inlined_call_operand.vmem [shape: f32[32,32], index: 0, kind: input, shape index: {}]
  %s1 = inlined_call_operand.vmem [shape: f32[1,32], index: 1, kind: input, shape index: {}]
  %s2 = inlined_call_operand.vmem [shape: f32[1,32], index: 2, kind: input, shape index: {}]
  %s3 = inlined_call_operand.vmem [shape: f32[32,32], index: 3, kind: input, shape index: {}]
  %s4 = inlined_call_operand.vmem [shape: f32[1,32], index: 4, kind: input, shape index: {}]
  %s5 = inlined_call_operand.vmem [shape: f32[32,32], index: 5, kind: input, shape index: {}]
  %s6 = inlined_call_operand.vmem [shape: f32[1,32], index: 6, kind: input, shape index: {}]
  %s7 = inlined_call_operand.vmem [shape: f32[32,32], index: 7, kind: output, shape index: {0}]
  %s8 = inlined_call_operand.vmem [shape: f32[32,32], index: 8, kind: output, shape index: {1}]
  %9 = xla_tuple %s7, %s8
  %s10 = sld [smem:[#allocation0]]
  $region69: #{cross_pika_attention_layer.19} parent=0
    _
  %s12 = ssub.s32 1, %s10
  %s13 = scalar_select 0, %s12, %s10
  loop: start=0, step=1, limit=4
  $region2: #{cross_pika_attention_layer.19} parent=0 // loop_pre_header
    _
  $region3: #{cross_pika_attention_layer.19} parent=0 // loop_header
    %s15 = sphi 0, %s19
    %p16 = scmp.ge.s32.totalorder %s15, 4
    %s25 = sphi 0, %s27
    %s28 = sphi 0, %s25
    %s29 = sphi 0, %s28
    %s45 = sphi 0, %s29
    %s49 = sphi 0, %s49
    %s51 = sphi 0, %s49
    %s52 = sphi 0, %s51
    %s66 = sphi 0, %s52
    %s70 = sphi 0, %s70
    %s72 = sphi 0, %s70
    %s73 = sphi 0, %s72
    %s87 = sphi 0, %s73
    %s91 = sphi 0, %s91
    %s93 = sphi 0, %s91
    %s94 = sphi 0, %s93
    %s108 = sphi 0, %s94
    %s112 = sphi 0, %s112
    %s114 = sphi 0, %s112
    %s115 = sphi 0, %s114
    %s129 = sphi 0, %s115
    %s133 = sphi 0, %s133
    %s135 = sphi 0, %s133
    %s136 = sphi 0, %s135
    %s150 = sphi 0, %s136
    %s154 = sphi 0, %s154
    %s156 = sphi 0, %s154
    %s157 = sphi 0, %s156
    %s171 = sphi 0, %s157
    %s177 = sphi 0, %s179
    %s180 = sphi 0, %s177
    %s181 = sphi 0, %s180
    %s197 = sphi 0, %s181
    %s203 = sphi 0, %s205
    %s206 = sphi 0, %s203
    %s207 = sphi 0, %s206
    %s223 = sphi 0, %s207
  $region4: #{cross_pika_attention_layer.19} parent=0 // loop_header_branch
    %18 = sbr.rel (%p16) target = $region8
  $region5: #{cross_pika_attention_layer.19} parent=0 // loop_body
    %s20 = ssub.s32 %s15, 1
    %s21 = ssub.s32 %s15, 2
    %s22 = sadd.s32 %s15, 1
    %s23 = ssub.s32 %s15, %s22
    %p24 = scmp.eq.s32.totalorder %s23, 0
    %s26 = sadd.s32 %s25, 1
    %s27 = scalar_select %p24, %s25, %s26
    %p30 = pneg %p24
    %p31 = scmp.eq.s32.totalorder %s15, 1
    %p32 = por %p30, %p31
    %p33 = scmp.ne.s32.totalorder %s25, %s28
    %p34 = scmp.eq.s32.totalorder %s15, 0
    %p35 = por %p33, %p34
    %p36 = scmp.ne.s32.totalorder %s25, %s28
    %p37 = scmp.eq.s32.totalorder %s20, 1
    %p38 = por %p36, %p37
    %p39 = scmp.ne.s32.totalorder %s28, %s29
    %p40 = scmp.eq.s32.totalorder %s20, 0
    %p41 = por %p39, %p40
    %p42 = scmp.ne.s32.totalorder %s28, %s29
    %p43 = scmp.eq.s32.totalorder %s21, 1
    %p44 = por %p42, %p43
    %p46 = scmp.ne.s32.totalorder %s29, %s45
    %p47 = scmp.eq.s32.totalorder %s21, 0
    %p48 = por %p46, %p47
    %s50 = sadd.s32 %s49, 1
    %p53 = scmp.eq.s32.totalorder %s15, 1
    %p54 = scmp.ne.s32.totalorder %s49, %s51
    %p55 = scmp.eq.s32.totalorder %s15, 0
    %p56 = por %p54, %p55
    %p57 = scmp.ne.s32.totalorder %s49, %s51
    %p58 = scmp.eq.s32.totalorder %s20, 1
    %p59 = por %p57, %p58
    %p60 = scmp.ne.s32.totalorder %s51, %s52
    %p61 = scmp.eq.s32.totalorder %s20, 0
    %p62 = por %p60, %p61
    %p63 = scmp.ne.s32.totalorder %s51, %s52
    %p64 = scmp.eq.s32.totalorder %s21, 1
    %p65 = por %p63, %p64
    %p67 = scmp.ne.s32.totalorder %s52, %s66
    %p68 = scmp.eq.s32.totalorder %s21, 0
    %p69 = por %p67, %p68
    %s71 = sadd.s32 %s70, 1
    %p74 = scmp.eq.s32.totalorder %s15, 1
    %p75 = scmp.ne.s32.totalorder %s70, %s72
    %p76 = scmp.eq.s32.totalorder %s15, 0
    %p77 = por %p75, %p76
    %p78 = scmp.ne.s32.totalorder %s70, %s72
    %p79 = scmp.eq.s32.totalorder %s20, 1
    %p80 = por %p78, %p79
    %p81 = scmp.ne.s32.totalorder %s72, %s73
    %p82 = scmp.eq.s32.totalorder %s20, 0
    %p83 = por %p81, %p82
    %p84 = scmp.ne.s32.totalorder %s72, %s73
    %p85 = scmp.eq.s32.totalorder %s21, 1
    %p86 = por %p84, %p85
    %p88 = scmp.ne.s32.totalorder %s73, %s87
    %p89 = scmp.eq.s32.totalorder %s21, 0
    %p90 = por %p88, %p89
    %s92 = sadd.s32 %s91, 1
    %p95 = scmp.eq.s32.totalorder %s15, 1
    %p96 = scmp.ne.s32.totalorder %s91, %s93
    %p97 = scmp.eq.s32.totalorder %s15, 0
    %p98 = por %p96, %p97
    %p99 = scmp.ne.s32.totalorder %s91, %s93
    %p100 = scmp.eq.s32.totalorder %s20, 1
    %p101 = por %p99, %p100
    %p102 = scmp.ne.s32.totalorder %s93, %s94
    %p103 = scmp.eq.s32.totalorder %s20, 0
    %p104 = por %p102, %p103
    %p105 = scmp.ne.s32.totalorder %s93, %s94
    %p106 = scmp.eq.s32.totalorder %s21, 1
    %p107 = por %p105, %p106
    %p109 = scmp.ne.s32.totalorder %s94, %s108
    %p110 = scmp.eq.s32.totalorder %s21, 0
    %p111 = por %p109, %p110
    %s113 = sadd.s32 %s112, 1
    %p116 = scmp.eq.s32.totalorder %s15, 1
    %p117 = scmp.ne.s32.totalorder %s112, %s114
    %p118 = scmp.eq.s32.totalorder %s15, 0
    %p119 = por %p117, %p118
    %p120 = scmp.ne.s32.totalorder %s112, %s114
    %p121 = scmp.eq.s32.totalorder %s20, 1
    %p122 = por %p120, %p121
    %p123 = scmp.ne.s32.totalorder %s114, %s115
    %p124 = scmp.eq.s32.totalorder %s20, 0
    %p125 = por %p123, %p124
    %p126 = scmp.ne.s32.totalorder %s114, %s115
    %p127 = scmp.eq.s32.totalorder %s21, 1
    %p128 = por %p126, %p127
    %p130 = scmp.ne.s32.totalorder %s115, %s129
    %p131 = scmp.eq.s32.totalorder %s21, 0
    %p132 = por %p130, %p131
    %s134 = sadd.s32 %s133, 1
    %p137 = scmp.eq.s32.totalorder %s15, 1
    %p138 = scmp.ne.s32.totalorder %s133, %s135
    %p139 = scmp.eq.s32.totalorder %s15, 0
    %p140 = por %p138, %p139
    %p141 = scmp.ne.s32.totalorder %s133, %s135
    %p142 = scmp.eq.s32.totalorder %s20, 1
    %p143 = por %p141, %p142
    %p144 = scmp.ne.s32.totalorder %s135, %s136
    %p145 = scmp.eq.s32.totalorder %s20, 0
    %p146 = por %p144, %p145
    %p147 = scmp.ne.s32.totalorder %s135, %s136
    %p148 = scmp.eq.s32.totalorder %s21, 1
    %p149 = por %p147, %p148
    %p151 = scmp.ne.s32.totalorder %s136, %s150
    %p152 = scmp.eq.s32.totalorder %s21, 0
    %p153 = por %p151, %p152
    %s155 = sadd.s32 %s154, 1
    %p158 = scmp.eq.s32.totalorder %s15, 1
    %p159 = scmp.ne.s32.totalorder %s154, %s156
    %p160 = scmp.eq.s32.totalorder %s15, 0
    %p161 = por %p159, %p160
    %p162 = scmp.ne.s32.totalorder %s154, %s156
    %p163 = scmp.eq.s32.totalorder %s20, 1
    %p164 = por %p162, %p163
    %p165 = scmp.ne.s32.totalorder %s156, %s157
    %p166 = scmp.eq.s32.totalorder %s20, 0
    %p167 = por %p165, %p166
    %p168 = scmp.ne.s32.totalorder %s156, %s157
    %p169 = scmp.eq.s32.totalorder %s21, 1
    %p170 = por %p168, %p169
    %p172 = scmp.ne.s32.totalorder %s157, %s171
    %p173 = scmp.eq.s32.totalorder %s21, 0
    %p174 = por %p172, %p173
    %s175 = ssub.s32 %s15, %s22
    %p176 = scmp.eq.s32.totalorder %s175, 0
    %s178 = sadd.s32 %s177, 1
    %s179 = scalar_select %p176, %s177, %s178
    %p182 = pneg %p176
    %p183 = scmp.eq.s32.totalorder %s15, 1
    %p184 = por %p182, %p183
    %p185 = scmp.ne.s32.totalorder %s177, %s180
    %p186 = scmp.eq.s32.totalorder %s15, 0
    %p187 = por %p185, %p186
    %p188 = scmp.ne.s32.totalorder %s177, %s180
    %p189 = scmp.eq.s32.totalorder %s20, 1
    %p190 = por %p188, %p189
    %p191 = scmp.ne.s32.totalorder %s180, %s181
    %p192 = scmp.eq.s32.totalorder %s20, 0
    %p193 = por %p191, %p192
    %p194 = scmp.ne.s32.totalorder %s180, %s181
    %p195 = scmp.eq.s32.totalorder %s21, 1
    %p196 = por %p194, %p195
    %p198 = scmp.ne.s32.totalorder %s181, %s197
    %p199 = scmp.eq.s32.totalorder %s21, 0
    %p200 = por %p198, %p199
    %s201 = ssub.s32 %s15, %s22
    %p202 = scmp.eq.s32.totalorder %s201, 0
    %s204 = sadd.s32 %s203, 1
    %s205 = scalar_select %p202, %s203, %s204
    %p208 = pneg %p202
    %p209 = scmp.eq.s32.totalorder %s15, 1
    %p210 = por %p208, %p209
    %p211 = scmp.ne.s32.totalorder %s203, %s206
    %p212 = scmp.eq.s32.totalorder %s15, 0
    %p213 = por %p211, %p212
    %p214 = scmp.ne.s32.totalorder %s203, %s206
    %p215 = scmp.eq.s32.totalorder %s20, 1
    %p216 = por %p214, %p215
    %p217 = scmp.ne.s32.totalorder %s206, %s207
    %p218 = scmp.eq.s32.totalorder %s20, 0
    %p219 = por %p217, %p218
    %p220 = scmp.ne.s32.totalorder %s206, %s207
    %p221 = scmp.eq.s32.totalorder %s21, 1
    %p222 = por %p220, %p221
    %p224 = scmp.ne.s32.totalorder %s207, %s223
    %p225 = scmp.eq.s32.totalorder %s21, 0
    %p226 = por %p224, %p225
    %p227 = scmp.le.s32.totalorder 1, %s15
    %p228 = scmp.lt.s32.totalorder %s15, 3
    %p229 = pnand %p227, %p228
    %p230 = pneg %p229
    // Predicated region
    $region9: #{cross_pika_attention_layer.19} parent=5 // pred_check
      _
    $region10: #{cross_pika_attention_layer.19} parent=5 // pred_check_branch
      %232 = sbr.rel (%p229) target = $region12
    $region11: #{cross_pika_attention_layer.19} parent=5 // pred_region
      %s233 = ssub.s32 %s15, 1
      // Predicated region
      $region13: #{cross_pika_attention_layer.19} parent=11 // pred_check
        %p234 = pneg %p62
      $region14: #{cross_pika_attention_layer.19} parent=11 // pred_check_branch
        %236 = sbr.rel (%p234) target = $region16
      $region15: #{cross_pika_attention_layer.19} parent=11 // pred_region
        _
      $region16: #{cross_pika_attention_layer.19} parent=11 // pred_fallthru
        _
      // Predicated region
      $region17: #{cross_pika_attention_layer.19} parent=11 // pred_check
        %p237 = pneg %p83
      $region18: #{cross_pika_attention_layer.19} parent=11 // pred_check_branch
        %239 = sbr.rel (%p237) target = $region20
      $region19: #{cross_pika_attention_layer.19} parent=11 // pred_region
        _
      $region20: #{cross_pika_attention_layer.19} parent=11 // pred_fallthru
        _
      // Predicated region
      $region21: #{cross_pika_attention_layer.19} parent=11 // pred_check
        %p240 = pneg %p104
      $region22: #{cross_pika_attention_layer.19} parent=11 // pred_check_branch
        %242 = sbr.rel (%p240) target = $region24
      $region23: #{cross_pika_attention_layer.19} parent=11 // pred_region
        _
      $region24: #{cross_pika_attention_layer.19} parent=11 // pred_fallthru
        _
      // Predicated region
      $region25: #{cross_pika_attention_layer.19} parent=11 // pred_check
        %p243 = pneg %p125
      $region26: #{cross_pika_attention_layer.19} parent=11 // pred_check_branch
        %245 = sbr.rel (%p243) target = $region28
      $region27: #{cross_pika_attention_layer.19} parent=11 // pred_region
        _
      $region28: #{cross_pika_attention_layer.19} parent=11 // pred_fallthru
        _
      // Predicated region
      $region29: #{cross_pika_attention_layer.19} parent=11 // pred_check
        %p246 = pneg %p146
      $region30: #{cross_pika_attention_layer.19} parent=11 // pred_check_branch
        %248 = sbr.rel (%p246) target = $region32
      $region31: #{cross_pika_attention_layer.19} parent=11 // pred_region
        _
      $region32: #{cross_pika_attention_layer.19} parent=11 // pred_fallthru
        _
      // Predicated region
      $region33: #{cross_pika_attention_layer.19} parent=11 // pred_check
        %p249 = pneg %p167
      $region34: #{cross_pika_attention_layer.19} parent=11 // pred_check_branch
        %251 = sbr.rel (%p249) target = $region36
      $region35: #{cross_pika_attention_layer.19} parent=11 // pred_region
        _
      $region36: #{cross_pika_attention_layer.19} parent=11 // pred_fallthru
        _
    $region12: #{cross_pika_attention_layer.19} parent=5 // pred_fallthru
      _
    %p252 = scmp.lt.s32.totalorder %s15, 2
    // Predicated region
    $region37: #{cross_pika_attention_layer.19} parent=5 // pred_check
      %p253 = pneg %p252
    $region38: #{cross_pika_attention_layer.19} parent=5 // pred_check_branch
      %255 = sbr.rel (%p253) target = $region40
    $region39: #{cross_pika_attention_layer.19} parent=5 // pred_region
      // Predicated region
      $region41: #{cross_pika_attention_layer.19} parent=39 // pred_check
        %p256 = pneg %p35
      $region42: #{cross_pika_attention_layer.19} parent=39 // pred_check_branch
        %258 = sbr.rel (%p256) target = $region44
      $region43: #{cross_pika_attention_layer.19} parent=39 // pred_region
        %s259 = smul.u32 2, %s15
        %p260 = scmp.lt.s32.totalorder %s259, 3
        %s261 = scalar_select %p260, %s259, 3
        %s262 = smul.addr %s261, 8
        %s263 = scalar_lea.vmem %s0, %s262
        %s264 = smul.u32 2, %s15
      $region44: #{cross_pika_attention_layer.19} parent=39 // pred_fallthru
        _
    $region40: #{cross_pika_attention_layer.19} parent=5 // pred_fallthru
      _
    %p265 = scmp.le.s32.totalorder 1, %s15
    %p266 = scmp.lt.s32.totalorder %s15, 3
    %p267 = pnand %p265, %p266
    %p268 = pneg %p267
    // Predicated region
    $region45: #{cross_pika_attention_layer.19} parent=5 // pred_check
      _
    $region46: #{cross_pika_attention_layer.19} parent=5 // pred_check_branch
      %270 = sbr.rel (%p267) target = $region48
    $region47: #{cross_pika_attention_layer.19} parent=5 // pred_region
      %s271 = ssub.s32 %s15, 1
      %s272 = smul.u32 2, %s20
      %p273 = scmp.lt.s32.totalorder %s272, 3
      %s274 = scalar_select %p273, %s272, 3
      %s275 = smul.addr %s274, 8
      %s276 = scalar_lea.vmem %s0, %s275
      %p277 = pneg %p41
      %p278 = pneg %p38
      %p279 = pneg %p62
      %p280 = pneg %p59
      %p281 = pneg %p83
      %p282 = pneg %p80
      %p283 = pneg %p104
      %p284 = pneg %p101
      %p285 = pneg %p125
      %p286 = pneg %p122
      %p287 = pneg %p146
      %p288 = pneg %p143
      %p289 = pneg %p167
      %p290 = pneg %p164
      %p291 = pneg %p193
      %p292 = pneg %p190
      %s293 = smul.u32 2, %s20
      %p294 = scmp.lt.s32.totalorder %s293, 3
      %s295 = scalar_select %p294, %s293, 3
      %s296 = smul.addr %s295, 8
      %s297 = scalar_lea.vmem %s7, %s296
      %p298 = pneg %p219
      %p299 = pneg %p216
      %s300 = smul.u32 2, %s20
      %p301 = scmp.lt.s32.totalorder %s300, 3
      %s302 = scalar_select %p301, %s300, 3
      %s303 = smul.addr %s302, 8
      %s304 = scalar_lea.vmem %s8, %s303
      %s305 = smul.u32 2, %s20
      %p306 = scmp.lt.s32.totalorder %s305, 3
      %s307 = scalar_select %p306, %s305, 3
      %s308 = smul.addr %s307, 8
      %s309 = scalar_lea.vmem %s0, %s308
      %s310 = smul.u32 2, %s20
      %s311 = smul.u32 2, %s20
      %p312 = scmp.lt.s32.totalorder %s311, 3
      %s313 = scalar_select %p312, %s311, 3
      %s314 = smul.addr %s313, 8
      %s315 = scalar_lea.vmem %s7, %s314
      %s316 = smul.u32 2, %s20
      %s317 = smul.u32 2, %s20
      %p318 = scmp.lt.s32.totalorder %s317, 3
      %s319 = scalar_select %p318, %s317, 3
      %s320 = smul.addr %s319, 8
      %s321 = scalar_lea.vmem %s8, %s320
      %s322 = smul.u32 2, %s20
      %v324 = vld [vmem:[%s309] sm:$0xff]
      %v325 = vld [vmem:[%s309 + $0x8] sm:$0xff]
      %v326 = vld [vmem:[%s1] sm:$0x1]
      %v327 = vld [vmem:[%s2] sm:$0x1]
      %vm328 = vcmask 261120
      %v329 = vsel %vm328, %v324, 0.0
      %330 = vadd.xlane.f32.xlu0 %v329
      %v331 = vpop.xlane.xlu0 %330
      %v332 = vsel %vm328, %v325, 0.0
      %333 = vadd.xlane.f32.xlu0 %v332
      %v334 = vpop.xlane.xlu0 %333
      %v335 = vrcp.pop 32.0
      %v336 = vmul.f32 %v331, %v335
      %v337 = vmul.f32 %v334, %v335
      %v338 = vsub.f32 %v324, %v336
      %v339 = vsub.f32 %v325, %v337
      %v340 = vmul.f32 %v338, %v338
      %v341 = vmul.f32 %v339, %v339
      %v342 = vsel %vm328, %v340, 0.0
      %343 = vadd.xlane.f32.xlu0 %v342
      %v344 = vpop.xlane.xlu0 %343
      %v345 = vsel %vm328, %v341, 0.0
      %346 = vadd.xlane.f32.xlu0 %v345
      %v347 = vpop.xlane.xlu0 %346
      %v348 = vmul.f32 %v344, %v335
      %v349 = vmul.f32 %v347, %v335
      %v350 = vadd.f32 %v348, 1e-05
      %v351 = vadd.f32 %v349, 1e-05
      %v352 = vrsqrt.pop %v350
      %v353 = vrsqrt.pop %v351
      %v354 = vmul.f32 %v338, %v352
      %v355 = vmul.f32 %v339, %v353
      %v357 = vlaneseq
      %v358 = vshrl.u32 %v357, 7
      %v359 = vsub.s32 0, %v358
      %v360 = vrot.slane %v326, %v359
      %v362 = vmul.f32 %v354, %v360
      %v363 = vmul.f32 %v355, %v360
      %v365 = vlaneseq
      %v366 = vshrl.u32 %v365, 7
      %v367 = vsub.s32 0, %v366
      %v368 = vrot.slane %v327, %v367
      %v370 = vadd.f32 %v362, %v368
      %v371 = vadd.f32 %v363, %v368
      %v372 = vpack.c.bf16 %v371, %v370
      %v373 = vld [vmem:[%s3] sm:$0xff]
      %v374 = vld [vmem:[%s3 + $0x8] sm:$0xff]
      %v375 = vld [vmem:[%s3 + $0x10] sm:$0xff]
      %v376 = vld [vmem:[%s3 + $0x18] sm:$0xff]
      %v377 = vpack.c.bf16 %v374, %v373
      %v378 = vpack.c.bf16 %v376, %v375
      %v379 = vld [vmem:[%s4] sm:$0x1]
      %v381 = vlaneseq
      %v382 = vshrl.u32 %v381, 7
      %v383 = vsub.s32 0, %v382
      %v384 = vrot.slane %v379, %v383
      %v387 = vsel %vm328, %v372, 0
      %389 = vmatprep.subr.bf16.mxu0 0
      %390 = vmatpush1.bf16.msra.mxu0 0
      %391 = vmatprep.subr.bf16.mxu0 0
      %392 = vmatpush1.bf16.msra.mxu0 0
      %393 = vmatprep.subr.bf16.mxu0 0
      %394 = vmatpush1.bf16.msra.mxu0 0
      %395 = vmatprep.subr.bf16.mxu0 0
      %396 = vmatpush1.bf16.msra.mxu0 0
      %397 = vmatprep.subr.bf16.mxu0 0
      %398 = vmatpush1.bf16.msra.mxu0 0
      %399 = vmatprep.subr.bf16.mxu0 0
      %400 = vmatpush1.bf16.msra.mxu0 0
      %401 = vmatprep.subr.bf16.mxu0 0
      %402 = vmatpush1.bf16.msra.mxu0 %v378
      %403 = vmatprep.subr.bf16.mxu0 0
      %404 = vmatpush1.bf16.msra.mxu0 %v377
      %405 = vmatprep.subr.bf16.mxu0 0
      %406 = vmatpush2.bf16.msra.mxu0 0
      %407 = vmatprep.subr.bf16.mxu0 0
      %408 = vmatpush2.bf16.msra.mxu0 0
      %409 = vmatprep.subr.bf16.mxu0 0
      %410 = vmatpush2.bf16.msra.mxu0 0
      %411 = vmatprep.subr.bf16.mxu0 0
      %412 = vmatpush2.bf16.msra.mxu0 0
      %413 = vmatprep.subr.bf16.mxu0 0
      %414 = vmatpush2.bf16.msra.mxu0 0
      %415 = vmatprep.subr.bf16.mxu0 0
      %416 = vmatpush2.bf16.msra.mxu0 0
      %417 = vmatprep.subr.bf16.mxu0 0
      %418 = vmatpush2.bf16.msra.mxu0 0
      %419 = vmatprep.subr.bf16.mxu0 0
      %420 = vmatpush2.bf16.msra.mxu0 0
      %421 = vmatprep.mubr.bf16.mxu0 0
      %422 = vmatmul.mubr.bf16.gmra.mxu0 %v387
      %v423 = vpop.f32.mrf.mxu0
      %v424 = vadd.f32 %v384, %v423
      %v425 = vpop.f32.mrf.mxu0
      %v426 = vpop.f32.mrf.mxu0
      %v427 = vadd.f32 %v384, %v426
      %v428 = vpop.f32.mrf.mxu0
      %429 = vdwg.mxu0
      %430 = vst.msk [vmem:[%s315] sm:$0xff] %vm328, %v424
      %431 = vst.msk [vmem:[%s315 + $0x8] sm:$0xff] %vm328, %v427
      %v432 = vld [vmem:[%s5] sm:$0xff]
      %v433 = vld [vmem:[%s5 + $0x8] sm:$0xff]
      %v434 = vld [vmem:[%s5 + $0x10] sm:$0xff]
      %v435 = vld [vmem:[%s5 + $0x18] sm:$0xff]
      %v436 = vpack.c.bf16 %v433, %v432
      %v437 = vpack.c.bf16 %v435, %v434
      %v438 = vld [vmem:[%s6] sm:$0x1]
      %v440 = vlaneseq
      %v441 = vshrl.u32 %v440, 7
      %v442 = vsub.s32 0, %v441
      %v443 = vrot.slane %v438, %v442
      %445 = vmatprep.subr.bf16.mxu0 0
      %446 = vmatpush1.bf16.msra.mxu0 0
      %447 = vmatprep.subr.bf16.mxu0 0
      %448 = vmatpush1.bf16.msra.mxu0 0
      %449 = vmatprep.subr.bf16.mxu0 0
      %450 = vmatpush1.bf16.msra.mxu0 0
      %451 = vmatprep.subr.bf16.mxu0 0
      %452 = vmatpush1.bf16.msra.mxu0 0
      %453 = vmatprep.subr.bf16.mxu0 0
      %454 = vmatpush1.bf16.msra.mxu0 0
      %455 = vmatprep.subr.bf16.mxu0 0
      %456 = vmatpush1.bf16.msra.mxu0 0
      %457 = vmatprep.subr.bf16.mxu0 0
      %458 = vmatpush1.bf16.msra.mxu0 %v437
      %459 = vmatprep.subr.bf16.mxu0 0
      %460 = vmatpush1.bf16.msra.mxu0 %v436
      %461 = vmatprep.subr.bf16.mxu0 0
      %462 = vmatpush2.bf16.msra.mxu0 0
      %463 = vmatprep.subr.bf16.mxu0 0
      %464 = vmatpush2.bf16.msra.mxu0 0
      %465 = vmatprep.subr.bf16.mxu0 0
      %466 = vmatpush2.bf16.msra.mxu0 0
      %467 = vmatprep.subr.bf16.mxu0 0
      %468 = vmatpush2.bf16.msra.mxu0 0
      %469 = vmatprep.subr.bf16.mxu0 0
      %470 = vmatpush2.bf16.msra.mxu0 0
      %471 = vmatprep.subr.bf16.mxu0 0
      %472 = vmatpush2.bf16.msra.mxu0 0
      %473 = vmatprep.subr.bf16.mxu0 0
      %474 = vmatpush2.bf16.msra.mxu0 0
      %475 = vmatprep.subr.bf16.mxu0 0
      %476 = vmatpush2.bf16.msra.mxu0 0
      %477 = vmatprep.mubr.bf16.mxu0 0
      %478 = vmatmul.mubr.bf16.gmra.mxu0 %v387
      %v479 = vpop.f32.mrf.mxu0
      %v480 = vadd.f32 %v443, %v479
      %v481 = vpop.f32.mrf.mxu0
      %v482 = vpop.f32.mrf.mxu0
      %v483 = vadd.f32 %v443, %v482
      %v484 = vpop.f32.mrf.mxu0
      %485 = vdwg.mxu0
      %486 = vst.msk [vmem:[%s321] sm:$0xff] %vm328, %v480
      %487 = vst.msk [vmem:[%s321 + $0x8] sm:$0xff] %vm328, %v483
      %s488 = smul.u32 2, %s20
      %p489 = scmp.lt.s32.totalorder %s488, 3
      %s490 = scalar_select %p489, %s488, 3
      %s491 = smul.addr %s490, 8
      %s492 = scalar_lea.vmem %s7, %s491
      %s493 = smul.u32 2, %s20
      %p494 = scmp.lt.s32.totalorder %s493, 3
      %s495 = scalar_select %p494, %s493, 3
      %s496 = smul.addr %s495, 8
      %s497 = scalar_lea.vmem %s8, %s496
      // Predicated region
      $region49: #{cross_pika_attention_layer.19} parent=47 // pred_check
        %p498 = pneg %p190
      $region50: #{cross_pika_attention_layer.19} parent=47 // pred_check_branch
        %500 = sbr.rel (%p498) target = $region52
      $region51: #{cross_pika_attention_layer.19} parent=47 // pred_region
        %s501 = smul.u32 2, %s20
      $region52: #{cross_pika_attention_layer.19} parent=47 // pred_fallthru
        _
      // Predicated region
      $region53: #{cross_pika_attention_layer.19} parent=47 // pred_check
        %p502 = pneg %p216
      $region54: #{cross_pika_attention_layer.19} parent=47 // pred_check_branch
        %504 = sbr.rel (%p502) target = $region56
      $region55: #{cross_pika_attention_layer.19} parent=47 // pred_region
        %s505 = smul.u32 2, %s20
      $region56: #{cross_pika_attention_layer.19} parent=47 // pred_fallthru
        _
    $region48: #{cross_pika_attention_layer.19} parent=5 // pred_fallthru
      _
    %p506 = scmp.le.s32.totalorder 2, %s15
    // Predicated region
    $region57: #{cross_pika_attention_layer.19} parent=5 // pred_check
      %p507 = pneg %p506
    $region58: #{cross_pika_attention_layer.19} parent=5 // pred_check_branch
      %509 = sbr.rel (%p507) target = $region60
    $region59: #{cross_pika_attention_layer.19} parent=5 // pred_region
      %s510 = ssub.s32 %s15, 2
      // Predicated region
      $region61: #{cross_pika_attention_layer.19} parent=59 // pred_check
        %p511 = pneg %p196
      $region62: #{cross_pika_attention_layer.19} parent=59 // pred_check_branch
        %513 = sbr.rel (%p511) target = $region64
      $region63: #{cross_pika_attention_layer.19} parent=59 // pred_region
        %s514 = smul.u32 2, %s21
        %p515 = scmp.lt.s32.totalorder %s514, 3
        %s516 = scalar_select %p515, %s514, 3
        %s517 = smul.addr %s516, 8
        %s518 = scalar_lea.vmem %s7, %s517
      $region64: #{cross_pika_attention_layer.19} parent=59 // pred_fallthru
        _
      // Predicated region
      $region65: #{cross_pika_attention_layer.19} parent=59 // pred_check
        %p519 = pneg %p222
      $region66: #{cross_pika_attention_layer.19} parent=59 // pred_check_branch
        %521 = sbr.rel (%p519) target = $region68
      $region67: #{cross_pika_attention_layer.19} parent=59 // pred_region
        %s522 = smul.u32 2, %s21
        %p523 = scmp.lt.s32.totalorder %s522, 3
        %s524 = scalar_select %p523, %s522, 3
        %s525 = smul.addr %s524, 8
        %s526 = scalar_lea.vmem %s8, %s525
      $region68: #{cross_pika_attention_layer.19} parent=59 // pred_fallthru
        _
    $region60: #{cross_pika_attention_layer.19} parent=5 // pred_fallthru
      _
  $region6: #{cross_pika_attention_layer.19} parent=0 // loop_footer
    %s19 = sadd.s32 1, %s15
  $region7: #{cross_pika_attention_layer.19} parent=0 // loop_footer_branch
    %14 = sbr.rel target = $region3
  $region8: #{cross_pika_attention_layer.19} parent=0 // loop_exit
    _

// kernel: cross_pika_attention_layer.26
$region0: #{cross_pika_attention_layer.26}
  #allocation0 [shape = 'u32[]', space=smem, size = 0x4, offset = 0x4, fixed_abs, tag = 'smem constant byte address 0x4 - core index']
  #allocation1 [shape = 'u32[144,128]{1,0:T(1,128)}', space=vmem, size = 0x12000, scoped, tag = 'internal scratch']
  %s0 = inlined_call_operand.vmem [shape: f32[16,32], index: 0, kind: input, shape index: {}]
  %s1 = inlined_call_operand.vmem [shape: f32[32,32], index: 1, kind: input, shape index: {}]
  %s2 = inlined_call_operand.vmem [shape: f32[1,32], index: 2, kind: input, shape index: {}]
  %s3 = inlined_call_operand.vmem [shape: f32[16,32], index: 3, kind: output, shape index: {}]
  %s4 = sld [smem:[#allocation0]]
  $region45: #{cross_pika_attention_layer.26} parent=0
    _
  %s6 = ssub.s32 1, %s4
  %s7 = scalar_select 0, %s6, %s4
  loop: start=0, step=1, limit=4
  $region2: #{cross_pika_attention_layer.26} parent=0 // loop_pre_header
    _
  $region3: #{cross_pika_attention_layer.26} parent=0 // loop_header
    %s9 = sphi 0, %s13
    %p10 = scmp.ge.s32.totalorder %s9, 4
    %s19 = sphi 0, %s21
    %s22 = sphi 0, %s19
    %s23 = sphi 0, %s22
    %s39 = sphi 0, %s23
    %s43 = sphi 0, %s43
    %s45 = sphi 0, %s43
    %s46 = sphi 0, %s45
    %s60 = sphi 0, %s46
    %s64 = sphi 0, %s64
    %s66 = sphi 0, %s64
    %s67 = sphi 0, %s66
    %s81 = sphi 0, %s67
    %s87 = sphi 0, %s89
    %s90 = sphi 0, %s87
    %s91 = sphi 0, %s90
    %s107 = sphi 0, %s91
  $region4: #{cross_pika_attention_layer.26} parent=0 // loop_header_branch
    %12 = sbr.rel (%p10) target = $region8
  $region5: #{cross_pika_attention_layer.26} parent=0 // loop_body
    %s14 = ssub.s32 %s9, 1
    %s15 = ssub.s32 %s9, 2
    %s16 = sadd.s32 %s9, 1
    %s17 = ssub.s32 %s9, %s16
    %p18 = scmp.eq.s32.totalorder %s17, 0
    %s20 = sadd.s32 %s19, 1
    %s21 = scalar_select %p18, %s19, %s20
    %p24 = pneg %p18
    %p25 = scmp.eq.s32.totalorder %s9, 1
    %p26 = por %p24, %p25
    %p27 = scmp.ne.s32.totalorder %s19, %s22
    %p28 = scmp.eq.s32.totalorder %s9, 0
    %p29 = por %p27, %p28
    %p30 = scmp.ne.s32.totalorder %s19, %s22
    %p31 = scmp.eq.s32.totalorder %s14, 1
    %p32 = por %p30, %p31
    %p33 = scmp.ne.s32.totalorder %s22, %s23
    %p34 = scmp.eq.s32.totalorder %s14, 0
    %p35 = por %p33, %p34
    %p36 = scmp.ne.s32.totalorder %s22, %s23
    %p37 = scmp.eq.s32.totalorder %s15, 1
    %p38 = por %p36, %p37
    %p40 = scmp.ne.s32.totalorder %s23, %s39
    %p41 = scmp.eq.s32.totalorder %s15, 0
    %p42 = por %p40, %p41
    %s44 = sadd.s32 %s43, 1
    %p47 = scmp.eq.s32.totalorder %s9, 1
    %p48 = scmp.ne.s32.totalorder %s43, %s45
    %p49 = scmp.eq.s32.totalorder %s9, 0
    %p50 = por %p48, %p49
    %p51 = scmp.ne.s32.totalorder %s43, %s45
    %p52 = scmp.eq.s32.totalorder %s14, 1
    %p53 = por %p51, %p52
    %p54 = scmp.ne.s32.totalorder %s45, %s46
    %p55 = scmp.eq.s32.totalorder %s14, 0
    %p56 = por %p54, %p55
    %p57 = scmp.ne.s32.totalorder %s45, %s46
    %p58 = scmp.eq.s32.totalorder %s15, 1
    %p59 = por %p57, %p58
    %p61 = scmp.ne.s32.totalorder %s46, %s60
    %p62 = scmp.eq.s32.totalorder %s15, 0
    %p63 = por %p61, %p62
    %s65 = sadd.s32 %s64, 1
    %p68 = scmp.eq.s32.totalorder %s9, 1
    %p69 = scmp.ne.s32.totalorder %s64, %s66
    %p70 = scmp.eq.s32.totalorder %s9, 0
    %p71 = por %p69, %p70
    %p72 = scmp.ne.s32.totalorder %s64, %s66
    %p73 = scmp.eq.s32.totalorder %s14, 1
    %p74 = por %p72, %p73
    %p75 = scmp.ne.s32.totalorder %s66, %s67
    %p76 = scmp.eq.s32.totalorder %s14, 0
    %p77 = por %p75, %p76
    %p78 = scmp.ne.s32.totalorder %s66, %s67
    %p79 = scmp.eq.s32.totalorder %s15, 1
    %p80 = por %p78, %p79
    %p82 = scmp.ne.s32.totalorder %s67, %s81
    %p83 = scmp.eq.s32.totalorder %s15, 0
    %p84 = por %p82, %p83
    %s85 = ssub.s32 %s9, %s16
    %p86 = scmp.eq.s32.totalorder %s85, 0
    %s88 = sadd.s32 %s87, 1
    %s89 = scalar_select %p86, %s87, %s88
    %p92 = pneg %p86
    %p93 = scmp.eq.s32.totalorder %s9, 1
    %p94 = por %p92, %p93
    %p95 = scmp.ne.s32.totalorder %s87, %s90
    %p96 = scmp.eq.s32.totalorder %s9, 0
    %p97 = por %p95, %p96
    %p98 = scmp.ne.s32.totalorder %s87, %s90
    %p99 = scmp.eq.s32.totalorder %s14, 1
    %p100 = por %p98, %p99
    %p101 = scmp.ne.s32.totalorder %s90, %s91
    %p102 = scmp.eq.s32.totalorder %s14, 0
    %p103 = por %p101, %p102
    %p104 = scmp.ne.s32.totalorder %s90, %s91
    %p105 = scmp.eq.s32.totalorder %s15, 1
    %p106 = por %p104, %p105
    %p108 = scmp.ne.s32.totalorder %s91, %s107
    %p109 = scmp.eq.s32.totalorder %s15, 0
    %p110 = por %p108, %p109
    %p111 = scmp.le.s32.totalorder 1, %s9
    %p112 = scmp.lt.s32.totalorder %s9, 3
    %p113 = pnand %p111, %p112
    %p114 = pneg %p113
    // Predicated region
    $region9: #{cross_pika_attention_layer.26} parent=5 // pred_check
      _
    $region10: #{cross_pika_attention_layer.26} parent=5 // pred_check_branch
      %116 = sbr.rel (%p113) target = $region12
    $region11: #{cross_pika_attention_layer.26} parent=5 // pred_region
      %s117 = ssub.s32 %s9, 1
      // Predicated region
      $region13: #{cross_pika_attention_layer.26} parent=11 // pred_check
        %p118 = pneg %p56
      $region14: #{cross_pika_attention_layer.26} parent=11 // pred_check_branch
        %120 = sbr.rel (%p118) target = $region16
      $region15: #{cross_pika_attention_layer.26} parent=11 // pred_region
        _
      $region16: #{cross_pika_attention_layer.26} parent=11 // pred_fallthru
        _
      // Predicated region
      $region17: #{cross_pika_attention_layer.26} parent=11 // pred_check
        %p121 = pneg %p77
      $region18: #{cross_pika_attention_layer.26} parent=11 // pred_check_branch
        %123 = sbr.rel (%p121) target = $region20
      $region19: #{cross_pika_attention_layer.26} parent=11 // pred_region
        _
      $region20: #{cross_pika_attention_layer.26} parent=11 // pred_fallthru
        _
    $region12: #{cross_pika_attention_layer.26} parent=5 // pred_fallthru
      _
    %p124 = scmp.lt.s32.totalorder %s9, 2
    // Predicated region
    $region21: #{cross_pika_attention_layer.26} parent=5 // pred_check
      %p125 = pneg %p124
    $region22: #{cross_pika_attention_layer.26} parent=5 // pred_check_branch
      %127 = sbr.rel (%p125) target = $region24
    $region23: #{cross_pika_attention_layer.26} parent=5 // pred_region
      // Predicated region
      $region25: #{cross_pika_attention_layer.26} parent=23 // pred_check
        %p128 = pneg %p29
      $region26: #{cross_pika_attention_layer.26} parent=23 // pred_check_branch
        %130 = sbr.rel (%p128) target = $region28
      $region27: #{cross_pika_attention_layer.26} parent=23 // pred_region
        %p131 = scmp.lt.s32.totalorder %s9, 1
        %s132 = scalar_select %p131, %s9, 1
        %s133 = smul.addr %s132, 8
        %s134 = scalar_lea.vmem %s0, %s133
      $region28: #{cross_pika_attention_layer.26} parent=23 // pred_fallthru
        _
    $region24: #{cross_pika_attention_layer.26} parent=5 // pred_fallthru
      _
    %p135 = scmp.le.s32.totalorder 1, %s9
    %p136 = scmp.lt.s32.totalorder %s9, 3
    %p137 = pnand %p135, %p136
    %p138 = pneg %p137
    // Predicated region
    $region29: #{cross_pika_attention_layer.26} parent=5 // pred_check
      _
    $region30: #{cross_pika_attention_layer.26} parent=5 // pred_check_branch
      %140 = sbr.rel (%p137) target = $region32
    $region31: #{cross_pika_attention_layer.26} parent=5 // pred_region
      %s141 = ssub.s32 %s9, 1
      %p142 = scmp.lt.s32.totalorder %s14, 1
      %s143 = scalar_select %p142, %s14, 1
      %s144 = smul.addr %s143, 8
      %s145 = scalar_lea.vmem %s0, %s144
      %p146 = pneg %p35
      %p147 = pneg %p32
      %p148 = pneg %p56
      %p149 = pneg %p53
      %p150 = pneg %p77
      %p151 = pneg %p74
      %p152 = pneg %p103
      %p153 = pneg %p100
      %p154 = scmp.lt.s32.totalorder %s14, 1
      %s155 = scalar_select %p154, %s14, 1
      %s156 = smul.addr %s155, 8
      %s157 = scalar_lea.vmem %s3, %s156
      %p158 = scmp.lt.s32.totalorder %s14, 1
      %s159 = scalar_select %p158, %s14, 1
      %s160 = smul.addr %s159, 8
      %s161 = scalar_lea.vmem %s0, %s160
      %p162 = scmp.lt.s32.totalorder %s14, 1
      %s163 = scalar_select %p162, %s14, 1
      %s164 = smul.addr %s163, 8
      %s165 = scalar_lea.vmem %s3, %s164
      %v167 = vld [vmem:[%s161] sm:$0xff]
      %v168 = vpack.c.bf16 %v167, %v167
      %v169 = vld [vmem:[%s1] sm:$0xff]
      %v170 = vld [vmem:[%s1 + $0x8] sm:$0xff]
      %v171 = vld [vmem:[%s1 + $0x10] sm:$0xff]
      %v172 = vld [vmem:[%s1 + $0x18] sm:$0xff]
      %v173 = vpack.c.bf16 %v170, %v169
      %v174 = vpack.c.bf16 %v172, %v171
      %v175 = vld [vmem:[%s2] sm:$0x1]
      %v177 = vlaneseq
      %v178 = vshrl.u32 %v177, 7
      %v179 = vsub.s32 0, %v178
      %v180 = vrot.slane %v175, %v179
      %vm182 = vcmask 261120
      %v184 = vsel %vm182, %v168, 0
      %186 = vmatprep.subr.bf16.mxu0 0
      %187 = vmatpush1.bf16.msra.mxu0 0
      %188 = vmatprep.subr.bf16.mxu0 0
      %189 = vmatpush1.bf16.msra.mxu0 0
      %190 = vmatprep.subr.bf16.mxu0 0
      %191 = vmatpush1.bf16.msra.mxu0 0
      %192 = vmatprep.subr.bf16.mxu0 0
      %193 = vmatpush1.bf16.msra.mxu0 0
      %194 = vmatprep.subr.bf16.mxu0 0
      %195 = vmatpush1.bf16.msra.mxu0 0
      %196 = vmatprep.subr.bf16.mxu0 0
      %197 = vmatpush1.bf16.msra.mxu0 0
      %198 = vmatprep.subr.bf16.mxu0 0
      %199 = vmatpush1.bf16.msra.mxu0 %v174
      %200 = vmatprep.subr.bf16.mxu0 0
      %201 = vmatpush1.bf16.msra.mxu0 %v173
      %202 = vmatprep.subr.bf16.mxu0 0
      %203 = vmatpush2.bf16.msra.mxu0 0
      %204 = vmatprep.subr.bf16.mxu0 0
      %205 = vmatpush2.bf16.msra.mxu0 0
      %206 = vmatprep.subr.bf16.mxu0 0
      %207 = vmatpush2.bf16.msra.mxu0 0
      %208 = vmatprep.subr.bf16.mxu0 0
      %209 = vmatpush2.bf16.msra.mxu0 0
      %210 = vmatprep.subr.bf16.mxu0 0
      %211 = vmatpush2.bf16.msra.mxu0 0
      %212 = vmatprep.subr.bf16.mxu0 0
      %213 = vmatpush2.bf16.msra.mxu0 0
      %214 = vmatprep.subr.bf16.mxu0 0
      %215 = vmatpush2.bf16.msra.mxu0 0
      %216 = vmatprep.subr.bf16.mxu0 0
      %217 = vmatpush2.bf16.msra.mxu0 0
      %218 = vmatprep.mubr.bf16.mxu0 0
      %219 = vmatmul.mubr.bf16.gmra.mxu0 %v184
      %v220 = vpop.f32.mrf.mxu0
      %v221 = vadd.f32 %v180, %v220
      %v222 = vpop.f32.mrf.mxu0
      %v223 = vpop.f32.mrf.mxu0
      %v224 = vpop.f32.mrf.mxu0
      %225 = vdwg.mxu0
      %226 = vst.msk [vmem:[%s165] sm:$0xff] %vm182, %v221
      %p227 = scmp.lt.s32.totalorder %s14, 1
      %s228 = scalar_select %p227, %s14, 1
      %s229 = smul.addr %s228, 8
      %s230 = scalar_lea.vmem %s3, %s229
      // Predicated region
      $region33: #{cross_pika_attention_layer.26} parent=31 // pred_check
        %p231 = pneg %p100
      $region34: #{cross_pika_attention_layer.26} parent=31 // pred_check_branch
        %233 = sbr.rel (%p231) target = $region36
      $region35: #{cross_pika_attention_layer.26} parent=31 // pred_region
        _
      $region36: #{cross_pika_attention_layer.26} parent=31 // pred_fallthru
        _
    $region32: #{cross_pika_attention_layer.26} parent=5 // pred_fallthru
      _
    %p234 = scmp.le.s32.totalorder 2, %s9
    // Predicated region
    $region37: #{cross_pika_attention_layer.26} parent=5 // pred_check
      %p235 = pneg %p234
    $region38: #{cross_pika_attention_layer.26} parent=5 // pred_check_branch
      %237 = sbr.rel (%p235) target = $region40
    $region39: #{cross_pika_attention_layer.26} parent=5 // pred_region
      %s238 = ssub.s32 %s9, 2
      // Predicated region
      $region41: #{cross_pika_attention_layer.26} parent=39 // pred_check
        %p239 = pneg %p106
      $region42: #{cross_pika_attention_layer.26} parent=39 // pred_check_branch
        %241 = sbr.rel (%p239) target = $region44
      $region43: #{cross_pika_attention_layer.26} parent=39 // pred_region
        %p242 = scmp.lt.s32.totalorder %s15, 1
        %s243 = scalar_select %p242, %s15, 1
        %s244 = smul.addr %s243, 8
        %s245 = scalar_lea.vmem %s3, %s244
      $region44: #{cross_pika_attention_layer.26} parent=39 // pred_fallthru
        _
    $region40: #{cross_pika_attention_layer.26} parent=5 // pred_fallthru
      _
  $region6: #{cross_pika_attention_layer.26} parent=0 // loop_footer
    %s13 = sadd.s32 1, %s9
  $region7: #{cross_pika_attention_layer.26} parent=0 // loop_footer_branch
    %8 = sbr.rel target = $region3
  $region8: #{cross_pika_attention_layer.26} parent=0 // loop_exit
    _

// kernel: cross_pika_attention_layer.20
$region0: #{cross_pika_attention_layer.20}
  #allocation0 [shape = 'u32[]', space=smem, size = 0x4, offset = 0x4, fixed_abs, tag = 'smem constant byte address 0x4 - core index']
  #allocation1 [shape = 'u32[144,128]{1,0:T(1,128)}', space=vmem, size = 0x12000, scoped, tag = 'internal scratch']
  %s0 = inlined_call_operand.vmem [shape: f32[2,8,32], index: 0, kind: input, shape index: {}]
  %s1 = inlined_call_operand.vmem [shape: f32[2,16,32], index: 1, kind: input, shape index: {}]
  %s2 = inlined_call_operand.vmem [shape: f32[2,16,32], index: 2, kind: input, shape index: {}]
  %s3 = inlined_call_operand.vmem [shape: f32[2,8,32], index: 3, kind: input, shape index: {}]
  %s4 = inlined_call_operand.vmem [shape: f32[32,32], index: 4, kind: input, shape index: {}]
  %s5 = inlined_call_operand.vmem [shape: f32[1,32], index: 5, kind: input, shape index: {}]
  %s6 = inlined_call_operand.vmem [shape: f32[2,8,32], index: 6, kind: output, shape index: {}]
  %s7 = sld [smem:[#allocation0]]
  $region57: #{cross_pika_attention_layer.20} parent=0
    _
  %s9 = ssub.s32 1, %s7
  %s10 = scalar_select 0, %s9, %s7
  loop: start=0, step=1, limit=4
  $region2: #{cross_pika_attention_layer.20} parent=0 // loop_pre_header
    _
  $region3: #{cross_pika_attention_layer.20} parent=0 // loop_header
    %s12 = sphi 0, %s16
    %p13 = scmp.ge.s32.totalorder %s12, 4
    %s22 = sphi 0, %s24
    %s25 = sphi 0, %s22
    %s26 = sphi 0, %s25
    %s42 = sphi 0, %s26
    %s48 = sphi 0, %s50
    %s51 = sphi 0, %s48
    %s52 = sphi 0, %s51
    %s68 = sphi 0, %s52
    %s74 = sphi 0, %s76
    %s77 = sphi 0, %s74
    %s78 = sphi 0, %s77
    %s94 = sphi 0, %s78
    %s100 = sphi 0, %s102
    %s103 = sphi 0, %s100
    %s104 = sphi 0, %s103
    %s120 = sphi 0, %s104
    %s124 = sphi 0, %s124
    %s126 = sphi 0, %s124
    %s127 = sphi 0, %s126
    %s141 = sphi 0, %s127
    %s145 = sphi 0, %s145
    %s147 = sphi 0, %s145
    %s148 = sphi 0, %s147
    %s162 = sphi 0, %s148
    %s168 = sphi 0, %s170
    %s171 = sphi 0, %s168
    %s172 = sphi 0, %s171
    %s188 = sphi 0, %s172
  $region4: #{cross_pika_attention_layer.20} parent=0 // loop_header_branch
    %15 = sbr.rel (%p13) target = $region8
  $region5: #{cross_pika_attention_layer.20} parent=0 // loop_body
    %s17 = ssub.s32 %s12, 1
    %s18 = ssub.s32 %s12, 2
    %s19 = sadd.s32 %s12, 1
    %s20 = ssub.s32 %s12, %s19
    %p21 = scmp.eq.s32.totalorder %s20, 0
    %s23 = sadd.s32 %s22, 1
    %s24 = scalar_select %p21, %s22, %s23
    %p27 = pneg %p21
    %p28 = scmp.eq.s32.totalorder %s12, 1
    %p29 = por %p27, %p28
    %p30 = scmp.ne.s32.totalorder %s22, %s25
    %p31 = scmp.eq.s32.totalorder %s12, 0
    %p32 = por %p30, %p31
    %p33 = scmp.ne.s32.totalorder %s22, %s25
    %p34 = scmp.eq.s32.totalorder %s17, 1
    %p35 = por %p33, %p34
    %p36 = scmp.ne.s32.totalorder %s25, %s26
    %p37 = scmp.eq.s32.totalorder %s17, 0
    %p38 = por %p36, %p37
    %p39 = scmp.ne.s32.totalorder %s25, %s26
    %p40 = scmp.eq.s32.totalorder %s18, 1
    %p41 = por %p39, %p40
    %p43 = scmp.ne.s32.totalorder %s26, %s42
    %p44 = scmp.eq.s32.totalorder %s18, 0
    %p45 = por %p43, %p44
    %s46 = ssub.s32 %s12, %s19
    %p47 = scmp.eq.s32.totalorder %s46, 0
    %s49 = sadd.s32 %s48, 1
    %s50 = scalar_select %p47, %s48, %s49
    %p53 = pneg %p47
    %p54 = scmp.eq.s32.totalorder %s12, 1
    %p55 = por %p53, %p54
    %p56 = scmp.ne.s32.totalorder %s48, %s51
    %p57 = scmp.eq.s32.totalorder %s12, 0
    %p58 = por %p56, %p57
    %p59 = scmp.ne.s32.totalorder %s48, %s51
    %p60 = scmp.eq.s32.totalorder %s17, 1
    %p61 = por %p59, %p60
    %p62 = scmp.ne.s32.totalorder %s51, %s52
    %p63 = scmp.eq.s32.totalorder %s17, 0
    %p64 = por %p62, %p63
    %p65 = scmp.ne.s32.totalorder %s51, %s52
    %p66 = scmp.eq.s32.totalorder %s18, 1
    %p67 = por %p65, %p66
    %p69 = scmp.ne.s32.totalorder %s52, %s68
    %p70 = scmp.eq.s32.totalorder %s18, 0
    %p71 = por %p69, %p70
    %s72 = ssub.s32 %s12, %s19
    %p73 = scmp.eq.s32.totalorder %s72, 0
    %s75 = sadd.s32 %s74, 1
    %s76 = scalar_select %p73, %s74, %s75
    %p79 = pneg %p73
    %p80 = scmp.eq.s32.totalorder %s12, 1
    %p81 = por %p79, %p80
    %p82 = scmp.ne.s32.totalorder %s74, %s77
    %p83 = scmp.eq.s32.totalorder %s12, 0
    %p84 = por %p82, %p83
    %p85 = scmp.ne.s32.totalorder %s74, %s77
    %p86 = scmp.eq.s32.totalorder %s17, 1
    %p87 = por %p85, %p86
    %p88 = scmp.ne.s32.totalorder %s77, %s78
    %p89 = scmp.eq.s32.totalorder %s17, 0
    %p90 = por %p88, %p89
    %p91 = scmp.ne.s32.totalorder %s77, %s78
    %p92 = scmp.eq.s32.totalorder %s18, 1
    %p93 = por %p91, %p92
    %p95 = scmp.ne.s32.totalorder %s78, %s94
    %p96 = scmp.eq.s32.totalorder %s18, 0
    %p97 = por %p95, %p96
    %s98 = ssub.s32 %s12, %s19
    %p99 = scmp.eq.s32.totalorder %s98, 0
    %s101 = sadd.s32 %s100, 1
    %s102 = scalar_select %p99, %s100, %s101
    %p105 = pneg %p99
    %p106 = scmp.eq.s32.totalorder %s12, 1
    %p107 = por %p105, %p106
    %p108 = scmp.ne.s32.totalorder %s100, %s103
    %p109 = scmp.eq.s32.totalorder %s12, 0
    %p110 = por %p108, %p109
    %p111 = scmp.ne.s32.totalorder %s100, %s103
    %p112 = scmp.eq.s32.totalorder %s17, 1
    %p113 = por %p111, %p112
    %p114 = scmp.ne.s32.totalorder %s103, %s104
    %p115 = scmp.eq.s32.totalorder %s17, 0
    %p116 = por %p114, %p115
    %p117 = scmp.ne.s32.totalorder %s103, %s104
    %p118 = scmp.eq.s32.totalorder %s18, 1
    %p119 = por %p117, %p118
    %p121 = scmp.ne.s32.totalorder %s104, %s120
    %p122 = scmp.eq.s32.totalorder %s18, 0
    %p123 = por %p121, %p122
    %s125 = sadd.s32 %s124, 1
    %p128 = scmp.eq.s32.totalorder %s12, 1
    %p129 = scmp.ne.s32.totalorder %s124, %s126
    %p130 = scmp.eq.s32.totalorder %s12, 0
    %p131 = por %p129, %p130
    %p132 = scmp.ne.s32.totalorder %s124, %s126
    %p133 = scmp.eq.s32.totalorder %s17, 1
    %p134 = por %p132, %p133
    %p135 = scmp.ne.s32.totalorder %s126, %s127
    %p136 = scmp.eq.s32.totalorder %s17, 0
    %p137 = por %p135, %p136
    %p138 = scmp.ne.s32.totalorder %s126, %s127
    %p139 = scmp.eq.s32.totalorder %s18, 1
    %p140 = por %p138, %p139
    %p142 = scmp.ne.s32.totalorder %s127, %s141
    %p143 = scmp.eq.s32.totalorder %s18, 0
    %p144 = por %p142, %p143
    %s146 = sadd.s32 %s145, 1
    %p149 = scmp.eq.s32.totalorder %s12, 1
    %p150 = scmp.ne.s32.totalorder %s145, %s147
    %p151 = scmp.eq.s32.totalorder %s12, 0
    %p152 = por %p150, %p151
    %p153 = scmp.ne.s32.totalorder %s145, %s147
    %p154 = scmp.eq.s32.totalorder %s17, 1
    %p155 = por %p153, %p154
    %p156 = scmp.ne.s32.totalorder %s147, %s148
    %p157 = scmp.eq.s32.totalorder %s17, 0
    %p158 = por %p156, %p157
    %p159 = scmp.ne.s32.totalorder %s147, %s148
    %p160 = scmp.eq.s32.totalorder %s18, 1
    %p161 = por %p159, %p160
    %p163 = scmp.ne.s32.totalorder %s148, %s162
    %p164 = scmp.eq.s32.totalorder %s18, 0
    %p165 = por %p163, %p164
    %s166 = ssub.s32 %s12, %s19
    %p167 = scmp.eq.s32.totalorder %s166, 0
    %s169 = sadd.s32 %s168, 1
    %s170 = scalar_select %p167, %s168, %s169
    %p173 = pneg %p167
    %p174 = scmp.eq.s32.totalorder %s12, 1
    %p175 = por %p173, %p174
    %p176 = scmp.ne.s32.totalorder %s168, %s171
    %p177 = scmp.eq.s32.totalorder %s12, 0
    %p178 = por %p176, %p177
    %p179 = scmp.ne.s32.totalorder %s168, %s171
    %p180 = scmp.eq.s32.totalorder %s17, 1
    %p181 = por %p179, %p180
    %p182 = scmp.ne.s32.totalorder %s171, %s172
    %p183 = scmp.eq.s32.totalorder %s17, 0
    %p184 = por %p182, %p183
    %p185 = scmp.ne.s32.totalorder %s171, %s172
    %p186 = scmp.eq.s32.totalorder %s18, 1
    %p187 = por %p185, %p186
    %p189 = scmp.ne.s32.totalorder %s172, %s188
    %p190 = scmp.eq.s32.totalorder %s18, 0
    %p191 = por %p189, %p190
    %p192 = scmp.le.s32.totalorder 1, %s12
    %p193 = scmp.lt.s32.totalorder %s12, 3
    %p194 = pnand %p192, %p193
    %p195 = pneg %p194
    // Predicated region
    $region9: #{cross_pika_attention_layer.20} parent=5 // pred_check
      _
    $region10: #{cross_pika_attention_layer.20} parent=5 // pred_check_branch
      %197 = sbr.rel (%p194) target = $region12
    $region11: #{cross_pika_attention_layer.20} parent=5 // pred_region
      %s198 = ssub.s32 %s12, 1
      // Predicated region
      $region13: #{cross_pika_attention_layer.20} parent=11 // pred_check
        %p199 = pneg %p137
      $region14: #{cross_pika_attention_layer.20} parent=11 // pred_check_branch
        %201 = sbr.rel (%p199) target = $region16
      $region15: #{cross_pika_attention_layer.20} parent=11 // pred_region
        _
      $region16: #{cross_pika_attention_layer.20} parent=11 // pred_fallthru
        _
      // Predicated region
      $region17: #{cross_pika_attention_layer.20} parent=11 // pred_check
        %p202 = pneg %p158
      $region18: #{cross_pika_attention_layer.20} parent=11 // pred_check_branch
        %204 = sbr.rel (%p202) target = $region20
      $region19: #{cross_pika_attention_layer.20} parent=11 // pred_region
        _
      $region20: #{cross_pika_attention_layer.20} parent=11 // pred_fallthru
        _
    $region12: #{cross_pika_attention_layer.20} parent=5 // pred_fallthru
      _
    %p205 = scmp.lt.s32.totalorder %s12, 2
    // Predicated region
    $region21: #{cross_pika_attention_layer.20} parent=5 // pred_check
      %p206 = pneg %p205
    $region22: #{cross_pika_attention_layer.20} parent=5 // pred_check_branch
      %208 = sbr.rel (%p206) target = $region24
    $region23: #{cross_pika_attention_layer.20} parent=5 // pred_region
      // Predicated region
      $region25: #{cross_pika_attention_layer.20} parent=23 // pred_check
        %p209 = pneg %p32
      $region26: #{cross_pika_attention_layer.20} parent=23 // pred_check_branch
        %211 = sbr.rel (%p209) target = $region28
      $region27: #{cross_pika_attention_layer.20} parent=23 // pred_region
        %p212 = scmp.lt.s32.totalorder %s12, 1
        %s213 = scalar_select %p212, %s12, 1
        %s214 = smul.addr %s213, 8
        %s215 = scalar_lea.vmem %s0, %s214
      $region28: #{cross_pika_attention_layer.20} parent=23 // pred_fallthru
        _
      // Predicated region
      $region29: #{cross_pika_attention_layer.20} parent=23 // pred_check
        %p216 = pneg %p58
      $region30: #{cross_pika_attention_layer.20} parent=23 // pred_check_branch
        %218 = sbr.rel (%p216) target = $region32
      $region31: #{cross_pika_attention_layer.20} parent=23 // pred_region
        %p219 = scmp.lt.s32.totalorder %s12, 1
        %s220 = scalar_select %p219, %s12, 1
        %s221 = smul.addr %s220, 2
        %s222 = smul.addr %s221, 8
        %s223 = scalar_lea.vmem %s1, %s222
      $region32: #{cross_pika_attention_layer.20} parent=23 // pred_fallthru
        _
      // Predicated region
      $region33: #{cross_pika_attention_layer.20} parent=23 // pred_check
        %p224 = pneg %p84
      $region34: #{cross_pika_attention_layer.20} parent=23 // pred_check_branch
        %226 = sbr.rel (%p224) target = $region36
      $region35: #{cross_pika_attention_layer.20} parent=23 // pred_region
        %p227 = scmp.lt.s32.totalorder %s12, 1
        %s228 = scalar_select %p227, %s12, 1
        %s229 = smul.addr %s228, 2
        %s230 = smul.addr %s229, 8
        %s231 = scalar_lea.vmem %s2, %s230
      $region36: #{cross_pika_attention_layer.20} parent=23 // pred_fallthru
        _
      // Predicated region
      $region37: #{cross_pika_attention_layer.20} parent=23 // pred_check
        %p232 = pneg %p110
      $region38: #{cross_pika_attention_layer.20} parent=23 // pred_check_branch
        %234 = sbr.rel (%p232) target = $region40
      $region39: #{cross_pika_attention_layer.20} parent=23 // pred_region
        %p235 = scmp.lt.s32.totalorder %s12, 1
        %s236 = scalar_select %p235, %s12, 1
        %s237 = smul.addr %s236, 8
        %s238 = scalar_lea.vmem %s3, %s237
      $region40: #{cross_pika_attention_layer.20} parent=23 // pred_fallthru
        _
    $region24: #{cross_pika_attention_layer.20} parent=5 // pred_fallthru
      _
    %p239 = scmp.le.s32.totalorder 1, %s12
    %p240 = scmp.lt.s32.totalorder %s12, 3
    %p241 = pnand %p239, %p240
    %p242 = pneg %p241
    // Predicated region
    $region41: #{cross_pika_attention_layer.20} parent=5 // pred_check
      _
    $region42: #{cross_pika_attention_layer.20} parent=5 // pred_check_branch
      %244 = sbr.rel (%p241) target = $region44
    $region43: #{cross_pika_attention_layer.20} parent=5 // pred_region
      %s245 = ssub.s32 %s12, 1
      %p246 = scmp.lt.s32.totalorder %s17, 1
      %s247 = scalar_select %p246, %s17, 1
      %s248 = smul.addr %s247, 8
      %s249 = scalar_lea.vmem %s0, %s248
      %p250 = pneg %p38
      %p251 = pneg %p35
      %p252 = scmp.lt.s32.totalorder %s17, 1
      %s253 = scalar_select %p252, %s17, 1
      %s254 = smul.addr %s253, 2
      %s255 = smul.addr %s254, 8
      %s256 = scalar_lea.vmem %s1, %s255
      %p257 = pneg %p64
      %p258 = pneg %p61
      %p259 = scmp.lt.s32.totalorder %s17, 1
      %s260 = scalar_select %p259, %s17, 1
      %s261 = smul.addr %s260, 2
      %s262 = smul.addr %s261, 8
      %s263 = scalar_lea.vmem %s2, %s262
      %p264 = pneg %p90
      %p265 = pneg %p87
      %p266 = scmp.lt.s32.totalorder %s17, 1
      %s267 = scalar_select %p266, %s17, 1
      %s268 = smul.addr %s267, 8
      %s269 = scalar_lea.vmem %s3, %s268
      %p270 = pneg %p116
      %p271 = pneg %p113
      %p272 = pneg %p137
      %p273 = pneg %p134
      %p274 = pneg %p158
      %p275 = pneg %p155
      %p276 = pneg %p184
      %p277 = pneg %p181
      %p278 = scmp.lt.s32.totalorder %s17, 1
      %s279 = scalar_select %p278, %s17, 1
      %s280 = smul.addr %s279, 8
      %s281 = scalar_lea.vmem %s6, %s280
      %p282 = scmp.lt.s32.totalorder %s17, 1
      %s283 = scalar_select %p282, %s17, 1
      %s284 = smul.addr %s283, 8
      %s285 = scalar_lea.vmem %s0, %s284
      %p286 = scmp.lt.s32.totalorder %s17, 1
      %s287 = scalar_select %p286, %s17, 1
      %s288 = smul.addr %s287, 2
      %s289 = smul.addr %s288, 8
      %s290 = scalar_lea.vmem %s1, %s289
      %p291 = scmp.lt.s32.totalorder %s17, 1
      %s292 = scalar_select %p291, %s17, 1
      %s293 = smul.addr %s292, 2
      %s294 = smul.addr %s293, 8
      %s295 = scalar_lea.vmem %s2, %s294
      %p296 = scmp.lt.s32.totalorder %s17, 1
      %s297 = scalar_select %p296, %s17, 1
      %s298 = smul.addr %s297, 8
      %s299 = scalar_lea.vmem %s3, %s298
      %p300 = scmp.lt.s32.totalorder %s17, 1
      %s301 = scalar_select %p300, %s17, 1
      %s302 = smul.addr %s301, 8
      %s303 = scalar_lea.vmem %s6, %s302
      %v305 = vld [vmem:[%s285] sm:$0xff]
      %v306 = vld [vmem:[%s290] sm:$0xff]
      %v307 = vld [vmem:[%s290 + $0x8] sm:$0xff]
      %v308 = vld [vmem:[%s295] sm:$0xff]
      %v309 = vld [vmem:[%s295 + $0x8] sm:$0xff]
      %v310 = vpack.c.bf16 %v305, %v305
      %v311 = vpack.c.bf16 %v307, %v306
      %v312 = vpack.c.bf16 %v309, %v308
      %vm313 = vcmask 64512
      %v315 = vsel %vm313, %v310, 0
      %v318 = vsel %vm313, %v311, 0
      %320 = vmatprep.subr.bf16.mxu0 0
      %321 = vmatpush1.bf16.xpose.msra.mxu0 0
      %322 = vmatprep.subr.bf16.mxu0 0
      %323 = vmatpush1.bf16.xpose.msra.mxu0 0
      %324 = vmatprep.subr.bf16.mxu0 0
      %325 = vmatpush1.bf16.xpose.msra.mxu0 0
      %326 = vmatprep.subr.bf16.mxu0 0
      %327 = vmatpush1.bf16.xpose.msra.mxu0 0
      %328 = vmatprep.subr.bf16.mxu0 0
      %329 = vmatpush1.bf16.xpose.msra.mxu0 0
      %330 = vmatprep.subr.bf16.mxu0 0
      %331 = vmatpush1.bf16.xpose.msra.mxu0 0
      %332 = vmatprep.subr.bf16.mxu0 0
      %333 = vmatpush1.bf16.xpose.msra.mxu0 0
      %334 = vmatprep.subr.bf16.mxu0 0
      %335 = vmatpush1.bf16.xpose.msra.mxu0 %v318
      %336 = vmatprep.subr.bf16.mxu0 0
      %337 = vmatpush2.bf16.xpose.msra.mxu0 0
      %338 = vmatprep.subr.bf16.mxu0 0
      %339 = vmatpush2.bf16.xpose.msra.mxu0 0
      %340 = vmatprep.subr.bf16.mxu0 0
      %341 = vmatpush2.bf16.xpose.msra.mxu0 0
      %342 = vmatprep.subr.bf16.mxu0 0
      %343 = vmatpush2.bf16.xpose.msra.mxu0 0
      %344 = vmatprep.subr.bf16.mxu0 0
      %345 = vmatpush2.bf16.xpose.msra.mxu0 0
      %346 = vmatprep.subr.bf16.mxu0 0
      %347 = vmatpush2.bf16.xpose.msra.mxu0 0
      %348 = vmatprep.subr.bf16.mxu0 0
      %349 = vmatpush2.bf16.xpose.msra.mxu0 0
      %350 = vmatprep.subr.bf16.mxu0 0
      %351 = vmatpush2.bf16.xpose.msra.mxu0 0
      %352 = vmatprep.mubr.bf16.mxu0 0
      %353 = vmatmul.mubr.bf16.gmra.mxu0 %v315
      %v354 = vpop.f32.mrf.mxu0
      %v355 = vadd.f32 0.0, %v354
      %v356 = vpop.f32.mrf.mxu0
      %v357 = vpop.f32.mrf.mxu0
      %v358 = vpop.f32.mrf.mxu0
      %359 = vdwg.mxu0
      %v360 = vmul.f32 %v355, 0.35355338
      %vm361 = vcmask 130048
      %v362 = vsel %vm361, %v360, -inf
      %363 = vmax.xlane.f32.xlu0 %v362
      %v364 = vpop.xlane.xlu0 %363
      %v365 = vsub.f32 %v360, %v364
      %v366 = vmul.f32 %v365, 1.442695
      %v367 = vpow.pop %v366
      %v368 = vsel %vm361, %v367, 0.0
      %369 = vadd.xlane.f32.xlu0 %v368
      %v370 = vpop.xlane.xlu0 %369
      %v371 = vrcp.pop %v370
      %v372 = vmul.f32 %v367, %v371
      %v373 = vpack.c.bf16 %v372, %v372
      %v375 = vsel %vm361, %v373, 0
      %377 = vmatprep.subr.bf16.mxu0 0
      %378 = vmatpush1.bf16.msra.mxu0 0
      %379 = vmatprep.subr.bf16.mxu0 0
      %380 = vmatpush1.bf16.msra.mxu0 0
      %381 = vmatprep.subr.bf16.mxu0 0
      %382 = vmatpush1.bf16.msra.mxu0 0
      %383 = vmatprep.subr.bf16.mxu0 0
      %384 = vmatpush1.bf16.msra.mxu0 0
      %385 = vmatprep.subr.bf16.mxu0 0
      %386 = vmatpush1.bf16.msra.mxu0 0
      %387 = vmatprep.subr.bf16.mxu0 0
      %388 = vmatpush1.bf16.msra.mxu0 0
      %389 = vmatprep.subr.bf16.mxu0 0
      %390 = vmatpush1.bf16.msra.mxu0 0
      %391 = vmatprep.subr.bf16.mxu0 0
      %392 = vmatpush1.bf16.msra.mxu0 %v312
      %393 = vmatprep.subr.bf16.mxu0 0
      %394 = vmatpush2.bf16.msra.mxu0 0
      %395 = vmatprep.subr.bf16.mxu0 0
      %396 = vmatpush2.bf16.msra.mxu0 0
      %397 = vmatprep.subr.bf16.mxu0 0
      %398 = vmatpush2.bf16.msra.mxu0 0
      %399 = vmatprep.subr.bf16.mxu0 0
      %400 = vmatpush2.bf16.msra.mxu0 0
      %401 = vmatprep.subr.bf16.mxu0 0
      %402 = vmatpush2.bf16.msra.mxu0 0
      %403 = vmatprep.subr.bf16.mxu0 0
      %404 = vmatpush2.bf16.msra.mxu0 0
      %405 = vmatprep.subr.bf16.mxu0 0
      %406 = vmatpush2.bf16.msra.mxu0 0
      %407 = vmatprep.subr.bf16.mxu0 0
      %408 = vmatpush2.bf16.msra.mxu0 0
      %409 = vmatprep.mubr.bf16.mxu0 0
      %410 = vmatmul.mubr.bf16.gmra.mxu0 %v375
      %v411 = vpop.f32.mrf.mxu0
      %v412 = vadd.f32 0.0, %v411
      %v413 = vpop.f32.mrf.mxu0
      %v414 = vpop.f32.mrf.mxu0
      %v415 = vpop.f32.mrf.mxu0
      %416 = vdwg.mxu0
      %v417 = vpack.c.bf16 %v412, %v412
      %v418 = vld [vmem:[%s4] sm:$0xff]
      %v419 = vpack.c.bf16 %v418, %v418
      %421 = vrot.lane.b32.xlu0 %v310, 120
      %v422 = vpop.permute.xlu0 %421
      %424 = vrot.lane.b32.xlu0 %v311, 120
      %v425 = vpop.permute.xlu0 %424
      %v427 = vsel %vm313, %v422, 0
      %v430 = vsel %vm313, %v425, 0
      %432 = vmatprep.subr.bf16.mxu0 0
      %433 = vmatpush1.bf16.xpose.msra.mxu0 0
      %434 = vmatprep.subr.bf16.mxu0 0
      %435 = vmatpush1.bf16.xpose.msra.mxu0 0
      %436 = vmatprep.subr.bf16.mxu0 0
      %437 = vmatpush1.bf16.xpose.msra.mxu0 0
      %438 = vmatprep.subr.bf16.mxu0 0
      %439 = vmatpush1.bf16.xpose.msra.mxu0 0
      %440 = vmatprep.subr.bf16.mxu0 0
      %441 = vmatpush1.bf16.xpose.msra.mxu0 0
      %442 = vmatprep.subr.bf16.mxu0 0
      %443 = vmatpush1.bf16.xpose.msra.mxu0 0
      %444 = vmatprep.subr.bf16.mxu0 0
      %445 = vmatpush1.bf16.xpose.msra.mxu0 0
      %446 = vmatprep.subr.bf16.mxu0 0
      %447 = vmatpush1.bf16.xpose.msra.mxu0 %v430
      %448 = vmatprep.subr.bf16.mxu0 0
      %449 = vmatpush2.bf16.xpose.msra.mxu0 0
      %450 = vmatprep.subr.bf16.mxu0 0
      %451 = vmatpush2.bf16.xpose.msra.mxu0 0
      %452 = vmatprep.subr.bf16.mxu0 0
      %453 = vmatpush2.bf16.xpose.msra.mxu0 0
      %454 = vmatprep.subr.bf16.mxu0 0
      %455 = vmatpush2.bf16.xpose.msra.mxu0 0
      %456 = vmatprep.subr.bf16.mxu0 0
      %457 = vmatpush2.bf16.xpose.msra.mxu0 0
      %458 = vmatprep.subr.bf16.mxu0 0
      %459 = vmatpush2.bf16.xpose.msra.mxu0 0
      %460 = vmatprep.subr.bf16.mxu0 0
      %461 = vmatpush2.bf16.xpose.msra.mxu0 0
      %462 = vmatprep.subr.bf16.mxu0 0
      %463 = vmatpush2.bf16.xpose.msra.mxu0 0
      %464 = vmatprep.mubr.bf16.mxu0 0
      %465 = vmatmul.mubr.bf16.gmra.mxu0 %v427
      %v466 = vpop.f32.mrf.mxu0
      %v467 = vadd.f32 0.0, %v466
      %v468 = vpop.f32.mrf.mxu0
      %v469 = vpop.f32.mrf.mxu0
      %v470 = vpop.f32.mrf.mxu0
      %471 = vdwg.mxu0
      %v472 = vmul.f32 %v467, 0.35355338
      %v473 = vsel %vm361, %v472, -inf
      %474 = vmax.xlane.f32.xlu0 %v473
      %v475 = vpop.xlane.xlu0 %474
      %v476 = vsub.f32 %v472, %v475
      %v477 = vmul.f32 %v476, 1.442695
      %v478 = vpow.pop %v477
      %v479 = vsel %vm361, %v478, 0.0
      %480 = vadd.xlane.f32.xlu0 %v479
      %v481 = vpop.xlane.xlu0 %480
      %v482 = vrcp.pop %v481
      %v483 = vmul.f32 %v478, %v482
      %v484 = vpack.c.bf16 %v483, %v483
      %486 = vrot.lane.b32.xlu0 %v312, 120
      %v487 = vpop.permute.xlu0 %486
      %v490 = vsel %vm361, %v484, 0
      %492 = vmatprep.subr.bf16.mxu0 0
      %493 = vmatpush1.bf16.msra.mxu0 0
      %494 = vmatprep.subr.bf16.mxu0 0
      %495 = vmatpush1.bf16.msra.mxu0 0
      %496 = vmatprep.subr.bf16.mxu0 0
      %497 = vmatpush1.bf16.msra.mxu0 0
      %498 = vmatprep.subr.bf16.mxu0 0
      %499 = vmatpush1.bf16.msra.mxu0 0
      %500 = vmatprep.subr.bf16.mxu0 0
      %501 = vmatpush1.bf16.msra.mxu0 0
      %502 = vmatprep.subr.bf16.mxu0 0
      %503 = vmatpush1.bf16.msra.mxu0 0
      %504 = vmatprep.subr.bf16.mxu0 0
      %505 = vmatpush1.bf16.msra.mxu0 0
      %506 = vmatprep.subr.bf16.mxu0 0
      %507 = vmatpush1.bf16.msra.mxu0 %v487
      %508 = vmatprep.subr.bf16.mxu0 0
      %509 = vmatpush2.bf16.msra.mxu0 0
      %510 = vmatprep.subr.bf16.mxu0 0
      %511 = vmatpush2.bf16.msra.mxu0 0
      %512 = vmatprep.subr.bf16.mxu0 0
      %513 = vmatpush2.bf16.msra.mxu0 0
      %514 = vmatprep.subr.bf16.mxu0 0
      %515 = vmatpush2.bf16.msra.mxu0 0
      %516 = vmatprep.subr.bf16.mxu0 0
      %517 = vmatpush2.bf16.msra.mxu0 0
      %518 = vmatprep.subr.bf16.mxu0 0
      %519 = vmatpush2.bf16.msra.mxu0 0
      %520 = vmatprep.subr.bf16.mxu0 0
      %521 = vmatpush2.bf16.msra.mxu0 0
      %522 = vmatprep.subr.bf16.mxu0 0
      %523 = vmatpush2.bf16.msra.mxu0 0
      %524 = vmatprep.mubr.bf16.mxu0 0
      %525 = vmatmul.mubr.bf16.gmra.mxu0 %v490
      %v526 = vpop.f32.mrf.mxu0
      %v527 = vadd.f32 0.0, %v526
      %v528 = vpop.f32.mrf.mxu0
      %v529 = vpop.f32.mrf.mxu0
      %v530 = vpop.f32.mrf.mxu0
      %531 = vdwg.mxu0
      %v532 = vpack.c.bf16 %v527, %v527
      %v533 = vld [vmem:[%s4 + $0x8] sm:$0xff]
      %v534 = vpack.c.bf16 %v533, %v533
      %v536 = vsel %vm313, %v532, 0
      %vm538 = vcmask 1043456
      %v540 = vsel %vm538, %v534, 0
      %542 = vmatprep.subr.bf16.mxu0 0
      %543 = vmatpush1.bf16.msra.mxu0 0
      %544 = vmatprep.subr.bf16.mxu0 0
      %545 = vmatpush1.bf16.msra.mxu0 0
      %546 = vmatprep.subr.bf16.mxu0 0
      %547 = vmatpush1.bf16.msra.mxu0 0
      %548 = vmatprep.subr.bf16.mxu0 0
      %549 = vmatpush1.bf16.msra.mxu0 0
      %550 = vmatprep.subr.bf16.mxu0 0
      %551 = vmatpush1.bf16.msra.mxu0 0
      %552 = vmatprep.subr.bf16.mxu0 0
      %553 = vmatpush1.bf16.msra.mxu0 0
      %554 = vmatprep.subr.bf16.mxu0 0
      %555 = vmatpush1.bf16.msra.mxu0 0
      %556 = vmatprep.subr.bf16.mxu0 0
      %557 = vmatpush1.bf16.msra.mxu0 %v540
      %558 = vmatprep.subr.bf16.mxu0 0
      %559 = vmatpush2.bf16.msra.mxu0 0
      %560 = vmatprep.subr.bf16.mxu0 0
      %561 = vmatpush2.bf16.msra.mxu0 0
      %562 = vmatprep.subr.bf16.mxu0 0
      %563 = vmatpush2.bf16.msra.mxu0 0
      %564 = vmatprep.subr.bf16.mxu0 0
      %565 = vmatpush2.bf16.msra.mxu0 0
      %566 = vmatprep.subr.bf16.mxu0 0
      %567 = vmatpush2.bf16.msra.mxu0 0
      %568 = vmatprep.subr.bf16.mxu0 0
      %569 = vmatpush2.bf16.msra.mxu0 0
      %570 = vmatprep.subr.bf16.mxu0 0
      %571 = vmatpush2.bf16.msra.mxu0 0
      %572 = vmatprep.subr.bf16.mxu0 0
      %573 = vmatpush2.bf16.msra.mxu0 0
      %574 = vmatprep.mubr.bf16.mxu0 0
      %575 = vmatmul.mubr.bf16.gmra.mxu0 %v536
      %v576 = vpop.f32.mrf.mxu0
      %v577 = vadd.f32 0.0, %v576
      %v578 = vpop.f32.mrf.mxu0
      %v579 = vpop.f32.mrf.mxu0
      %v580 = vpop.f32.mrf.mxu0
      %581 = vdwg.mxu0
      %v583 = vsel %vm313, %v417, 0
      %v586 = vsel %vm538, %v419, 0
      %588 = vmatprep.subr.bf16.mxu0 0
      %589 = vmatpush1.bf16.msra.mxu0 0
      %590 = vmatprep.subr.bf16.mxu0 0
      %591 = vmatpush1.bf16.msra.mxu0 0
      %592 = vmatprep.subr.bf16.mxu0 0
      %593 = vmatpush1.bf16.msra.mxu0 0
      %594 = vmatprep.subr.bf16.mxu0 0
      %595 = vmatpush1.bf16.msra.mxu0 0
      %596 = vmatprep.subr.bf16.mxu0 0
      %597 = vmatpush1.bf16.msra.mxu0 0
      %598 = vmatprep.subr.bf16.mxu0 0
      %599 = vmatpush1.bf16.msra.mxu0 0
      %600 = vmatprep.subr.bf16.mxu0 0
      %601 = vmatpush1.bf16.msra.mxu0 0
      %602 = vmatprep.subr.bf16.mxu0 0
      %603 = vmatpush1.bf16.msra.mxu0 %v586
      %604 = vmatprep.subr.bf16.mxu0 0
      %605 = vmatpush2.bf16.msra.mxu0 0
      %606 = vmatprep.subr.bf16.mxu0 0
      %607 = vmatpush2.bf16.msra.mxu0 0
      %608 = vmatprep.subr.bf16.mxu0 0
      %609 = vmatpush2.bf16.msra.mxu0 0
      %610 = vmatprep.subr.bf16.mxu0 0
      %611 = vmatpush2.bf16.msra.mxu0 0
      %612 = vmatprep.subr.bf16.mxu0 0
      %613 = vmatpush2.bf16.msra.mxu0 0
      %614 = vmatprep.subr.bf16.mxu0 0
      %615 = vmatpush2.bf16.msra.mxu0 0
      %616 = vmatprep.subr.bf16.mxu0 0
      %617 = vmatpush2.bf16.msra.mxu0 0
      %618 = vmatprep.subr.bf16.mxu0 0
      %619 = vmatpush2.bf16.msra.mxu0 0
      %620 = vmatprep.mubr.bf16.mxu0 0
      %621 = vmatmul.mubr.bf16.gmra.mxu0 %v583
      %v622 = vpop.f32.mrf.mxu0
      %v623 = vadd.f32 %v577, %v622
      %v624 = vpop.f32.mrf.mxu0
      %v625 = vpop.f32.mrf.mxu0
      %v626 = vpop.f32.mrf.mxu0
      %627 = vdwg.mxu0
      %628 = vrot.lane.b32.xlu0 %v310, 112
      %v629 = vpop.permute.xlu0 %628
      %630 = vrot.lane.b32.xlu0 %v311, 112
      %v631 = vpop.permute.xlu0 %630
      %v633 = vsel %vm313, %v629, 0
      %v636 = vsel %vm313, %v631, 0
      %638 = vmatprep.subr.bf16.mxu0 0
      %639 = vmatpush1.bf16.xpose.msra.mxu0 0
      %640 = vmatprep.subr.bf16.mxu0 0
      %641 = vmatpush1.bf16.xpose.msra.mxu0 0
      %642 = vmatprep.subr.bf16.mxu0 0
      %643 = vmatpush1.bf16.xpose.msra.mxu0 0
      %644 = vmatprep.subr.bf16.mxu0 0
      %645 = vmatpush1.bf16.xpose.msra.mxu0 0
      %646 = vmatprep.subr.bf16.mxu0 0
      %647 = vmatpush1.bf16.xpose.msra.mxu0 0
      %648 = vmatprep.subr.bf16.mxu0 0
      %649 = vmatpush1.bf16.xpose.msra.mxu0 0
      %650 = vmatprep.subr.bf16.mxu0 0
      %651 = vmatpush1.bf16.xpose.msra.mxu0 0
      %652 = vmatprep.subr.bf16.mxu0 0
      %653 = vmatpush1.bf16.xpose.msra.mxu0 %v636
      %654 = vmatprep.subr.bf16.mxu0 0
      %655 = vmatpush2.bf16.xpose.msra.mxu0 0
      %656 = vmatprep.subr.bf16.mxu0 0
      %657 = vmatpush2.bf16.xpose.msra.mxu0 0
      %658 = vmatprep.subr.bf16.mxu0 0
      %659 = vmatpush2.bf16.xpose.msra.mxu0 0
      %660 = vmatprep.subr.bf16.mxu0 0
      %661 = vmatpush2.bf16.xpose.msra.mxu0 0
      %662 = vmatprep.subr.bf16.mxu0 0
      %663 = vmatpush2.bf16.xpose.msra.mxu0 0
      %664 = vmatprep.subr.bf16.mxu0 0
      %665 = vmatpush2.bf16.xpose.msra.mxu0 0
      %666 = vmatprep.subr.bf16.mxu0 0
      %667 = vmatpush2.bf16.xpose.msra.mxu0 0
      %668 = vmatprep.subr.bf16.mxu0 0
      %669 = vmatpush2.bf16.xpose.msra.mxu0 0
      %670 = vmatprep.mubr.bf16.mxu0 0
      %671 = vmatmul.mubr.bf16.gmra.mxu0 %v633
      %v672 = vpop.f32.mrf.mxu0
      %v673 = vadd.f32 0.0, %v672
      %v674 = vpop.f32.mrf.mxu0
      %v675 = vpop.f32.mrf.mxu0
      %v676 = vpop.f32.mrf.mxu0
      %677 = vdwg.mxu0
      %v678 = vmul.f32 %v673, 0.35355338
      %v679 = vsel %vm361, %v678, -inf
      %680 = vmax.xlane.f32.xlu0 %v679
      %v681 = vpop.xlane.xlu0 %680
      %v682 = vsub.f32 %v678, %v681
      %v683 = vmul.f32 %v682, 1.442695
      %v684 = vpow.pop %v683
      %v685 = vsel %vm361, %v684, 0.0
      %686 = vadd.xlane.f32.xlu0 %v685
      %v687 = vpop.xlane.xlu0 %686
      %v688 = vrcp.pop %v687
      %v689 = vmul.f32 %v684, %v688
      %v690 = vpack.c.bf16 %v689, %v689
      %691 = vrot.lane.b32.xlu0 %v312, 112
      %v692 = vpop.permute.xlu0 %691
      %v695 = vsel %vm361, %v690, 0
      %697 = vmatprep.subr.bf16.mxu0 0
      %698 = vmatpush1.bf16.msra.mxu0 0
      %699 = vmatprep.subr.bf16.mxu0 0
      %700 = vmatpush1.bf16.msra.mxu0 0
      %701 = vmatprep.subr.bf16.mxu0 0
      %702 = vmatpush1.bf16.msra.mxu0 0
      %703 = vmatprep.subr.bf16.mxu0 0
      %704 = vmatpush1.bf16.msra.mxu0 0
      %705 = vmatprep.subr.bf16.mxu0 0
      %706 = vmatpush1.bf16.msra.mxu0 0
      %707 = vmatprep.subr.bf16.mxu0 0
      %708 = vmatpush1.bf16.msra.mxu0 0
      %709 = vmatprep.subr.bf16.mxu0 0
      %710 = vmatpush1.bf16.msra.mxu0 0
      %711 = vmatprep.subr.bf16.mxu0 0
      %712 = vmatpush1.bf16.msra.mxu0 %v692
      %713 = vmatprep.subr.bf16.mxu0 0
      %714 = vmatpush2.bf16.msra.mxu0 0
      %715 = vmatprep.subr.bf16.mxu0 0
      %716 = vmatpush2.bf16.msra.mxu0 0
      %717 = vmatprep.subr.bf16.mxu0 0
      %718 = vmatpush2.bf16.msra.mxu0 0
      %719 = vmatprep.subr.bf16.mxu0 0
      %720 = vmatpush2.bf16.msra.mxu0 0
      %721 = vmatprep.subr.bf16.mxu0 0
      %722 = vmatpush2.bf16.msra.mxu0 0
      %723 = vmatprep.subr.bf16.mxu0 0
      %724 = vmatpush2.bf16.msra.mxu0 0
      %725 = vmatprep.subr.bf16.mxu0 0
      %726 = vmatpush2.bf16.msra.mxu0 0
      %727 = vmatprep.subr.bf16.mxu0 0
      %728 = vmatpush2.bf16.msra.mxu0 0
      %729 = vmatprep.mubr.bf16.mxu0 0
      %730 = vmatmul.mubr.bf16.gmra.mxu0 %v695
      %v731 = vpop.f32.mrf.mxu0
      %v732 = vadd.f32 0.0, %v731
      %v733 = vpop.f32.mrf.mxu0
      %v734 = vpop.f32.mrf.mxu0
      %v735 = vpop.f32.mrf.mxu0
      %736 = vdwg.mxu0
      %v737 = vpack.c.bf16 %v732, %v732
      %v738 = vld [vmem:[%s4 + $0x10] sm:$0xff]
      %v739 = vpack.c.bf16 %v738, %v738
      %v741 = vsel %vm313, %v737, 0
      %v744 = vsel %vm538, %v739, 0
      %746 = vmatprep.subr.bf16.mxu0 0
      %747 = vmatpush1.bf16.msra.mxu0 0
      %748 = vmatprep.subr.bf16.mxu0 0
      %749 = vmatpush1.bf16.msra.mxu0 0
      %750 = vmatprep.subr.bf16.mxu0 0
      %751 = vmatpush1.bf16.msra.mxu0 0
      %752 = vmatprep.subr.bf16.mxu0 0
      %753 = vmatpush1.bf16.msra.mxu0 0
      %754 = vmatprep.subr.bf16.mxu0 0
      %755 = vmatpush1.bf16.msra.mxu0 0
      %756 = vmatprep.subr.bf16.mxu0 0
      %757 = vmatpush1.bf16.msra.mxu0 0
      %758 = vmatprep.subr.bf16.mxu0 0
      %759 = vmatpush1.bf16.msra.mxu0 0
      %760 = vmatprep.subr.bf16.mxu0 0
      %761 = vmatpush1.bf16.msra.mxu0 %v744
      %762 = vmatprep.subr.bf16.mxu0 0
      %763 = vmatpush2.bf16.msra.mxu0 0
      %764 = vmatprep.subr.bf16.mxu0 0
      %765 = vmatpush2.bf16.msra.mxu0 0
      %766 = vmatprep.subr.bf16.mxu0 0
      %767 = vmatpush2.bf16.msra.mxu0 0
      %768 = vmatprep.subr.bf16.mxu0 0
      %769 = vmatpush2.bf16.msra.mxu0 0
      %770 = vmatprep.subr.bf16.mxu0 0
      %771 = vmatpush2.bf16.msra.mxu0 0
      %772 = vmatprep.subr.bf16.mxu0 0
      %773 = vmatpush2.bf16.msra.mxu0 0
      %774 = vmatprep.subr.bf16.mxu0 0
      %775 = vmatpush2.bf16.msra.mxu0 0
      %776 = vmatprep.subr.bf16.mxu0 0
      %777 = vmatpush2.bf16.msra.mxu0 0
      %778 = vmatprep.mubr.bf16.mxu0 0
      %779 = vmatmul.mubr.bf16.gmra.mxu0 %v741
      %v780 = vpop.f32.mrf.mxu0
      %v781 = vadd.f32 0.0, %v780
      %v782 = vpop.f32.mrf.mxu0
      %v783 = vpop.f32.mrf.mxu0
      %v784 = vpop.f32.mrf.mxu0
      %785 = vdwg.mxu0
      %v786 = vadd.f32 %v623, %v781
      %787 = vrot.lane.b32.xlu0 %v310, 104
      %v788 = vpop.permute.xlu0 %787
      %789 = vrot.lane.b32.xlu0 %v311, 104
      %v790 = vpop.permute.xlu0 %789
      %v792 = vsel %vm313, %v788, 0
      %v795 = vsel %vm313, %v790, 0
      %797 = vmatprep.subr.bf16.mxu0 0
      %798 = vmatpush1.bf16.xpose.msra.mxu0 0
      %799 = vmatprep.subr.bf16.mxu0 0
      %800 = vmatpush1.bf16.xpose.msra.mxu0 0
      %801 = vmatprep.subr.bf16.mxu0 0
      %802 = vmatpush1.bf16.xpose.msra.mxu0 0
      %803 = vmatprep.subr.bf16.mxu0 0
      %804 = vmatpush1.bf16.xpose.msra.mxu0 0
      %805 = vmatprep.subr.bf16.mxu0 0
      %806 = vmatpush1.bf16.xpose.msra.mxu0 0
      %807 = vmatprep.subr.bf16.mxu0 0
      %808 = vmatpush1.bf16.xpose.msra.mxu0 0
      %809 = vmatprep.subr.bf16.mxu0 0
      %810 = vmatpush1.bf16.xpose.msra.mxu0 0
      %811 = vmatprep.subr.bf16.mxu0 0
      %812 = vmatpush1.bf16.xpose.msra.mxu0 %v795
      %813 = vmatprep.subr.bf16.mxu0 0
      %814 = vmatpush2.bf16.xpose.msra.mxu0 0
      %815 = vmatprep.subr.bf16.mxu0 0
      %816 = vmatpush2.bf16.xpose.msra.mxu0 0
      %817 = vmatprep.subr.bf16.mxu0 0
      %818 = vmatpush2.bf16.xpose.msra.mxu0 0
      %819 = vmatprep.subr.bf16.mxu0 0
      %820 = vmatpush2.bf16.xpose.msra.mxu0 0
      %821 = vmatprep.subr.bf16.mxu0 0
      %822 = vmatpush2.bf16.xpose.msra.mxu0 0
      %823 = vmatprep.subr.bf16.mxu0 0
      %824 = vmatpush2.bf16.xpose.msra.mxu0 0
      %825 = vmatprep.subr.bf16.mxu0 0
      %826 = vmatpush2.bf16.xpose.msra.mxu0 0
      %827 = vmatprep.subr.bf16.mxu0 0
      %828 = vmatpush2.bf16.xpose.msra.mxu0 0
      %829 = vmatprep.mubr.bf16.mxu0 0
      %830 = vmatmul.mubr.bf16.gmra.mxu0 %v792
      %v831 = vpop.f32.mrf.mxu0
      %v832 = vadd.f32 0.0, %v831
      %v833 = vpop.f32.mrf.mxu0
      %v834 = vpop.f32.mrf.mxu0
      %v835 = vpop.f32.mrf.mxu0
      %836 = vdwg.mxu0
      %v837 = vmul.f32 %v832, 0.35355338
      %v838 = vsel %vm361, %v837, -inf
      %839 = vmax.xlane.f32.xlu0 %v838
      %v840 = vpop.xlane.xlu0 %839
      %v841 = vsub.f32 %v837, %v840
      %v842 = vmul.f32 %v841, 1.442695
      %v843 = vpow.pop %v842
      %v844 = vsel %vm361, %v843, 0.0
      %845 = vadd.xlane.f32.xlu0 %v844
      %v846 = vpop.xlane.xlu0 %845
      %v847 = vrcp.pop %v846
      %v848 = vmul.f32 %v843, %v847
      %v849 = vpack.c.bf16 %v848, %v848
      %850 = vrot.lane.b32.xlu0 %v312, 104
      %v851 = vpop.permute.xlu0 %850
      %v854 = vsel %vm361, %v849, 0
      %856 = vmatprep.subr.bf16.mxu0 0
      %857 = vmatpush1.bf16.msra.mxu0 0
      %858 = vmatprep.subr.bf16.mxu0 0
      %859 = vmatpush1.bf16.msra.mxu0 0
      %860 = vmatprep.subr.bf16.mxu0 0
      %861 = vmatpush1.bf16.msra.mxu0 0
      %862 = vmatprep.subr.bf16.mxu0 0
      %863 = vmatpush1.bf16.msra.mxu0 0
      %864 = vmatprep.subr.bf16.mxu0 0
      %865 = vmatpush1.bf16.msra.mxu0 0
      %866 = vmatprep.subr.bf16.mxu0 0
      %867 = vmatpush1.bf16.msra.mxu0 0
      %868 = vmatprep.subr.bf16.mxu0 0
      %869 = vmatpush1.bf16.msra.mxu0 0
      %870 = vmatprep.subr.bf16.mxu0 0
      %871 = vmatpush1.bf16.msra.mxu0 %v851
      %872 = vmatprep.subr.bf16.mxu0 0
      %873 = vmatpush2.bf16.msra.mxu0 0
      %874 = vmatprep.subr.bf16.mxu0 0
      %875 = vmatpush2.bf16.msra.mxu0 0
      %876 = vmatprep.subr.bf16.mxu0 0
      %877 = vmatpush2.bf16.msra.mxu0 0
      %878 = vmatprep.subr.bf16.mxu0 0
      %879 = vmatpush2.bf16.msra.mxu0 0
      %880 = vmatprep.subr.bf16.mxu0 0
      %881 = vmatpush2.bf16.msra.mxu0 0
      %882 = vmatprep.subr.bf16.mxu0 0
      %883 = vmatpush2.bf16.msra.mxu0 0
      %884 = vmatprep.subr.bf16.mxu0 0
      %885 = vmatpush2.bf16.msra.mxu0 0
      %886 = vmatprep.subr.bf16.mxu0 0
      %887 = vmatpush2.bf16.msra.mxu0 0
      %888 = vmatprep.mubr.bf16.mxu0 0
      %889 = vmatmul.mubr.bf16.gmra.mxu0 %v854
      %v890 = vpop.f32.mrf.mxu0
      %v891 = vadd.f32 0.0, %v890
      %v892 = vpop.f32.mrf.mxu0
      %v893 = vpop.f32.mrf.mxu0
      %v894 = vpop.f32.mrf.mxu0
      %895 = vdwg.mxu0
      %v896 = vpack.c.bf16 %v891, %v891
      %v897 = vld [vmem:[%s4 + $0x18] sm:$0xff]
      %v898 = vpack.c.bf16 %v897, %v897
      %v900 = vsel %vm313, %v896, 0
      %v903 = vsel %vm538, %v898, 0
      %905 = vmatprep.subr.bf16.mxu0 0
      %906 = vmatpush1.bf16.msra.mxu0 0
      %907 = vmatprep.subr.bf16.mxu0 0
      %908 = vmatpush1.bf16.msra.mxu0 0
      %909 = vmatprep.subr.bf16.mxu0 0
      %910 = vmatpush1.bf16.msra.mxu0 0
      %911 = vmatprep.subr.bf16.mxu0 0
      %912 = vmatpush1.bf16.msra.mxu0 0
      %913 = vmatprep.subr.bf16.mxu0 0
      %914 = vmatpush1.bf16.msra.mxu0 0
      %915 = vmatprep.subr.bf16.mxu0 0
      %916 = vmatpush1.bf16.msra.mxu0 0
      %917 = vmatprep.subr.bf16.mxu0 0
      %918 = vmatpush1.bf16.msra.mxu0 0
      %919 = vmatprep.subr.bf16.mxu0 0
      %920 = vmatpush1.bf16.msra.mxu0 %v903
      %921 = vmatprep.subr.bf16.mxu0 0
      %922 = vmatpush2.bf16.msra.mxu0 0
      %923 = vmatprep.subr.bf16.mxu0 0
      %924 = vmatpush2.bf16.msra.mxu0 0
      %925 = vmatprep.subr.bf16.mxu0 0
      %926 = vmatpush2.bf16.msra.mxu0 0
      %927 = vmatprep.subr.bf16.mxu0 0
      %928 = vmatpush2.bf16.msra.mxu0 0
      %929 = vmatprep.subr.bf16.mxu0 0
      %930 = vmatpush2.bf16.msra.mxu0 0
      %931 = vmatprep.subr.bf16.mxu0 0
      %932 = vmatpush2.bf16.msra.mxu0 0
      %933 = vmatprep.subr.bf16.mxu0 0
      %934 = vmatpush2.bf16.msra.mxu0 0
      %935 = vmatprep.subr.bf16.mxu0 0
      %936 = vmatpush2.bf16.msra.mxu0 0
      %937 = vmatprep.mubr.bf16.mxu0 0
      %938 = vmatmul.mubr.bf16.gmra.mxu0 %v900
      %v939 = vpop.f32.mrf.mxu0
      %v940 = vadd.f32 0.0, %v939
      %v941 = vpop.f32.mrf.mxu0
      %v942 = vpop.f32.mrf.mxu0
      %v943 = vpop.f32.mrf.mxu0
      %944 = vdwg.mxu0
      %v945 = vadd.f32 %v786, %v940
      %v946 = vld [vmem:[%s5] sm:$0x1]
      %v948 = vlaneseq
      %v949 = vshrl.u32 %v948, 7
      %v950 = vsub.s32 0, %v949
      %v951 = vrot.slane %v946, %v950
      %v953 = vadd.f32 %v945, %v951
      %v954 = vld [vmem:[%s299] sm:$0xff]
      %v955 = vadd.f32 %v954, %v953
      %vm956 = vcmask 261120
      %957 = vst.msk [vmem:[%s303] sm:$0xff] %vm956, %v955
      %p958 = scmp.lt.s32.totalorder %s17, 1
      %s959 = scalar_select %p958, %s17, 1
      %s960 = smul.addr %s959, 8
      %s961 = scalar_lea.vmem %s6, %s960
      // Predicated region
      $region45: #{cross_pika_attention_layer.20} parent=43 // pred_check
        %p962 = pneg %p181
      $region46: #{cross_pika_attention_layer.20} parent=43 // pred_check_branch
        %964 = sbr.rel (%p962) target = $region48
      $region47: #{cross_pika_attention_layer.20} parent=43 // pred_region
        _
      $region48: #{cross_pika_attention_layer.20} parent=43 // pred_fallthru
        _
    $region44: #{cross_pika_attention_layer.20} parent=5 // pred_fallthru
      _
    %p965 = scmp.le.s32.totalorder 2, %s12
    // Predicated region
    $region49: #{cross_pika_attention_layer.20} parent=5 // pred_check
      %p966 = pneg %p965
    $region50: #{cross_pika_attention_layer.20} parent=5 // pred_check_branch
      %968 = sbr.rel (%p966) target = $region52
    $region51: #{cross_pika_attention_layer.20} parent=5 // pred_region
      %s969 = ssub.s32 %s12, 2
      // Predicated region
      $region53: #{cross_pika_attention_layer.20} parent=51 // pred_check
        %p970 = pneg %p187
      $region54: #{cross_pika_attention_layer.20} parent=51 // pred_check_branch
        %972 = sbr.rel (%p970) target = $region56
      $region55: #{cross_pika_attention_layer.20} parent=51 // pred_region
        %p973 = scmp.lt.s32.totalorder %s18, 1
        %s974 = scalar_select %p973, %s18, 1
        %s975 = smul.addr %s974, 8
        %s976 = scalar_lea.vmem %s6, %s975
      $region56: #{cross_pika_attention_layer.20} parent=51 // pred_fallthru
        _
    $region52: #{cross_pika_attention_layer.20} parent=5 // pred_fallthru
      _
  $region6: #{cross_pika_attention_layer.20} parent=0 // loop_footer
    %s16 = sadd.s32 1, %s12
  $region7: #{cross_pika_attention_layer.20} parent=0 // loop_footer_branch
    %11 = sbr.rel target = $region3
  $region8: #{cross_pika_attention_layer.20} parent=0 // loop_exit
    _

// kernel: cross_pika_attention_layer.28
$region0: #{cross_pika_attention_layer.28}
  #allocation0 [shape = 'u32[]', space=smem, size = 0x4, offset = 0x4, fixed_abs, tag = 'smem constant byte address 0x4 - core index']
  #allocation1 [shape = 'u32[144,128]{1,0:T(1,128)}', space=vmem, size = 0x12000, scoped, tag = 'internal scratch']
  %s0 = inlined_call_operand.vmem [shape: f32[16,32], index: 0, kind: input, shape index: {}]
  %s1 = inlined_call_operand.vmem [shape: f32[32,32], index: 1, kind: input, shape index: {}]
  %s2 = inlined_call_operand.vmem [shape: f32[1,32], index: 2, kind: input, shape index: {}]
  %s3 = inlined_call_operand.vmem [shape: f32[32,32], index: 3, kind: input, shape index: {}]
  %s4 = inlined_call_operand.vmem [shape: f32[1,32], index: 4, kind: input, shape index: {}]
  %s5 = inlined_call_operand.vmem [shape: f32[16,32], index: 5, kind: output, shape index: {0}]
  %s6 = inlined_call_operand.vmem [shape: f32[16,32], index: 6, kind: output, shape index: {1}]
  %7 = xla_tuple %s5, %s6
  %s8 = sld [smem:[#allocation0]]
  $region61: #{cross_pika_attention_layer.28} parent=0
    _
  %s10 = ssub.s32 1, %s8
  %s11 = scalar_select 0, %s10, %s8
  loop: start=0, step=1, limit=4
  $region2: #{cross_pika_attention_layer.28} parent=0 // loop_pre_header
    _
  $region3: #{cross_pika_attention_layer.28} parent=0 // loop_header
    %s13 = sphi 0, %s17
    %p14 = scmp.ge.s32.totalorder %s13, 4
    %s23 = sphi 0, %s25
    %s26 = sphi 0, %s23
    %s27 = sphi 0, %s26
    %s43 = sphi 0, %s27
    %s47 = sphi 0, %s47
    %s49 = sphi 0, %s47
    %s50 = sphi 0, %s49
    %s64 = sphi 0, %s50
    %s68 = sphi 0, %s68
    %s70 = sphi 0, %s68
    %s71 = sphi 0, %s70
    %s85 = sphi 0, %s71
    %s89 = sphi 0, %s89
    %s91 = sphi 0, %s89
    %s92 = sphi 0, %s91
    %s106 = sphi 0, %s92
    %s110 = sphi 0, %s110
    %s112 = sphi 0, %s110
    %s113 = sphi 0, %s112
    %s127 = sphi 0, %s113
    %s133 = sphi 0, %s135
    %s136 = sphi 0, %s133
    %s137 = sphi 0, %s136
    %s153 = sphi 0, %s137
    %s159 = sphi 0, %s161
    %s162 = sphi 0, %s159
    %s163 = sphi 0, %s162
    %s179 = sphi 0, %s163
  $region4: #{cross_pika_attention_layer.28} parent=0 // loop_header_branch
    %16 = sbr.rel (%p14) target = $region8
  $region5: #{cross_pika_attention_layer.28} parent=0 // loop_body
    %s18 = ssub.s32 %s13, 1
    %s19 = ssub.s32 %s13, 2
    %s20 = sadd.s32 %s13, 1
    %s21 = ssub.s32 %s13, %s20
    %p22 = scmp.eq.s32.totalorder %s21, 0
    %s24 = sadd.s32 %s23, 1
    %s25 = scalar_select %p22, %s23, %s24
    %p28 = pneg %p22
    %p29 = scmp.eq.s32.totalorder %s13, 1
    %p30 = por %p28, %p29
    %p31 = scmp.ne.s32.totalorder %s23, %s26
    %p32 = scmp.eq.s32.totalorder %s13, 0
    %p33 = por %p31, %p32
    %p34 = scmp.ne.s32.totalorder %s23, %s26
    %p35 = scmp.eq.s32.totalorder %s18, 1
    %p36 = por %p34, %p35
    %p37 = scmp.ne.s32.totalorder %s26, %s27
    %p38 = scmp.eq.s32.totalorder %s18, 0
    %p39 = por %p37, %p38
    %p40 = scmp.ne.s32.totalorder %s26, %s27
    %p41 = scmp.eq.s32.totalorder %s19, 1
    %p42 = por %p40, %p41
    %p44 = scmp.ne.s32.totalorder %s27, %s43
    %p45 = scmp.eq.s32.totalorder %s19, 0
    %p46 = por %p44, %p45
    %s48 = sadd.s32 %s47, 1
    %p51 = scmp.eq.s32.totalorder %s13, 1
    %p52 = scmp.ne.s32.totalorder %s47, %s49
    %p53 = scmp.eq.s32.totalorder %s13, 0
    %p54 = por %p52, %p53
    %p55 = scmp.ne.s32.totalorder %s47, %s49
    %p56 = scmp.eq.s32.totalorder %s18, 1
    %p57 = por %p55, %p56
    %p58 = scmp.ne.s32.totalorder %s49, %s50
    %p59 = scmp.eq.s32.totalorder %s18, 0
    %p60 = por %p58, %p59
    %p61 = scmp.ne.s32.totalorder %s49, %s50
    %p62 = scmp.eq.s32.totalorder %s19, 1
    %p63 = por %p61, %p62
    %p65 = scmp.ne.s32.totalorder %s50, %s64
    %p66 = scmp.eq.s32.totalorder %s19, 0
    %p67 = por %p65, %p66
    %s69 = sadd.s32 %s68, 1
    %p72 = scmp.eq.s32.totalorder %s13, 1
    %p73 = scmp.ne.s32.totalorder %s68, %s70
    %p74 = scmp.eq.s32.totalorder %s13, 0
    %p75 = por %p73, %p74
    %p76 = scmp.ne.s32.totalorder %s68, %s70
    %p77 = scmp.eq.s32.totalorder %s18, 1
    %p78 = por %p76, %p77
    %p79 = scmp.ne.s32.totalorder %s70, %s71
    %p80 = scmp.eq.s32.totalorder %s18, 0
    %p81 = por %p79, %p80
    %p82 = scmp.ne.s32.totalorder %s70, %s71
    %p83 = scmp.eq.s32.totalorder %s19, 1
    %p84 = por %p82, %p83
    %p86 = scmp.ne.s32.totalorder %s71, %s85
    %p87 = scmp.eq.s32.totalorder %s19, 0
    %p88 = por %p86, %p87
    %s90 = sadd.s32 %s89, 1
    %p93 = scmp.eq.s32.totalorder %s13, 1
    %p94 = scmp.ne.s32.totalorder %s89, %s91
    %p95 = scmp.eq.s32.totalorder %s13, 0
    %p96 = por %p94, %p95
    %p97 = scmp.ne.s32.totalorder %s89, %s91
    %p98 = scmp.eq.s32.totalorder %s18, 1
    %p99 = por %p97, %p98
    %p100 = scmp.ne.s32.totalorder %s91, %s92
    %p101 = scmp.eq.s32.totalorder %s18, 0
    %p102 = por %p100, %p101
    %p103 = scmp.ne.s32.totalorder %s91, %s92
    %p104 = scmp.eq.s32.totalorder %s19, 1
    %p105 = por %p103, %p104
    %p107 = scmp.ne.s32.totalorder %s92, %s106
    %p108 = scmp.eq.s32.totalorder %s19, 0
    %p109 = por %p107, %p108
    %s111 = sadd.s32 %s110, 1
    %p114 = scmp.eq.s32.totalorder %s13, 1
    %p115 = scmp.ne.s32.totalorder %s110, %s112
    %p116 = scmp.eq.s32.totalorder %s13, 0
    %p117 = por %p115, %p116
    %p118 = scmp.ne.s32.totalorder %s110, %s112
    %p119 = scmp.eq.s32.totalorder %s18, 1
    %p120 = por %p118, %p119
    %p121 = scmp.ne.s32.totalorder %s112, %s113
    %p122 = scmp.eq.s32.totalorder %s18, 0
    %p123 = por %p121, %p122
    %p124 = scmp.ne.s32.totalorder %s112, %s113
    %p125 = scmp.eq.s32.totalorder %s19, 1
    %p126 = por %p124, %p125
    %p128 = scmp.ne.s32.totalorder %s113, %s127
    %p129 = scmp.eq.s32.totalorder %s19, 0
    %p130 = por %p128, %p129
    %s131 = ssub.s32 %s13, %s20
    %p132 = scmp.eq.s32.totalorder %s131, 0
    %s134 = sadd.s32 %s133, 1
    %s135 = scalar_select %p132, %s133, %s134
    %p138 = pneg %p132
    %p139 = scmp.eq.s32.totalorder %s13, 1
    %p140 = por %p138, %p139
    %p141 = scmp.ne.s32.totalorder %s133, %s136
    %p142 = scmp.eq.s32.totalorder %s13, 0
    %p143 = por %p141, %p142
    %p144 = scmp.ne.s32.totalorder %s133, %s136
    %p145 = scmp.eq.s32.totalorder %s18, 1
    %p146 = por %p144, %p145
    %p147 = scmp.ne.s32.totalorder %s136, %s137
    %p148 = scmp.eq.s32.totalorder %s18, 0
    %p149 = por %p147, %p148
    %p150 = scmp.ne.s32.totalorder %s136, %s137
    %p151 = scmp.eq.s32.totalorder %s19, 1
    %p152 = por %p150, %p151
    %p154 = scmp.ne.s32.totalorder %s137, %s153
    %p155 = scmp.eq.s32.totalorder %s19, 0
    %p156 = por %p154, %p155
    %s157 = ssub.s32 %s13, %s20
    %p158 = scmp.eq.s32.totalorder %s157, 0
    %s160 = sadd.s32 %s159, 1
    %s161 = scalar_select %p158, %s159, %s160
    %p164 = pneg %p158
    %p165 = scmp.eq.s32.totalorder %s13, 1
    %p166 = por %p164, %p165
    %p167 = scmp.ne.s32.totalorder %s159, %s162
    %p168 = scmp.eq.s32.totalorder %s13, 0
    %p169 = por %p167, %p168
    %p170 = scmp.ne.s32.totalorder %s159, %s162
    %p171 = scmp.eq.s32.totalorder %s18, 1
    %p172 = por %p170, %p171
    %p173 = scmp.ne.s32.totalorder %s162, %s163
    %p174 = scmp.eq.s32.totalorder %s18, 0
    %p175 = por %p173, %p174
    %p176 = scmp.ne.s32.totalorder %s162, %s163
    %p177 = scmp.eq.s32.totalorder %s19, 1
    %p178 = por %p176, %p177
    %p180 = scmp.ne.s32.totalorder %s163, %s179
    %p181 = scmp.eq.s32.totalorder %s19, 0
    %p182 = por %p180, %p181
    %p183 = scmp.le.s32.totalorder 1, %s13
    %p184 = scmp.lt.s32.totalorder %s13, 3
    %p185 = pnand %p183, %p184
    %p186 = pneg %p185
    // Predicated region
    $region9: #{cross_pika_attention_layer.28} parent=5 // pred_check
      _
    $region10: #{cross_pika_attention_layer.28} parent=5 // pred_check_branch
      %188 = sbr.rel (%p185) target = $region12
    $region11: #{cross_pika_attention_layer.28} parent=5 // pred_region
      %s189 = ssub.s32 %s13, 1
      // Predicated region
      $region13: #{cross_pika_attention_layer.28} parent=11 // pred_check
        %p190 = pneg %p60
      $region14: #{cross_pika_attention_layer.28} parent=11 // pred_check_branch
        %192 = sbr.rel (%p190) target = $region16
      $region15: #{cross_pika_attention_layer.28} parent=11 // pred_region
        _
      $region16: #{cross_pika_attention_layer.28} parent=11 // pred_fallthru
        _
      // Predicated region
      $region17: #{cross_pika_attention_layer.28} parent=11 // pred_check
        %p193 = pneg %p81
      $region18: #{cross_pika_attention_layer.28} parent=11 // pred_check_branch
        %195 = sbr.rel (%p193) target = $region20
      $region19: #{cross_pika_attention_layer.28} parent=11 // pred_region
        _
      $region20: #{cross_pika_attention_layer.28} parent=11 // pred_fallthru
        _
      // Predicated region
      $region21: #{cross_pika_attention_layer.28} parent=11 // pred_check
        %p196 = pneg %p102
      $region22: #{cross_pika_attention_layer.28} parent=11 // pred_check_branch
        %198 = sbr.rel (%p196) target = $region24
      $region23: #{cross_pika_attention_layer.28} parent=11 // pred_region
        _
      $region24: #{cross_pika_attention_layer.28} parent=11 // pred_fallthru
        _
      // Predicated region
      $region25: #{cross_pika_attention_layer.28} parent=11 // pred_check
        %p199 = pneg %p123
      $region26: #{cross_pika_attention_layer.28} parent=11 // pred_check_branch
        %201 = sbr.rel (%p199) target = $region28
      $region27: #{cross_pika_attention_layer.28} parent=11 // pred_region
        _
      $region28: #{cross_pika_attention_layer.28} parent=11 // pred_fallthru
        _
    $region12: #{cross_pika_attention_layer.28} parent=5 // pred_fallthru
      _
    %p202 = scmp.lt.s32.totalorder %s13, 2
    // Predicated region
    $region29: #{cross_pika_attention_layer.28} parent=5 // pred_check
      %p203 = pneg %p202
    $region30: #{cross_pika_attention_layer.28} parent=5 // pred_check_branch
      %205 = sbr.rel (%p203) target = $region32
    $region31: #{cross_pika_attention_layer.28} parent=5 // pred_region
      // Predicated region
      $region33: #{cross_pika_attention_layer.28} parent=31 // pred_check
        %p206 = pneg %p33
      $region34: #{cross_pika_attention_layer.28} parent=31 // pred_check_branch
        %208 = sbr.rel (%p206) target = $region36
      $region35: #{cross_pika_attention_layer.28} parent=31 // pred_region
        %p209 = scmp.lt.s32.totalorder %s13, 1
        %s210 = scalar_select %p209, %s13, 1
        %s211 = smul.addr %s210, 8
        %s212 = scalar_lea.vmem %s0, %s211
      $region36: #{cross_pika_attention_layer.28} parent=31 // pred_fallthru
        _
    $region32: #{cross_pika_attention_layer.28} parent=5 // pred_fallthru
      _
    %p213 = scmp.le.s32.totalorder 1, %s13
    %p214 = scmp.lt.s32.totalorder %s13, 3
    %p215 = pnand %p213, %p214
    %p216 = pneg %p215
    // Predicated region
    $region37: #{cross_pika_attention_layer.28} parent=5 // pred_check
      _
    $region38: #{cross_pika_attention_layer.28} parent=5 // pred_check_branch
      %218 = sbr.rel (%p215) target = $region40
    $region39: #{cross_pika_attention_layer.28} parent=5 // pred_region
      %s219 = ssub.s32 %s13, 1
      %p220 = scmp.lt.s32.totalorder %s18, 1
      %s221 = scalar_select %p220, %s18, 1
      %s222 = smul.addr %s221, 8
      %s223 = scalar_lea.vmem %s0, %s222
      %p224 = pneg %p39
      %p225 = pneg %p36
      %p226 = pneg %p60
      %p227 = pneg %p57
      %p228 = pneg %p81
      %p229 = pneg %p78
      %p230 = pneg %p102
      %p231 = pneg %p99
      %p232 = pneg %p123
      %p233 = pneg %p120
      %p234 = pneg %p149
      %p235 = pneg %p146
      %p236 = scmp.lt.s32.totalorder %s18, 1
      %s237 = scalar_select %p236, %s18, 1
      %s238 = smul.addr %s237, 8
      %s239 = scalar_lea.vmem %s5, %s238
      %p240 = pneg %p175
      %p241 = pneg %p172
      %p242 = scmp.lt.s32.totalorder %s18, 1
      %s243 = scalar_select %p242, %s18, 1
      %s244 = smul.addr %s243, 8
      %s245 = scalar_lea.vmem %s6, %s244
      %p246 = scmp.lt.s32.totalorder %s18, 1
      %s247 = scalar_select %p246, %s18, 1
      %s248 = smul.addr %s247, 8
      %s249 = scalar_lea.vmem %s0, %s248
      %p250 = scmp.lt.s32.totalorder %s18, 1
      %s251 = scalar_select %p250, %s18, 1
      %s252 = smul.addr %s251, 8
      %s253 = scalar_lea.vmem %s5, %s252
      %p254 = scmp.lt.s32.totalorder %s18, 1
      %s255 = scalar_select %p254, %s18, 1
      %s256 = smul.addr %s255, 8
      %s257 = scalar_lea.vmem %s6, %s256
      %v259 = vld [vmem:[%s249] sm:$0xff]
      %v260 = vpack.c.bf16 %v259, %v259
      %v261 = vld [vmem:[%s1] sm:$0xff]
      %v262 = vld [vmem:[%s1 + $0x8] sm:$0xff]
      %v263 = vld [vmem:[%s1 + $0x10] sm:$0xff]
      %v264 = vld [vmem:[%s1 + $0x18] sm:$0xff]
      %v265 = vpack.c.bf16 %v262, %v261
      %v266 = vpack.c.bf16 %v264, %v263
      %v267 = vld [vmem:[%s2] sm:$0x1]
      %v269 = vlaneseq
      %v270 = vshrl.u32 %v269, 7
      %v271 = vsub.s32 0, %v270
      %v272 = vrot.slane %v267, %v271
      %vm274 = vcmask 261120
      %v276 = vsel %vm274, %v260, 0
      %278 = vmatprep.subr.bf16.mxu0 0
      %279 = vmatpush1.bf16.msra.mxu0 0
      %280 = vmatprep.subr.bf16.mxu0 0
      %281 = vmatpush1.bf16.msra.mxu0 0
      %282 = vmatprep.subr.bf16.mxu0 0
      %283 = vmatpush1.bf16.msra.mxu0 0
      %284 = vmatprep.subr.bf16.mxu0 0
      %285 = vmatpush1.bf16.msra.mxu0 0
      %286 = vmatprep.subr.bf16.mxu0 0
      %287 = vmatpush1.bf16.msra.mxu0 0
      %288 = vmatprep.subr.bf16.mxu0 0
      %289 = vmatpush1.bf16.msra.mxu0 0
      %290 = vmatprep.subr.bf16.mxu0 0
      %291 = vmatpush1.bf16.msra.mxu0 %v266
      %292 = vmatprep.subr.bf16.mxu0 0
      %293 = vmatpush1.bf16.msra.mxu0 %v265
      %294 = vmatprep.subr.bf16.mxu0 0
      %295 = vmatpush2.bf16.msra.mxu0 0
      %296 = vmatprep.subr.bf16.mxu0 0
      %297 = vmatpush2.bf16.msra.mxu0 0
      %298 = vmatprep.subr.bf16.mxu0 0
      %299 = vmatpush2.bf16.msra.mxu0 0
      %300 = vmatprep.subr.bf16.mxu0 0
      %301 = vmatpush2.bf16.msra.mxu0 0
      %302 = vmatprep.subr.bf16.mxu0 0
      %303 = vmatpush2.bf16.msra.mxu0 0
      %304 = vmatprep.subr.bf16.mxu0 0
      %305 = vmatpush2.bf16.msra.mxu0 0
      %306 = vmatprep.subr.bf16.mxu0 0
      %307 = vmatpush2.bf16.msra.mxu0 0
      %308 = vmatprep.subr.bf16.mxu0 0
      %309 = vmatpush2.bf16.msra.mxu0 0
      %310 = vmatprep.mubr.bf16.mxu0 0
      %311 = vmatmul.mubr.bf16.gmra.mxu0 %v276
      %v312 = vpop.f32.mrf.mxu0
      %v313 = vadd.f32 %v272, %v312
      %v314 = vpop.f32.mrf.mxu0
      %v315 = vpop.f32.mrf.mxu0
      %v316 = vpop.f32.mrf.mxu0
      %317 = vdwg.mxu0
      %318 = vst.msk [vmem:[%s253] sm:$0xff] %vm274, %v313
      %v319 = vld [vmem:[%s3] sm:$0xff]
      %v320 = vld [vmem:[%s3 + $0x8] sm:$0xff]
      %v321 = vld [vmem:[%s3 + $0x10] sm:$0xff]
      %v322 = vld [vmem:[%s3 + $0x18] sm:$0xff]
      %v323 = vpack.c.bf16 %v320, %v319
      %v324 = vpack.c.bf16 %v322, %v321
      %v325 = vld [vmem:[%s4] sm:$0x1]
      %v327 = vlaneseq
      %v328 = vshrl.u32 %v327, 7
      %v329 = vsub.s32 0, %v328
      %v330 = vrot.slane %v325, %v329
      %332 = vmatprep.subr.bf16.mxu0 0
      %333 = vmatpush1.bf16.msra.mxu0 0
      %334 = vmatprep.subr.bf16.mxu0 0
      %335 = vmatpush1.bf16.msra.mxu0 0
      %336 = vmatprep.subr.bf16.mxu0 0
      %337 = vmatpush1.bf16.msra.mxu0 0
      %338 = vmatprep.subr.bf16.mxu0 0
      %339 = vmatpush1.bf16.msra.mxu0 0
      %340 = vmatprep.subr.bf16.mxu0 0
      %341 = vmatpush1.bf16.msra.mxu0 0
      %342 = vmatprep.subr.bf16.mxu0 0
      %343 = vmatpush1.bf16.msra.mxu0 0
      %344 = vmatprep.subr.bf16.mxu0 0
      %345 = vmatpush1.bf16.msra.mxu0 %v324
      %346 = vmatprep.subr.bf16.mxu0 0
      %347 = vmatpush1.bf16.msra.mxu0 %v323
      %348 = vmatprep.subr.bf16.mxu0 0
      %349 = vmatpush2.bf16.msra.mxu0 0
      %350 = vmatprep.subr.bf16.mxu0 0
      %351 = vmatpush2.bf16.msra.mxu0 0
      %352 = vmatprep.subr.bf16.mxu0 0
      %353 = vmatpush2.bf16.msra.mxu0 0
      %354 = vmatprep.subr.bf16.mxu0 0
      %355 = vmatpush2.bf16.msra.mxu0 0
      %356 = vmatprep.subr.bf16.mxu0 0
      %357 = vmatpush2.bf16.msra.mxu0 0
      %358 = vmatprep.subr.bf16.mxu0 0
      %359 = vmatpush2.bf16.msra.mxu0 0
      %360 = vmatprep.subr.bf16.mxu0 0
      %361 = vmatpush2.bf16.msra.mxu0 0
      %362 = vmatprep.subr.bf16.mxu0 0
      %363 = vmatpush2.bf16.msra.mxu0 0
      %364 = vmatprep.mubr.bf16.mxu0 0
      %365 = vmatmul.mubr.bf16.gmra.mxu0 %v276
      %v366 = vpop.f32.mrf.mxu0
      %v367 = vadd.f32 %v330, %v366
      %v368 = vpop.f32.mrf.mxu0
      %v369 = vpop.f32.mrf.mxu0
      %v370 = vpop.f32.mrf.mxu0
      %371 = vdwg.mxu0
      %372 = vst.msk [vmem:[%s257] sm:$0xff] %vm274, %v367
      %p373 = scmp.lt.s32.totalorder %s18, 1
      %s374 = scalar_select %p373, %s18, 1
      %s375 = smul.addr %s374, 8
      %s376 = scalar_lea.vmem %s5, %s375
      %p377 = scmp.lt.s32.totalorder %s18, 1
      %s378 = scalar_select %p377, %s18, 1
      %s379 = smul.addr %s378, 8
      %s380 = scalar_lea.vmem %s6, %s379
      // Predicated region
      $region41: #{cross_pika_attention_layer.28} parent=39 // pred_check
        %p381 = pneg %p146
      $region42: #{cross_pika_attention_layer.28} parent=39 // pred_check_branch
        %383 = sbr.rel (%p381) target = $region44
      $region43: #{cross_pika_attention_layer.28} parent=39 // pred_region
        _
      $region44: #{cross_pika_attention_layer.28} parent=39 // pred_fallthru
        _
      // Predicated region
      $region45: #{cross_pika_attention_layer.28} parent=39 // pred_check
        %p384 = pneg %p172
      $region46: #{cross_pika_attention_layer.28} parent=39 // pred_check_branch
        %386 = sbr.rel (%p384) target = $region48
      $region47: #{cross_pika_attention_layer.28} parent=39 // pred_region
        _
      $region48: #{cross_pika_attention_layer.28} parent=39 // pred_fallthru
        _
    $region40: #{cross_pika_attention_layer.28} parent=5 // pred_fallthru
      _
    %p387 = scmp.le.s32.totalorder 2, %s13
    // Predicated region
    $region49: #{cross_pika_attention_layer.28} parent=5 // pred_check
      %p388 = pneg %p387
    $region50: #{cross_pika_attention_layer.28} parent=5 // pred_check_branch
      %390 = sbr.rel (%p388) target = $region52
    $region51: #{cross_pika_attention_layer.28} parent=5 // pred_region
      %s391 = ssub.s32 %s13, 2
      // Predicated region
      $region53: #{cross_pika_attention_layer.28} parent=51 // pred_check
        %p392 = pneg %p152
      $region54: #{cross_pika_attention_layer.28} parent=51 // pred_check_branch
        %394 = sbr.rel (%p392) target = $region56
      $region55: #{cross_pika_attention_layer.28} parent=51 // pred_region
        %p395 = scmp.lt.s32.totalorder %s19, 1
        %s396 = scalar_select %p395, %s19, 1
        %s397 = smul.addr %s396, 8
        %s398 = scalar_lea.vmem %s5, %s397
      $region56: #{cross_pika_attention_layer.28} parent=51 // pred_fallthru
        _
      // Predicated region
      $region57: #{cross_pika_attention_layer.28} parent=51 // pred_check
        %p399 = pneg %p178
      $region58: #{cross_pika_attention_layer.28} parent=51 // pred_check_branch
        %401 = sbr.rel (%p399) target = $region60
      $region59: #{cross_pika_attention_layer.28} parent=51 // pred_region
        %p402 = scmp.lt.s32.totalorder %s19, 1
        %s403 = scalar_select %p402, %s19, 1
        %s404 = smul.addr %s403, 8
        %s405 = scalar_lea.vmem %s6, %s404
      $region60: #{cross_pika_attention_layer.28} parent=51 // pred_fallthru
        _
    $region52: #{cross_pika_attention_layer.28} parent=5 // pred_fallthru
      _
  $region6: #{cross_pika_attention_layer.28} parent=0 // loop_footer
    %s17 = sadd.s32 1, %s13
  $region7: #{cross_pika_attention_layer.28} parent=0 // loop_footer_branch
    %12 = sbr.rel target = $region3
  $region8: #{cross_pika_attention_layer.28} parent=0 // loop_exit
    _

// kernel: cross_pika_attention_layer.21
$region0: #{cross_pika_attention_layer.21}
  #allocation0 [shape = 'u32[]', space=smem, size = 0x4, offset = 0x4, fixed_abs, tag = 'smem constant byte address 0x4 - core index']
  #allocation1 [shape = 'u32[144,128]{1,0:T(1,128)}', space=vmem, size = 0x12000, scoped, tag = 'internal scratch']
  %s0 = inlined_call_operand.vmem [shape: f32[16,32], index: 0, kind: input, shape index: {}]
  %s1 = inlined_call_operand.vmem [shape: f32[1,32], index: 1, kind: input, shape index: {}]
  %s2 = inlined_call_operand.vmem [shape: f32[1,32], index: 2, kind: input, shape index: {}]
  %s3 = inlined_call_operand.vmem [shape: f32[32,128], index: 3, kind: input, shape index: {}]
  %s4 = inlined_call_operand.vmem [shape: f32[1,128], index: 4, kind: input, shape index: {}]
  %s5 = inlined_call_operand.vmem [shape: f32[128,32], index: 5, kind: input, shape index: {}]
  %s6 = inlined_call_operand.vmem [shape: f32[1,32], index: 6, kind: input, shape index: {}]
  %s7 = inlined_call_operand.vmem [shape: f32[16,32], index: 7, kind: output, shape index: {}]
  %s8 = sld [smem:[#allocation0]]
  $region61: #{cross_pika_attention_layer.21} parent=0
    _
  %s10 = ssub.s32 1, %s8
  %s11 = scalar_select 0, %s10, %s8
  loop: start=0, step=1, limit=4
  $region2: #{cross_pika_attention_layer.21} parent=0 // loop_pre_header
    _
  $region3: #{cross_pika_attention_layer.21} parent=0 // loop_header
    %s13 = sphi 0, %s17
    %p14 = scmp.ge.s32.totalorder %s13, 4
    %s23 = sphi 0, %s25
    %s26 = sphi 0, %s23
    %s27 = sphi 0, %s26
    %s43 = sphi 0, %s27
    %s47 = sphi 0, %s47
    %s49 = sphi 0, %s47
    %s50 = sphi 0, %s49
    %s64 = sphi 0, %s50
    %s68 = sphi 0, %s68
    %s70 = sphi 0, %s68
    %s71 = sphi 0, %s70
    %s85 = sphi 0, %s71
    %s89 = sphi 0, %s89
    %s91 = sphi 0, %s89
    %s92 = sphi 0, %s91
    %s106 = sphi 0, %s92
    %s110 = sphi 0, %s110
    %s112 = sphi 0, %s110
    %s113 = sphi 0, %s112
    %s127 = sphi 0, %s113
    %s131 = sphi 0, %s131
    %s133 = sphi 0, %s131
    %s134 = sphi 0, %s133
    %s148 = sphi 0, %s134
    %s152 = sphi 0, %s152
    %s154 = sphi 0, %s152
    %s155 = sphi 0, %s154
    %s169 = sphi 0, %s155
    %s175 = sphi 0, %s177
    %s178 = sphi 0, %s175
    %s179 = sphi 0, %s178
    %s195 = sphi 0, %s179
  $region4: #{cross_pika_attention_layer.21} parent=0 // loop_header_branch
    %16 = sbr.rel (%p14) target = $region8
  $region5: #{cross_pika_attention_layer.21} parent=0 // loop_body
    %s18 = ssub.s32 %s13, 1
    %s19 = ssub.s32 %s13, 2
    %s20 = sadd.s32 %s13, 1
    %s21 = ssub.s32 %s13, %s20
    %p22 = scmp.eq.s32.totalorder %s21, 0
    %s24 = sadd.s32 %s23, 1
    %s25 = scalar_select %p22, %s23, %s24
    %p28 = pneg %p22
    %p29 = scmp.eq.s32.totalorder %s13, 1
    %p30 = por %p28, %p29
    %p31 = scmp.ne.s32.totalorder %s23, %s26
    %p32 = scmp.eq.s32.totalorder %s13, 0
    %p33 = por %p31, %p32
    %p34 = scmp.ne.s32.totalorder %s23, %s26
    %p35 = scmp.eq.s32.totalorder %s18, 1
    %p36 = por %p34, %p35
    %p37 = scmp.ne.s32.totalorder %s26, %s27
    %p38 = scmp.eq.s32.totalorder %s18, 0
    %p39 = por %p37, %p38
    %p40 = scmp.ne.s32.totalorder %s26, %s27
    %p41 = scmp.eq.s32.totalorder %s19, 1
    %p42 = por %p40, %p41
    %p44 = scmp.ne.s32.totalorder %s27, %s43
    %p45 = scmp.eq.s32.totalorder %s19, 0
    %p46 = por %p44, %p45
    %s48 = sadd.s32 %s47, 1
    %p51 = scmp.eq.s32.totalorder %s13, 1
    %p52 = scmp.ne.s32.totalorder %s47, %s49
    %p53 = scmp.eq.s32.totalorder %s13, 0
    %p54 = por %p52, %p53
    %p55 = scmp.ne.s32.totalorder %s47, %s49
    %p56 = scmp.eq.s32.totalorder %s18, 1
    %p57 = por %p55, %p56
    %p58 = scmp.ne.s32.totalorder %s49, %s50
    %p59 = scmp.eq.s32.totalorder %s18, 0
    %p60 = por %p58, %p59
    %p61 = scmp.ne.s32.totalorder %s49, %s50
    %p62 = scmp.eq.s32.totalorder %s19, 1
    %p63 = por %p61, %p62
    %p65 = scmp.ne.s32.totalorder %s50, %s64
    %p66 = scmp.eq.s32.totalorder %s19, 0
    %p67 = por %p65, %p66
    %s69 = sadd.s32 %s68, 1
    %p72 = scmp.eq.s32.totalorder %s13, 1
    %p73 = scmp.ne.s32.totalorder %s68, %s70
    %p74 = scmp.eq.s32.totalorder %s13, 0
    %p75 = por %p73, %p74
    %p76 = scmp.ne.s32.totalorder %s68, %s70
    %p77 = scmp.eq.s32.totalorder %s18, 1
    %p78 = por %p76, %p77
    %p79 = scmp.ne.s32.totalorder %s70, %s71
    %p80 = scmp.eq.s32.totalorder %s18, 0
    %p81 = por %p79, %p80
    %p82 = scmp.ne.s32.totalorder %s70, %s71
    %p83 = scmp.eq.s32.totalorder %s19, 1
    %p84 = por %p82, %p83
    %p86 = scmp.ne.s32.totalorder %s71, %s85
    %p87 = scmp.eq.s32.totalorder %s19, 0
    %p88 = por %p86, %p87
    %s90 = sadd.s32 %s89, 1
    %p93 = scmp.eq.s32.totalorder %s13, 1
    %p94 = scmp.ne.s32.totalorder %s89, %s91
    %p95 = scmp.eq.s32.totalorder %s13, 0
    %p96 = por %p94, %p95
    %p97 = scmp.ne.s32.totalorder %s89, %s91
    %p98 = scmp.eq.s32.totalorder %s18, 1
    %p99 = por %p97, %p98
    %p100 = scmp.ne.s32.totalorder %s91, %s92
    %p101 = scmp.eq.s32.totalorder %s18, 0
    %p102 = por %p100, %p101
    %p103 = scmp.ne.s32.totalorder %s91, %s92
    %p104 = scmp.eq.s32.totalorder %s19, 1
    %p105 = por %p103, %p104
    %p107 = scmp.ne.s32.totalorder %s92, %s106
    %p108 = scmp.eq.s32.totalorder %s19, 0
    %p109 = por %p107, %p108
    %s111 = sadd.s32 %s110, 1
    %p114 = scmp.eq.s32.totalorder %s13, 1
    %p115 = scmp.ne.s32.totalorder %s110, %s112
    %p116 = scmp.eq.s32.totalorder %s13, 0
    %p117 = por %p115, %p116
    %p118 = scmp.ne.s32.totalorder %s110, %s112
    %p119 = scmp.eq.s32.totalorder %s18, 1
    %p120 = por %p118, %p119
    %p121 = scmp.ne.s32.totalorder %s112, %s113
    %p122 = scmp.eq.s32.totalorder %s18, 0
    %p123 = por %p121, %p122
    %p124 = scmp.ne.s32.totalorder %s112, %s113
    %p125 = scmp.eq.s32.totalorder %s19, 1
    %p126 = por %p124, %p125
    %p128 = scmp.ne.s32.totalorder %s113, %s127
    %p129 = scmp.eq.s32.totalorder %s19, 0
    %p130 = por %p128, %p129
    %s132 = sadd.s32 %s131, 1
    %p135 = scmp.eq.s32.totalorder %s13, 1
    %p136 = scmp.ne.s32.totalorder %s131, %s133
    %p137 = scmp.eq.s32.totalorder %s13, 0
    %p138 = por %p136, %p137
    %p139 = scmp.ne.s32.totalorder %s131, %s133
    %p140 = scmp.eq.s32.totalorder %s18, 1
    %p141 = por %p139, %p140
    %p142 = scmp.ne.s32.totalorder %s133, %s134
    %p143 = scmp.eq.s32.totalorder %s18, 0
    %p144 = por %p142, %p143
    %p145 = scmp.ne.s32.totalorder %s133, %s134
    %p146 = scmp.eq.s32.totalorder %s19, 1
    %p147 = por %p145, %p146
    %p149 = scmp.ne.s32.totalorder %s134, %s148
    %p150 = scmp.eq.s32.totalorder %s19, 0
    %p151 = por %p149, %p150
    %s153 = sadd.s32 %s152, 1
    %p156 = scmp.eq.s32.totalorder %s13, 1
    %p157 = scmp.ne.s32.totalorder %s152, %s154
    %p158 = scmp.eq.s32.totalorder %s13, 0
    %p159 = por %p157, %p158
    %p160 = scmp.ne.s32.totalorder %s152, %s154
    %p161 = scmp.eq.s32.totalorder %s18, 1
    %p162 = por %p160, %p161
    %p163 = scmp.ne.s32.totalorder %s154, %s155
    %p164 = scmp.eq.s32.totalorder %s18, 0
    %p165 = por %p163, %p164
    %p166 = scmp.ne.s32.totalorder %s154, %s155
    %p167 = scmp.eq.s32.totalorder %s19, 1
    %p168 = por %p166, %p167
    %p170 = scmp.ne.s32.totalorder %s155, %s169
    %p171 = scmp.eq.s32.totalorder %s19, 0
    %p172 = por %p170, %p171
    %s173 = ssub.s32 %s13, %s20
    %p174 = scmp.eq.s32.totalorder %s173, 0
    %s176 = sadd.s32 %s175, 1
    %s177 = scalar_select %p174, %s175, %s176
    %p180 = pneg %p174
    %p181 = scmp.eq.s32.totalorder %s13, 1
    %p182 = por %p180, %p181
    %p183 = scmp.ne.s32.totalorder %s175, %s178
    %p184 = scmp.eq.s32.totalorder %s13, 0
    %p185 = por %p183, %p184
    %p186 = scmp.ne.s32.totalorder %s175, %s178
    %p187 = scmp.eq.s32.totalorder %s18, 1
    %p188 = por %p186, %p187
    %p189 = scmp.ne.s32.totalorder %s178, %s179
    %p190 = scmp.eq.s32.totalorder %s18, 0
    %p191 = por %p189, %p190
    %p192 = scmp.ne.s32.totalorder %s178, %s179
    %p193 = scmp.eq.s32.totalorder %s19, 1
    %p194 = por %p192, %p193
    %p196 = scmp.ne.s32.totalorder %s179, %s195
    %p197 = scmp.eq.s32.totalorder %s19, 0
    %p198 = por %p196, %p197
    %p199 = scmp.le.s32.totalorder 1, %s13
    %p200 = scmp.lt.s32.totalorder %s13, 3
    %p201 = pnand %p199, %p200
    %p202 = pneg %p201
    // Predicated region
    $region9: #{cross_pika_attention_layer.21} parent=5 // pred_check
      _
    $region10: #{cross_pika_attention_layer.21} parent=5 // pred_check_branch
      %204 = sbr.rel (%p201) target = $region12
    $region11: #{cross_pika_attention_layer.21} parent=5 // pred_region
      %s205 = ssub.s32 %s13, 1
      // Predicated region
      $region13: #{cross_pika_attention_layer.21} parent=11 // pred_check
        %p206 = pneg %p60
      $region14: #{cross_pika_attention_layer.21} parent=11 // pred_check_branch
        %208 = sbr.rel (%p206) target = $region16
      $region15: #{cross_pika_attention_layer.21} parent=11 // pred_region
        _
      $region16: #{cross_pika_attention_layer.21} parent=11 // pred_fallthru
        _
      // Predicated region
      $region17: #{cross_pika_attention_layer.21} parent=11 // pred_check
        %p209 = pneg %p81
      $region18: #{cross_pika_attention_layer.21} parent=11 // pred_check_branch
        %211 = sbr.rel (%p209) target = $region20
      $region19: #{cross_pika_attention_layer.21} parent=11 // pred_region
        _
      $region20: #{cross_pika_attention_layer.21} parent=11 // pred_fallthru
        _
      // Predicated region
      $region21: #{cross_pika_attention_layer.21} parent=11 // pred_check
        %p212 = pneg %p102
      $region22: #{cross_pika_attention_layer.21} parent=11 // pred_check_branch
        %214 = sbr.rel (%p212) target = $region24
      $region23: #{cross_pika_attention_layer.21} parent=11 // pred_region
        _
      $region24: #{cross_pika_attention_layer.21} parent=11 // pred_fallthru
        _
      // Predicated region
      $region25: #{cross_pika_attention_layer.21} parent=11 // pred_check
        %p215 = pneg %p123
      $region26: #{cross_pika_attention_layer.21} parent=11 // pred_check_branch
        %217 = sbr.rel (%p215) target = $region28
      $region27: #{cross_pika_attention_layer.21} parent=11 // pred_region
        _
      $region28: #{cross_pika_attention_layer.21} parent=11 // pred_fallthru
        _
      // Predicated region
      $region29: #{cross_pika_attention_layer.21} parent=11 // pred_check
        %p218 = pneg %p144
      $region30: #{cross_pika_attention_layer.21} parent=11 // pred_check_branch
        %220 = sbr.rel (%p218) target = $region32
      $region31: #{cross_pika_attention_layer.21} parent=11 // pred_region
        _
      $region32: #{cross_pika_attention_layer.21} parent=11 // pred_fallthru
        _
      // Predicated region
      $region33: #{cross_pika_attention_layer.21} parent=11 // pred_check
        %p221 = pneg %p165
      $region34: #{cross_pika_attention_layer.21} parent=11 // pred_check_branch
        %223 = sbr.rel (%p221) target = $region36
      $region35: #{cross_pika_attention_layer.21} parent=11 // pred_region
        _
      $region36: #{cross_pika_attention_layer.21} parent=11 // pred_fallthru
        _
    $region12: #{cross_pika_attention_layer.21} parent=5 // pred_fallthru
      _
    %p224 = scmp.lt.s32.totalorder %s13, 2
    // Predicated region
    $region37: #{cross_pika_attention_layer.21} parent=5 // pred_check
      %p225 = pneg %p224
    $region38: #{cross_pika_attention_layer.21} parent=5 // pred_check_branch
      %227 = sbr.rel (%p225) target = $region40
    $region39: #{cross_pika_attention_layer.21} parent=5 // pred_region
      // Predicated region
      $region41: #{cross_pika_attention_layer.21} parent=39 // pred_check
        %p228 = pneg %p33
      $region42: #{cross_pika_attention_layer.21} parent=39 // pred_check_branch
        %230 = sbr.rel (%p228) target = $region44
      $region43: #{cross_pika_attention_layer.21} parent=39 // pred_region
        %p231 = scmp.lt.s32.totalorder %s13, 1
        %s232 = scalar_select %p231, %s13, 1
        %s233 = smul.addr %s232, 8
        %s234 = scalar_lea.vmem %s0, %s233
      $region44: #{cross_pika_attention_layer.21} parent=39 // pred_fallthru
        _
    $region40: #{cross_pika_attention_layer.21} parent=5 // pred_fallthru
      _
    %p235 = scmp.le.s32.totalorder 1, %s13
    %p236 = scmp.lt.s32.totalorder %s13, 3
    %p237 = pnand %p235, %p236
    %p238 = pneg %p237
    // Predicated region
    $region45: #{cross_pika_attention_layer.21} parent=5 // pred_check
      _
    $region46: #{cross_pika_attention_layer.21} parent=5 // pred_check_branch
      %240 = sbr.rel (%p237) target = $region48
    $region47: #{cross_pika_attention_layer.21} parent=5 // pred_region
      %s241 = ssub.s32 %s13, 1
      %p242 = scmp.lt.s32.totalorder %s18, 1
      %s243 = scalar_select %p242, %s18, 1
      %s244 = smul.addr %s243, 8
      %s245 = scalar_lea.vmem %s0, %s244
      %p246 = pneg %p39
      %p247 = pneg %p36
      %p248 = pneg %p60
      %p249 = pneg %p57
      %p250 = pneg %p81
      %p251 = pneg %p78
      %p252 = pneg %p102
      %p253 = pneg %p99
      %p254 = pneg %p123
      %p255 = pneg %p120
      %p256 = pneg %p144
      %p257 = pneg %p141
      %p258 = pneg %p165
      %p259 = pneg %p162
      %p260 = pneg %p191
      %p261 = pneg %p188
      %p262 = scmp.lt.s32.totalorder %s18, 1
      %s263 = scalar_select %p262, %s18, 1
      %s264 = smul.addr %s263, 8
      %s265 = scalar_lea.vmem %s7, %s264
      %p266 = scmp.lt.s32.totalorder %s18, 1
      %s267 = scalar_select %p266, %s18, 1
      %s268 = smul.addr %s267, 8
      %s269 = scalar_lea.vmem %s0, %s268
      %p270 = scmp.lt.s32.totalorder %s18, 1
      %s271 = scalar_select %p270, %s18, 1
      %s272 = smul.addr %s271, 8
      %s273 = scalar_lea.vmem %s7, %s272
      %v275 = vld [vmem:[%s269] sm:$0xff]
      %v276 = vld [vmem:[%s1] sm:$0x1]
      %v277 = vld [vmem:[%s2] sm:$0x1]
      %vm278 = vcmask 261120
      %v279 = vsel %vm278, %v275, 0.0
      %280 = vadd.xlane.f32.xlu0 %v279
      %v281 = vpop.xlane.xlu0 %280
      %v282 = vrcp.pop 32.0
      %v283 = vmul.f32 %v281, %v282
      %v284 = vsub.f32 %v275, %v283
      %v285 = vmul.f32 %v284, %v284
      %v286 = vsel %vm278, %v285, 0.0
      %287 = vadd.xlane.f32.xlu0 %v286
      %v288 = vpop.xlane.xlu0 %287
      %v289 = vmul.f32 %v288, %v282
      %v290 = vadd.f32 %v289, 1e-05
      %v291 = vrsqrt.pop %v290
      %v292 = vmul.f32 %v284, %v291
      %v294 = vlaneseq
      %v295 = vshrl.u32 %v294, 7
      %v296 = vsub.s32 0, %v295
      %v297 = vrot.slane %v276, %v296
      %v299 = vmul.f32 %v292, %v297
      %v301 = vlaneseq
      %v302 = vshrl.u32 %v301, 7
      %v303 = vsub.s32 0, %v302
      %v304 = vrot.slane %v277, %v303
      %v306 = vadd.f32 %v299, %v304
      %v307 = vpack.c.bf16 %v306, %v306
      %v308 = vld [vmem:[%s3] sm:$0xff]
      %v309 = vld [vmem:[%s3 + $0x8] sm:$0xff]
      %v310 = vld [vmem:[%s3 + $0x10] sm:$0xff]
      %v311 = vld [vmem:[%s3 + $0x18] sm:$0xff]
      %v312 = vpack.c.bf16 %v309, %v308
      %v313 = vpack.c.bf16 %v311, %v310
      %v314 = vld [vmem:[%s4] sm:$0x1]
      %v316 = vlaneseq
      %v317 = vshrl.u32 %v316, 7
      %v318 = vsub.s32 0, %v317
      %v319 = vrot.slane %v314, %v318
      %v322 = vsel %vm278, %v307, 0
      %324 = vmatprep.subr.bf16.mxu0 0
      %325 = vmatpush1.bf16.msra.mxu0 0
      %326 = vmatprep.subr.bf16.mxu0 0
      %327 = vmatpush1.bf16.msra.mxu0 0
      %328 = vmatprep.subr.bf16.mxu0 0
      %329 = vmatpush1.bf16.msra.mxu0 0
      %330 = vmatprep.subr.bf16.mxu0 0
      %331 = vmatpush1.bf16.msra.mxu0 0
      %332 = vmatprep.subr.bf16.mxu0 0
      %333 = vmatpush1.bf16.msra.mxu0 0
      %334 = vmatprep.subr.bf16.mxu0 0
      %335 = vmatpush1.bf16.msra.mxu0 0
      %336 = vmatprep.subr.bf16.mxu0 0
      %337 = vmatpush1.bf16.msra.mxu0 %v313
      %338 = vmatprep.subr.bf16.mxu0 0
      %339 = vmatpush1.bf16.msra.mxu0 %v312
      %340 = vmatprep.subr.bf16.mxu0 0
      %341 = vmatpush2.bf16.msra.mxu0 0
      %342 = vmatprep.subr.bf16.mxu0 0
      %343 = vmatpush2.bf16.msra.mxu0 0
      %344 = vmatprep.subr.bf16.mxu0 0
      %345 = vmatpush2.bf16.msra.mxu0 0
      %346 = vmatprep.subr.bf16.mxu0 0
      %347 = vmatpush2.bf16.msra.mxu0 0
      %348 = vmatprep.subr.bf16.mxu0 0
      %349 = vmatpush2.bf16.msra.mxu0 0
      %350 = vmatprep.subr.bf16.mxu0 0
      %351 = vmatpush2.bf16.msra.mxu0 0
      %352 = vmatprep.subr.bf16.mxu0 0
      %353 = vmatpush2.bf16.msra.mxu0 0
      %354 = vmatprep.subr.bf16.mxu0 0
      %355 = vmatpush2.bf16.msra.mxu0 0
      %356 = vmatprep.mubr.bf16.mxu0 0
      %357 = vmatmul.mubr.bf16.gmra.mxu0 %v322
      %v358 = vpop.f32.mrf.mxu0
      %v359 = vadd.f32 %v319, %v358
      %v360 = vpop.f32.mrf.mxu0
      %v361 = vpop.f32.mrf.mxu0
      %v362 = vpop.f32.mrf.mxu0
      %363 = vdwg.mxu0
      %v364 = vmul.f32 %v359, 0.5
      %v365 = vmul.f32 %v359, 0.044715
      %v366 = vmul.f32 %v365, %v359
      %v367 = vmul.f32 %v366, %v359
      %v368 = vadd.f32 %v359, %v367
      %v369 = vmul.f32 %v368, 0.7978846
      %v370 = vtanh.pop %v369
      %v371 = vadd.f32 %v370, 1.0
      %v372 = vmul.f32 %v364, %v371
      %v373 = vpack.c.bf16 %v372, %v372
      %v374 = vld [vmem:[%s5] sm:$0xff]
      %v375 = vld [vmem:[%s5 + $0x8] sm:$0xff]
      %v376 = vld [vmem:[%s5 + $0x10] sm:$0xff]
      %v377 = vld [vmem:[%s5 + $0x18] sm:$0xff]
      %v378 = vld [vmem:[%s5 + $0x20] sm:$0xff]
      %v379 = vld [vmem:[%s5 + $0x28] sm:$0xff]
      %v380 = vld [vmem:[%s5 + $0x30] sm:$0xff]
      %v381 = vld [vmem:[%s5 + $0x38] sm:$0xff]
      %v382 = vld [vmem:[%s5 + $0x40] sm:$0xff]
      %v383 = vld [vmem:[%s5 + $0x48] sm:$0xff]
      %v384 = vld [vmem:[%s5 + $0x50] sm:$0xff]
      %v385 = vld [vmem:[%s5 + $0x58] sm:$0xff]
      %v386 = vld [vmem:[%s5 + $0x60] sm:$0xff]
      %v387 = vld [vmem:[%s5 + $0x68] sm:$0xff]
      %v388 = vld [vmem:[%s5 + $0x70] sm:$0xff]
      %v389 = vld [vmem:[%s5 + $0x78] sm:$0xff]
      %v390 = vpack.c.bf16 %v375, %v374
      %v391 = vpack.c.bf16 %v377, %v376
      %v392 = vpack.c.bf16 %v379, %v378
      %v393 = vpack.c.bf16 %v381, %v380
      %v394 = vpack.c.bf16 %v383, %v382
      %v395 = vpack.c.bf16 %v385, %v384
      %v396 = vpack.c.bf16 %v387, %v386
      %v397 = vpack.c.bf16 %v389, %v388
      %v398 = vld [vmem:[%s6] sm:$0x1]
      %v400 = vlaneseq
      %v401 = vshrl.u32 %v400, 7
      %v402 = vsub.s32 0, %v401
      %v403 = vrot.slane %v398, %v402
      %405 = vmatprep.subr.bf16.mxu0 0
      %406 = vmatpush1.bf16.msra.mxu0 %v397
      %407 = vmatprep.subr.bf16.mxu0 0
      %408 = vmatpush1.bf16.msra.mxu0 %v396
      %409 = vmatprep.subr.bf16.mxu0 0
      %410 = vmatpush1.bf16.msra.mxu0 %v395
      %411 = vmatprep.subr.bf16.mxu0 0
      %412 = vmatpush1.bf16.msra.mxu0 %v394
      %413 = vmatprep.subr.bf16.mxu0 0
      %414 = vmatpush1.bf16.msra.mxu0 %v393
      %415 = vmatprep.subr.bf16.mxu0 0
      %416 = vmatpush1.bf16.msra.mxu0 %v392
      %417 = vmatprep.subr.bf16.mxu0 0
      %418 = vmatpush1.bf16.msra.mxu0 %v391
      %419 = vmatprep.subr.bf16.mxu0 0
      %420 = vmatpush1.bf16.msra.mxu0 %v390
      %421 = vmatprep.subr.bf16.mxu0 0
      %422 = vmatpush2.bf16.msra.mxu0 0
      %423 = vmatprep.subr.bf16.mxu0 0
      %424 = vmatpush2.bf16.msra.mxu0 0
      %425 = vmatprep.subr.bf16.mxu0 0
      %426 = vmatpush2.bf16.msra.mxu0 0
      %427 = vmatprep.subr.bf16.mxu0 0
      %428 = vmatpush2.bf16.msra.mxu0 0
      %429 = vmatprep.subr.bf16.mxu0 0
      %430 = vmatpush2.bf16.msra.mxu0 0
      %431 = vmatprep.subr.bf16.mxu0 0
      %432 = vmatpush2.bf16.msra.mxu0 0
      %433 = vmatprep.subr.bf16.mxu0 0
      %434 = vmatpush2.bf16.msra.mxu0 0
      %435 = vmatprep.subr.bf16.mxu0 0
      %436 = vmatpush2.bf16.msra.mxu0 0
      %437 = vmatprep.mubr.bf16.mxu0 0
      %438 = vmatmul.mubr.bf16.gmra.mxu0 %v373
      %v439 = vpop.f32.mrf.mxu0
      %v440 = vadd.f32 %v403, %v439
      %v441 = vpop.f32.mrf.mxu0
      %v442 = vpop.f32.mrf.mxu0
      %v443 = vpop.f32.mrf.mxu0
      %444 = vdwg.mxu0
      %v445 = vadd.f32 %v275, %v440
      %446 = vst.msk [vmem:[%s273] sm:$0xff] %vm278, %v445
      %p447 = scmp.lt.s32.totalorder %s18, 1
      %s448 = scalar_select %p447, %s18, 1
      %s449 = smul.addr %s448, 8
      %s450 = scalar_lea.vmem %s7, %s449
      // Predicated region
      $region49: #{cross_pika_attention_layer.21} parent=47 // pred_check
        %p451 = pneg %p188
      $region50: #{cross_pika_attention_layer.21} parent=47 // pred_check_branch
        %453 = sbr.rel (%p451) target = $region52
      $region51: #{cross_pika_attention_layer.21} parent=47 // pred_region
        _
      $region52: #{cross_pika_attention_layer.21} parent=47 // pred_fallthru
        _
    $region48: #{cross_pika_attention_layer.21} parent=5 // pred_fallthru
      _
    %p454 = scmp.le.s32.totalorder 2, %s13
    // Predicated region
    $region53: #{cross_pika_attention_layer.21} parent=5 // pred_check
      %p455 = pneg %p454
    $region54: #{cross_pika_attention_layer.21} parent=5 // pred_check_branch
      %457 = sbr.rel (%p455) target = $region56
    $region55: #{cross_pika_attention_layer.21} parent=5 // pred_region
      %s458 = ssub.s32 %s13, 2
      // Predicated region
      $region57: #{cross_pika_attention_layer.21} parent=55 // pred_check
        %p459 = pneg %p194
      $region58: #{cross_pika_attention_layer.21} parent=55 // pred_check_branch
        %461 = sbr.rel (%p459) target = $region60
      $region59: #{cross_pika_attention_layer.21} parent=55 // pred_region
        %p462 = scmp.lt.s32.totalorder %s19, 1
        %s463 = scalar_select %p462, %s19, 1
        %s464 = smul.addr %s463, 8
        %s465 = scalar_lea.vmem %s7, %s464
      $region60: #{cross_pika_attention_layer.21} parent=55 // pred_fallthru
        _
    $region56: #{cross_pika_attention_layer.21} parent=5 // pred_fallthru
      _
  $region6: #{cross_pika_attention_layer.21} parent=0 // loop_footer
    %s17 = sadd.s32 1, %s13
  $region7: #{cross_pika_attention_layer.21} parent=0 // loop_footer_branch
    %12 = sbr.rel target = $region3
  $region8: #{cross_pika_attention_layer.21} parent=0 // loop_exit
    _

// kernel: cross_pika_attention_layer.30
$region0: #{cross_pika_attention_layer.30}
  #allocation0 [shape = 'u32[]', space=smem, size = 0x4, offset = 0x4, fixed_abs, tag = 'smem constant byte address 0x4 - core index']
  #allocation1 [shape = 'u32[144,128]{1,0:T(1,128)}', space=vmem, size = 0x12000, scoped, tag = 'internal scratch']
  #allocation2 [shape = 'f32[1,1]{1,0:T(1,128)S(1)}', space=vmem, size = 0x200, scoped, tag = 'scoped memory for cross_pika_attention_layer.30']
  %s0 = inlined_call_operand.vmem [shape: f32[16,32], index: 0, kind: input, shape index: {}]
  %s1 = inlined_call_operand.vmem [shape: f32[1,32], index: 1, kind: input, shape index: {}]
  %s2 = inlined_call_operand.vmem [shape: f32[1,32], index: 2, kind: input, shape index: {}]
  %s3 = inlined_call_operand.vmem [shape: f32[32,128], index: 3, kind: input, shape index: {}]
  %s4 = inlined_call_operand.vmem [shape: f32[1,128], index: 4, kind: input, shape index: {}]
  %s5 = inlined_call_operand.vmem [shape: f32[128,32], index: 5, kind: input, shape index: {}]
  %s6 = inlined_call_operand.vmem [shape: f32[1,32], index: 6, kind: input, shape index: {}]
  %s7 = inlined_call_operand.<no memory space> [shape: f32[1,1], index: 7, kind: input, shape index: {}]
  %s8 = inlined_call_operand.vmem [shape: f32[16,32], index: 8, kind: output, shape index: {}]
  %s9 = sld [smem:[#allocation0]]
  $region65: #{cross_pika_attention_layer.30} parent=0
    _
  %s11 = ssub.s32 1, %s9
  %s12 = scalar_select 0, %s11, %s9
  %v13 = vstv %s7
  %14 = vst [vmem:[#allocation2] sm:$0x1] %v13
  loop: start=0, step=1, limit=4
  $region2: #{cross_pika_attention_layer.30} parent=0 // loop_pre_header
    _
  $region3: #{cross_pika_attention_layer.30} parent=0 // loop_header
    %s16 = sphi 0, %s20
    %p17 = scmp.ge.s32.totalorder %s16, 4
    %s26 = sphi 0, %s28
    %s29 = sphi 0, %s26
    %s30 = sphi 0, %s29
    %s46 = sphi 0, %s30
    %s50 = sphi 0, %s50
    %s52 = sphi 0, %s50
    %s53 = sphi 0, %s52
    %s67 = sphi 0, %s53
    %s71 = sphi 0, %s71
    %s73 = sphi 0, %s71
    %s74 = sphi 0, %s73
    %s88 = sphi 0, %s74
    %s92 = sphi 0, %s92
    %s94 = sphi 0, %s92
    %s95 = sphi 0, %s94
    %s109 = sphi 0, %s95
    %s113 = sphi 0, %s113
    %s115 = sphi 0, %s113
    %s116 = sphi 0, %s115
    %s130 = sphi 0, %s116
    %s134 = sphi 0, %s134
    %s136 = sphi 0, %s134
    %s137 = sphi 0, %s136
    %s151 = sphi 0, %s137
    %s155 = sphi 0, %s155
    %s157 = sphi 0, %s155
    %s158 = sphi 0, %s157
    %s172 = sphi 0, %s158
    %s176 = sphi 0, %s176
    %s178 = sphi 0, %s176
    %s179 = sphi 0, %s178
    %s193 = sphi 0, %s179
    %s199 = sphi 0, %s201
    %s202 = sphi 0, %s199
    %s203 = sphi 0, %s202
    %s219 = sphi 0, %s203
  $region4: #{cross_pika_attention_layer.30} parent=0 // loop_header_branch
    %19 = sbr.rel (%p17) target = $region8
  $region5: #{cross_pika_attention_layer.30} parent=0 // loop_body
    %s21 = ssub.s32 %s16, 1
    %s22 = ssub.s32 %s16, 2
    %s23 = sadd.s32 %s16, 1
    %s24 = ssub.s32 %s16, %s23
    %p25 = scmp.eq.s32.totalorder %s24, 0
    %s27 = sadd.s32 %s26, 1
    %s28 = scalar_select %p25, %s26, %s27
    %p31 = pneg %p25
    %p32 = scmp.eq.s32.totalorder %s16, 1
    %p33 = por %p31, %p32
    %p34 = scmp.ne.s32.totalorder %s26, %s29
    %p35 = scmp.eq.s32.totalorder %s16, 0
    %p36 = por %p34, %p35
    %p37 = scmp.ne.s32.totalorder %s26, %s29
    %p38 = scmp.eq.s32.totalorder %s21, 1
    %p39 = por %p37, %p38
    %p40 = scmp.ne.s32.totalorder %s29, %s30
    %p41 = scmp.eq.s32.totalorder %s21, 0
    %p42 = por %p40, %p41
    %p43 = scmp.ne.s32.totalorder %s29, %s30
    %p44 = scmp.eq.s32.totalorder %s22, 1
    %p45 = por %p43, %p44
    %p47 = scmp.ne.s32.totalorder %s30, %s46
    %p48 = scmp.eq.s32.totalorder %s22, 0
    %p49 = por %p47, %p48
    %s51 = sadd.s32 %s50, 1
    %p54 = scmp.eq.s32.totalorder %s16, 1
    %p55 = scmp.ne.s32.totalorder %s50, %s52
    %p56 = scmp.eq.s32.totalorder %s16, 0
    %p57 = por %p55, %p56
    %p58 = scmp.ne.s32.totalorder %s50, %s52
    %p59 = scmp.eq.s32.totalorder %s21, 1
    %p60 = por %p58, %p59
    %p61 = scmp.ne.s32.totalorder %s52, %s53
    %p62 = scmp.eq.s32.totalorder %s21, 0
    %p63 = por %p61, %p62
    %p64 = scmp.ne.s32.totalorder %s52, %s53
    %p65 = scmp.eq.s32.totalorder %s22, 1
    %p66 = por %p64, %p65
    %p68 = scmp.ne.s32.totalorder %s53, %s67
    %p69 = scmp.eq.s32.totalorder %s22, 0
    %p70 = por %p68, %p69
    %s72 = sadd.s32 %s71, 1
    %p75 = scmp.eq.s32.totalorder %s16, 1
    %p76 = scmp.ne.s32.totalorder %s71, %s73
    %p77 = scmp.eq.s32.totalorder %s16, 0
    %p78 = por %p76, %p77
    %p79 = scmp.ne.s32.totalorder %s71, %s73
    %p80 = scmp.eq.s32.totalorder %s21, 1
    %p81 = por %p79, %p80
    %p82 = scmp.ne.s32.totalorder %s73, %s74
    %p83 = scmp.eq.s32.totalorder %s21, 0
    %p84 = por %p82, %p83
    %p85 = scmp.ne.s32.totalorder %s73, %s74
    %p86 = scmp.eq.s32.totalorder %s22, 1
    %p87 = por %p85, %p86
    %p89 = scmp.ne.s32.totalorder %s74, %s88
    %p90 = scmp.eq.s32.totalorder %s22, 0
    %p91 = por %p89, %p90
    %s93 = sadd.s32 %s92, 1
    %p96 = scmp.eq.s32.totalorder %s16, 1
    %p97 = scmp.ne.s32.totalorder %s92, %s94
    %p98 = scmp.eq.s32.totalorder %s16, 0
    %p99 = por %p97, %p98
    %p100 = scmp.ne.s32.totalorder %s92, %s94
    %p101 = scmp.eq.s32.totalorder %s21, 1
    %p102 = por %p100, %p101
    %p103 = scmp.ne.s32.totalorder %s94, %s95
    %p104 = scmp.eq.s32.totalorder %s21, 0
    %p105 = por %p103, %p104
    %p106 = scmp.ne.s32.totalorder %s94, %s95
    %p107 = scmp.eq.s32.totalorder %s22, 1
    %p108 = por %p106, %p107
    %p110 = scmp.ne.s32.totalorder %s95, %s109
    %p111 = scmp.eq.s32.totalorder %s22, 0
    %p112 = por %p110, %p111
    %s114 = sadd.s32 %s113, 1
    %p117 = scmp.eq.s32.totalorder %s16, 1
    %p118 = scmp.ne.s32.totalorder %s113, %s115
    %p119 = scmp.eq.s32.totalorder %s16, 0
    %p120 = por %p118, %p119
    %p121 = scmp.ne.s32.totalorder %s113, %s115
    %p122 = scmp.eq.s32.totalorder %s21, 1
    %p123 = por %p121, %p122
    %p124 = scmp.ne.s32.totalorder %s115, %s116
    %p125 = scmp.eq.s32.totalorder %s21, 0
    %p126 = por %p124, %p125
    %p127 = scmp.ne.s32.totalorder %s115, %s116
    %p128 = scmp.eq.s32.totalorder %s22, 1
    %p129 = por %p127, %p128
    %p131 = scmp.ne.s32.totalorder %s116, %s130
    %p132 = scmp.eq.s32.totalorder %s22, 0
    %p133 = por %p131, %p132
    %s135 = sadd.s32 %s134, 1
    %p138 = scmp.eq.s32.totalorder %s16, 1
    %p139 = scmp.ne.s32.totalorder %s134, %s136
    %p140 = scmp.eq.s32.totalorder %s16, 0
    %p141 = por %p139, %p140
    %p142 = scmp.ne.s32.totalorder %s134, %s136
    %p143 = scmp.eq.s32.totalorder %s21, 1
    %p144 = por %p142, %p143
    %p145 = scmp.ne.s32.totalorder %s136, %s137
    %p146 = scmp.eq.s32.totalorder %s21, 0
    %p147 = por %p145, %p146
    %p148 = scmp.ne.s32.totalorder %s136, %s137
    %p149 = scmp.eq.s32.totalorder %s22, 1
    %p150 = por %p148, %p149
    %p152 = scmp.ne.s32.totalorder %s137, %s151
    %p153 = scmp.eq.s32.totalorder %s22, 0
    %p154 = por %p152, %p153
    %s156 = sadd.s32 %s155, 1
    %p159 = scmp.eq.s32.totalorder %s16, 1
    %p160 = scmp.ne.s32.totalorder %s155, %s157
    %p161 = scmp.eq.s32.totalorder %s16, 0
    %p162 = por %p160, %p161
    %p163 = scmp.ne.s32.totalorder %s155, %s157
    %p164 = scmp.eq.s32.totalorder %s21, 1
    %p165 = por %p163, %p164
    %p166 = scmp.ne.s32.totalorder %s157, %s158
    %p167 = scmp.eq.s32.totalorder %s21, 0
    %p168 = por %p166, %p167
    %p169 = scmp.ne.s32.totalorder %s157, %s158
    %p170 = scmp.eq.s32.totalorder %s22, 1
    %p171 = por %p169, %p170
    %p173 = scmp.ne.s32.totalorder %s158, %s172
    %p174 = scmp.eq.s32.totalorder %s22, 0
    %p175 = por %p173, %p174
    %s177 = sadd.s32 %s176, 1
    %p180 = scmp.eq.s32.totalorder %s16, 1
    %p181 = scmp.ne.s32.totalorder %s176, %s178
    %p182 = scmp.eq.s32.totalorder %s16, 0
    %p183 = por %p181, %p182
    %p184 = scmp.ne.s32.totalorder %s176, %s178
    %p185 = scmp.eq.s32.totalorder %s21, 1
    %p186 = por %p184, %p185
    %p187 = scmp.ne.s32.totalorder %s178, %s179
    %p188 = scmp.eq.s32.totalorder %s21, 0
    %p189 = por %p187, %p188
    %p190 = scmp.ne.s32.totalorder %s178, %s179
    %p191 = scmp.eq.s32.totalorder %s22, 1
    %p192 = por %p190, %p191
    %p194 = scmp.ne.s32.totalorder %s179, %s193
    %p195 = scmp.eq.s32.totalorder %s22, 0
    %p196 = por %p194, %p195
    %s197 = ssub.s32 %s16, %s23
    %p198 = scmp.eq.s32.totalorder %s197, 0
    %s200 = sadd.s32 %s199, 1
    %s201 = scalar_select %p198, %s199, %s200
    %p204 = pneg %p198
    %p205 = scmp.eq.s32.totalorder %s16, 1
    %p206 = por %p204, %p205
    %p207 = scmp.ne.s32.totalorder %s199, %s202
    %p208 = scmp.eq.s32.totalorder %s16, 0
    %p209 = por %p207, %p208
    %p210 = scmp.ne.s32.totalorder %s199, %s202
    %p211 = scmp.eq.s32.totalorder %s21, 1
    %p212 = por %p210, %p211
    %p213 = scmp.ne.s32.totalorder %s202, %s203
    %p214 = scmp.eq.s32.totalorder %s21, 0
    %p215 = por %p213, %p214
    %p216 = scmp.ne.s32.totalorder %s202, %s203
    %p217 = scmp.eq.s32.totalorder %s22, 1
    %p218 = por %p216, %p217
    %p220 = scmp.ne.s32.totalorder %s203, %s219
    %p221 = scmp.eq.s32.totalorder %s22, 0
    %p222 = por %p220, %p221
    %p223 = scmp.le.s32.totalorder 1, %s16
    %p224 = scmp.lt.s32.totalorder %s16, 3
    %p225 = pnand %p223, %p224
    %p226 = pneg %p225
    // Predicated region
    $region9: #{cross_pika_attention_layer.30} parent=5 // pred_check
      _
    $region10: #{cross_pika_attention_layer.30} parent=5 // pred_check_branch
      %228 = sbr.rel (%p225) target = $region12
    $region11: #{cross_pika_attention_layer.30} parent=5 // pred_region
      %s229 = ssub.s32 %s16, 1
      // Predicated region
      $region13: #{cross_pika_attention_layer.30} parent=11 // pred_check
        %p230 = pneg %p63
      $region14: #{cross_pika_attention_layer.30} parent=11 // pred_check_branch
        %232 = sbr.rel (%p230) target = $region16
      $region15: #{cross_pika_attention_layer.30} parent=11 // pred_region
        _
      $region16: #{cross_pika_attention_layer.30} parent=11 // pred_fallthru
        _
      // Predicated region
      $region17: #{cross_pika_attention_layer.30} parent=11 // pred_check
        %p233 = pneg %p84
      $region18: #{cross_pika_attention_layer.30} parent=11 // pred_check_branch
        %235 = sbr.rel (%p233) target = $region20
      $region19: #{cross_pika_attention_layer.30} parent=11 // pred_region
        _
      $region20: #{cross_pika_attention_layer.30} parent=11 // pred_fallthru
        _
      // Predicated region
      $region21: #{cross_pika_attention_layer.30} parent=11 // pred_check
        %p236 = pneg %p105
      $region22: #{cross_pika_attention_layer.30} parent=11 // pred_check_branch
        %238 = sbr.rel (%p236) target = $region24
      $region23: #{cross_pika_attention_layer.30} parent=11 // pred_region
        _
      $region24: #{cross_pika_attention_layer.30} parent=11 // pred_fallthru
        _
      // Predicated region
      $region25: #{cross_pika_attention_layer.30} parent=11 // pred_check
        %p239 = pneg %p126
      $region26: #{cross_pika_attention_layer.30} parent=11 // pred_check_branch
        %241 = sbr.rel (%p239) target = $region28
      $region27: #{cross_pika_attention_layer.30} parent=11 // pred_region
        _
      $region28: #{cross_pika_attention_layer.30} parent=11 // pred_fallthru
        _
      // Predicated region
      $region29: #{cross_pika_attention_layer.30} parent=11 // pred_check
        %p242 = pneg %p147
      $region30: #{cross_pika_attention_layer.30} parent=11 // pred_check_branch
        %244 = sbr.rel (%p242) target = $region32
      $region31: #{cross_pika_attention_layer.30} parent=11 // pred_region
        _
      $region32: #{cross_pika_attention_layer.30} parent=11 // pred_fallthru
        _
      // Predicated region
      $region33: #{cross_pika_attention_layer.30} parent=11 // pred_check
        %p245 = pneg %p168
      $region34: #{cross_pika_attention_layer.30} parent=11 // pred_check_branch
        %247 = sbr.rel (%p245) target = $region36
      $region35: #{cross_pika_attention_layer.30} parent=11 // pred_region
        _
      $region36: #{cross_pika_attention_layer.30} parent=11 // pred_fallthru
        _
      // Predicated region
      $region37: #{cross_pika_attention_layer.30} parent=11 // pred_check
        %p248 = pneg %p189
      $region38: #{cross_pika_attention_layer.30} parent=11 // pred_check_branch
        %250 = sbr.rel (%p248) target = $region40
      $region39: #{cross_pika_attention_layer.30} parent=11 // pred_region
        _
      $region40: #{cross_pika_attention_layer.30} parent=11 // pred_fallthru
        _
    $region12: #{cross_pika_attention_layer.30} parent=5 // pred_fallthru
      _
    %p251 = scmp.lt.s32.totalorder %s16, 2
    // Predicated region
    $region41: #{cross_pika_attention_layer.30} parent=5 // pred_check
      %p252 = pneg %p251
    $region42: #{cross_pika_attention_layer.30} parent=5 // pred_check_branch
      %254 = sbr.rel (%p252) target = $region44
    $region43: #{cross_pika_attention_layer.30} parent=5 // pred_region
      // Predicated region
      $region45: #{cross_pika_attention_layer.30} parent=43 // pred_check
        %p255 = pneg %p36
      $region46: #{cross_pika_attention_layer.30} parent=43 // pred_check_branch
        %257 = sbr.rel (%p255) target = $region48
      $region47: #{cross_pika_attention_layer.30} parent=43 // pred_region
        %p258 = scmp.lt.s32.totalorder %s16, 1
        %s259 = scalar_select %p258, %s16, 1
        %s260 = smul.addr %s259, 8
        %s261 = scalar_lea.vmem %s0, %s260
      $region48: #{cross_pika_attention_layer.30} parent=43 // pred_fallthru
        _
    $region44: #{cross_pika_attention_layer.30} parent=5 // pred_fallthru
      _
    %p262 = scmp.le.s32.totalorder 1, %s16
    %p263 = scmp.lt.s32.totalorder %s16, 3
    %p264 = pnand %p262, %p263
    %p265 = pneg %p264
    // Predicated region
    $region49: #{cross_pika_attention_layer.30} parent=5 // pred_check
      _
    $region50: #{cross_pika_attention_layer.30} parent=5 // pred_check_branch
      %267 = sbr.rel (%p264) target = $region52
    $region51: #{cross_pika_attention_layer.30} parent=5 // pred_region
      %s268 = ssub.s32 %s16, 1
      %p269 = scmp.lt.s32.totalorder %s21, 1
      %s270 = scalar_select %p269, %s21, 1
      %s271 = smul.addr %s270, 8
      %s272 = scalar_lea.vmem %s0, %s271
      %p273 = pneg %p42
      %p274 = pneg %p39
      %p275 = pneg %p63
      %p276 = pneg %p60
      %p277 = pneg %p84
      %p278 = pneg %p81
      %p279 = pneg %p105
      %p280 = pneg %p102
      %p281 = pneg %p126
      %p282 = pneg %p123
      %p283 = pneg %p147
      %p284 = pneg %p144
      %p285 = pneg %p168
      %p286 = pneg %p165
      %p287 = pneg %p189
      %p288 = pneg %p186
      %p289 = pneg %p215
      %p290 = pneg %p212
      %p291 = scmp.lt.s32.totalorder %s21, 1
      %s292 = scalar_select %p291, %s21, 1
      %s293 = smul.addr %s292, 8
      %s294 = scalar_lea.vmem %s8, %s293
      %p295 = scmp.lt.s32.totalorder %s21, 1
      %s296 = scalar_select %p295, %s21, 1
      %s297 = smul.addr %s296, 8
      %s298 = scalar_lea.vmem %s0, %s297
      %p299 = scmp.lt.s32.totalorder %s21, 1
      %s300 = scalar_select %p299, %s21, 1
      %s301 = smul.addr %s300, 8
      %s302 = scalar_lea.vmem %s8, %s301
      %v304 = vld [vmem:[%s298] sm:$0xff]
      %v305 = vld [vmem:[%s1] sm:$0x1]
      %v306 = vld [vmem:[%s2] sm:$0x1]
      %vm307 = vcmask 261120
      %v308 = vsel %vm307, %v304, 0.0
      %309 = vadd.xlane.f32.xlu0 %v308
      %v310 = vpop.xlane.xlu0 %309
      %v311 = vrcp.pop 32.0
      %v312 = vmul.f32 %v310, %v311
      %v313 = vsub.f32 %v304, %v312
      %v314 = vmul.f32 %v313, %v313
      %v315 = vsel %vm307, %v314, 0.0
      %316 = vadd.xlane.f32.xlu0 %v315
      %v317 = vpop.xlane.xlu0 %316
      %v318 = vmul.f32 %v317, %v311
      %v319 = vadd.f32 %v318, 1e-05
      %v320 = vrsqrt.pop %v319
      %v321 = vmul.f32 %v313, %v320
      %v323 = vlaneseq
      %v324 = vshrl.u32 %v323, 7
      %v325 = vsub.s32 0, %v324
      %v326 = vrot.slane %v305, %v325
      %v328 = vmul.f32 %v321, %v326
      %v330 = vlaneseq
      %v331 = vshrl.u32 %v330, 7
      %v332 = vsub.s32 0, %v331
      %v333 = vrot.slane %v306, %v332
      %v335 = vadd.f32 %v328, %v333
      %v336 = vpack.c.bf16 %v335, %v335
      %v337 = vld [vmem:[%s3] sm:$0xff]
      %v338 = vld [vmem:[%s3 + $0x8] sm:$0xff]
      %v339 = vld [vmem:[%s3 + $0x10] sm:$0xff]
      %v340 = vld [vmem:[%s3 + $0x18] sm:$0xff]
      %v341 = vpack.c.bf16 %v338, %v337
      %v342 = vpack.c.bf16 %v340, %v339
      %v343 = vld [vmem:[%s4] sm:$0x1]
      %v345 = vlaneseq
      %v346 = vshrl.u32 %v345, 7
      %v347 = vsub.s32 0, %v346
      %v348 = vrot.slane %v343, %v347
      %v351 = vsel %vm307, %v336, 0
      %353 = vmatprep.subr.bf16.mxu0 0
      %354 = vmatpush1.bf16.msra.mxu0 0
      %355 = vmatprep.subr.bf16.mxu0 0
      %356 = vmatpush1.bf16.msra.mxu0 0
      %357 = vmatprep.subr.bf16.mxu0 0
      %358 = vmatpush1.bf16.msra.mxu0 0
      %359 = vmatprep.subr.bf16.mxu0 0
      %360 = vmatpush1.bf16.msra.mxu0 0
      %361 = vmatprep.subr.bf16.mxu0 0
      %362 = vmatpush1.bf16.msra.mxu0 0
      %363 = vmatprep.subr.bf16.mxu0 0
      %364 = vmatpush1.bf16.msra.mxu0 0
      %365 = vmatprep.subr.bf16.mxu0 0
      %366 = vmatpush1.bf16.msra.mxu0 %v342
      %367 = vmatprep.subr.bf16.mxu0 0
      %368 = vmatpush1.bf16.msra.mxu0 %v341
      %369 = vmatprep.subr.bf16.mxu0 0
      %370 = vmatpush2.bf16.msra.mxu0 0
      %371 = vmatprep.subr.bf16.mxu0 0
      %372 = vmatpush2.bf16.msra.mxu0 0
      %373 = vmatprep.subr.bf16.mxu0 0
      %374 = vmatpush2.bf16.msra.mxu0 0
      %375 = vmatprep.subr.bf16.mxu0 0
      %376 = vmatpush2.bf16.msra.mxu0 0
      %377 = vmatprep.subr.bf16.mxu0 0
      %378 = vmatpush2.bf16.msra.mxu0 0
      %379 = vmatprep.subr.bf16.mxu0 0
      %380 = vmatpush2.bf16.msra.mxu0 0
      %381 = vmatprep.subr.bf16.mxu0 0
      %382 = vmatpush2.bf16.msra.mxu0 0
      %383 = vmatprep.subr.bf16.mxu0 0
      %384 = vmatpush2.bf16.msra.mxu0 0
      %385 = vmatprep.mubr.bf16.mxu0 0
      %386 = vmatmul.mubr.bf16.gmra.mxu0 %v351
      %v387 = vpop.f32.mrf.mxu0
      %v388 = vadd.f32 %v348, %v387
      %v389 = vpop.f32.mrf.mxu0
      %v390 = vpop.f32.mrf.mxu0
      %v391 = vpop.f32.mrf.mxu0
      %392 = vdwg.mxu0
      %v393 = vmul.f32 %v388, 0.5
      %v394 = vmul.f32 %v388, 0.044715
      %v395 = vmul.f32 %v394, %v388
      %v396 = vmul.f32 %v395, %v388
      %v397 = vadd.f32 %v388, %v396
      %v398 = vmul.f32 %v397, 0.7978846
      %v399 = vtanh.pop %v398
      %v400 = vadd.f32 %v399, 1.0
      %v401 = vmul.f32 %v393, %v400
      %v402 = vpack.c.bf16 %v401, %v401
      %v403 = vld [vmem:[%s5] sm:$0xff]
      %v404 = vld [vmem:[%s5 + $0x8] sm:$0xff]
      %v405 = vld [vmem:[%s5 + $0x10] sm:$0xff]
      %v406 = vld [vmem:[%s5 + $0x18] sm:$0xff]
      %v407 = vld [vmem:[%s5 + $0x20] sm:$0xff]
      %v408 = vld [vmem:[%s5 + $0x28] sm:$0xff]
      %v409 = vld [vmem:[%s5 + $0x30] sm:$0xff]
      %v410 = vld [vmem:[%s5 + $0x38] sm:$0xff]
      %v411 = vld [vmem:[%s5 + $0x40] sm:$0xff]
      %v412 = vld [vmem:[%s5 + $0x48] sm:$0xff]
      %v413 = vld [vmem:[%s5 + $0x50] sm:$0xff]
      %v414 = vld [vmem:[%s5 + $0x58] sm:$0xff]
      %v415 = vld [vmem:[%s5 + $0x60] sm:$0xff]
      %v416 = vld [vmem:[%s5 + $0x68] sm:$0xff]
      %v417 = vld [vmem:[%s5 + $0x70] sm:$0xff]
      %v418 = vld [vmem:[%s5 + $0x78] sm:$0xff]
      %v419 = vpack.c.bf16 %v404, %v403
      %v420 = vpack.c.bf16 %v406, %v405
      %v421 = vpack.c.bf16 %v408, %v407
      %v422 = vpack.c.bf16 %v410, %v409
      %v423 = vpack.c.bf16 %v412, %v411
      %v424 = vpack.c.bf16 %v414, %v413
      %v425 = vpack.c.bf16 %v416, %v415
      %v426 = vpack.c.bf16 %v418, %v417
      %v427 = vld [vmem:[%s6] sm:$0x1]
      %v429 = vlaneseq
      %v430 = vshrl.u32 %v429, 7
      %v431 = vsub.s32 0, %v430
      %v432 = vrot.slane %v427, %v431
      %434 = vmatprep.subr.bf16.mxu0 0
      %435 = vmatpush1.bf16.msra.mxu0 %v426
      %436 = vmatprep.subr.bf16.mxu0 0
      %437 = vmatpush1.bf16.msra.mxu0 %v425
      %438 = vmatprep.subr.bf16.mxu0 0
      %439 = vmatpush1.bf16.msra.mxu0 %v424
      %440 = vmatprep.subr.bf16.mxu0 0
      %441 = vmatpush1.bf16.msra.mxu0 %v423
      %442 = vmatprep.subr.bf16.mxu0 0
      %443 = vmatpush1.bf16.msra.mxu0 %v422
      %444 = vmatprep.subr.bf16.mxu0 0
      %445 = vmatpush1.bf16.msra.mxu0 %v421
      %446 = vmatprep.subr.bf16.mxu0 0
      %447 = vmatpush1.bf16.msra.mxu0 %v420
      %448 = vmatprep.subr.bf16.mxu0 0
      %449 = vmatpush1.bf16.msra.mxu0 %v419
      %450 = vmatprep.subr.bf16.mxu0 0
      %451 = vmatpush2.bf16.msra.mxu0 0
      %452 = vmatprep.subr.bf16.mxu0 0
      %453 = vmatpush2.bf16.msra.mxu0 0
      %454 = vmatprep.subr.bf16.mxu0 0
      %455 = vmatpush2.bf16.msra.mxu0 0
      %456 = vmatprep.subr.bf16.mxu0 0
      %457 = vmatpush2.bf16.msra.mxu0 0
      %458 = vmatprep.subr.bf16.mxu0 0
      %459 = vmatpush2.bf16.msra.mxu0 0
      %460 = vmatprep.subr.bf16.mxu0 0
      %461 = vmatpush2.bf16.msra.mxu0 0
      %462 = vmatprep.subr.bf16.mxu0 0
      %463 = vmatpush2.bf16.msra.mxu0 0
      %464 = vmatprep.subr.bf16.mxu0 0
      %465 = vmatpush2.bf16.msra.mxu0 0
      %466 = vmatprep.mubr.bf16.mxu0 0
      %467 = vmatmul.mubr.bf16.gmra.mxu0 %v402
      %v468 = vpop.f32.mrf.mxu0
      %v469 = vadd.f32 %v432, %v468
      %v470 = vpop.f32.mrf.mxu0
      %v471 = vpop.f32.mrf.mxu0
      %v472 = vpop.f32.mrf.mxu0
      %473 = vdwg.mxu0
      %v474 = vld [vmem:[#allocation2] sm:$0x1]
      %v476 = vlaneseq
      %v477 = vshrl.u32 %v476, 7
      %v478 = vsub.s32 0, %v477
      %v479 = vrot.slane %v474, %v478
      %480 = vset.pattern.permute.xlu0 0
      %481 = vperm.xlu0 %480, %v479
      %v482 = vpop.permute.xlu0 %481
      %v484 = vmul.f32 %v482, %v469
      %v485 = vadd.f32 %v304, %v484
      %486 = vst.msk [vmem:[%s302] sm:$0xff] %vm307, %v485
      %p487 = scmp.lt.s32.totalorder %s21, 1
      %s488 = scalar_select %p487, %s21, 1
      %s489 = smul.addr %s488, 8
      %s490 = scalar_lea.vmem %s8, %s489
      // Predicated region
      $region53: #{cross_pika_attention_layer.30} parent=51 // pred_check
        %p491 = pneg %p212
      $region54: #{cross_pika_attention_layer.30} parent=51 // pred_check_branch
        %493 = sbr.rel (%p491) target = $region56
      $region55: #{cross_pika_attention_layer.30} parent=51 // pred_region
        _
      $region56: #{cross_pika_attention_layer.30} parent=51 // pred_fallthru
        _
    $region52: #{cross_pika_attention_layer.30} parent=5 // pred_fallthru
      _
    %p494 = scmp.le.s32.totalorder 2, %s16
    // Predicated region
    $region57: #{cross_pika_attention_layer.30} parent=5 // pred_check
      %p495 = pneg %p494
    $region58: #{cross_pika_attention_layer.30} parent=5 // pred_check_branch
      %497 = sbr.rel (%p495) target = $region60
    $region59: #{cross_pika_attention_layer.30} parent=5 // pred_region
      %s498 = ssub.s32 %s16, 2
      // Predicated region
      $region61: #{cross_pika_attention_layer.30} parent=59 // pred_check
        %p499 = pneg %p218
      $region62: #{cross_pika_attention_layer.30} parent=59 // pred_check_branch
        %501 = sbr.rel (%p499) target = $region64
      $region63: #{cross_pika_attention_layer.30} parent=59 // pred_region
        %p502 = scmp.lt.s32.totalorder %s22, 1
        %s503 = scalar_select %p502, %s22, 1
        %s504 = smul.addr %s503, 8
        %s505 = scalar_lea.vmem %s8, %s504
      $region64: #{cross_pika_attention_layer.30} parent=59 // pred_fallthru
        _
    $region60: #{cross_pika_attention_layer.30} parent=5 // pred_fallthru
      _
  $region6: #{cross_pika_attention_layer.30} parent=0 // loop_footer
    %s20 = sadd.s32 1, %s16
  $region7: #{cross_pika_attention_layer.30} parent=0 // loop_footer_branch
    %15 = sbr.rel target = $region3
  $region8: #{cross_pika_attention_layer.30} parent=0 // loop_exit
    _

// kernel: cross_pika_attention_layer.31
$region0: #{cross_pika_attention_layer.31}
  #allocation0 [shape = 'u32[]', space=smem, size = 0x4, offset = 0x4, fixed_abs, tag = 'smem constant byte address 0x4 - core index']
  #allocation1 [shape = 'u32[144,128]{1,0:T(1,128)}', space=vmem, size = 0x12000, scoped, tag = 'internal scratch']
  %s0 = inlined_call_operand.vmem [shape: f32[16,32], index: 0, kind: input, shape index: {}]
  %s1 = inlined_call_operand.vmem [shape: f32[1,32], index: 1, kind: input, shape index: {}]
  %s2 = inlined_call_operand.vmem [shape: f32[1,32], index: 2, kind: input, shape index: {}]
  %s3 = inlined_call_operand.vmem [shape: f32[32,32], index: 3, kind: input, shape index: {}]
  %s4 = inlined_call_operand.vmem [shape: f32[1,32], index: 4, kind: input, shape index: {}]
  %s5 = inlined_call_operand.vmem [shape: f32[32,32], index: 5, kind: input, shape index: {}]
  %s6 = inlined_call_operand.vmem [shape: f32[1,32], index: 6, kind: input, shape index: {}]
  %s7 = inlined_call_operand.vmem [shape: f32[32,32], index: 7, kind: input, shape index: {}]
  %s8 = inlined_call_operand.vmem [shape: f32[1,32], index: 8, kind: input, shape index: {}]
  %s9 = inlined_call_operand.vmem [shape: f32[16,32], index: 9, kind: output, shape index: {0}]
  %s10 = inlined_call_operand.vmem [shape: f32[16,32], index: 10, kind: output, shape index: {1}]
  %s11 = inlined_call_operand.vmem [shape: f32[16,32], index: 11, kind: output, shape index: {2}]
  %12 = xla_tuple %s9, %s10, %s11
  %s13 = sld [smem:[#allocation0]]
  $region85: #{cross_pika_attention_layer.31} parent=0
    _
  %s15 = ssub.s32 1, %s13
  %s16 = scalar_select 0, %s15, %s13
  loop: start=0, step=1, limit=4
  $region2: #{cross_pika_attention_layer.31} parent=0 // loop_pre_header
    _
  $region3: #{cross_pika_attention_layer.31} parent=0 // loop_header
    %s18 = sphi 0, %s22
    %p19 = scmp.ge.s32.totalorder %s18, 4
    %s28 = sphi 0, %s30
    %s31 = sphi 0, %s28
    %s32 = sphi 0, %s31
    %s48 = sphi 0, %s32
    %s52 = sphi 0, %s52
    %s54 = sphi 0, %s52
    %s55 = sphi 0, %s54
    %s69 = sphi 0, %s55
    %s73 = sphi 0, %s73
    %s75 = sphi 0, %s73
    %s76 = sphi 0, %s75
    %s90 = sphi 0, %s76
    %s94 = sphi 0, %s94
    %s96 = sphi 0, %s94
    %s97 = sphi 0, %s96
    %s111 = sphi 0, %s97
    %s115 = sphi 0, %s115
    %s117 = sphi 0, %s115
    %s118 = sphi 0, %s117
    %s132 = sphi 0, %s118
    %s136 = sphi 0, %s136
    %s138 = sphi 0, %s136
    %s139 = sphi 0, %s138
    %s153 = sphi 0, %s139
    %s157 = sphi 0, %s157
    %s159 = sphi 0, %s157
    %s160 = sphi 0, %s159
    %s174 = sphi 0, %s160
    %s178 = sphi 0, %s178
    %s180 = sphi 0, %s178
    %s181 = sphi 0, %s180
    %s195 = sphi 0, %s181
    %s199 = sphi 0, %s199
    %s201 = sphi 0, %s199
    %s202 = sphi 0, %s201
    %s216 = sphi 0, %s202
    %s222 = sphi 0, %s224
    %s225 = sphi 0, %s222
    %s226 = sphi 0, %s225
    %s242 = sphi 0, %s226
    %s248 = sphi 0, %s250
    %s251 = sphi 0, %s248
    %s252 = sphi 0, %s251
    %s268 = sphi 0, %s252
    %s274 = sphi 0, %s276
    %s277 = sphi 0, %s274
    %s278 = sphi 0, %s277
    %s294 = sphi 0, %s278
  $region4: #{cross_pika_attention_layer.31} parent=0 // loop_header_branch
    %21 = sbr.rel (%p19) target = $region8
  $region5: #{cross_pika_attention_layer.31} parent=0 // loop_body
    %s23 = ssub.s32 %s18, 1
    %s24 = ssub.s32 %s18, 2
    %s25 = sadd.s32 %s18, 1
    %s26 = ssub.s32 %s18, %s25
    %p27 = scmp.eq.s32.totalorder %s26, 0
    %s29 = sadd.s32 %s28, 1
    %s30 = scalar_select %p27, %s28, %s29
    %p33 = pneg %p27
    %p34 = scmp.eq.s32.totalorder %s18, 1
    %p35 = por %p33, %p34
    %p36 = scmp.ne.s32.totalorder %s28, %s31
    %p37 = scmp.eq.s32.totalorder %s18, 0
    %p38 = por %p36, %p37
    %p39 = scmp.ne.s32.totalorder %s28, %s31
    %p40 = scmp.eq.s32.totalorder %s23, 1
    %p41 = por %p39, %p40
    %p42 = scmp.ne.s32.totalorder %s31, %s32
    %p43 = scmp.eq.s32.totalorder %s23, 0
    %p44 = por %p42, %p43
    %p45 = scmp.ne.s32.totalorder %s31, %s32
    %p46 = scmp.eq.s32.totalorder %s24, 1
    %p47 = por %p45, %p46
    %p49 = scmp.ne.s32.totalorder %s32, %s48
    %p50 = scmp.eq.s32.totalorder %s24, 0
    %p51 = por %p49, %p50
    %s53 = sadd.s32 %s52, 1
    %p56 = scmp.eq.s32.totalorder %s18, 1
    %p57 = scmp.ne.s32.totalorder %s52, %s54
    %p58 = scmp.eq.s32.totalorder %s18, 0
    %p59 = por %p57, %p58
    %p60 = scmp.ne.s32.totalorder %s52, %s54
    %p61 = scmp.eq.s32.totalorder %s23, 1
    %p62 = por %p60, %p61
    %p63 = scmp.ne.s32.totalorder %s54, %s55
    %p64 = scmp.eq.s32.totalorder %s23, 0
    %p65 = por %p63, %p64
    %p66 = scmp.ne.s32.totalorder %s54, %s55
    %p67 = scmp.eq.s32.totalorder %s24, 1
    %p68 = por %p66, %p67
    %p70 = scmp.ne.s32.totalorder %s55, %s69
    %p71 = scmp.eq.s32.totalorder %s24, 0
    %p72 = por %p70, %p71
    %s74 = sadd.s32 %s73, 1
    %p77 = scmp.eq.s32.totalorder %s18, 1
    %p78 = scmp.ne.s32.totalorder %s73, %s75
    %p79 = scmp.eq.s32.totalorder %s18, 0
    %p80 = por %p78, %p79
    %p81 = scmp.ne.s32.totalorder %s73, %s75
    %p82 = scmp.eq.s32.totalorder %s23, 1
    %p83 = por %p81, %p82
    %p84 = scmp.ne.s32.totalorder %s75, %s76
    %p85 = scmp.eq.s32.totalorder %s23, 0
    %p86 = por %p84, %p85
    %p87 = scmp.ne.s32.totalorder %s75, %s76
    %p88 = scmp.eq.s32.totalorder %s24, 1
    %p89 = por %p87, %p88
    %p91 = scmp.ne.s32.totalorder %s76, %s90
    %p92 = scmp.eq.s32.totalorder %s24, 0
    %p93 = por %p91, %p92
    %s95 = sadd.s32 %s94, 1
    %p98 = scmp.eq.s32.totalorder %s18, 1
    %p99 = scmp.ne.s32.totalorder %s94, %s96
    %p100 = scmp.eq.s32.totalorder %s18, 0
    %p101 = por %p99, %p100
    %p102 = scmp.ne.s32.totalorder %s94, %s96
    %p103 = scmp.eq.s32.totalorder %s23, 1
    %p104 = por %p102, %p103
    %p105 = scmp.ne.s32.totalorder %s96, %s97
    %p106 = scmp.eq.s32.totalorder %s23, 0
    %p107 = por %p105, %p106
    %p108 = scmp.ne.s32.totalorder %s96, %s97
    %p109 = scmp.eq.s32.totalorder %s24, 1
    %p110 = por %p108, %p109
    %p112 = scmp.ne.s32.totalorder %s97, %s111
    %p113 = scmp.eq.s32.totalorder %s24, 0
    %p114 = por %p112, %p113
    %s116 = sadd.s32 %s115, 1
    %p119 = scmp.eq.s32.totalorder %s18, 1
    %p120 = scmp.ne.s32.totalorder %s115, %s117
    %p121 = scmp.eq.s32.totalorder %s18, 0
    %p122 = por %p120, %p121
    %p123 = scmp.ne.s32.totalorder %s115, %s117
    %p124 = scmp.eq.s32.totalorder %s23, 1
    %p125 = por %p123, %p124
    %p126 = scmp.ne.s32.totalorder %s117, %s118
    %p127 = scmp.eq.s32.totalorder %s23, 0
    %p128 = por %p126, %p127
    %p129 = scmp.ne.s32.totalorder %s117, %s118
    %p130 = scmp.eq.s32.totalorder %s24, 1
    %p131 = por %p129, %p130
    %p133 = scmp.ne.s32.totalorder %s118, %s132
    %p134 = scmp.eq.s32.totalorder %s24, 0
    %p135 = por %p133, %p134
    %s137 = sadd.s32 %s136, 1
    %p140 = scmp.eq.s32.totalorder %s18, 1
    %p141 = scmp.ne.s32.totalorder %s136, %s138
    %p142 = scmp.eq.s32.totalorder %s18, 0
    %p143 = por %p141, %p142
    %p144 = scmp.ne.s32.totalorder %s136, %s138
    %p145 = scmp.eq.s32.totalorder %s23, 1
    %p146 = por %p144, %p145
    %p147 = scmp.ne.s32.totalorder %s138, %s139
    %p148 = scmp.eq.s32.totalorder %s23, 0
    %p149 = por %p147, %p148
    %p150 = scmp.ne.s32.totalorder %s138, %s139
    %p151 = scmp.eq.s32.totalorder %s24, 1
    %p152 = por %p150, %p151
    %p154 = scmp.ne.s32.totalorder %s139, %s153
    %p155 = scmp.eq.s32.totalorder %s24, 0
    %p156 = por %p154, %p155
    %s158 = sadd.s32 %s157, 1
    %p161 = scmp.eq.s32.totalorder %s18, 1
    %p162 = scmp.ne.s32.totalorder %s157, %s159
    %p163 = scmp.eq.s32.totalorder %s18, 0
    %p164 = por %p162, %p163
    %p165 = scmp.ne.s32.totalorder %s157, %s159
    %p166 = scmp.eq.s32.totalorder %s23, 1
    %p167 = por %p165, %p166
    %p168 = scmp.ne.s32.totalorder %s159, %s160
    %p169 = scmp.eq.s32.totalorder %s23, 0
    %p170 = por %p168, %p169
    %p171 = scmp.ne.s32.totalorder %s159, %s160
    %p172 = scmp.eq.s32.totalorder %s24, 1
    %p173 = por %p171, %p172
    %p175 = scmp.ne.s32.totalorder %s160, %s174
    %p176 = scmp.eq.s32.totalorder %s24, 0
    %p177 = por %p175, %p176
    %s179 = sadd.s32 %s178, 1
    %p182 = scmp.eq.s32.totalorder %s18, 1
    %p183 = scmp.ne.s32.totalorder %s178, %s180
    %p184 = scmp.eq.s32.totalorder %s18, 0
    %p185 = por %p183, %p184
    %p186 = scmp.ne.s32.totalorder %s178, %s180
    %p187 = scmp.eq.s32.totalorder %s23, 1
    %p188 = por %p186, %p187
    %p189 = scmp.ne.s32.totalorder %s180, %s181
    %p190 = scmp.eq.s32.totalorder %s23, 0
    %p191 = por %p189, %p190
    %p192 = scmp.ne.s32.totalorder %s180, %s181
    %p193 = scmp.eq.s32.totalorder %s24, 1
    %p194 = por %p192, %p193
    %p196 = scmp.ne.s32.totalorder %s181, %s195
    %p197 = scmp.eq.s32.totalorder %s24, 0
    %p198 = por %p196, %p197
    %s200 = sadd.s32 %s199, 1
    %p203 = scmp.eq.s32.totalorder %s18, 1
    %p204 = scmp.ne.s32.totalorder %s199, %s201
    %p205 = scmp.eq.s32.totalorder %s18, 0
    %p206 = por %p204, %p205
    %p207 = scmp.ne.s32.totalorder %s199, %s201
    %p208 = scmp.eq.s32.totalorder %s23, 1
    %p209 = por %p207, %p208
    %p210 = scmp.ne.s32.totalorder %s201, %s202
    %p211 = scmp.eq.s32.totalorder %s23, 0
    %p212 = por %p210, %p211
    %p213 = scmp.ne.s32.totalorder %s201, %s202
    %p214 = scmp.eq.s32.totalorder %s24, 1
    %p215 = por %p213, %p214
    %p217 = scmp.ne.s32.totalorder %s202, %s216
    %p218 = scmp.eq.s32.totalorder %s24, 0
    %p219 = por %p217, %p218
    %s220 = ssub.s32 %s18, %s25
    %p221 = scmp.eq.s32.totalorder %s220, 0
    %s223 = sadd.s32 %s222, 1
    %s224 = scalar_select %p221, %s222, %s223
    %p227 = pneg %p221
    %p228 = scmp.eq.s32.totalorder %s18, 1
    %p229 = por %p227, %p228
    %p230 = scmp.ne.s32.totalorder %s222, %s225
    %p231 = scmp.eq.s32.totalorder %s18, 0
    %p232 = por %p230, %p231
    %p233 = scmp.ne.s32.totalorder %s222, %s225
    %p234 = scmp.eq.s32.totalorder %s23, 1
    %p235 = por %p233, %p234
    %p236 = scmp.ne.s32.totalorder %s225, %s226
    %p237 = scmp.eq.s32.totalorder %s23, 0
    %p238 = por %p236, %p237
    %p239 = scmp.ne.s32.totalorder %s225, %s226
    %p240 = scmp.eq.s32.totalorder %s24, 1
    %p241 = por %p239, %p240
    %p243 = scmp.ne.s32.totalorder %s226, %s242
    %p244 = scmp.eq.s32.totalorder %s24, 0
    %p245 = por %p243, %p244
    %s246 = ssub.s32 %s18, %s25
    %p247 = scmp.eq.s32.totalorder %s246, 0
    %s249 = sadd.s32 %s248, 1
    %s250 = scalar_select %p247, %s248, %s249
    %p253 = pneg %p247
    %p254 = scmp.eq.s32.totalorder %s18, 1
    %p255 = por %p253, %p254
    %p256 = scmp.ne.s32.totalorder %s248, %s251
    %p257 = scmp.eq.s32.totalorder %s18, 0
    %p258 = por %p256, %p257
    %p259 = scmp.ne.s32.totalorder %s248, %s251
    %p260 = scmp.eq.s32.totalorder %s23, 1
    %p261 = por %p259, %p260
    %p262 = scmp.ne.s32.totalorder %s251, %s252
    %p263 = scmp.eq.s32.totalorder %s23, 0
    %p264 = por %p262, %p263
    %p265 = scmp.ne.s32.totalorder %s251, %s252
    %p266 = scmp.eq.s32.totalorder %s24, 1
    %p267 = por %p265, %p266
    %p269 = scmp.ne.s32.totalorder %s252, %s268
    %p270 = scmp.eq.s32.totalorder %s24, 0
    %p271 = por %p269, %p270
    %s272 = ssub.s32 %s18, %s25
    %p273 = scmp.eq.s32.totalorder %s272, 0
    %s275 = sadd.s32 %s274, 1
    %s276 = scalar_select %p273, %s274, %s275
    %p279 = pneg %p273
    %p280 = scmp.eq.s32.totalorder %s18, 1
    %p281 = por %p279, %p280
    %p282 = scmp.ne.s32.totalorder %s274, %s277
    %p283 = scmp.eq.s32.totalorder %s18, 0
    %p284 = por %p282, %p283
    %p285 = scmp.ne.s32.totalorder %s274, %s277
    %p286 = scmp.eq.s32.totalorder %s23, 1
    %p287 = por %p285, %p286
    %p288 = scmp.ne.s32.totalorder %s277, %s278
    %p289 = scmp.eq.s32.totalorder %s23, 0
    %p290 = por %p288, %p289
    %p291 = scmp.ne.s32.totalorder %s277, %s278
    %p292 = scmp.eq.s32.totalorder %s24, 1
    %p293 = por %p291, %p292
    %p295 = scmp.ne.s32.totalorder %s278, %s294
    %p296 = scmp.eq.s32.totalorder %s24, 0
    %p297 = por %p295, %p296
    %p298 = scmp.le.s32.totalorder 1, %s18
    %p299 = scmp.lt.s32.totalorder %s18, 3
    %p300 = pnand %p298, %p299
    %p301 = pneg %p300
    // Predicated region
    $region9: #{cross_pika_attention_layer.31} parent=5 // pred_check
      _
    $region10: #{cross_pika_attention_layer.31} parent=5 // pred_check_branch
      %303 = sbr.rel (%p300) target = $region12
    $region11: #{cross_pika_attention_layer.31} parent=5 // pred_region
      %s304 = ssub.s32 %s18, 1
      // Predicated region
      $region13: #{cross_pika_attention_layer.31} parent=11 // pred_check
        %p305 = pneg %p65
      $region14: #{cross_pika_attention_layer.31} parent=11 // pred_check_branch
        %307 = sbr.rel (%p305) target = $region16
      $region15: #{cross_pika_attention_layer.31} parent=11 // pred_region
        _
      $region16: #{cross_pika_attention_layer.31} parent=11 // pred_fallthru
        _
      // Predicated region
      $region17: #{cross_pika_attention_layer.31} parent=11 // pred_check
        %p308 = pneg %p86
      $region18: #{cross_pika_attention_layer.31} parent=11 // pred_check_branch
        %310 = sbr.rel (%p308) target = $region20
      $region19: #{cross_pika_attention_layer.31} parent=11 // pred_region
        _
      $region20: #{cross_pika_attention_layer.31} parent=11 // pred_fallthru
        _
      // Predicated region
      $region21: #{cross_pika_attention_layer.31} parent=11 // pred_check
        %p311 = pneg %p107
      $region22: #{cross_pika_attention_layer.31} parent=11 // pred_check_branch
        %313 = sbr.rel (%p311) target = $region24
      $region23: #{cross_pika_attention_layer.31} parent=11 // pred_region
        _
      $region24: #{cross_pika_attention_layer.31} parent=11 // pred_fallthru
        _
      // Predicated region
      $region25: #{cross_pika_attention_layer.31} parent=11 // pred_check
        %p314 = pneg %p128
      $region26: #{cross_pika_attention_layer.31} parent=11 // pred_check_branch
        %316 = sbr.rel (%p314) target = $region28
      $region27: #{cross_pika_attention_layer.31} parent=11 // pred_region
        _
      $region28: #{cross_pika_attention_layer.31} parent=11 // pred_fallthru
        _
      // Predicated region
      $region29: #{cross_pika_attention_layer.31} parent=11 // pred_check
        %p317 = pneg %p149
      $region30: #{cross_pika_attention_layer.31} parent=11 // pred_check_branch
        %319 = sbr.rel (%p317) target = $region32
      $region31: #{cross_pika_attention_layer.31} parent=11 // pred_region
        _
      $region32: #{cross_pika_attention_layer.31} parent=11 // pred_fallthru
        _
      // Predicated region
      $region33: #{cross_pika_attention_layer.31} parent=11 // pred_check
        %p320 = pneg %p170
      $region34: #{cross_pika_attention_layer.31} parent=11 // pred_check_branch
        %322 = sbr.rel (%p320) target = $region36
      $region35: #{cross_pika_attention_layer.31} parent=11 // pred_region
        _
      $region36: #{cross_pika_attention_layer.31} parent=11 // pred_fallthru
        _
      // Predicated region
      $region37: #{cross_pika_attention_layer.31} parent=11 // pred_check
        %p323 = pneg %p191
      $region38: #{cross_pika_attention_layer.31} parent=11 // pred_check_branch
        %325 = sbr.rel (%p323) target = $region40
      $region39: #{cross_pika_attention_layer.31} parent=11 // pred_region
        _
      $region40: #{cross_pika_attention_layer.31} parent=11 // pred_fallthru
        _
      // Predicated region
      $region41: #{cross_pika_attention_layer.31} parent=11 // pred_check
        %p326 = pneg %p212
      $region42: #{cross_pika_attention_layer.31} parent=11 // pred_check_branch
        %328 = sbr.rel (%p326) target = $region44
      $region43: #{cross_pika_attention_layer.31} parent=11 // pred_region
        _
      $region44: #{cross_pika_attention_layer.31} parent=11 // pred_fallthru
        _
    $region12: #{cross_pika_attention_layer.31} parent=5 // pred_fallthru
      _
    %p329 = scmp.lt.s32.totalorder %s18, 2
    // Predicated region
    $region45: #{cross_pika_attention_layer.31} parent=5 // pred_check
      %p330 = pneg %p329
    $region46: #{cross_pika_attention_layer.31} parent=5 // pred_check_branch
      %332 = sbr.rel (%p330) target = $region48
    $region47: #{cross_pika_attention_layer.31} parent=5 // pred_region
      // Predicated region
      $region49: #{cross_pika_attention_layer.31} parent=47 // pred_check
        %p333 = pneg %p38
      $region50: #{cross_pika_attention_layer.31} parent=47 // pred_check_branch
        %335 = sbr.rel (%p333) target = $region52
      $region51: #{cross_pika_attention_layer.31} parent=47 // pred_region
        %p336 = scmp.lt.s32.totalorder %s18, 1
        %s337 = scalar_select %p336, %s18, 1
        %s338 = smul.addr %s337, 8
        %s339 = scalar_lea.vmem %s0, %s338
      $region52: #{cross_pika_attention_layer.31} parent=47 // pred_fallthru
        _
    $region48: #{cross_pika_attention_layer.31} parent=5 // pred_fallthru
      _
    %p340 = scmp.le.s32.totalorder 1, %s18
    %p341 = scmp.lt.s32.totalorder %s18, 3
    %p342 = pnand %p340, %p341
    %p343 = pneg %p342
    // Predicated region
    $region53: #{cross_pika_attention_layer.31} parent=5 // pred_check
      _
    $region54: #{cross_pika_attention_layer.31} parent=5 // pred_check_branch
      %345 = sbr.rel (%p342) target = $region56
    $region55: #{cross_pika_attention_layer.31} parent=5 // pred_region
      %s346 = ssub.s32 %s18, 1
      %p347 = scmp.lt.s32.totalorder %s23, 1
      %s348 = scalar_select %p347, %s23, 1
      %s349 = smul.addr %s348, 8
      %s350 = scalar_lea.vmem %s0, %s349
      %p351 = pneg %p44
      %p352 = pneg %p41
      %p353 = pneg %p65
      %p354 = pneg %p62
      %p355 = pneg %p86
      %p356 = pneg %p83
      %p357 = pneg %p107
      %p358 = pneg %p104
      %p359 = pneg %p128
      %p360 = pneg %p125
      %p361 = pneg %p149
      %p362 = pneg %p146
      %p363 = pneg %p170
      %p364 = pneg %p167
      %p365 = pneg %p191
      %p366 = pneg %p188
      %p367 = pneg %p212
      %p368 = pneg %p209
      %p369 = pneg %p238
      %p370 = pneg %p235
      %p371 = scmp.lt.s32.totalorder %s23, 1
      %s372 = scalar_select %p371, %s23, 1
      %s373 = smul.addr %s372, 8
      %s374 = scalar_lea.vmem %s9, %s373
      %p375 = pneg %p264
      %p376 = pneg %p261
      %p377 = scmp.lt.s32.totalorder %s23, 1
      %s378 = scalar_select %p377, %s23, 1
      %s379 = smul.addr %s378, 8
      %s380 = scalar_lea.vmem %s10, %s379
      %p381 = pneg %p290
      %p382 = pneg %p287
      %p383 = scmp.lt.s32.totalorder %s23, 1
      %s384 = scalar_select %p383, %s23, 1
      %s385 = smul.addr %s384, 8
      %s386 = scalar_lea.vmem %s11, %s385
      %p387 = scmp.lt.s32.totalorder %s23, 1
      %s388 = scalar_select %p387, %s23, 1
      %s389 = smul.addr %s388, 8
      %s390 = scalar_lea.vmem %s0, %s389
      %p391 = scmp.lt.s32.totalorder %s23, 1
      %s392 = scalar_select %p391, %s23, 1
      %s393 = smul.addr %s392, 8
      %s394 = scalar_lea.vmem %s9, %s393
      %p395 = scmp.lt.s32.totalorder %s23, 1
      %s396 = scalar_select %p395, %s23, 1
      %s397 = smul.addr %s396, 8
      %s398 = scalar_lea.vmem %s10, %s397
      %p399 = scmp.lt.s32.totalorder %s23, 1
      %s400 = scalar_select %p399, %s23, 1
      %s401 = smul.addr %s400, 8
      %s402 = scalar_lea.vmem %s11, %s401
      %v404 = vld [vmem:[%s390] sm:$0xff]
      %v405 = vld [vmem:[%s1] sm:$0x1]
      %v406 = vld [vmem:[%s2] sm:$0x1]
      %vm407 = vcmask 261120
      %v408 = vsel %vm407, %v404, 0.0
      %409 = vadd.xlane.f32.xlu0 %v408
      %v410 = vpop.xlane.xlu0 %409
      %v411 = vrcp.pop 32.0
      %v412 = vmul.f32 %v410, %v411
      %v413 = vsub.f32 %v404, %v412
      %v414 = vmul.f32 %v413, %v413
      %v415 = vsel %vm407, %v414, 0.0
      %416 = vadd.xlane.f32.xlu0 %v415
      %v417 = vpop.xlane.xlu0 %416
      %v418 = vmul.f32 %v417, %v411
      %v419 = vadd.f32 %v418, 1e-05
      %v420 = vrsqrt.pop %v419
      %v421 = vmul.f32 %v413, %v420
      %v423 = vlaneseq
      %v424 = vshrl.u32 %v423, 7
      %v425 = vsub.s32 0, %v424
      %v426 = vrot.slane %v405, %v425
      %v428 = vmul.f32 %v421, %v426
      %v430 = vlaneseq
      %v431 = vshrl.u32 %v430, 7
      %v432 = vsub.s32 0, %v431
      %v433 = vrot.slane %v406, %v432
      %v435 = vadd.f32 %v428, %v433
      %v436 = vpack.c.bf16 %v435, %v435
      %v437 = vld [vmem:[%s3] sm:$0xff]
      %v438 = vld [vmem:[%s3 + $0x8] sm:$0xff]
      %v439 = vld [vmem:[%s3 + $0x10] sm:$0xff]
      %v440 = vld [vmem:[%s3 + $0x18] sm:$0xff]
      %v441 = vpack.c.bf16 %v438, %v437
      %v442 = vpack.c.bf16 %v440, %v439
      %v443 = vld [vmem:[%s4] sm:$0x1]
      %v445 = vlaneseq
      %v446 = vshrl.u32 %v445, 7
      %v447 = vsub.s32 0, %v446
      %v448 = vrot.slane %v443, %v447
      %v451 = vsel %vm407, %v436, 0
      %453 = vmatprep.subr.bf16.mxu0 0
      %454 = vmatpush1.bf16.msra.mxu0 0
      %455 = vmatprep.subr.bf16.mxu0 0
      %456 = vmatpush1.bf16.msra.mxu0 0
      %457 = vmatprep.subr.bf16.mxu0 0
      %458 = vmatpush1.bf16.msra.mxu0 0
      %459 = vmatprep.subr.bf16.mxu0 0
      %460 = vmatpush1.bf16.msra.mxu0 0
      %461 = vmatprep.subr.bf16.mxu0 0
      %462 = vmatpush1.bf16.msra.mxu0 0
      %463 = vmatprep.subr.bf16.mxu0 0
      %464 = vmatpush1.bf16.msra.mxu0 0
      %465 = vmatprep.subr.bf16.mxu0 0
      %466 = vmatpush1.bf16.msra.mxu0 %v442
      %467 = vmatprep.subr.bf16.mxu0 0
      %468 = vmatpush1.bf16.msra.mxu0 %v441
      %469 = vmatprep.subr.bf16.mxu0 0
      %470 = vmatpush2.bf16.msra.mxu0 0
      %471 = vmatprep.subr.bf16.mxu0 0
      %472 = vmatpush2.bf16.msra.mxu0 0
      %473 = vmatprep.subr.bf16.mxu0 0
      %474 = vmatpush2.bf16.msra.mxu0 0
      %475 = vmatprep.subr.bf16.mxu0 0
      %476 = vmatpush2.bf16.msra.mxu0 0
      %477 = vmatprep.subr.bf16.mxu0 0
      %478 = vmatpush2.bf16.msra.mxu0 0
      %479 = vmatprep.subr.bf16.mxu0 0
      %480 = vmatpush2.bf16.msra.mxu0 0
      %481 = vmatprep.subr.bf16.mxu0 0
      %482 = vmatpush2.bf16.msra.mxu0 0
      %483 = vmatprep.subr.bf16.mxu0 0
      %484 = vmatpush2.bf16.msra.mxu0 0
      %485 = vmatprep.mubr.bf16.mxu0 0
      %486 = vmatmul.mubr.bf16.gmra.mxu0 %v451
      %v487 = vpop.f32.mrf.mxu0
      %v488 = vadd.f32 %v448, %v487
      %v489 = vpop.f32.mrf.mxu0
      %v490 = vpop.f32.mrf.mxu0
      %v491 = vpop.f32.mrf.mxu0
      %492 = vdwg.mxu0
      %493 = vst.msk [vmem:[%s394] sm:$0xff] %vm407, %v488
      %v494 = vld [vmem:[%s5] sm:$0xff]
      %v495 = vld [vmem:[%s5 + $0x8] sm:$0xff]
      %v496 = vld [vmem:[%s5 + $0x10] sm:$0xff]
      %v497 = vld [vmem:[%s5 + $0x18] sm:$0xff]
      %v498 = vpack.c.bf16 %v495, %v494
      %v499 = vpack.c.bf16 %v497, %v496
      %v500 = vld [vmem:[%s6] sm:$0x1]
      %v502 = vlaneseq
      %v503 = vshrl.u32 %v502, 7
      %v504 = vsub.s32 0, %v503
      %v505 = vrot.slane %v500, %v504
      %507 = vmatprep.subr.bf16.mxu0 0
      %508 = vmatpush1.bf16.msra.mxu0 0
      %509 = vmatprep.subr.bf16.mxu0 0
      %510 = vmatpush1.bf16.msra.mxu0 0
      %511 = vmatprep.subr.bf16.mxu0 0
      %512 = vmatpush1.bf16.msra.mxu0 0
      %513 = vmatprep.subr.bf16.mxu0 0
      %514 = vmatpush1.bf16.msra.mxu0 0
      %515 = vmatprep.subr.bf16.mxu0 0
      %516 = vmatpush1.bf16.msra.mxu0 0
      %517 = vmatprep.subr.bf16.mxu0 0
      %518 = vmatpush1.bf16.msra.mxu0 0
      %519 = vmatprep.subr.bf16.mxu0 0
      %520 = vmatpush1.bf16.msra.mxu0 %v499
      %521 = vmatprep.subr.bf16.mxu0 0
      %522 = vmatpush1.bf16.msra.mxu0 %v498
      %523 = vmatprep.subr.bf16.mxu0 0
      %524 = vmatpush2.bf16.msra.mxu0 0
      %525 = vmatprep.subr.bf16.mxu0 0
      %526 = vmatpush2.bf16.msra.mxu0 0
      %527 = vmatprep.subr.bf16.mxu0 0
      %528 = vmatpush2.bf16.msra.mxu0 0
      %529 = vmatprep.subr.bf16.mxu0 0
      %530 = vmatpush2.bf16.msra.mxu0 0
      %531 = vmatprep.subr.bf16.mxu0 0
      %532 = vmatpush2.bf16.msra.mxu0 0
      %533 = vmatprep.subr.bf16.mxu0 0
      %534 = vmatpush2.bf16.msra.mxu0 0
      %535 = vmatprep.subr.bf16.mxu0 0
      %536 = vmatpush2.bf16.msra.mxu0 0
      %537 = vmatprep.subr.bf16.mxu0 0
      %538 = vmatpush2.bf16.msra.mxu0 0
      %539 = vmatprep.mubr.bf16.mxu0 0
      %540 = vmatmul.mubr.bf16.gmra.mxu0 %v451
      %v541 = vpop.f32.mrf.mxu0
      %v542 = vadd.f32 %v505, %v541
      %v543 = vpop.f32.mrf.mxu0
      %v544 = vpop.f32.mrf.mxu0
      %v545 = vpop.f32.mrf.mxu0
      %546 = vdwg.mxu0
      %547 = vst.msk [vmem:[%s398] sm:$0xff] %vm407, %v542
      %v548 = vld [vmem:[%s7] sm:$0xff]
      %v549 = vld [vmem:[%s7 + $0x8] sm:$0xff]
      %v550 = vld [vmem:[%s7 + $0x10] sm:$0xff]
      %v551 = vld [vmem:[%s7 + $0x18] sm:$0xff]
      %v552 = vpack.c.bf16 %v549, %v548
      %v553 = vpack.c.bf16 %v551, %v550
      %v554 = vld [vmem:[%s8] sm:$0x1]
      %v556 = vlaneseq
      %v557 = vshrl.u32 %v556, 7
      %v558 = vsub.s32 0, %v557
      %v559 = vrot.slane %v554, %v558
      %561 = vmatprep.subr.bf16.mxu0 0
      %562 = vmatpush1.bf16.msra.mxu0 0
      %563 = vmatprep.subr.bf16.mxu0 0
      %564 = vmatpush1.bf16.msra.mxu0 0
      %565 = vmatprep.subr.bf16.mxu0 0
      %566 = vmatpush1.bf16.msra.mxu0 0
      %567 = vmatprep.subr.bf16.mxu0 0
      %568 = vmatpush1.bf16.msra.mxu0 0
      %569 = vmatprep.subr.bf16.mxu0 0
      %570 = vmatpush1.bf16.msra.mxu0 0
      %571 = vmatprep.subr.bf16.mxu0 0
      %572 = vmatpush1.bf16.msra.mxu0 0
      %573 = vmatprep.subr.bf16.mxu0 0
      %574 = vmatpush1.bf16.msra.mxu0 %v553
      %575 = vmatprep.subr.bf16.mxu0 0
      %576 = vmatpush1.bf16.msra.mxu0 %v552
      %577 = vmatprep.subr.bf16.mxu0 0
      %578 = vmatpush2.bf16.msra.mxu0 0
      %579 = vmatprep.subr.bf16.mxu0 0
      %580 = vmatpush2.bf16.msra.mxu0 0
      %581 = vmatprep.subr.bf16.mxu0 0
      %582 = vmatpush2.bf16.msra.mxu0 0
      %583 = vmatprep.subr.bf16.mxu0 0
      %584 = vmatpush2.bf16.msra.mxu0 0
      %585 = vmatprep.subr.bf16.mxu0 0
      %586 = vmatpush2.bf16.msra.mxu0 0
      %587 = vmatprep.subr.bf16.mxu0 0
      %588 = vmatpush2.bf16.msra.mxu0 0
      %589 = vmatprep.subr.bf16.mxu0 0
      %590 = vmatpush2.bf16.msra.mxu0 0
      %591 = vmatprep.subr.bf16.mxu0 0
      %592 = vmatpush2.bf16.msra.mxu0 0
      %593 = vmatprep.mubr.bf16.mxu0 0
      %594 = vmatmul.mubr.bf16.gmra.mxu0 %v451
      %v595 = vpop.f32.mrf.mxu0
      %v596 = vadd.f32 %v559, %v595
      %v597 = vpop.f32.mrf.mxu0
      %v598 = vpop.f32.mrf.mxu0
      %v599 = vpop.f32.mrf.mxu0
      %600 = vdwg.mxu0
      %601 = vst.msk [vmem:[%s402] sm:$0xff] %vm407, %v596
      %p602 = scmp.lt.s32.totalorder %s23, 1
      %s603 = scalar_select %p602, %s23, 1
      %s604 = smul.addr %s603, 8
      %s605 = scalar_lea.vmem %s9, %s604
      %p606 = scmp.lt.s32.totalorder %s23, 1
      %s607 = scalar_select %p606, %s23, 1
      %s608 = smul.addr %s607, 8
      %s609 = scalar_lea.vmem %s10, %s608
      %p610 = scmp.lt.s32.totalorder %s23, 1
      %s611 = scalar_select %p610, %s23, 1
      %s612 = smul.addr %s611, 8
      %s613 = scalar_lea.vmem %s11, %s612
      // Predicated region
      $region57: #{cross_pika_attention_layer.31} parent=55 // pred_check
        %p614 = pneg %p235
      $region58: #{cross_pika_attention_layer.31} parent=55 // pred_check_branch
        %616 = sbr.rel (%p614) target = $region60
      $region59: #{cross_pika_attention_layer.31} parent=55 // pred_region
        _
      $region60: #{cross_pika_attention_layer.31} parent=55 // pred_fallthru
        _
      // Predicated region
      $region61: #{cross_pika_attention_layer.31} parent=55 // pred_check
        %p617 = pneg %p261
      $region62: #{cross_pika_attention_layer.31} parent=55 // pred_check_branch
        %619 = sbr.rel (%p617) target = $region64
      $region63: #{cross_pika_attention_layer.31} parent=55 // pred_region
        _
      $region64: #{cross_pika_attention_layer.31} parent=55 // pred_fallthru
        _
      // Predicated region
      $region65: #{cross_pika_attention_layer.31} parent=55 // pred_check
        %p620 = pneg %p287
      $region66: #{cross_pika_attention_layer.31} parent=55 // pred_check_branch
        %622 = sbr.rel (%p620) target = $region68
      $region67: #{cross_pika_attention_layer.31} parent=55 // pred_region
        _
      $region68: #{cross_pika_attention_layer.31} parent=55 // pred_fallthru
        _
    $region56: #{cross_pika_attention_layer.31} parent=5 // pred_fallthru
      _
    %p623 = scmp.le.s32.totalorder 2, %s18
    // Predicated region
    $region69: #{cross_pika_attention_layer.31} parent=5 // pred_check
      %p624 = pneg %p623
    $region70: #{cross_pika_attention_layer.31} parent=5 // pred_check_branch
      %626 = sbr.rel (%p624) target = $region72
    $region71: #{cross_pika_attention_layer.31} parent=5 // pred_region
      %s627 = ssub.s32 %s18, 2
      // Predicated region
      $region73: #{cross_pika_attention_layer.31} parent=71 // pred_check
        %p628 = pneg %p241
      $region74: #{cross_pika_attention_layer.31} parent=71 // pred_check_branch
        %630 = sbr.rel (%p628) target = $region76
      $region75: #{cross_pika_attention_layer.31} parent=71 // pred_region
        %p631 = scmp.lt.s32.totalorder %s24, 1
        %s632 = scalar_select %p631, %s24, 1
        %s633 = smul.addr %s632, 8
        %s634 = scalar_lea.vmem %s9, %s633
      $region76: #{cross_pika_attention_layer.31} parent=71 // pred_fallthru
        _
      // Predicated region
      $region77: #{cross_pika_attention_layer.31} parent=71 // pred_check
        %p635 = pneg %p267
      $region78: #{cross_pika_attention_layer.31} parent=71 // pred_check_branch
        %637 = sbr.rel (%p635) target = $region80
      $region79: #{cross_pika_attention_layer.31} parent=71 // pred_region
        %p638 = scmp.lt.s32.totalorder %s24, 1
        %s639 = scalar_select %p638, %s24, 1
        %s640 = smul.addr %s639, 8
        %s641 = scalar_lea.vmem %s10, %s640
      $region80: #{cross_pika_attention_layer.31} parent=71 // pred_fallthru
        _
      // Predicated region
      $region81: #{cross_pika_attention_layer.31} parent=71 // pred_check
        %p642 = pneg %p293
      $region82: #{cross_pika_attention_layer.31} parent=71 // pred_check_branch
        %644 = sbr.rel (%p642) target = $region84
      $region83: #{cross_pika_attention_layer.31} parent=71 // pred_region
        %p645 = scmp.lt.s32.totalorder %s24, 1
        %s646 = scalar_select %p645, %s24, 1
        %s647 = smul.addr %s646, 8
        %s648 = scalar_lea.vmem %s11, %s647
      $region84: #{cross_pika_attention_layer.31} parent=71 // pred_fallthru
        _
    $region72: #{cross_pika_attention_layer.31} parent=5 // pred_fallthru
      _
  $region6: #{cross_pika_attention_layer.31} parent=0 // loop_footer
    %s22 = sadd.s32 1, %s18
  $region7: #{cross_pika_attention_layer.31} parent=0 // loop_footer_branch
    %17 = sbr.rel target = $region3
  $region8: #{cross_pika_attention_layer.31} parent=0 // loop_exit
    _

// kernel: cross_pika_attention_layer.29
$region0: #{cross_pika_attention_layer.29}
  #allocation0 [shape = 'u32[]', space=smem, size = 0x4, offset = 0x4, fixed_abs, tag = 'smem constant byte address 0x4 - core index']
  #allocation1 [shape = 'u32[144,128]{1,0:T(1,128)}', space=vmem, size = 0x12000, scoped, tag = 'internal scratch']
  #allocation2 [shape = 'f32[1,1]{1,0:T(1,128)S(1)}', space=vmem, size = 0x200, scoped, tag = 'scoped memory for cross_pika_attention_layer.29']
  %s0 = inlined_call_operand.vmem [shape: f32[2,8,32], index: 0, kind: input, shape index: {}]
  %s1 = inlined_call_operand.vmem [shape: f32[2,8,32], index: 1, kind: input, shape index: {}]
  %s2 = inlined_call_operand.vmem [shape: f32[2,8,32], index: 2, kind: input, shape index: {}]
  %s3 = inlined_call_operand.vmem [shape: f32[2,8,32], index: 3, kind: input, shape index: {}]
  %s4 = inlined_call_operand.vmem [shape: f32[32,32], index: 4, kind: input, shape index: {}]
  %s5 = inlined_call_operand.vmem [shape: f32[1,32], index: 5, kind: input, shape index: {}]
  %s6 = inlined_call_operand.<no memory space> [shape: f32[1,1], index: 6, kind: input, shape index: {}]
  %s7 = inlined_call_operand.vmem [shape: f32[2,8,32], index: 7, kind: output, shape index: {}]
  %s8 = sld [smem:[#allocation0]]
  $region61: #{cross_pika_attention_layer.29} parent=0
    _
  %s10 = ssub.s32 1, %s8
  %s11 = scalar_select 0, %s10, %s8
  %v12 = vstv %s6
  %13 = vst [vmem:[#allocation2] sm:$0x1] %v12
  loop: start=0, step=1, limit=4
  $region2: #{cross_pika_attention_layer.29} parent=0 // loop_pre_header
    _
  $region3: #{cross_pika_attention_layer.29} parent=0 // loop_header
    %s15 = sphi 0, %s19
    %p16 = scmp.ge.s32.totalorder %s15, 4
    %s25 = sphi 0, %s27
    %s28 = sphi 0, %s25
    %s29 = sphi 0, %s28
    %s45 = sphi 0, %s29
    %s51 = sphi 0, %s53
    %s54 = sphi 0, %s51
    %s55 = sphi 0, %s54
    %s71 = sphi 0, %s55
    %s77 = sphi 0, %s79
    %s80 = sphi 0, %s77
    %s81 = sphi 0, %s80
    %s97 = sphi 0, %s81
    %s103 = sphi 0, %s105
    %s106 = sphi 0, %s103
    %s107 = sphi 0, %s106
    %s123 = sphi 0, %s107
    %s127 = sphi 0, %s127
    %s129 = sphi 0, %s127
    %s130 = sphi 0, %s129
    %s144 = sphi 0, %s130
    %s148 = sphi 0, %s148
    %s150 = sphi 0, %s148
    %s151 = sphi 0, %s150
    %s165 = sphi 0, %s151
    %s169 = sphi 0, %s169
    %s171 = sphi 0, %s169
    %s172 = sphi 0, %s171
    %s186 = sphi 0, %s172
    %s192 = sphi 0, %s194
    %s195 = sphi 0, %s192
    %s196 = sphi 0, %s195
    %s212 = sphi 0, %s196
  $region4: #{cross_pika_attention_layer.29} parent=0 // loop_header_branch
    %18 = sbr.rel (%p16) target = $region8
  $region5: #{cross_pika_attention_layer.29} parent=0 // loop_body
    %s20 = ssub.s32 %s15, 1
    %s21 = ssub.s32 %s15, 2
    %s22 = sadd.s32 %s15, 1
    %s23 = ssub.s32 %s15, %s22
    %p24 = scmp.eq.s32.totalorder %s23, 0
    %s26 = sadd.s32 %s25, 1
    %s27 = scalar_select %p24, %s25, %s26
    %p30 = pneg %p24
    %p31 = scmp.eq.s32.totalorder %s15, 1
    %p32 = por %p30, %p31
    %p33 = scmp.ne.s32.totalorder %s25, %s28
    %p34 = scmp.eq.s32.totalorder %s15, 0
    %p35 = por %p33, %p34
    %p36 = scmp.ne.s32.totalorder %s25, %s28
    %p37 = scmp.eq.s32.totalorder %s20, 1
    %p38 = por %p36, %p37
    %p39 = scmp.ne.s32.totalorder %s28, %s29
    %p40 = scmp.eq.s32.totalorder %s20, 0
    %p41 = por %p39, %p40
    %p42 = scmp.ne.s32.totalorder %s28, %s29
    %p43 = scmp.eq.s32.totalorder %s21, 1
    %p44 = por %p42, %p43
    %p46 = scmp.ne.s32.totalorder %s29, %s45
    %p47 = scmp.eq.s32.totalorder %s21, 0
    %p48 = por %p46, %p47
    %s49 = ssub.s32 %s15, %s22
    %p50 = scmp.eq.s32.totalorder %s49, 0
    %s52 = sadd.s32 %s51, 1
    %s53 = scalar_select %p50, %s51, %s52
    %p56 = pneg %p50
    %p57 = scmp.eq.s32.totalorder %s15, 1
    %p58 = por %p56, %p57
    %p59 = scmp.ne.s32.totalorder %s51, %s54
    %p60 = scmp.eq.s32.totalorder %s15, 0
    %p61 = por %p59, %p60
    %p62 = scmp.ne.s32.totalorder %s51, %s54
    %p63 = scmp.eq.s32.totalorder %s20, 1
    %p64 = por %p62, %p63
    %p65 = scmp.ne.s32.totalorder %s54, %s55
    %p66 = scmp.eq.s32.totalorder %s20, 0
    %p67 = por %p65, %p66
    %p68 = scmp.ne.s32.totalorder %s54, %s55
    %p69 = scmp.eq.s32.totalorder %s21, 1
    %p70 = por %p68, %p69
    %p72 = scmp.ne.s32.totalorder %s55, %s71
    %p73 = scmp.eq.s32.totalorder %s21, 0
    %p74 = por %p72, %p73
    %s75 = ssub.s32 %s15, %s22
    %p76 = scmp.eq.s32.totalorder %s75, 0
    %s78 = sadd.s32 %s77, 1
    %s79 = scalar_select %p76, %s77, %s78
    %p82 = pneg %p76
    %p83 = scmp.eq.s32.totalorder %s15, 1
    %p84 = por %p82, %p83
    %p85 = scmp.ne.s32.totalorder %s77, %s80
    %p86 = scmp.eq.s32.totalorder %s15, 0
    %p87 = por %p85, %p86
    %p88 = scmp.ne.s32.totalorder %s77, %s80
    %p89 = scmp.eq.s32.totalorder %s20, 1
    %p90 = por %p88, %p89
    %p91 = scmp.ne.s32.totalorder %s80, %s81
    %p92 = scmp.eq.s32.totalorder %s20, 0
    %p93 = por %p91, %p92
    %p94 = scmp.ne.s32.totalorder %s80, %s81
    %p95 = scmp.eq.s32.totalorder %s21, 1
    %p96 = por %p94, %p95
    %p98 = scmp.ne.s32.totalorder %s81, %s97
    %p99 = scmp.eq.s32.totalorder %s21, 0
    %p100 = por %p98, %p99
    %s101 = ssub.s32 %s15, %s22
    %p102 = scmp.eq.s32.totalorder %s101, 0
    %s104 = sadd.s32 %s103, 1
    %s105 = scalar_select %p102, %s103, %s104
    %p108 = pneg %p102
    %p109 = scmp.eq.s32.totalorder %s15, 1
    %p110 = por %p108, %p109
    %p111 = scmp.ne.s32.totalorder %s103, %s106
    %p112 = scmp.eq.s32.totalorder %s15, 0
    %p113 = por %p111, %p112
    %p114 = scmp.ne.s32.totalorder %s103, %s106
    %p115 = scmp.eq.s32.totalorder %s20, 1
    %p116 = por %p114, %p115
    %p117 = scmp.ne.s32.totalorder %s106, %s107
    %p118 = scmp.eq.s32.totalorder %s20, 0
    %p119 = por %p117, %p118
    %p120 = scmp.ne.s32.totalorder %s106, %s107
    %p121 = scmp.eq.s32.totalorder %s21, 1
    %p122 = por %p120, %p121
    %p124 = scmp.ne.s32.totalorder %s107, %s123
    %p125 = scmp.eq.s32.totalorder %s21, 0
    %p126 = por %p124, %p125
    %s128 = sadd.s32 %s127, 1
    %p131 = scmp.eq.s32.totalorder %s15, 1
    %p132 = scmp.ne.s32.totalorder %s127, %s129
    %p133 = scmp.eq.s32.totalorder %s15, 0
    %p134 = por %p132, %p133
    %p135 = scmp.ne.s32.totalorder %s127, %s129
    %p136 = scmp.eq.s32.totalorder %s20, 1
    %p137 = por %p135, %p136
    %p138 = scmp.ne.s32.totalorder %s129, %s130
    %p139 = scmp.eq.s32.totalorder %s20, 0
    %p140 = por %p138, %p139
    %p141 = scmp.ne.s32.totalorder %s129, %s130
    %p142 = scmp.eq.s32.totalorder %s21, 1
    %p143 = por %p141, %p142
    %p145 = scmp.ne.s32.totalorder %s130, %s144
    %p146 = scmp.eq.s32.totalorder %s21, 0
    %p147 = por %p145, %p146
    %s149 = sadd.s32 %s148, 1
    %p152 = scmp.eq.s32.totalorder %s15, 1
    %p153 = scmp.ne.s32.totalorder %s148, %s150
    %p154 = scmp.eq.s32.totalorder %s15, 0
    %p155 = por %p153, %p154
    %p156 = scmp.ne.s32.totalorder %s148, %s150
    %p157 = scmp.eq.s32.totalorder %s20, 1
    %p158 = por %p156, %p157
    %p159 = scmp.ne.s32.totalorder %s150, %s151
    %p160 = scmp.eq.s32.totalorder %s20, 0
    %p161 = por %p159, %p160
    %p162 = scmp.ne.s32.totalorder %s150, %s151
    %p163 = scmp.eq.s32.totalorder %s21, 1
    %p164 = por %p162, %p163
    %p166 = scmp.ne.s32.totalorder %s151, %s165
    %p167 = scmp.eq.s32.totalorder %s21, 0
    %p168 = por %p166, %p167
    %s170 = sadd.s32 %s169, 1
    %p173 = scmp.eq.s32.totalorder %s15, 1
    %p174 = scmp.ne.s32.totalorder %s169, %s171
    %p175 = scmp.eq.s32.totalorder %s15, 0
    %p176 = por %p174, %p175
    %p177 = scmp.ne.s32.totalorder %s169, %s171
    %p178 = scmp.eq.s32.totalorder %s20, 1
    %p179 = por %p177, %p178
    %p180 = scmp.ne.s32.totalorder %s171, %s172
    %p181 = scmp.eq.s32.totalorder %s20, 0
    %p182 = por %p180, %p181
    %p183 = scmp.ne.s32.totalorder %s171, %s172
    %p184 = scmp.eq.s32.totalorder %s21, 1
    %p185 = por %p183, %p184
    %p187 = scmp.ne.s32.totalorder %s172, %s186
    %p188 = scmp.eq.s32.totalorder %s21, 0
    %p189 = por %p187, %p188
    %s190 = ssub.s32 %s15, %s22
    %p191 = scmp.eq.s32.totalorder %s190, 0
    %s193 = sadd.s32 %s192, 1
    %s194 = scalar_select %p191, %s192, %s193
    %p197 = pneg %p191
    %p198 = scmp.eq.s32.totalorder %s15, 1
    %p199 = por %p197, %p198
    %p200 = scmp.ne.s32.totalorder %s192, %s195
    %p201 = scmp.eq.s32.totalorder %s15, 0
    %p202 = por %p200, %p201
    %p203 = scmp.ne.s32.totalorder %s192, %s195
    %p204 = scmp.eq.s32.totalorder %s20, 1
    %p205 = por %p203, %p204
    %p206 = scmp.ne.s32.totalorder %s195, %s196
    %p207 = scmp.eq.s32.totalorder %s20, 0
    %p208 = por %p206, %p207
    %p209 = scmp.ne.s32.totalorder %s195, %s196
    %p210 = scmp.eq.s32.totalorder %s21, 1
    %p211 = por %p209, %p210
    %p213 = scmp.ne.s32.totalorder %s196, %s212
    %p214 = scmp.eq.s32.totalorder %s21, 0
    %p215 = por %p213, %p214
    %p216 = scmp.le.s32.totalorder 1, %s15
    %p217 = scmp.lt.s32.totalorder %s15, 3
    %p218 = pnand %p216, %p217
    %p219 = pneg %p218
    // Predicated region
    $region9: #{cross_pika_attention_layer.29} parent=5 // pred_check
      _
    $region10: #{cross_pika_attention_layer.29} parent=5 // pred_check_branch
      %221 = sbr.rel (%p218) target = $region12
    $region11: #{cross_pika_attention_layer.29} parent=5 // pred_region
      %s222 = ssub.s32 %s15, 1
      // Predicated region
      $region13: #{cross_pika_attention_layer.29} parent=11 // pred_check
        %p223 = pneg %p140
      $region14: #{cross_pika_attention_layer.29} parent=11 // pred_check_branch
        %225 = sbr.rel (%p223) target = $region16
      $region15: #{cross_pika_attention_layer.29} parent=11 // pred_region
        _
      $region16: #{cross_pika_attention_layer.29} parent=11 // pred_fallthru
        _
      // Predicated region
      $region17: #{cross_pika_attention_layer.29} parent=11 // pred_check
        %p226 = pneg %p161
      $region18: #{cross_pika_attention_layer.29} parent=11 // pred_check_branch
        %228 = sbr.rel (%p226) target = $region20
      $region19: #{cross_pika_attention_layer.29} parent=11 // pred_region
        _
      $region20: #{cross_pika_attention_layer.29} parent=11 // pred_fallthru
        _
      // Predicated region
      $region21: #{cross_pika_attention_layer.29} parent=11 // pred_check
        %p229 = pneg %p182
      $region22: #{cross_pika_attention_layer.29} parent=11 // pred_check_branch
        %231 = sbr.rel (%p229) target = $region24
      $region23: #{cross_pika_attention_layer.29} parent=11 // pred_region
        _
      $region24: #{cross_pika_attention_layer.29} parent=11 // pred_fallthru
        _
    $region12: #{cross_pika_attention_layer.29} parent=5 // pred_fallthru
      _
    %p232 = scmp.lt.s32.totalorder %s15, 2
    // Predicated region
    $region25: #{cross_pika_attention_layer.29} parent=5 // pred_check
      %p233 = pneg %p232
    $region26: #{cross_pika_attention_layer.29} parent=5 // pred_check_branch
      %235 = sbr.rel (%p233) target = $region28
    $region27: #{cross_pika_attention_layer.29} parent=5 // pred_region
      // Predicated region
      $region29: #{cross_pika_attention_layer.29} parent=27 // pred_check
        %p236 = pneg %p35
      $region30: #{cross_pika_attention_layer.29} parent=27 // pred_check_branch
        %238 = sbr.rel (%p236) target = $region32
      $region31: #{cross_pika_attention_layer.29} parent=27 // pred_region
        %p239 = scmp.lt.s32.totalorder %s15, 1
        %s240 = scalar_select %p239, %s15, 1
        %s241 = smul.addr %s240, 8
        %s242 = scalar_lea.vmem %s0, %s241
      $region32: #{cross_pika_attention_layer.29} parent=27 // pred_fallthru
        _
      // Predicated region
      $region33: #{cross_pika_attention_layer.29} parent=27 // pred_check
        %p243 = pneg %p61
      $region34: #{cross_pika_attention_layer.29} parent=27 // pred_check_branch
        %245 = sbr.rel (%p243) target = $region36
      $region35: #{cross_pika_attention_layer.29} parent=27 // pred_region
        %p246 = scmp.lt.s32.totalorder %s15, 1
        %s247 = scalar_select %p246, %s15, 1
        %s248 = smul.addr %s247, 8
        %s249 = scalar_lea.vmem %s1, %s248
      $region36: #{cross_pika_attention_layer.29} parent=27 // pred_fallthru
        _
      // Predicated region
      $region37: #{cross_pika_attention_layer.29} parent=27 // pred_check
        %p250 = pneg %p87
      $region38: #{cross_pika_attention_layer.29} parent=27 // pred_check_branch
        %252 = sbr.rel (%p250) target = $region40
      $region39: #{cross_pika_attention_layer.29} parent=27 // pred_region
        %p253 = scmp.lt.s32.totalorder %s15, 1
        %s254 = scalar_select %p253, %s15, 1
        %s255 = smul.addr %s254, 8
        %s256 = scalar_lea.vmem %s2, %s255
      $region40: #{cross_pika_attention_layer.29} parent=27 // pred_fallthru
        _
      // Predicated region
      $region41: #{cross_pika_attention_layer.29} parent=27 // pred_check
        %p257 = pneg %p113
      $region42: #{cross_pika_attention_layer.29} parent=27 // pred_check_branch
        %259 = sbr.rel (%p257) target = $region44
      $region43: #{cross_pika_attention_layer.29} parent=27 // pred_region
        %p260 = scmp.lt.s32.totalorder %s15, 1
        %s261 = scalar_select %p260, %s15, 1
        %s262 = smul.addr %s261, 8
        %s263 = scalar_lea.vmem %s3, %s262
      $region44: #{cross_pika_attention_layer.29} parent=27 // pred_fallthru
        _
    $region28: #{cross_pika_attention_layer.29} parent=5 // pred_fallthru
      _
    %p264 = scmp.le.s32.totalorder 1, %s15
    %p265 = scmp.lt.s32.totalorder %s15, 3
    %p266 = pnand %p264, %p265
    %p267 = pneg %p266
    // Predicated region
    $region45: #{cross_pika_attention_layer.29} parent=5 // pred_check
      _
    $region46: #{cross_pika_attention_layer.29} parent=5 // pred_check_branch
      %269 = sbr.rel (%p266) target = $region48
    $region47: #{cross_pika_attention_layer.29} parent=5 // pred_region
      %s270 = ssub.s32 %s15, 1
      %p271 = scmp.lt.s32.totalorder %s20, 1
      %s272 = scalar_select %p271, %s20, 1
      %s273 = smul.addr %s272, 8
      %s274 = scalar_lea.vmem %s0, %s273
      %p275 = pneg %p41
      %p276 = pneg %p38
      %p277 = scmp.lt.s32.totalorder %s20, 1
      %s278 = scalar_select %p277, %s20, 1
      %s279 = smul.addr %s278, 8
      %s280 = scalar_lea.vmem %s1, %s279
      %p281 = pneg %p67
      %p282 = pneg %p64
      %p283 = scmp.lt.s32.totalorder %s20, 1
      %s284 = scalar_select %p283, %s20, 1
      %s285 = smul.addr %s284, 8
      %s286 = scalar_lea.vmem %s2, %s285
      %p287 = pneg %p93
      %p288 = pneg %p90
      %p289 = scmp.lt.s32.totalorder %s20, 1
      %s290 = scalar_select %p289, %s20, 1
      %s291 = smul.addr %s290, 8
      %s292 = scalar_lea.vmem %s3, %s291
      %p293 = pneg %p119
      %p294 = pneg %p116
      %p295 = pneg %p140
      %p296 = pneg %p137
      %p297 = pneg %p161
      %p298 = pneg %p158
      %p299 = pneg %p182
      %p300 = pneg %p179
      %p301 = pneg %p208
      %p302 = pneg %p205
      %p303 = scmp.lt.s32.totalorder %s20, 1
      %s304 = scalar_select %p303, %s20, 1
      %s305 = smul.addr %s304, 8
      %s306 = scalar_lea.vmem %s7, %s305
      %p307 = scmp.lt.s32.totalorder %s20, 1
      %s308 = scalar_select %p307, %s20, 1
      %s309 = smul.addr %s308, 8
      %s310 = scalar_lea.vmem %s0, %s309
      %p311 = scmp.lt.s32.totalorder %s20, 1
      %s312 = scalar_select %p311, %s20, 1
      %s313 = smul.addr %s312, 8
      %s314 = scalar_lea.vmem %s1, %s313
      %p315 = scmp.lt.s32.totalorder %s20, 1
      %s316 = scalar_select %p315, %s20, 1
      %s317 = smul.addr %s316, 8
      %s318 = scalar_lea.vmem %s2, %s317
      %p319 = scmp.lt.s32.totalorder %s20, 1
      %s320 = scalar_select %p319, %s20, 1
      %s321 = smul.addr %s320, 8
      %s322 = scalar_lea.vmem %s3, %s321
      %p323 = scmp.lt.s32.totalorder %s20, 1
      %s324 = scalar_select %p323, %s20, 1
      %s325 = smul.addr %s324, 8
      %s326 = scalar_lea.vmem %s7, %s325
      %v328 = vld [vmem:[%s310] sm:$0xff]
      %v329 = vld [vmem:[%s314] sm:$0xff]
      %v330 = vld [vmem:[%s318] sm:$0xff]
      %v331 = vpack.c.bf16 %v328, %v328
      %v332 = vpack.c.bf16 %v329, %v329
      %v333 = vpack.c.bf16 %v330, %v330
      %vm334 = vcmask 64512
      %v336 = vsel %vm334, %v331, 0
      %v339 = vsel %vm334, %v332, 0
      %341 = vmatprep.subr.bf16.mxu0 0
      %342 = vmatpush1.bf16.xpose.msra.mxu0 0
      %343 = vmatprep.subr.bf16.mxu0 0
      %344 = vmatpush1.bf16.xpose.msra.mxu0 0
      %345 = vmatprep.subr.bf16.mxu0 0
      %346 = vmatpush1.bf16.xpose.msra.mxu0 0
      %347 = vmatprep.subr.bf16.mxu0 0
      %348 = vmatpush1.bf16.xpose.msra.mxu0 0
      %349 = vmatprep.subr.bf16.mxu0 0
      %350 = vmatpush1.bf16.xpose.msra.mxu0 0
      %351 = vmatprep.subr.bf16.mxu0 0
      %352 = vmatpush1.bf16.xpose.msra.mxu0 0
      %353 = vmatprep.subr.bf16.mxu0 0
      %354 = vmatpush1.bf16.xpose.msra.mxu0 0
      %355 = vmatprep.subr.bf16.mxu0 0
      %356 = vmatpush1.bf16.xpose.msra.mxu0 %v339
      %357 = vmatprep.subr.bf16.mxu0 0
      %358 = vmatpush2.bf16.xpose.msra.mxu0 0
      %359 = vmatprep.subr.bf16.mxu0 0
      %360 = vmatpush2.bf16.xpose.msra.mxu0 0
      %361 = vmatprep.subr.bf16.mxu0 0
      %362 = vmatpush2.bf16.xpose.msra.mxu0 0
      %363 = vmatprep.subr.bf16.mxu0 0
      %364 = vmatpush2.bf16.xpose.msra.mxu0 0
      %365 = vmatprep.subr.bf16.mxu0 0
      %366 = vmatpush2.bf16.xpose.msra.mxu0 0
      %367 = vmatprep.subr.bf16.mxu0 0
      %368 = vmatpush2.bf16.xpose.msra.mxu0 0
      %369 = vmatprep.subr.bf16.mxu0 0
      %370 = vmatpush2.bf16.xpose.msra.mxu0 0
      %371 = vmatprep.subr.bf16.mxu0 0
      %372 = vmatpush2.bf16.xpose.msra.mxu0 0
      %373 = vmatprep.mubr.bf16.mxu0 0
      %374 = vmatmul.mubr.bf16.gmra.mxu0 %v336
      %v375 = vpop.f32.mrf.mxu0
      %v376 = vadd.f32 0.0, %v375
      %v377 = vpop.f32.mrf.mxu0
      %v378 = vpop.f32.mrf.mxu0
      %v379 = vpop.f32.mrf.mxu0
      %380 = vdwg.mxu0
      %v381 = vmul.f32 %v376, 0.35355338
      %v382 = vsel %vm334, %v381, -inf
      %383 = vmax.xlane.f32.xlu0 %v382
      %v384 = vpop.xlane.xlu0 %383
      %v385 = vsub.f32 %v381, %v384
      %v386 = vmul.f32 %v385, 1.442695
      %v387 = vpow.pop %v386
      %v388 = vsel %vm334, %v387, 0.0
      %389 = vadd.xlane.f32.xlu0 %v388
      %v390 = vpop.xlane.xlu0 %389
      %v391 = vrcp.pop %v390
      %v392 = vmul.f32 %v387, %v391
      %v393 = vpack.c.bf16 %v392, %v392
      %v395 = vsel %vm334, %v393, 0
      %vm397 = vcmask 1043456
      %v399 = vsel %vm397, %v333, 0
      %401 = vmatprep.subr.bf16.mxu0 0
      %402 = vmatpush1.bf16.msra.mxu0 0
      %403 = vmatprep.subr.bf16.mxu0 0
      %404 = vmatpush1.bf16.msra.mxu0 0
      %405 = vmatprep.subr.bf16.mxu0 0
      %406 = vmatpush1.bf16.msra.mxu0 0
      %407 = vmatprep.subr.bf16.mxu0 0
      %408 = vmatpush1.bf16.msra.mxu0 0
      %409 = vmatprep.subr.bf16.mxu0 0
      %410 = vmatpush1.bf16.msra.mxu0 0
      %411 = vmatprep.subr.bf16.mxu0 0
      %412 = vmatpush1.bf16.msra.mxu0 0
      %413 = vmatprep.subr.bf16.mxu0 0
      %414 = vmatpush1.bf16.msra.mxu0 0
      %415 = vmatprep.subr.bf16.mxu0 0
      %416 = vmatpush1.bf16.msra.mxu0 %v399
      %417 = vmatprep.subr.bf16.mxu0 0
      %418 = vmatpush2.bf16.msra.mxu0 0
      %419 = vmatprep.subr.bf16.mxu0 0
      %420 = vmatpush2.bf16.msra.mxu0 0
      %421 = vmatprep.subr.bf16.mxu0 0
      %422 = vmatpush2.bf16.msra.mxu0 0
      %423 = vmatprep.subr.bf16.mxu0 0
      %424 = vmatpush2.bf16.msra.mxu0 0
      %425 = vmatprep.subr.bf16.mxu0 0
      %426 = vmatpush2.bf16.msra.mxu0 0
      %427 = vmatprep.subr.bf16.mxu0 0
      %428 = vmatpush2.bf16.msra.mxu0 0
      %429 = vmatprep.subr.bf16.mxu0 0
      %430 = vmatpush2.bf16.msra.mxu0 0
      %431 = vmatprep.subr.bf16.mxu0 0
      %432 = vmatpush2.bf16.msra.mxu0 0
      %433 = vmatprep.mubr.bf16.mxu0 0
      %434 = vmatmul.mubr.bf16.gmra.mxu0 %v395
      %v435 = vpop.f32.mrf.mxu0
      %v436 = vadd.f32 0.0, %v435
      %v437 = vpop.f32.mrf.mxu0
      %v438 = vpop.f32.mrf.mxu0
      %v439 = vpop.f32.mrf.mxu0
      %440 = vdwg.mxu0
      %v441 = vpack.c.bf16 %v436, %v436
      %v442 = vld [vmem:[%s4] sm:$0xff]
      %v443 = vpack.c.bf16 %v442, %v442
      %445 = vrot.lane.b32.xlu0 %v331, 120
      %v446 = vpop.permute.xlu0 %445
      %448 = vrot.lane.b32.xlu0 %v332, 120
      %v449 = vpop.permute.xlu0 %448
      %v451 = vsel %vm334, %v446, 0
      %v454 = vsel %vm334, %v449, 0
      %456 = vmatprep.subr.bf16.mxu0 0
      %457 = vmatpush1.bf16.xpose.msra.mxu0 0
      %458 = vmatprep.subr.bf16.mxu0 0
      %459 = vmatpush1.bf16.xpose.msra.mxu0 0
      %460 = vmatprep.subr.bf16.mxu0 0
      %461 = vmatpush1.bf16.xpose.msra.mxu0 0
      %462 = vmatprep.subr.bf16.mxu0 0
      %463 = vmatpush1.bf16.xpose.msra.mxu0 0
      %464 = vmatprep.subr.bf16.mxu0 0
      %465 = vmatpush1.bf16.xpose.msra.mxu0 0
      %466 = vmatprep.subr.bf16.mxu0 0
      %467 = vmatpush1.bf16.xpose.msra.mxu0 0
      %468 = vmatprep.subr.bf16.mxu0 0
      %469 = vmatpush1.bf16.xpose.msra.mxu0 0
      %470 = vmatprep.subr.bf16.mxu0 0
      %471 = vmatpush1.bf16.xpose.msra.mxu0 %v454
      %472 = vmatprep.subr.bf16.mxu0 0
      %473 = vmatpush2.bf16.xpose.msra.mxu0 0
      %474 = vmatprep.subr.bf16.mxu0 0
      %475 = vmatpush2.bf16.xpose.msra.mxu0 0
      %476 = vmatprep.subr.bf16.mxu0 0
      %477 = vmatpush2.bf16.xpose.msra.mxu0 0
      %478 = vmatprep.subr.bf16.mxu0 0
      %479 = vmatpush2.bf16.xpose.msra.mxu0 0
      %480 = vmatprep.subr.bf16.mxu0 0
      %481 = vmatpush2.bf16.xpose.msra.mxu0 0
      %482 = vmatprep.subr.bf16.mxu0 0
      %483 = vmatpush2.bf16.xpose.msra.mxu0 0
      %484 = vmatprep.subr.bf16.mxu0 0
      %485 = vmatpush2.bf16.xpose.msra.mxu0 0
      %486 = vmatprep.subr.bf16.mxu0 0
      %487 = vmatpush2.bf16.xpose.msra.mxu0 0
      %488 = vmatprep.mubr.bf16.mxu0 0
      %489 = vmatmul.mubr.bf16.gmra.mxu0 %v451
      %v490 = vpop.f32.mrf.mxu0
      %v491 = vadd.f32 0.0, %v490
      %v492 = vpop.f32.mrf.mxu0
      %v493 = vpop.f32.mrf.mxu0
      %v494 = vpop.f32.mrf.mxu0
      %495 = vdwg.mxu0
      %v496 = vmul.f32 %v491, 0.35355338
      %v497 = vsel %vm334, %v496, -inf
      %498 = vmax.xlane.f32.xlu0 %v497
      %v499 = vpop.xlane.xlu0 %498
      %v500 = vsub.f32 %v496, %v499
      %v501 = vmul.f32 %v500, 1.442695
      %v502 = vpow.pop %v501
      %v503 = vsel %vm334, %v502, 0.0
      %504 = vadd.xlane.f32.xlu0 %v503
      %v505 = vpop.xlane.xlu0 %504
      %v506 = vrcp.pop %v505
      %v507 = vmul.f32 %v502, %v506
      %v508 = vpack.c.bf16 %v507, %v507
      %510 = vrot.lane.b32.xlu0 %v333, 120
      %v511 = vpop.permute.xlu0 %510
      %v513 = vsel %vm334, %v508, 0
      %v516 = vsel %vm397, %v511, 0
      %518 = vmatprep.subr.bf16.mxu0 0
      %519 = vmatpush1.bf16.msra.mxu0 0
      %520 = vmatprep.subr.bf16.mxu0 0
      %521 = vmatpush1.bf16.msra.mxu0 0
      %522 = vmatprep.subr.bf16.mxu0 0
      %523 = vmatpush1.bf16.msra.mxu0 0
      %524 = vmatprep.subr.bf16.mxu0 0
      %525 = vmatpush1.bf16.msra.mxu0 0
      %526 = vmatprep.subr.bf16.mxu0 0
      %527 = vmatpush1.bf16.msra.mxu0 0
      %528 = vmatprep.subr.bf16.mxu0 0
      %529 = vmatpush1.bf16.msra.mxu0 0
      %530 = vmatprep.subr.bf16.mxu0 0
      %531 = vmatpush1.bf16.msra.mxu0 0
      %532 = vmatprep.subr.bf16.mxu0 0
      %533 = vmatpush1.bf16.msra.mxu0 %v516
      %534 = vmatprep.subr.bf16.mxu0 0
      %535 = vmatpush2.bf16.msra.mxu0 0
      %536 = vmatprep.subr.bf16.mxu0 0
      %537 = vmatpush2.bf16.msra.mxu0 0
      %538 = vmatprep.subr.bf16.mxu0 0
      %539 = vmatpush2.bf16.msra.mxu0 0
      %540 = vmatprep.subr.bf16.mxu0 0
      %541 = vmatpush2.bf16.msra.mxu0 0
      %542 = vmatprep.subr.bf16.mxu0 0
      %543 = vmatpush2.bf16.msra.mxu0 0
      %544 = vmatprep.subr.bf16.mxu0 0
      %545 = vmatpush2.bf16.msra.mxu0 0
      %546 = vmatprep.subr.bf16.mxu0 0
      %547 = vmatpush2.bf16.msra.mxu0 0
      %548 = vmatprep.subr.bf16.mxu0 0
      %549 = vmatpush2.bf16.msra.mxu0 0
      %550 = vmatprep.mubr.bf16.mxu0 0
      %551 = vmatmul.mubr.bf16.gmra.mxu0 %v513
      %v552 = vpop.f32.mrf.mxu0
      %v553 = vadd.f32 0.0, %v552
      %v554 = vpop.f32.mrf.mxu0
      %v555 = vpop.f32.mrf.mxu0
      %v556 = vpop.f32.mrf.mxu0
      %557 = vdwg.mxu0
      %v558 = vpack.c.bf16 %v553, %v553
      %v559 = vld [vmem:[%s4 + $0x8] sm:$0xff]
      %v560 = vpack.c.bf16 %v559, %v559
      %v562 = vsel %vm334, %v558, 0
      %v565 = vsel %vm397, %v560, 0
      %567 = vmatprep.subr.bf16.mxu0 0
      %568 = vmatpush1.bf16.msra.mxu0 0
      %569 = vmatprep.subr.bf16.mxu0 0
      %570 = vmatpush1.bf16.msra.mxu0 0
      %571 = vmatprep.subr.bf16.mxu0 0
      %572 = vmatpush1.bf16.msra.mxu0 0
      %573 = vmatprep.subr.bf16.mxu0 0
      %574 = vmatpush1.bf16.msra.mxu0 0
      %575 = vmatprep.subr.bf16.mxu0 0
      %576 = vmatpush1.bf16.msra.mxu0 0
      %577 = vmatprep.subr.bf16.mxu0 0
      %578 = vmatpush1.bf16.msra.mxu0 0
      %579 = vmatprep.subr.bf16.mxu0 0
      %580 = vmatpush1.bf16.msra.mxu0 0
      %581 = vmatprep.subr.bf16.mxu0 0
      %582 = vmatpush1.bf16.msra.mxu0 %v565
      %583 = vmatprep.subr.bf16.mxu0 0
      %584 = vmatpush2.bf16.msra.mxu0 0
      %585 = vmatprep.subr.bf16.mxu0 0
      %586 = vmatpush2.bf16.msra.mxu0 0
      %587 = vmatprep.subr.bf16.mxu0 0
      %588 = vmatpush2.bf16.msra.mxu0 0
      %589 = vmatprep.subr.bf16.mxu0 0
      %590 = vmatpush2.bf16.msra.mxu0 0
      %591 = vmatprep.subr.bf16.mxu0 0
      %592 = vmatpush2.bf16.msra.mxu0 0
      %593 = vmatprep.subr.bf16.mxu0 0
      %594 = vmatpush2.bf16.msra.mxu0 0
      %595 = vmatprep.subr.bf16.mxu0 0
      %596 = vmatpush2.bf16.msra.mxu0 0
      %597 = vmatprep.subr.bf16.mxu0 0
      %598 = vmatpush2.bf16.msra.mxu0 0
      %599 = vmatprep.mubr.bf16.mxu0 0
      %600 = vmatmul.mubr.bf16.gmra.mxu0 %v562
      %v601 = vpop.f32.mrf.mxu0
      %v602 = vadd.f32 0.0, %v601
      %v603 = vpop.f32.mrf.mxu0
      %v604 = vpop.f32.mrf.mxu0
      %v605 = vpop.f32.mrf.mxu0
      %606 = vdwg.mxu0
      %v608 = vsel %vm334, %v441, 0
      %v611 = vsel %vm397, %v443, 0
      %613 = vmatprep.subr.bf16.mxu0 0
      %614 = vmatpush1.bf16.msra.mxu0 0
      %615 = vmatprep.subr.bf16.mxu0 0
      %616 = vmatpush1.bf16.msra.mxu0 0
      %617 = vmatprep.subr.bf16.mxu0 0
      %618 = vmatpush1.bf16.msra.mxu0 0
      %619 = vmatprep.subr.bf16.mxu0 0
      %620 = vmatpush1.bf16.msra.mxu0 0
      %621 = vmatprep.subr.bf16.mxu0 0
      %622 = vmatpush1.bf16.msra.mxu0 0
      %623 = vmatprep.subr.bf16.mxu0 0
      %624 = vmatpush1.bf16.msra.mxu0 0
      %625 = vmatprep.subr.bf16.mxu0 0
      %626 = vmatpush1.bf16.msra.mxu0 0
      %627 = vmatprep.subr.bf16.mxu0 0
      %628 = vmatpush1.bf16.msra.mxu0 %v611
      %629 = vmatprep.subr.bf16.mxu0 0
      %630 = vmatpush2.bf16.msra.mxu0 0
      %631 = vmatprep.subr.bf16.mxu0 0
      %632 = vmatpush2.bf16.msra.mxu0 0
      %633 = vmatprep.subr.bf16.mxu0 0
      %634 = vmatpush2.bf16.msra.mxu0 0
      %635 = vmatprep.subr.bf16.mxu0 0
      %636 = vmatpush2.bf16.msra.mxu0 0
      %637 = vmatprep.subr.bf16.mxu0 0
      %638 = vmatpush2.bf16.msra.mxu0 0
      %639 = vmatprep.subr.bf16.mxu0 0
      %640 = vmatpush2.bf16.msra.mxu0 0
      %641 = vmatprep.subr.bf16.mxu0 0
      %642 = vmatpush2.bf16.msra.mxu0 0
      %643 = vmatprep.subr.bf16.mxu0 0
      %644 = vmatpush2.bf16.msra.mxu0 0
      %645 = vmatprep.mubr.bf16.mxu0 0
      %646 = vmatmul.mubr.bf16.gmra.mxu0 %v608
      %v647 = vpop.f32.mrf.mxu0
      %v648 = vadd.f32 %v602, %v647
      %v649 = vpop.f32.mrf.mxu0
      %v650 = vpop.f32.mrf.mxu0
      %v651 = vpop.f32.mrf.mxu0
      %652 = vdwg.mxu0
      %653 = vrot.lane.b32.xlu0 %v331, 112
      %v654 = vpop.permute.xlu0 %653
      %655 = vrot.lane.b32.xlu0 %v332, 112
      %v656 = vpop.permute.xlu0 %655
      %v658 = vsel %vm334, %v654, 0
      %v661 = vsel %vm334, %v656, 0
      %663 = vmatprep.subr.bf16.mxu0 0
      %664 = vmatpush1.bf16.xpose.msra.mxu0 0
      %665 = vmatprep.subr.bf16.mxu0 0
      %666 = vmatpush1.bf16.xpose.msra.mxu0 0
      %667 = vmatprep.subr.bf16.mxu0 0
      %668 = vmatpush1.bf16.xpose.msra.mxu0 0
      %669 = vmatprep.subr.bf16.mxu0 0
      %670 = vmatpush1.bf16.xpose.msra.mxu0 0
      %671 = vmatprep.subr.bf16.mxu0 0
      %672 = vmatpush1.bf16.xpose.msra.mxu0 0
      %673 = vmatprep.subr.bf16.mxu0 0
      %674 = vmatpush1.bf16.xpose.msra.mxu0 0
      %675 = vmatprep.subr.bf16.mxu0 0
      %676 = vmatpush1.bf16.xpose.msra.mxu0 0
      %677 = vmatprep.subr.bf16.mxu0 0
      %678 = vmatpush1.bf16.xpose.msra.mxu0 %v661
      %679 = vmatprep.subr.bf16.mxu0 0
      %680 = vmatpush2.bf16.xpose.msra.mxu0 0
      %681 = vmatprep.subr.bf16.mxu0 0
      %682 = vmatpush2.bf16.xpose.msra.mxu0 0
      %683 = vmatprep.subr.bf16.mxu0 0
      %684 = vmatpush2.bf16.xpose.msra.mxu0 0
      %685 = vmatprep.subr.bf16.mxu0 0
      %686 = vmatpush2.bf16.xpose.msra.mxu0 0
      %687 = vmatprep.subr.bf16.mxu0 0
      %688 = vmatpush2.bf16.xpose.msra.mxu0 0
      %689 = vmatprep.subr.bf16.mxu0 0
      %690 = vmatpush2.bf16.xpose.msra.mxu0 0
      %691 = vmatprep.subr.bf16.mxu0 0
      %692 = vmatpush2.bf16.xpose.msra.mxu0 0
      %693 = vmatprep.subr.bf16.mxu0 0
      %694 = vmatpush2.bf16.xpose.msra.mxu0 0
      %695 = vmatprep.mubr.bf16.mxu0 0
      %696 = vmatmul.mubr.bf16.gmra.mxu0 %v658
      %v697 = vpop.f32.mrf.mxu0
      %v698 = vadd.f32 0.0, %v697
      %v699 = vpop.f32.mrf.mxu0
      %v700 = vpop.f32.mrf.mxu0
      %v701 = vpop.f32.mrf.mxu0
      %702 = vdwg.mxu0
      %v703 = vmul.f32 %v698, 0.35355338
      %v704 = vsel %vm334, %v703, -inf
      %705 = vmax.xlane.f32.xlu0 %v704
      %v706 = vpop.xlane.xlu0 %705
      %v707 = vsub.f32 %v703, %v706
      %v708 = vmul.f32 %v707, 1.442695
      %v709 = vpow.pop %v708
      %v710 = vsel %vm334, %v709, 0.0
      %711 = vadd.xlane.f32.xlu0 %v710
      %v712 = vpop.xlane.xlu0 %711
      %v713 = vrcp.pop %v712
      %v714 = vmul.f32 %v709, %v713
      %v715 = vpack.c.bf16 %v714, %v714
      %716 = vrot.lane.b32.xlu0 %v333, 112
      %v717 = vpop.permute.xlu0 %716
      %v719 = vsel %vm334, %v715, 0
      %v722 = vsel %vm397, %v717, 0
      %724 = vmatprep.subr.bf16.mxu0 0
      %725 = vmatpush1.bf16.msra.mxu0 0
      %726 = vmatprep.subr.bf16.mxu0 0
      %727 = vmatpush1.bf16.msra.mxu0 0
      %728 = vmatprep.subr.bf16.mxu0 0
      %729 = vmatpush1.bf16.msra.mxu0 0
      %730 = vmatprep.subr.bf16.mxu0 0
      %731 = vmatpush1.bf16.msra.mxu0 0
      %732 = vmatprep.subr.bf16.mxu0 0
      %733 = vmatpush1.bf16.msra.mxu0 0
      %734 = vmatprep.subr.bf16.mxu0 0
      %735 = vmatpush1.bf16.msra.mxu0 0
      %736 = vmatprep.subr.bf16.mxu0 0
      %737 = vmatpush1.bf16.msra.mxu0 0
      %738 = vmatprep.subr.bf16.mxu0 0
      %739 = vmatpush1.bf16.msra.mxu0 %v722
      %740 = vmatprep.subr.bf16.mxu0 0
      %741 = vmatpush2.bf16.msra.mxu0 0
      %742 = vmatprep.subr.bf16.mxu0 0
      %743 = vmatpush2.bf16.msra.mxu0 0
      %744 = vmatprep.subr.bf16.mxu0 0
      %745 = vmatpush2.bf16.msra.mxu0 0
      %746 = vmatprep.subr.bf16.mxu0 0
      %747 = vmatpush2.bf16.msra.mxu0 0
      %748 = vmatprep.subr.bf16.mxu0 0
      %749 = vmatpush2.bf16.msra.mxu0 0
      %750 = vmatprep.subr.bf16.mxu0 0
      %751 = vmatpush2.bf16.msra.mxu0 0
      %752 = vmatprep.subr.bf16.mxu0 0
      %753 = vmatpush2.bf16.msra.mxu0 0
      %754 = vmatprep.subr.bf16.mxu0 0
      %755 = vmatpush2.bf16.msra.mxu0 0
      %756 = vmatprep.mubr.bf16.mxu0 0
      %757 = vmatmul.mubr.bf16.gmra.mxu0 %v719
      %v758 = vpop.f32.mrf.mxu0
      %v759 = vadd.f32 0.0, %v758
      %v760 = vpop.f32.mrf.mxu0
      %v761 = vpop.f32.mrf.mxu0
      %v762 = vpop.f32.mrf.mxu0
      %763 = vdwg.mxu0
      %v764 = vpack.c.bf16 %v759, %v759
      %v765 = vld [vmem:[%s4 + $0x10] sm:$0xff]
      %v766 = vpack.c.bf16 %v765, %v765
      %v768 = vsel %vm334, %v764, 0
      %v771 = vsel %vm397, %v766, 0
      %773 = vmatprep.subr.bf16.mxu0 0
      %774 = vmatpush1.bf16.msra.mxu0 0
      %775 = vmatprep.subr.bf16.mxu0 0
      %776 = vmatpush1.bf16.msra.mxu0 0
      %777 = vmatprep.subr.bf16.mxu0 0
      %778 = vmatpush1.bf16.msra.mxu0 0
      %779 = vmatprep.subr.bf16.mxu0 0
      %780 = vmatpush1.bf16.msra.mxu0 0
      %781 = vmatprep.subr.bf16.mxu0 0
      %782 = vmatpush1.bf16.msra.mxu0 0
      %783 = vmatprep.subr.bf16.mxu0 0
      %784 = vmatpush1.bf16.msra.mxu0 0
      %785 = vmatprep.subr.bf16.mxu0 0
      %786 = vmatpush1.bf16.msra.mxu0 0
      %787 = vmatprep.subr.bf16.mxu0 0
      %788 = vmatpush1.bf16.msra.mxu0 %v771
      %789 = vmatprep.subr.bf16.mxu0 0
      %790 = vmatpush2.bf16.msra.mxu0 0
      %791 = vmatprep.subr.bf16.mxu0 0
      %792 = vmatpush2.bf16.msra.mxu0 0
      %793 = vmatprep.subr.bf16.mxu0 0
      %794 = vmatpush2.bf16.msra.mxu0 0
      %795 = vmatprep.subr.bf16.mxu0 0
      %796 = vmatpush2.bf16.msra.mxu0 0
      %797 = vmatprep.subr.bf16.mxu0 0
      %798 = vmatpush2.bf16.msra.mxu0 0
      %799 = vmatprep.subr.bf16.mxu0 0
      %800 = vmatpush2.bf16.msra.mxu0 0
      %801 = vmatprep.subr.bf16.mxu0 0
      %802 = vmatpush2.bf16.msra.mxu0 0
      %803 = vmatprep.subr.bf16.mxu0 0
      %804 = vmatpush2.bf16.msra.mxu0 0
      %805 = vmatprep.mubr.bf16.mxu0 0
      %806 = vmatmul.mubr.bf16.gmra.mxu0 %v768
      %v807 = vpop.f32.mrf.mxu0
      %v808 = vadd.f32 0.0, %v807
      %v809 = vpop.f32.mrf.mxu0
      %v810 = vpop.f32.mrf.mxu0
      %v811 = vpop.f32.mrf.mxu0
      %812 = vdwg.mxu0
      %v813 = vadd.f32 %v648, %v808
      %814 = vrot.lane.b32.xlu0 %v331, 104
      %v815 = vpop.permute.xlu0 %814
      %816 = vrot.lane.b32.xlu0 %v332, 104
      %v817 = vpop.permute.xlu0 %816
      %v819 = vsel %vm334, %v815, 0
      %v822 = vsel %vm334, %v817, 0
      %824 = vmatprep.subr.bf16.mxu0 0
      %825 = vmatpush1.bf16.xpose.msra.mxu0 0
      %826 = vmatprep.subr.bf16.mxu0 0
      %827 = vmatpush1.bf16.xpose.msra.mxu0 0
      %828 = vmatprep.subr.bf16.mxu0 0
      %829 = vmatpush1.bf16.xpose.msra.mxu0 0
      %830 = vmatprep.subr.bf16.mxu0 0
      %831 = vmatpush1.bf16.xpose.msra.mxu0 0
      %832 = vmatprep.subr.bf16.mxu0 0
      %833 = vmatpush1.bf16.xpose.msra.mxu0 0
      %834 = vmatprep.subr.bf16.mxu0 0
      %835 = vmatpush1.bf16.xpose.msra.mxu0 0
      %836 = vmatprep.subr.bf16.mxu0 0
      %837 = vmatpush1.bf16.xpose.msra.mxu0 0
      %838 = vmatprep.subr.bf16.mxu0 0
      %839 = vmatpush1.bf16.xpose.msra.mxu0 %v822
      %840 = vmatprep.subr.bf16.mxu0 0
      %841 = vmatpush2.bf16.xpose.msra.mxu0 0
      %842 = vmatprep.subr.bf16.mxu0 0
      %843 = vmatpush2.bf16.xpose.msra.mxu0 0
      %844 = vmatprep.subr.bf16.mxu0 0
      %845 = vmatpush2.bf16.xpose.msra.mxu0 0
      %846 = vmatprep.subr.bf16.mxu0 0
      %847 = vmatpush2.bf16.xpose.msra.mxu0 0
      %848 = vmatprep.subr.bf16.mxu0 0
      %849 = vmatpush2.bf16.xpose.msra.mxu0 0
      %850 = vmatprep.subr.bf16.mxu0 0
      %851 = vmatpush2.bf16.xpose.msra.mxu0 0
      %852 = vmatprep.subr.bf16.mxu0 0
      %853 = vmatpush2.bf16.xpose.msra.mxu0 0
      %854 = vmatprep.subr.bf16.mxu0 0
      %855 = vmatpush2.bf16.xpose.msra.mxu0 0
      %856 = vmatprep.mubr.bf16.mxu0 0
      %857 = vmatmul.mubr.bf16.gmra.mxu0 %v819
      %v858 = vpop.f32.mrf.mxu0
      %v859 = vadd.f32 0.0, %v858
      %v860 = vpop.f32.mrf.mxu0
      %v861 = vpop.f32.mrf.mxu0
      %v862 = vpop.f32.mrf.mxu0
      %863 = vdwg.mxu0
      %v864 = vmul.f32 %v859, 0.35355338
      %v865 = vsel %vm334, %v864, -inf
      %866 = vmax.xlane.f32.xlu0 %v865
      %v867 = vpop.xlane.xlu0 %866
      %v868 = vsub.f32 %v864, %v867
      %v869 = vmul.f32 %v868, 1.442695
      %v870 = vpow.pop %v869
      %v871 = vsel %vm334, %v870, 0.0
      %872 = vadd.xlane.f32.xlu0 %v871
      %v873 = vpop.xlane.xlu0 %872
      %v874 = vrcp.pop %v873
      %v875 = vmul.f32 %v870, %v874
      %v876 = vpack.c.bf16 %v875, %v875
      %877 = vrot.lane.b32.xlu0 %v333, 104
      %v878 = vpop.permute.xlu0 %877
      %v880 = vsel %vm334, %v876, 0
      %v883 = vsel %vm397, %v878, 0
      %885 = vmatprep.subr.bf16.mxu0 0
      %886 = vmatpush1.bf16.msra.mxu0 0
      %887 = vmatprep.subr.bf16.mxu0 0
      %888 = vmatpush1.bf16.msra.mxu0 0
      %889 = vmatprep.subr.bf16.mxu0 0
      %890 = vmatpush1.bf16.msra.mxu0 0
      %891 = vmatprep.subr.bf16.mxu0 0
      %892 = vmatpush1.bf16.msra.mxu0 0
      %893 = vmatprep.subr.bf16.mxu0 0
      %894 = vmatpush1.bf16.msra.mxu0 0
      %895 = vmatprep.subr.bf16.mxu0 0
      %896 = vmatpush1.bf16.msra.mxu0 0
      %897 = vmatprep.subr.bf16.mxu0 0
      %898 = vmatpush1.bf16.msra.mxu0 0
      %899 = vmatprep.subr.bf16.mxu0 0
      %900 = vmatpush1.bf16.msra.mxu0 %v883
      %901 = vmatprep.subr.bf16.mxu0 0
      %902 = vmatpush2.bf16.msra.mxu0 0
      %903 = vmatprep.subr.bf16.mxu0 0
      %904 = vmatpush2.bf16.msra.mxu0 0
      %905 = vmatprep.subr.bf16.mxu0 0
      %906 = vmatpush2.bf16.msra.mxu0 0
      %907 = vmatprep.subr.bf16.mxu0 0
      %908 = vmatpush2.bf16.msra.mxu0 0
      %909 = vmatprep.subr.bf16.mxu0 0
      %910 = vmatpush2.bf16.msra.mxu0 0
      %911 = vmatprep.subr.bf16.mxu0 0
      %912 = vmatpush2.bf16.msra.mxu0 0
      %913 = vmatprep.subr.bf16.mxu0 0
      %914 = vmatpush2.bf16.msra.mxu0 0
      %915 = vmatprep.subr.bf16.mxu0 0
      %916 = vmatpush2.bf16.msra.mxu0 0
      %917 = vmatprep.mubr.bf16.mxu0 0
      %918 = vmatmul.mubr.bf16.gmra.mxu0 %v880
      %v919 = vpop.f32.mrf.mxu0
      %v920 = vadd.f32 0.0, %v919
      %v921 = vpop.f32.mrf.mxu0
      %v922 = vpop.f32.mrf.mxu0
      %v923 = vpop.f32.mrf.mxu0
      %924 = vdwg.mxu0
      %v925 = vpack.c.bf16 %v920, %v920
      %v926 = vld [vmem:[%s4 + $0x18] sm:$0xff]
      %v927 = vpack.c.bf16 %v926, %v926
      %v929 = vsel %vm334, %v925, 0
      %v932 = vsel %vm397, %v927, 0
      %934 = vmatprep.subr.bf16.mxu0 0
      %935 = vmatpush1.bf16.msra.mxu0 0
      %936 = vmatprep.subr.bf16.mxu0 0
      %937 = vmatpush1.bf16.msra.mxu0 0
      %938 = vmatprep.subr.bf16.mxu0 0
      %939 = vmatpush1.bf16.msra.mxu0 0
      %940 = vmatprep.subr.bf16.mxu0 0
      %941 = vmatpush1.bf16.msra.mxu0 0
      %942 = vmatprep.subr.bf16.mxu0 0
      %943 = vmatpush1.bf16.msra.mxu0 0
      %944 = vmatprep.subr.bf16.mxu0 0
      %945 = vmatpush1.bf16.msra.mxu0 0
      %946 = vmatprep.subr.bf16.mxu0 0
      %947 = vmatpush1.bf16.msra.mxu0 0
      %948 = vmatprep.subr.bf16.mxu0 0
      %949 = vmatpush1.bf16.msra.mxu0 %v932
      %950 = vmatprep.subr.bf16.mxu0 0
      %951 = vmatpush2.bf16.msra.mxu0 0
      %952 = vmatprep.subr.bf16.mxu0 0
      %953 = vmatpush2.bf16.msra.mxu0 0
      %954 = vmatprep.subr.bf16.mxu0 0
      %955 = vmatpush2.bf16.msra.mxu0 0
      %956 = vmatprep.subr.bf16.mxu0 0
      %957 = vmatpush2.bf16.msra.mxu0 0
      %958 = vmatprep.subr.bf16.mxu0 0
      %959 = vmatpush2.bf16.msra.mxu0 0
      %960 = vmatprep.subr.bf16.mxu0 0
      %961 = vmatpush2.bf16.msra.mxu0 0
      %962 = vmatprep.subr.bf16.mxu0 0
      %963 = vmatpush2.bf16.msra.mxu0 0
      %964 = vmatprep.subr.bf16.mxu0 0
      %965 = vmatpush2.bf16.msra.mxu0 0
      %966 = vmatprep.mubr.bf16.mxu0 0
      %967 = vmatmul.mubr.bf16.gmra.mxu0 %v929
      %v968 = vpop.f32.mrf.mxu0
      %v969 = vadd.f32 0.0, %v968
      %v970 = vpop.f32.mrf.mxu0
      %v971 = vpop.f32.mrf.mxu0
      %v972 = vpop.f32.mrf.mxu0
      %973 = vdwg.mxu0
      %v974 = vadd.f32 %v813, %v969
      %v975 = vld [vmem:[%s5] sm:$0x1]
      %v977 = vlaneseq
      %v978 = vshrl.u32 %v977, 7
      %v979 = vsub.s32 0, %v978
      %v980 = vrot.slane %v975, %v979
      %v982 = vadd.f32 %v974, %v980
      %v983 = vld [vmem:[#allocation2] sm:$0x1]
      %v985 = vlaneseq
      %v986 = vshrl.u32 %v985, 7
      %v987 = vsub.s32 0, %v986
      %v988 = vrot.slane %v983, %v987
      %989 = vset.pattern.permute.xlu0 0
      %990 = vperm.xlu0 %989, %v988
      %v991 = vpop.permute.xlu0 %990
      %v993 = vmul.f32 %v991, %v982
      %v994 = vld [vmem:[%s322] sm:$0xff]
      %v995 = vadd.f32 %v994, %v993
      %vm996 = vcmask 261120
      %997 = vst.msk [vmem:[%s326] sm:$0xff] %vm996, %v995
      %p998 = scmp.lt.s32.totalorder %s20, 1
      %s999 = scalar_select %p998, %s20, 1
      %s1000 = smul.addr %s999, 8
      %s1001 = scalar_lea.vmem %s7, %s1000
      // Predicated region
      $region49: #{cross_pika_attention_layer.29} parent=47 // pred_check
        %p1002 = pneg %p205
      $region50: #{cross_pika_attention_layer.29} parent=47 // pred_check_branch
        %1004 = sbr.rel (%p1002) target = $region52
      $region51: #{cross_pika_attention_layer.29} parent=47 // pred_region
        _
      $region52: #{cross_pika_attention_layer.29} parent=47 // pred_fallthru
        _
    $region48: #{cross_pika_attention_layer.29} parent=5 // pred_fallthru
      _
    %p1005 = scmp.le.s32.totalorder 2, %s15
    // Predicated region
    $region53: #{cross_pika_attention_layer.29} parent=5 // pred_check
      %p1006 = pneg %p1005
    $region54: #{cross_pika_attention_layer.29} parent=5 // pred_check_branch
      %1008 = sbr.rel (%p1006) target = $region56
    $region55: #{cross_pika_attention_layer.29} parent=5 // pred_region
      %s1009 = ssub.s32 %s15, 2
      // Predicated region
      $region57: #{cross_pika_attention_layer.29} parent=55 // pred_check
        %p1010 = pneg %p211
      $region58: #{cross_pika_attention_layer.29} parent=55 // pred_check_branch
        %1012 = sbr.rel (%p1010) target = $region60
      $region59: #{cross_pika_attention_layer.29} parent=55 // pred_region
        %p1013 = scmp.lt.s32.totalorder %s21, 1
        %s1014 = scalar_select %p1013, %s21, 1
        %s1015 = smul.addr %s1014, 8
        %s1016 = scalar_lea.vmem %s7, %s1015
      $region60: #{cross_pika_attention_layer.29} parent=55 // pred_fallthru
        _
    $region56: #{cross_pika_attention_layer.29} parent=5 // pred_fallthru
      _
  $region6: #{cross_pika_attention_layer.29} parent=0 // loop_footer
    %s19 = sadd.s32 1, %s15
  $region7: #{cross_pika_attention_layer.29} parent=0 // loop_footer_branch
    %14 = sbr.rel target = $region3
  $region8: #{cross_pika_attention_layer.29} parent=0 // loop_exit
    _

// kernel: cross_pika_attention_layer.32
$region0: #{cross_pika_attention_layer.32}
  #allocation0 [shape = 'u32[]', space=smem, size = 0x4, offset = 0x4, fixed_abs, tag = 'smem constant byte address 0x4 - core index']
  #allocation1 [shape = 'u32[144,128]{1,0:T(1,128)}', space=vmem, size = 0x12000, scoped, tag = 'internal scratch']
  %s0 = inlined_call_operand.vmem [shape: f32[2,8,32], index: 0, kind: input, shape index: {}]
  %s1 = inlined_call_operand.vmem [shape: f32[2,8,32], index: 1, kind: input, shape index: {}]
  %s2 = inlined_call_operand.vmem [shape: f32[2,8,32], index: 2, kind: input, shape index: {}]
  %s3 = inlined_call_operand.vmem [shape: f32[2,8,32], index: 3, kind: input, shape index: {}]
  %s4 = inlined_call_operand.vmem [shape: f32[32,32], index: 4, kind: input, shape index: {}]
  %s5 = inlined_call_operand.vmem [shape: f32[1,32], index: 5, kind: input, shape index: {}]
  %s6 = inlined_call_operand.vmem [shape: f32[2,1,8], index: 6, kind: input, shape index: {}]
  %s7 = inlined_call_operand.vmem [shape: f32[2,8,32], index: 7, kind: output, shape index: {}]
  %s8 = sld [smem:[#allocation0]]
  $region61: #{cross_pika_attention_layer.32} parent=0
    _
  %s10 = ssub.s32 1, %s8
  %s11 = scalar_select 0, %s10, %s8
  loop: start=0, step=1, limit=4
  $region2: #{cross_pika_attention_layer.32} parent=0 // loop_pre_header
    _
  $region3: #{cross_pika_attention_layer.32} parent=0 // loop_header
    %s13 = sphi 0, %s17
    %p14 = scmp.ge.s32.totalorder %s13, 4
    %s23 = sphi 0, %s25
    %s26 = sphi 0, %s23
    %s27 = sphi 0, %s26
    %s43 = sphi 0, %s27
    %s49 = sphi 0, %s51
    %s52 = sphi 0, %s49
    %s53 = sphi 0, %s52
    %s69 = sphi 0, %s53
    %s75 = sphi 0, %s77
    %s78 = sphi 0, %s75
    %s79 = sphi 0, %s78
    %s95 = sphi 0, %s79
    %s101 = sphi 0, %s103
    %s104 = sphi 0, %s101
    %s105 = sphi 0, %s104
    %s121 = sphi 0, %s105
    %s125 = sphi 0, %s125
    %s127 = sphi 0, %s125
    %s128 = sphi 0, %s127
    %s142 = sphi 0, %s128
    %s146 = sphi 0, %s146
    %s148 = sphi 0, %s146
    %s149 = sphi 0, %s148
    %s163 = sphi 0, %s149
    %s169 = sphi 0, %s171
    %s172 = sphi 0, %s169
    %s173 = sphi 0, %s172
    %s189 = sphi 0, %s173
    %s195 = sphi 0, %s197
    %s198 = sphi 0, %s195
    %s199 = sphi 0, %s198
    %s215 = sphi 0, %s199
  $region4: #{cross_pika_attention_layer.32} parent=0 // loop_header_branch
    %16 = sbr.rel (%p14) target = $region8
  $region5: #{cross_pika_attention_layer.32} parent=0 // loop_body
    %s18 = ssub.s32 %s13, 1
    %s19 = ssub.s32 %s13, 2
    %s20 = sadd.s32 %s13, 1
    %s21 = ssub.s32 %s13, %s20
    %p22 = scmp.eq.s32.totalorder %s21, 0
    %s24 = sadd.s32 %s23, 1
    %s25 = scalar_select %p22, %s23, %s24
    %p28 = pneg %p22
    %p29 = scmp.eq.s32.totalorder %s13, 1
    %p30 = por %p28, %p29
    %p31 = scmp.ne.s32.totalorder %s23, %s26
    %p32 = scmp.eq.s32.totalorder %s13, 0
    %p33 = por %p31, %p32
    %p34 = scmp.ne.s32.totalorder %s23, %s26
    %p35 = scmp.eq.s32.totalorder %s18, 1
    %p36 = por %p34, %p35
    %p37 = scmp.ne.s32.totalorder %s26, %s27
    %p38 = scmp.eq.s32.totalorder %s18, 0
    %p39 = por %p37, %p38
    %p40 = scmp.ne.s32.totalorder %s26, %s27
    %p41 = scmp.eq.s32.totalorder %s19, 1
    %p42 = por %p40, %p41
    %p44 = scmp.ne.s32.totalorder %s27, %s43
    %p45 = scmp.eq.s32.totalorder %s19, 0
    %p46 = por %p44, %p45
    %s47 = ssub.s32 %s13, %s20
    %p48 = scmp.eq.s32.totalorder %s47, 0
    %s50 = sadd.s32 %s49, 1
    %s51 = scalar_select %p48, %s49, %s50
    %p54 = pneg %p48
    %p55 = scmp.eq.s32.totalorder %s13, 1
    %p56 = por %p54, %p55
    %p57 = scmp.ne.s32.totalorder %s49, %s52
    %p58 = scmp.eq.s32.totalorder %s13, 0
    %p59 = por %p57, %p58
    %p60 = scmp.ne.s32.totalorder %s49, %s52
    %p61 = scmp.eq.s32.totalorder %s18, 1
    %p62 = por %p60, %p61
    %p63 = scmp.ne.s32.totalorder %s52, %s53
    %p64 = scmp.eq.s32.totalorder %s18, 0
    %p65 = por %p63, %p64
    %p66 = scmp.ne.s32.totalorder %s52, %s53
    %p67 = scmp.eq.s32.totalorder %s19, 1
    %p68 = por %p66, %p67
    %p70 = scmp.ne.s32.totalorder %s53, %s69
    %p71 = scmp.eq.s32.totalorder %s19, 0
    %p72 = por %p70, %p71
    %s73 = ssub.s32 %s13, %s20
    %p74 = scmp.eq.s32.totalorder %s73, 0
    %s76 = sadd.s32 %s75, 1
    %s77 = scalar_select %p74, %s75, %s76
    %p80 = pneg %p74
    %p81 = scmp.eq.s32.totalorder %s13, 1
    %p82 = por %p80, %p81
    %p83 = scmp.ne.s32.totalorder %s75, %s78
    %p84 = scmp.eq.s32.totalorder %s13, 0
    %p85 = por %p83, %p84
    %p86 = scmp.ne.s32.totalorder %s75, %s78
    %p87 = scmp.eq.s32.totalorder %s18, 1
    %p88 = por %p86, %p87
    %p89 = scmp.ne.s32.totalorder %s78, %s79
    %p90 = scmp.eq.s32.totalorder %s18, 0
    %p91 = por %p89, %p90
    %p92 = scmp.ne.s32.totalorder %s78, %s79
    %p93 = scmp.eq.s32.totalorder %s19, 1
    %p94 = por %p92, %p93
    %p96 = scmp.ne.s32.totalorder %s79, %s95
    %p97 = scmp.eq.s32.totalorder %s19, 0
    %p98 = por %p96, %p97
    %s99 = ssub.s32 %s13, %s20
    %p100 = scmp.eq.s32.totalorder %s99, 0
    %s102 = sadd.s32 %s101, 1
    %s103 = scalar_select %p100, %s101, %s102
    %p106 = pneg %p100
    %p107 = scmp.eq.s32.totalorder %s13, 1
    %p108 = por %p106, %p107
    %p109 = scmp.ne.s32.totalorder %s101, %s104
    %p110 = scmp.eq.s32.totalorder %s13, 0
    %p111 = por %p109, %p110
    %p112 = scmp.ne.s32.totalorder %s101, %s104
    %p113 = scmp.eq.s32.totalorder %s18, 1
    %p114 = por %p112, %p113
    %p115 = scmp.ne.s32.totalorder %s104, %s105
    %p116 = scmp.eq.s32.totalorder %s18, 0
    %p117 = por %p115, %p116
    %p118 = scmp.ne.s32.totalorder %s104, %s105
    %p119 = scmp.eq.s32.totalorder %s19, 1
    %p120 = por %p118, %p119
    %p122 = scmp.ne.s32.totalorder %s105, %s121
    %p123 = scmp.eq.s32.totalorder %s19, 0
    %p124 = por %p122, %p123
    %s126 = sadd.s32 %s125, 1
    %p129 = scmp.eq.s32.totalorder %s13, 1
    %p130 = scmp.ne.s32.totalorder %s125, %s127
    %p131 = scmp.eq.s32.totalorder %s13, 0
    %p132 = por %p130, %p131
    %p133 = scmp.ne.s32.totalorder %s125, %s127
    %p134 = scmp.eq.s32.totalorder %s18, 1
    %p135 = por %p133, %p134
    %p136 = scmp.ne.s32.totalorder %s127, %s128
    %p137 = scmp.eq.s32.totalorder %s18, 0
    %p138 = por %p136, %p137
    %p139 = scmp.ne.s32.totalorder %s127, %s128
    %p140 = scmp.eq.s32.totalorder %s19, 1
    %p141 = por %p139, %p140
    %p143 = scmp.ne.s32.totalorder %s128, %s142
    %p144 = scmp.eq.s32.totalorder %s19, 0
    %p145 = por %p143, %p144
    %s147 = sadd.s32 %s146, 1
    %p150 = scmp.eq.s32.totalorder %s13, 1
    %p151 = scmp.ne.s32.totalorder %s146, %s148
    %p152 = scmp.eq.s32.totalorder %s13, 0
    %p153 = por %p151, %p152
    %p154 = scmp.ne.s32.totalorder %s146, %s148
    %p155 = scmp.eq.s32.totalorder %s18, 1
    %p156 = por %p154, %p155
    %p157 = scmp.ne.s32.totalorder %s148, %s149
    %p158 = scmp.eq.s32.totalorder %s18, 0
    %p159 = por %p157, %p158
    %p160 = scmp.ne.s32.totalorder %s148, %s149
    %p161 = scmp.eq.s32.totalorder %s19, 1
    %p162 = por %p160, %p161
    %p164 = scmp.ne.s32.totalorder %s149, %s163
    %p165 = scmp.eq.s32.totalorder %s19, 0
    %p166 = por %p164, %p165
    %s167 = ssub.s32 %s13, %s20
    %p168 = scmp.eq.s32.totalorder %s167, 0
    %s170 = sadd.s32 %s169, 1
    %s171 = scalar_select %p168, %s169, %s170
    %p174 = pneg %p168
    %p175 = scmp.eq.s32.totalorder %s13, 1
    %p176 = por %p174, %p175
    %p177 = scmp.ne.s32.totalorder %s169, %s172
    %p178 = scmp.eq.s32.totalorder %s13, 0
    %p179 = por %p177, %p178
    %p180 = scmp.ne.s32.totalorder %s169, %s172
    %p181 = scmp.eq.s32.totalorder %s18, 1
    %p182 = por %p180, %p181
    %p183 = scmp.ne.s32.totalorder %s172, %s173
    %p184 = scmp.eq.s32.totalorder %s18, 0
    %p185 = por %p183, %p184
    %p186 = scmp.ne.s32.totalorder %s172, %s173
    %p187 = scmp.eq.s32.totalorder %s19, 1
    %p188 = por %p186, %p187
    %p190 = scmp.ne.s32.totalorder %s173, %s189
    %p191 = scmp.eq.s32.totalorder %s19, 0
    %p192 = por %p190, %p191
    %s193 = ssub.s32 %s13, %s20
    %p194 = scmp.eq.s32.totalorder %s193, 0
    %s196 = sadd.s32 %s195, 1
    %s197 = scalar_select %p194, %s195, %s196
    %p200 = pneg %p194
    %p201 = scmp.eq.s32.totalorder %s13, 1
    %p202 = por %p200, %p201
    %p203 = scmp.ne.s32.totalorder %s195, %s198
    %p204 = scmp.eq.s32.totalorder %s13, 0
    %p205 = por %p203, %p204
    %p206 = scmp.ne.s32.totalorder %s195, %s198
    %p207 = scmp.eq.s32.totalorder %s18, 1
    %p208 = por %p206, %p207
    %p209 = scmp.ne.s32.totalorder %s198, %s199
    %p210 = scmp.eq.s32.totalorder %s18, 0
    %p211 = por %p209, %p210
    %p212 = scmp.ne.s32.totalorder %s198, %s199
    %p213 = scmp.eq.s32.totalorder %s19, 1
    %p214 = por %p212, %p213
    %p216 = scmp.ne.s32.totalorder %s199, %s215
    %p217 = scmp.eq.s32.totalorder %s19, 0
    %p218 = por %p216, %p217
    %p219 = scmp.le.s32.totalorder 1, %s13
    %p220 = scmp.lt.s32.totalorder %s13, 3
    %p221 = pnand %p219, %p220
    %p222 = pneg %p221
    // Predicated region
    $region9: #{cross_pika_attention_layer.32} parent=5 // pred_check
      _
    $region10: #{cross_pika_attention_layer.32} parent=5 // pred_check_branch
      %224 = sbr.rel (%p221) target = $region12
    $region11: #{cross_pika_attention_layer.32} parent=5 // pred_region
      %s225 = ssub.s32 %s13, 1
      // Predicated region
      $region13: #{cross_pika_attention_layer.32} parent=11 // pred_check
        %p226 = pneg %p138
      $region14: #{cross_pika_attention_layer.32} parent=11 // pred_check_branch
        %228 = sbr.rel (%p226) target = $region16
      $region15: #{cross_pika_attention_layer.32} parent=11 // pred_region
        _
      $region16: #{cross_pika_attention_layer.32} parent=11 // pred_fallthru
        _
      // Predicated region
      $region17: #{cross_pika_attention_layer.32} parent=11 // pred_check
        %p229 = pneg %p159
      $region18: #{cross_pika_attention_layer.32} parent=11 // pred_check_branch
        %231 = sbr.rel (%p229) target = $region20
      $region19: #{cross_pika_attention_layer.32} parent=11 // pred_region
        _
      $region20: #{cross_pika_attention_layer.32} parent=11 // pred_fallthru
        _
    $region12: #{cross_pika_attention_layer.32} parent=5 // pred_fallthru
      _
    %p232 = scmp.lt.s32.totalorder %s13, 2
    // Predicated region
    $region21: #{cross_pika_attention_layer.32} parent=5 // pred_check
      %p233 = pneg %p232
    $region22: #{cross_pika_attention_layer.32} parent=5 // pred_check_branch
      %235 = sbr.rel (%p233) target = $region24
    $region23: #{cross_pika_attention_layer.32} parent=5 // pred_region
      // Predicated region
      $region25: #{cross_pika_attention_layer.32} parent=23 // pred_check
        %p236 = pneg %p33
      $region26: #{cross_pika_attention_layer.32} parent=23 // pred_check_branch
        %238 = sbr.rel (%p236) target = $region28
      $region27: #{cross_pika_attention_layer.32} parent=23 // pred_region
        %p239 = scmp.lt.s32.totalorder %s13, 1
        %s240 = scalar_select %p239, %s13, 1
        %s241 = smul.addr %s240, 8
        %s242 = scalar_lea.vmem %s0, %s241
      $region28: #{cross_pika_attention_layer.32} parent=23 // pred_fallthru
        _
      // Predicated region
      $region29: #{cross_pika_attention_layer.32} parent=23 // pred_check
        %p243 = pneg %p59
      $region30: #{cross_pika_attention_layer.32} parent=23 // pred_check_branch
        %245 = sbr.rel (%p243) target = $region32
      $region31: #{cross_pika_attention_layer.32} parent=23 // pred_region
        %p246 = scmp.lt.s32.totalorder %s13, 1
        %s247 = scalar_select %p246, %s13, 1
        %s248 = smul.addr %s247, 8
        %s249 = scalar_lea.vmem %s1, %s248
      $region32: #{cross_pika_attention_layer.32} parent=23 // pred_fallthru
        _
      // Predicated region
      $region33: #{cross_pika_attention_layer.32} parent=23 // pred_check
        %p250 = pneg %p85
      $region34: #{cross_pika_attention_layer.32} parent=23 // pred_check_branch
        %252 = sbr.rel (%p250) target = $region36
      $region35: #{cross_pika_attention_layer.32} parent=23 // pred_region
        %p253 = scmp.lt.s32.totalorder %s13, 1
        %s254 = scalar_select %p253, %s13, 1
        %s255 = smul.addr %s254, 8
        %s256 = scalar_lea.vmem %s2, %s255
      $region36: #{cross_pika_attention_layer.32} parent=23 // pred_fallthru
        _
      // Predicated region
      $region37: #{cross_pika_attention_layer.32} parent=23 // pred_check
        %p257 = pneg %p111
      $region38: #{cross_pika_attention_layer.32} parent=23 // pred_check_branch
        %259 = sbr.rel (%p257) target = $region40
      $region39: #{cross_pika_attention_layer.32} parent=23 // pred_region
        %p260 = scmp.lt.s32.totalorder %s13, 1
        %s261 = scalar_select %p260, %s13, 1
        %s262 = smul.addr %s261, 8
        %s263 = scalar_lea.vmem %s3, %s262
      $region40: #{cross_pika_attention_layer.32} parent=23 // pred_fallthru
        _
      // Predicated region
      $region41: #{cross_pika_attention_layer.32} parent=23 // pred_check
        %p264 = pneg %p179
      $region42: #{cross_pika_attention_layer.32} parent=23 // pred_check_branch
        %266 = sbr.rel (%p264) target = $region44
      $region43: #{cross_pika_attention_layer.32} parent=23 // pred_region
        %p267 = scmp.lt.s32.totalorder %s13, 1
        %s268 = scalar_select %p267, %s13, 1
        %s269 = scalar_lea.vmem %s6, %s268
      $region44: #{cross_pika_attention_layer.32} parent=23 // pred_fallthru
        _
    $region24: #{cross_pika_attention_layer.32} parent=5 // pred_fallthru
      _
    %p270 = scmp.le.s32.totalorder 1, %s13
    %p271 = scmp.lt.s32.totalorder %s13, 3
    %p272 = pnand %p270, %p271
    %p273 = pneg %p272
    // Predicated region
    $region45: #{cross_pika_attention_layer.32} parent=5 // pred_check
      _
    $region46: #{cross_pika_attention_layer.32} parent=5 // pred_check_branch
      %275 = sbr.rel (%p272) target = $region48
    $region47: #{cross_pika_attention_layer.32} parent=5 // pred_region
      %s276 = ssub.s32 %s13, 1
      %p277 = scmp.lt.s32.totalorder %s18, 1
      %s278 = scalar_select %p277, %s18, 1
      %s279 = smul.addr %s278, 8
      %s280 = scalar_lea.vmem %s0, %s279
      %p281 = pneg %p39
      %p282 = pneg %p36
      %p283 = scmp.lt.s32.totalorder %s18, 1
      %s284 = scalar_select %p283, %s18, 1
      %s285 = smul.addr %s284, 8
      %s286 = scalar_lea.vmem %s1, %s285
      %p287 = pneg %p65
      %p288 = pneg %p62
      %p289 = scmp.lt.s32.totalorder %s18, 1
      %s290 = scalar_select %p289, %s18, 1
      %s291 = smul.addr %s290, 8
      %s292 = scalar_lea.vmem %s2, %s291
      %p293 = pneg %p91
      %p294 = pneg %p88
      %p295 = scmp.lt.s32.totalorder %s18, 1
      %s296 = scalar_select %p295, %s18, 1
      %s297 = smul.addr %s296, 8
      %s298 = scalar_lea.vmem %s3, %s297
      %p299 = pneg %p117
      %p300 = pneg %p114
      %p301 = pneg %p138
      %p302 = pneg %p135
      %p303 = pneg %p159
      %p304 = pneg %p156
      %p305 = scmp.lt.s32.totalorder %s18, 1
      %s306 = scalar_select %p305, %s18, 1
      %s307 = scalar_lea.vmem %s6, %s306
      %p308 = pneg %p185
      %p309 = pneg %p182
      %p310 = pneg %p211
      %p311 = pneg %p208
      %p312 = scmp.lt.s32.totalorder %s18, 1
      %s313 = scalar_select %p312, %s18, 1
      %s314 = smul.addr %s313, 8
      %s315 = scalar_lea.vmem %s7, %s314
      %p316 = scmp.lt.s32.totalorder %s18, 1
      %s317 = scalar_select %p316, %s18, 1
      %s318 = smul.addr %s317, 8
      %s319 = scalar_lea.vmem %s0, %s318
      %p320 = scmp.lt.s32.totalorder %s18, 1
      %s321 = scalar_select %p320, %s18, 1
      %s322 = smul.addr %s321, 8
      %s323 = scalar_lea.vmem %s1, %s322
      %p324 = scmp.lt.s32.totalorder %s18, 1
      %s325 = scalar_select %p324, %s18, 1
      %s326 = smul.addr %s325, 8
      %s327 = scalar_lea.vmem %s2, %s326
      %p328 = scmp.lt.s32.totalorder %s18, 1
      %s329 = scalar_select %p328, %s18, 1
      %s330 = smul.addr %s329, 8
      %s331 = scalar_lea.vmem %s3, %s330
      %p332 = scmp.lt.s32.totalorder %s18, 1
      %s333 = scalar_select %p332, %s18, 1
      %s334 = scalar_lea.vmem %s6, %s333
      %p335 = scmp.lt.s32.totalorder %s18, 1
      %s336 = scalar_select %p335, %s18, 1
      %s337 = smul.addr %s336, 8
      %s338 = scalar_lea.vmem %s7, %s337
      %v340 = vld [vmem:[%s319] sm:$0xff]
      %v341 = vld [vmem:[%s323] sm:$0xff]
      %v342 = vld [vmem:[%s327] sm:$0xff]
      %v343 = vlaneseq
      %v344 = vshrl.u32 %v343, 7
      %v345 = vlaneseq
      %v346 = vand.u32 %v345, 127
      %vm347 = vcmp.le.s32.totalorder %v346, %v344
      %v348 = vld [vmem:[%s334] sm:$0x1]
      %vm349 = vcmp.gt.f32.partialorder %v348, 0.5
      %v350 = vsel %vm349, 1, 0
      %v351 = vlaneseq
      %v352 = vshrl.u32 %v351, 7
      %v353 = vsub.s32 0, %v352
      %v354 = vrot.slane %v350, %v353
      %vm355 = vcmp.eq.s32.totalorder %v354, 1
      %vm356 = vmand %vm347, %vm355
      %v357 = vpack.c.bf16 %v340, %v340
      %v358 = vpack.c.bf16 %v341, %v341
      %v359 = vpack.c.bf16 %v342, %v342
      %vm360 = vcmask 64512
      %v362 = vsel %vm360, %v357, 0
      %v365 = vsel %vm360, %v358, 0
      %367 = vmatprep.subr.bf16.mxu0 0
      %368 = vmatpush1.bf16.xpose.msra.mxu0 0
      %369 = vmatprep.subr.bf16.mxu0 0
      %370 = vmatpush1.bf16.xpose.msra.mxu0 0
      %371 = vmatprep.subr.bf16.mxu0 0
      %372 = vmatpush1.bf16.xpose.msra.mxu0 0
      %373 = vmatprep.subr.bf16.mxu0 0
      %374 = vmatpush1.bf16.xpose.msra.mxu0 0
      %375 = vmatprep.subr.bf16.mxu0 0
      %376 = vmatpush1.bf16.xpose.msra.mxu0 0
      %377 = vmatprep.subr.bf16.mxu0 0
      %378 = vmatpush1.bf16.xpose.msra.mxu0 0
      %379 = vmatprep.subr.bf16.mxu0 0
      %380 = vmatpush1.bf16.xpose.msra.mxu0 0
      %381 = vmatprep.subr.bf16.mxu0 0
      %382 = vmatpush1.bf16.xpose.msra.mxu0 %v365
      %383 = vmatprep.subr.bf16.mxu0 0
      %384 = vmatpush2.bf16.xpose.msra.mxu0 0
      %385 = vmatprep.subr.bf16.mxu0 0
      %386 = vmatpush2.bf16.xpose.msra.mxu0 0
      %387 = vmatprep.subr.bf16.mxu0 0
      %388 = vmatpush2.bf16.xpose.msra.mxu0 0
      %389 = vmatprep.subr.bf16.mxu0 0
      %390 = vmatpush2.bf16.xpose.msra.mxu0 0
      %391 = vmatprep.subr.bf16.mxu0 0
      %392 = vmatpush2.bf16.xpose.msra.mxu0 0
      %393 = vmatprep.subr.bf16.mxu0 0
      %394 = vmatpush2.bf16.xpose.msra.mxu0 0
      %395 = vmatprep.subr.bf16.mxu0 0
      %396 = vmatpush2.bf16.xpose.msra.mxu0 0
      %397 = vmatprep.subr.bf16.mxu0 0
      %398 = vmatpush2.bf16.xpose.msra.mxu0 0
      %399 = vmatprep.mubr.bf16.mxu0 0
      %400 = vmatmul.mubr.bf16.gmra.mxu0 %v362
      %v401 = vpop.f32.mrf.mxu0
      %v402 = vadd.f32 0.0, %v401
      %v403 = vpop.f32.mrf.mxu0
      %v404 = vpop.f32.mrf.mxu0
      %v405 = vpop.f32.mrf.mxu0
      %406 = vdwg.mxu0
      %v407 = vmul.f32 %v402, 0.35355338
      %v408 = vsel %vm356, %v407, -1e+30
      %v409 = vsel %vm360, %v408, -inf
      %410 = vmax.xlane.f32.xlu0 %v409
      %v411 = vpop.xlane.xlu0 %410
      %v412 = vsub.f32 %v408, %v411
      %v413 = vmul.f32 %v412, 1.442695
      %v414 = vpow.pop %v413
      %v415 = vsel %vm360, %v414, 0.0
      %416 = vadd.xlane.f32.xlu0 %v415
      %v417 = vpop.xlane.xlu0 %416
      %v418 = vrcp.pop %v417
      %v419 = vmul.f32 %v414, %v418
      %v420 = vpack.c.bf16 %v419, %v419
      %v422 = vsel %vm360, %v420, 0
      %vm424 = vcmask 1043456
      %v426 = vsel %vm424, %v359, 0
      %428 = vmatprep.subr.bf16.mxu0 0
      %429 = vmatpush1.bf16.msra.mxu0 0
      %430 = vmatprep.subr.bf16.mxu0 0
      %431 = vmatpush1.bf16.msra.mxu0 0
      %432 = vmatprep.subr.bf16.mxu0 0
      %433 = vmatpush1.bf16.msra.mxu0 0
      %434 = vmatprep.subr.bf16.mxu0 0
      %435 = vmatpush1.bf16.msra.mxu0 0
      %436 = vmatprep.subr.bf16.mxu0 0
      %437 = vmatpush1.bf16.msra.mxu0 0
      %438 = vmatprep.subr.bf16.mxu0 0
      %439 = vmatpush1.bf16.msra.mxu0 0
      %440 = vmatprep.subr.bf16.mxu0 0
      %441 = vmatpush1.bf16.msra.mxu0 0
      %442 = vmatprep.subr.bf16.mxu0 0
      %443 = vmatpush1.bf16.msra.mxu0 %v426
      %444 = vmatprep.subr.bf16.mxu0 0
      %445 = vmatpush2.bf16.msra.mxu0 0
      %446 = vmatprep.subr.bf16.mxu0 0
      %447 = vmatpush2.bf16.msra.mxu0 0
      %448 = vmatprep.subr.bf16.mxu0 0
      %449 = vmatpush2.bf16.msra.mxu0 0
      %450 = vmatprep.subr.bf16.mxu0 0
      %451 = vmatpush2.bf16.msra.mxu0 0
      %452 = vmatprep.subr.bf16.mxu0 0
      %453 = vmatpush2.bf16.msra.mxu0 0
      %454 = vmatprep.subr.bf16.mxu0 0
      %455 = vmatpush2.bf16.msra.mxu0 0
      %456 = vmatprep.subr.bf16.mxu0 0
      %457 = vmatpush2.bf16.msra.mxu0 0
      %458 = vmatprep.subr.bf16.mxu0 0
      %459 = vmatpush2.bf16.msra.mxu0 0
      %460 = vmatprep.mubr.bf16.mxu0 0
      %461 = vmatmul.mubr.bf16.gmra.mxu0 %v422
      %v462 = vpop.f32.mrf.mxu0
      %v463 = vadd.f32 0.0, %v462
      %v464 = vpop.f32.mrf.mxu0
      %v465 = vpop.f32.mrf.mxu0
      %v466 = vpop.f32.mrf.mxu0
      %467 = vdwg.mxu0
      %v468 = vpack.c.bf16 %v463, %v463
      %v469 = vld [vmem:[%s4] sm:$0xff]
      %v470 = vpack.c.bf16 %v469, %v469
      %472 = vrot.lane.b32.xlu0 %v357, 120
      %v473 = vpop.permute.xlu0 %472
      %475 = vrot.lane.b32.xlu0 %v358, 120
      %v476 = vpop.permute.xlu0 %475
      %v478 = vsel %vm360, %v473, 0
      %v481 = vsel %vm360, %v476, 0
      %483 = vmatprep.subr.bf16.mxu0 0
      %484 = vmatpush1.bf16.xpose.msra.mxu0 0
      %485 = vmatprep.subr.bf16.mxu0 0
      %486 = vmatpush1.bf16.xpose.msra.mxu0 0
      %487 = vmatprep.subr.bf16.mxu0 0
      %488 = vmatpush1.bf16.xpose.msra.mxu0 0
      %489 = vmatprep.subr.bf16.mxu0 0
      %490 = vmatpush1.bf16.xpose.msra.mxu0 0
      %491 = vmatprep.subr.bf16.mxu0 0
      %492 = vmatpush1.bf16.xpose.msra.mxu0 0
      %493 = vmatprep.subr.bf16.mxu0 0
      %494 = vmatpush1.bf16.xpose.msra.mxu0 0
      %495 = vmatprep.subr.bf16.mxu0 0
      %496 = vmatpush1.bf16.xpose.msra.mxu0 0
      %497 = vmatprep.subr.bf16.mxu0 0
      %498 = vmatpush1.bf16.xpose.msra.mxu0 %v481
      %499 = vmatprep.subr.bf16.mxu0 0
      %500 = vmatpush2.bf16.xpose.msra.mxu0 0
      %501 = vmatprep.subr.bf16.mxu0 0
      %502 = vmatpush2.bf16.xpose.msra.mxu0 0
      %503 = vmatprep.subr.bf16.mxu0 0
      %504 = vmatpush2.bf16.xpose.msra.mxu0 0
      %505 = vmatprep.subr.bf16.mxu0 0
      %506 = vmatpush2.bf16.xpose.msra.mxu0 0
      %507 = vmatprep.subr.bf16.mxu0 0
      %508 = vmatpush2.bf16.xpose.msra.mxu0 0
      %509 = vmatprep.subr.bf16.mxu0 0
      %510 = vmatpush2.bf16.xpose.msra.mxu0 0
      %511 = vmatprep.subr.bf16.mxu0 0
      %512 = vmatpush2.bf16.xpose.msra.mxu0 0
      %513 = vmatprep.subr.bf16.mxu0 0
      %514 = vmatpush2.bf16.xpose.msra.mxu0 0
      %515 = vmatprep.mubr.bf16.mxu0 0
      %516 = vmatmul.mubr.bf16.gmra.mxu0 %v478
      %v517 = vpop.f32.mrf.mxu0
      %v518 = vadd.f32 0.0, %v517
      %v519 = vpop.f32.mrf.mxu0
      %v520 = vpop.f32.mrf.mxu0
      %v521 = vpop.f32.mrf.mxu0
      %522 = vdwg.mxu0
      %v523 = vmul.f32 %v518, 0.35355338
      %v524 = vsel %vm356, %v523, -1e+30
      %v525 = vsel %vm360, %v524, -inf
      %526 = vmax.xlane.f32.xlu0 %v525
      %v527 = vpop.xlane.xlu0 %526
      %v528 = vsub.f32 %v524, %v527
      %v529 = vmul.f32 %v528, 1.442695
      %v530 = vpow.pop %v529
      %v531 = vsel %vm360, %v530, 0.0
      %532 = vadd.xlane.f32.xlu0 %v531
      %v533 = vpop.xlane.xlu0 %532
      %v534 = vrcp.pop %v533
      %v535 = vmul.f32 %v530, %v534
      %v536 = vpack.c.bf16 %v535, %v535
      %538 = vrot.lane.b32.xlu0 %v359, 120
      %v539 = vpop.permute.xlu0 %538
      %v541 = vsel %vm360, %v536, 0
      %v544 = vsel %vm424, %v539, 0
      %546 = vmatprep.subr.bf16.mxu0 0
      %547 = vmatpush1.bf16.msra.mxu0 0
      %548 = vmatprep.subr.bf16.mxu0 0
      %549 = vmatpush1.bf16.msra.mxu0 0
      %550 = vmatprep.subr.bf16.mxu0 0
      %551 = vmatpush1.bf16.msra.mxu0 0
      %552 = vmatprep.subr.bf16.mxu0 0
      %553 = vmatpush1.bf16.msra.mxu0 0
      %554 = vmatprep.subr.bf16.mxu0 0
      %555 = vmatpush1.bf16.msra.mxu0 0
      %556 = vmatprep.subr.bf16.mxu0 0
      %557 = vmatpush1.bf16.msra.mxu0 0
      %558 = vmatprep.subr.bf16.mxu0 0
      %559 = vmatpush1.bf16.msra.mxu0 0
      %560 = vmatprep.subr.bf16.mxu0 0
      %561 = vmatpush1.bf16.msra.mxu0 %v544
      %562 = vmatprep.subr.bf16.mxu0 0
      %563 = vmatpush2.bf16.msra.mxu0 0
      %564 = vmatprep.subr.bf16.mxu0 0
      %565 = vmatpush2.bf16.msra.mxu0 0
      %566 = vmatprep.subr.bf16.mxu0 0
      %567 = vmatpush2.bf16.msra.mxu0 0
      %568 = vmatprep.subr.bf16.mxu0 0
      %569 = vmatpush2.bf16.msra.mxu0 0
      %570 = vmatprep.subr.bf16.mxu0 0
      %571 = vmatpush2.bf16.msra.mxu0 0
      %572 = vmatprep.subr.bf16.mxu0 0
      %573 = vmatpush2.bf16.msra.mxu0 0
      %574 = vmatprep.subr.bf16.mxu0 0
      %575 = vmatpush2.bf16.msra.mxu0 0
      %576 = vmatprep.subr.bf16.mxu0 0
      %577 = vmatpush2.bf16.msra.mxu0 0
      %578 = vmatprep.mubr.bf16.mxu0 0
      %579 = vmatmul.mubr.bf16.gmra.mxu0 %v541
      %v580 = vpop.f32.mrf.mxu0
      %v581 = vadd.f32 0.0, %v580
      %v582 = vpop.f32.mrf.mxu0
      %v583 = vpop.f32.mrf.mxu0
      %v584 = vpop.f32.mrf.mxu0
      %585 = vdwg.mxu0
      %v586 = vpack.c.bf16 %v581, %v581
      %v587 = vld [vmem:[%s4 + $0x8] sm:$0xff]
      %v588 = vpack.c.bf16 %v587, %v587
      %v590 = vsel %vm360, %v586, 0
      %v593 = vsel %vm424, %v588, 0
      %595 = vmatprep.subr.bf16.mxu0 0
      %596 = vmatpush1.bf16.msra.mxu0 0
      %597 = vmatprep.subr.bf16.mxu0 0
      %598 = vmatpush1.bf16.msra.mxu0 0
      %599 = vmatprep.subr.bf16.mxu0 0
      %600 = vmatpush1.bf16.msra.mxu0 0
      %601 = vmatprep.subr.bf16.mxu0 0
      %602 = vmatpush1.bf16.msra.mxu0 0
      %603 = vmatprep.subr.bf16.mxu0 0
      %604 = vmatpush1.bf16.msra.mxu0 0
      %605 = vmatprep.subr.bf16.mxu0 0
      %606 = vmatpush1.bf16.msra.mxu0 0
      %607 = vmatprep.subr.bf16.mxu0 0
      %608 = vmatpush1.bf16.msra.mxu0 0
      %609 = vmatprep.subr.bf16.mxu0 0
      %610 = vmatpush1.bf16.msra.mxu0 %v593
      %611 = vmatprep.subr.bf16.mxu0 0
      %612 = vmatpush2.bf16.msra.mxu0 0
      %613 = vmatprep.subr.bf16.mxu0 0
      %614 = vmatpush2.bf16.msra.mxu0 0
      %615 = vmatprep.subr.bf16.mxu0 0
      %616 = vmatpush2.bf16.msra.mxu0 0
      %617 = vmatprep.subr.bf16.mxu0 0
      %618 = vmatpush2.bf16.msra.mxu0 0
      %619 = vmatprep.subr.bf16.mxu0 0
      %620 = vmatpush2.bf16.msra.mxu0 0
      %621 = vmatprep.subr.bf16.mxu0 0
      %622 = vmatpush2.bf16.msra.mxu0 0
      %623 = vmatprep.subr.bf16.mxu0 0
      %624 = vmatpush2.bf16.msra.mxu0 0
      %625 = vmatprep.subr.bf16.mxu0 0
      %626 = vmatpush2.bf16.msra.mxu0 0
      %627 = vmatprep.mubr.bf16.mxu0 0
      %628 = vmatmul.mubr.bf16.gmra.mxu0 %v590
      %v629 = vpop.f32.mrf.mxu0
      %v630 = vadd.f32 0.0, %v629
      %v631 = vpop.f32.mrf.mxu0
      %v632 = vpop.f32.mrf.mxu0
      %v633 = vpop.f32.mrf.mxu0
      %634 = vdwg.mxu0
      %v636 = vsel %vm360, %v468, 0
      %v639 = vsel %vm424, %v470, 0
      %641 = vmatprep.subr.bf16.mxu0 0
      %642 = vmatpush1.bf16.msra.mxu0 0
      %643 = vmatprep.subr.bf16.mxu0 0
      %644 = vmatpush1.bf16.msra.mxu0 0
      %645 = vmatprep.subr.bf16.mxu0 0
      %646 = vmatpush1.bf16.msra.mxu0 0
      %647 = vmatprep.subr.bf16.mxu0 0
      %648 = vmatpush1.bf16.msra.mxu0 0
      %649 = vmatprep.subr.bf16.mxu0 0
      %650 = vmatpush1.bf16.msra.mxu0 0
      %651 = vmatprep.subr.bf16.mxu0 0
      %652 = vmatpush1.bf16.msra.mxu0 0
      %653 = vmatprep.subr.bf16.mxu0 0
      %654 = vmatpush1.bf16.msra.mxu0 0
      %655 = vmatprep.subr.bf16.mxu0 0
      %656 = vmatpush1.bf16.msra.mxu0 %v639
      %657 = vmatprep.subr.bf16.mxu0 0
      %658 = vmatpush2.bf16.msra.mxu0 0
      %659 = vmatprep.subr.bf16.mxu0 0
      %660 = vmatpush2.bf16.msra.mxu0 0
      %661 = vmatprep.subr.bf16.mxu0 0
      %662 = vmatpush2.bf16.msra.mxu0 0
      %663 = vmatprep.subr.bf16.mxu0 0
      %664 = vmatpush2.bf16.msra.mxu0 0
      %665 = vmatprep.subr.bf16.mxu0 0
      %666 = vmatpush2.bf16.msra.mxu0 0
      %667 = vmatprep.subr.bf16.mxu0 0
      %668 = vmatpush2.bf16.msra.mxu0 0
      %669 = vmatprep.subr.bf16.mxu0 0
      %670 = vmatpush2.bf16.msra.mxu0 0
      %671 = vmatprep.subr.bf16.mxu0 0
      %672 = vmatpush2.bf16.msra.mxu0 0
      %673 = vmatprep.mubr.bf16.mxu0 0
      %674 = vmatmul.mubr.bf16.gmra.mxu0 %v636
      %v675 = vpop.f32.mrf.mxu0
      %v676 = vadd.f32 %v630, %v675
      %v677 = vpop.f32.mrf.mxu0
      %v678 = vpop.f32.mrf.mxu0
      %v679 = vpop.f32.mrf.mxu0
      %680 = vdwg.mxu0
      %681 = vrot.lane.b32.xlu0 %v357, 112
      %v682 = vpop.permute.xlu0 %681
      %683 = vrot.lane.b32.xlu0 %v358, 112
      %v684 = vpop.permute.xlu0 %683
      %v686 = vsel %vm360, %v682, 0
      %v689 = vsel %vm360, %v684, 0
      %691 = vmatprep.subr.bf16.mxu0 0
      %692 = vmatpush1.bf16.xpose.msra.mxu0 0
      %693 = vmatprep.subr.bf16.mxu0 0
      %694 = vmatpush1.bf16.xpose.msra.mxu0 0
      %695 = vmatprep.subr.bf16.mxu0 0
      %696 = vmatpush1.bf16.xpose.msra.mxu0 0
      %697 = vmatprep.subr.bf16.mxu0 0
      %698 = vmatpush1.bf16.xpose.msra.mxu0 0
      %699 = vmatprep.subr.bf16.mxu0 0
      %700 = vmatpush1.bf16.xpose.msra.mxu0 0
      %701 = vmatprep.subr.bf16.mxu0 0
      %702 = vmatpush1.bf16.xpose.msra.mxu0 0
      %703 = vmatprep.subr.bf16.mxu0 0
      %704 = vmatpush1.bf16.xpose.msra.mxu0 0
      %705 = vmatprep.subr.bf16.mxu0 0
      %706 = vmatpush1.bf16.xpose.msra.mxu0 %v689
      %707 = vmatprep.subr.bf16.mxu0 0
      %708 = vmatpush2.bf16.xpose.msra.mxu0 0
      %709 = vmatprep.subr.bf16.mxu0 0
      %710 = vmatpush2.bf16.xpose.msra.mxu0 0
      %711 = vmatprep.subr.bf16.mxu0 0
      %712 = vmatpush2.bf16.xpose.msra.mxu0 0
      %713 = vmatprep.subr.bf16.mxu0 0
      %714 = vmatpush2.bf16.xpose.msra.mxu0 0
      %715 = vmatprep.subr.bf16.mxu0 0
      %716 = vmatpush2.bf16.xpose.msra.mxu0 0
      %717 = vmatprep.subr.bf16.mxu0 0
      %718 = vmatpush2.bf16.xpose.msra.mxu0 0
      %719 = vmatprep.subr.bf16.mxu0 0
      %720 = vmatpush2.bf16.xpose.msra.mxu0 0
      %721 = vmatprep.subr.bf16.mxu0 0
      %722 = vmatpush2.bf16.xpose.msra.mxu0 0
      %723 = vmatprep.mubr.bf16.mxu0 0
      %724 = vmatmul.mubr.bf16.gmra.mxu0 %v686
      %v725 = vpop.f32.mrf.mxu0
      %v726 = vadd.f32 0.0, %v725
      %v727 = vpop.f32.mrf.mxu0
      %v728 = vpop.f32.mrf.mxu0
      %v729 = vpop.f32.mrf.mxu0
      %730 = vdwg.mxu0
      %v731 = vmul.f32 %v726, 0.35355338
      %v732 = vsel %vm356, %v731, -1e+30
      %v733 = vsel %vm360, %v732, -inf
      %734 = vmax.xlane.f32.xlu0 %v733
      %v735 = vpop.xlane.xlu0 %734
      %v736 = vsub.f32 %v732, %v735
      %v737 = vmul.f32 %v736, 1.442695
      %v738 = vpow.pop %v737
      %v739 = vsel %vm360, %v738, 0.0
      %740 = vadd.xlane.f32.xlu0 %v739
      %v741 = vpop.xlane.xlu0 %740
      %v742 = vrcp.pop %v741
      %v743 = vmul.f32 %v738, %v742
      %v744 = vpack.c.bf16 %v743, %v743
      %745 = vrot.lane.b32.xlu0 %v359, 112
      %v746 = vpop.permute.xlu0 %745
      %v748 = vsel %vm360, %v744, 0
      %v751 = vsel %vm424, %v746, 0
      %753 = vmatprep.subr.bf16.mxu0 0
      %754 = vmatpush1.bf16.msra.mxu0 0
      %755 = vmatprep.subr.bf16.mxu0 0
      %756 = vmatpush1.bf16.msra.mxu0 0
      %757 = vmatprep.subr.bf16.mxu0 0
      %758 = vmatpush1.bf16.msra.mxu0 0
      %759 = vmatprep.subr.bf16.mxu0 0
      %760 = vmatpush1.bf16.msra.mxu0 0
      %761 = vmatprep.subr.bf16.mxu0 0
      %762 = vmatpush1.bf16.msra.mxu0 0
      %763 = vmatprep.subr.bf16.mxu0 0
      %764 = vmatpush1.bf16.msra.mxu0 0
      %765 = vmatprep.subr.bf16.mxu0 0
      %766 = vmatpush1.bf16.msra.mxu0 0
      %767 = vmatprep.subr.bf16.mxu0 0
      %768 = vmatpush1.bf16.msra.mxu0 %v751
      %769 = vmatprep.subr.bf16.mxu0 0
      %770 = vmatpush2.bf16.msra.mxu0 0
      %771 = vmatprep.subr.bf16.mxu0 0
      %772 = vmatpush2.bf16.msra.mxu0 0
      %773 = vmatprep.subr.bf16.mxu0 0
      %774 = vmatpush2.bf16.msra.mxu0 0
      %775 = vmatprep.subr.bf16.mxu0 0
      %776 = vmatpush2.bf16.msra.mxu0 0
      %777 = vmatprep.subr.bf16.mxu0 0
      %778 = vmatpush2.bf16.msra.mxu0 0
      %779 = vmatprep.subr.bf16.mxu0 0
      %780 = vmatpush2.bf16.msra.mxu0 0
      %781 = vmatprep.subr.bf16.mxu0 0
      %782 = vmatpush2.bf16.msra.mxu0 0
      %783 = vmatprep.subr.bf16.mxu0 0
      %784 = vmatpush2.bf16.msra.mxu0 0
      %785 = vmatprep.mubr.bf16.mxu0 0
      %786 = vmatmul.mubr.bf16.gmra.mxu0 %v748
      %v787 = vpop.f32.mrf.mxu0
      %v788 = vadd.f32 0.0, %v787
      %v789 = vpop.f32.mrf.mxu0
      %v790 = vpop.f32.mrf.mxu0
      %v791 = vpop.f32.mrf.mxu0
      %792 = vdwg.mxu0
      %v793 = vpack.c.bf16 %v788, %v788
      %v794 = vld [vmem:[%s4 + $0x10] sm:$0xff]
      %v795 = vpack.c.bf16 %v794, %v794
      %v797 = vsel %vm360, %v793, 0
      %v800 = vsel %vm424, %v795, 0
      %802 = vmatprep.subr.bf16.mxu0 0
      %803 = vmatpush1.bf16.msra.mxu0 0
      %804 = vmatprep.subr.bf16.mxu0 0
      %805 = vmatpush1.bf16.msra.mxu0 0
      %806 = vmatprep.subr.bf16.mxu0 0
      %807 = vmatpush1.bf16.msra.mxu0 0
      %808 = vmatprep.subr.bf16.mxu0 0
      %809 = vmatpush1.bf16.msra.mxu0 0
      %810 = vmatprep.subr.bf16.mxu0 0
      %811 = vmatpush1.bf16.msra.mxu0 0
      %812 = vmatprep.subr.bf16.mxu0 0
      %813 = vmatpush1.bf16.msra.mxu0 0
      %814 = vmatprep.subr.bf16.mxu0 0
      %815 = vmatpush1.bf16.msra.mxu0 0
      %816 = vmatprep.subr.bf16.mxu0 0
      %817 = vmatpush1.bf16.msra.mxu0 %v800
      %818 = vmatprep.subr.bf16.mxu0 0
      %819 = vmatpush2.bf16.msra.mxu0 0
      %820 = vmatprep.subr.bf16.mxu0 0
      %821 = vmatpush2.bf16.msra.mxu0 0
      %822 = vmatprep.subr.bf16.mxu0 0
      %823 = vmatpush2.bf16.msra.mxu0 0
      %824 = vmatprep.subr.bf16.mxu0 0
      %825 = vmatpush2.bf16.msra.mxu0 0
      %826 = vmatprep.subr.bf16.mxu0 0
      %827 = vmatpush2.bf16.msra.mxu0 0
      %828 = vmatprep.subr.bf16.mxu0 0
      %829 = vmatpush2.bf16.msra.mxu0 0
      %830 = vmatprep.subr.bf16.mxu0 0
      %831 = vmatpush2.bf16.msra.mxu0 0
      %832 = vmatprep.subr.bf16.mxu0 0
      %833 = vmatpush2.bf16.msra.mxu0 0
      %834 = vmatprep.mubr.bf16.mxu0 0
      %835 = vmatmul.mubr.bf16.gmra.mxu0 %v797
      %v836 = vpop.f32.mrf.mxu0
      %v837 = vadd.f32 0.0, %v836
      %v838 = vpop.f32.mrf.mxu0
      %v839 = vpop.f32.mrf.mxu0
      %v840 = vpop.f32.mrf.mxu0
      %841 = vdwg.mxu0
      %v842 = vadd.f32 %v676, %v837
      %843 = vrot.lane.b32.xlu0 %v357, 104
      %v844 = vpop.permute.xlu0 %843
      %845 = vrot.lane.b32.xlu0 %v358, 104
      %v846 = vpop.permute.xlu0 %845
      %v848 = vsel %vm360, %v844, 0
      %v851 = vsel %vm360, %v846, 0
      %853 = vmatprep.subr.bf16.mxu0 0
      %854 = vmatpush1.bf16.xpose.msra.mxu0 0
      %855 = vmatprep.subr.bf16.mxu0 0
      %856 = vmatpush1.bf16.xpose.msra.mxu0 0
      %857 = vmatprep.subr.bf16.mxu0 0
      %858 = vmatpush1.bf16.xpose.msra.mxu0 0
      %859 = vmatprep.subr.bf16.mxu0 0
      %860 = vmatpush1.bf16.xpose.msra.mxu0 0
      %861 = vmatprep.subr.bf16.mxu0 0
      %862 = vmatpush1.bf16.xpose.msra.mxu0 0
      %863 = vmatprep.subr.bf16.mxu0 0
      %864 = vmatpush1.bf16.xpose.msra.mxu0 0
      %865 = vmatprep.subr.bf16.mxu0 0
      %866 = vmatpush1.bf16.xpose.msra.mxu0 0
      %867 = vmatprep.subr.bf16.mxu0 0
      %868 = vmatpush1.bf16.xpose.msra.mxu0 %v851
      %869 = vmatprep.subr.bf16.mxu0 0
      %870 = vmatpush2.bf16.xpose.msra.mxu0 0
      %871 = vmatprep.subr.bf16.mxu0 0
      %872 = vmatpush2.bf16.xpose.msra.mxu0 0
      %873 = vmatprep.subr.bf16.mxu0 0
      %874 = vmatpush2.bf16.xpose.msra.mxu0 0
      %875 = vmatprep.subr.bf16.mxu0 0
      %876 = vmatpush2.bf16.xpose.msra.mxu0 0
      %877 = vmatprep.subr.bf16.mxu0 0
      %878 = vmatpush2.bf16.xpose.msra.mxu0 0
      %879 = vmatprep.subr.bf16.mxu0 0
      %880 = vmatpush2.bf16.xpose.msra.mxu0 0
      %881 = vmatprep.subr.bf16.mxu0 0
      %882 = vmatpush2.bf16.xpose.msra.mxu0 0
      %883 = vmatprep.subr.bf16.mxu0 0
      %884 = vmatpush2.bf16.xpose.msra.mxu0 0
      %885 = vmatprep.mubr.bf16.mxu0 0
      %886 = vmatmul.mubr.bf16.gmra.mxu0 %v848
      %v887 = vpop.f32.mrf.mxu0
      %v888 = vadd.f32 0.0, %v887
      %v889 = vpop.f32.mrf.mxu0
      %v890 = vpop.f32.mrf.mxu0
      %v891 = vpop.f32.mrf.mxu0
      %892 = vdwg.mxu0
      %v893 = vmul.f32 %v888, 0.35355338
      %v894 = vsel %vm356, %v893, -1e+30
      %v895 = vsel %vm360, %v894, -inf
      %896 = vmax.xlane.f32.xlu0 %v895
      %v897 = vpop.xlane.xlu0 %896
      %v898 = vsub.f32 %v894, %v897
      %v899 = vmul.f32 %v898, 1.442695
      %v900 = vpow.pop %v899
      %v901 = vsel %vm360, %v900, 0.0
      %902 = vadd.xlane.f32.xlu0 %v901
      %v903 = vpop.xlane.xlu0 %902
      %v904 = vrcp.pop %v903
      %v905 = vmul.f32 %v900, %v904
      %v906 = vpack.c.bf16 %v905, %v905
      %907 = vrot.lane.b32.xlu0 %v359, 104
      %v908 = vpop.permute.xlu0 %907
      %v910 = vsel %vm360, %v906, 0
      %v913 = vsel %vm424, %v908, 0
      %915 = vmatprep.subr.bf16.mxu0 0
      %916 = vmatpush1.bf16.msra.mxu0 0
      %917 = vmatprep.subr.bf16.mxu0 0
      %918 = vmatpush1.bf16.msra.mxu0 0
      %919 = vmatprep.subr.bf16.mxu0 0
      %920 = vmatpush1.bf16.msra.mxu0 0
      %921 = vmatprep.subr.bf16.mxu0 0
      %922 = vmatpush1.bf16.msra.mxu0 0
      %923 = vmatprep.subr.bf16.mxu0 0
      %924 = vmatpush1.bf16.msra.mxu0 0
      %925 = vmatprep.subr.bf16.mxu0 0
      %926 = vmatpush1.bf16.msra.mxu0 0
      %927 = vmatprep.subr.bf16.mxu0 0
      %928 = vmatpush1.bf16.msra.mxu0 0
      %929 = vmatprep.subr.bf16.mxu0 0
      %930 = vmatpush1.bf16.msra.mxu0 %v913
      %931 = vmatprep.subr.bf16.mxu0 0
      %932 = vmatpush2.bf16.msra.mxu0 0
      %933 = vmatprep.subr.bf16.mxu0 0
      %934 = vmatpush2.bf16.msra.mxu0 0
      %935 = vmatprep.subr.bf16.mxu0 0
      %936 = vmatpush2.bf16.msra.mxu0 0
      %937 = vmatprep.subr.bf16.mxu0 0
      %938 = vmatpush2.bf16.msra.mxu0 0
      %939 = vmatprep.subr.bf16.mxu0 0
      %940 = vmatpush2.bf16.msra.mxu0 0
      %941 = vmatprep.subr.bf16.mxu0 0
      %942 = vmatpush2.bf16.msra.mxu0 0
      %943 = vmatprep.subr.bf16.mxu0 0
      %944 = vmatpush2.bf16.msra.mxu0 0
      %945 = vmatprep.subr.bf16.mxu0 0
      %946 = vmatpush2.bf16.msra.mxu0 0
      %947 = vmatprep.mubr.bf16.mxu0 0
      %948 = vmatmul.mubr.bf16.gmra.mxu0 %v910
      %v949 = vpop.f32.mrf.mxu0
      %v950 = vadd.f32 0.0, %v949
      %v951 = vpop.f32.mrf.mxu0
      %v952 = vpop.f32.mrf.mxu0
      %v953 = vpop.f32.mrf.mxu0
      %954 = vdwg.mxu0
      %v955 = vpack.c.bf16 %v950, %v950
      %v956 = vld [vmem:[%s4 + $0x18] sm:$0xff]
      %v957 = vpack.c.bf16 %v956, %v956
      %v959 = vsel %vm360, %v955, 0
      %v962 = vsel %vm424, %v957, 0
      %964 = vmatprep.subr.bf16.mxu0 0
      %965 = vmatpush1.bf16.msra.mxu0 0
      %966 = vmatprep.subr.bf16.mxu0 0
      %967 = vmatpush1.bf16.msra.mxu0 0
      %968 = vmatprep.subr.bf16.mxu0 0
      %969 = vmatpush1.bf16.msra.mxu0 0
      %970 = vmatprep.subr.bf16.mxu0 0
      %971 = vmatpush1.bf16.msra.mxu0 0
      %972 = vmatprep.subr.bf16.mxu0 0
      %973 = vmatpush1.bf16.msra.mxu0 0
      %974 = vmatprep.subr.bf16.mxu0 0
      %975 = vmatpush1.bf16.msra.mxu0 0
      %976 = vmatprep.subr.bf16.mxu0 0
      %977 = vmatpush1.bf16.msra.mxu0 0
      %978 = vmatprep.subr.bf16.mxu0 0
      %979 = vmatpush1.bf16.msra.mxu0 %v962
      %980 = vmatprep.subr.bf16.mxu0 0
      %981 = vmatpush2.bf16.msra.mxu0 0
      %982 = vmatprep.subr.bf16.mxu0 0
      %983 = vmatpush2.bf16.msra.mxu0 0
      %984 = vmatprep.subr.bf16.mxu0 0
      %985 = vmatpush2.bf16.msra.mxu0 0
      %986 = vmatprep.subr.bf16.mxu0 0
      %987 = vmatpush2.bf16.msra.mxu0 0
      %988 = vmatprep.subr.bf16.mxu0 0
      %989 = vmatpush2.bf16.msra.mxu0 0
      %990 = vmatprep.subr.bf16.mxu0 0
      %991 = vmatpush2.bf16.msra.mxu0 0
      %992 = vmatprep.subr.bf16.mxu0 0
      %993 = vmatpush2.bf16.msra.mxu0 0
      %994 = vmatprep.subr.bf16.mxu0 0
      %995 = vmatpush2.bf16.msra.mxu0 0
      %996 = vmatprep.mubr.bf16.mxu0 0
      %997 = vmatmul.mubr.bf16.gmra.mxu0 %v959
      %v998 = vpop.f32.mrf.mxu0
      %v999 = vadd.f32 0.0, %v998
      %v1000 = vpop.f32.mrf.mxu0
      %v1001 = vpop.f32.mrf.mxu0
      %v1002 = vpop.f32.mrf.mxu0
      %1003 = vdwg.mxu0
      %v1004 = vadd.f32 %v842, %v999
      %v1005 = vld [vmem:[%s5] sm:$0x1]
      %v1007 = vlaneseq
      %v1008 = vshrl.u32 %v1007, 7
      %v1009 = vsub.s32 0, %v1008
      %v1010 = vrot.slane %v1005, %v1009
      %v1012 = vadd.f32 %v1004, %v1010
      %v1013 = vld [vmem:[%s331] sm:$0xff]
      %v1014 = vadd.f32 %v1013, %v1012
      %vm1015 = vcmask 261120
      %1016 = vst.msk [vmem:[%s338] sm:$0xff] %vm1015, %v1014
      %p1017 = scmp.lt.s32.totalorder %s18, 1
      %s1018 = scalar_select %p1017, %s18, 1
      %s1019 = smul.addr %s1018, 8
      %s1020 = scalar_lea.vmem %s7, %s1019
      // Predicated region
      $region49: #{cross_pika_attention_layer.32} parent=47 // pred_check
        %p1021 = pneg %p208
      $region50: #{cross_pika_attention_layer.32} parent=47 // pred_check_branch
        %1023 = sbr.rel (%p1021) target = $region52
      $region51: #{cross_pika_attention_layer.32} parent=47 // pred_region
        _
      $region52: #{cross_pika_attention_layer.32} parent=47 // pred_fallthru
        _
    $region48: #{cross_pika_attention_layer.32} parent=5 // pred_fallthru
      _
    %p1024 = scmp.le.s32.totalorder 2, %s13
    // Predicated region
    $region53: #{cross_pika_attention_layer.32} parent=5 // pred_check
      %p1025 = pneg %p1024
    $region54: #{cross_pika_attention_layer.32} parent=5 // pred_check_branch
      %1027 = sbr.rel (%p1025) target = $region56
    $region55: #{cross_pika_attention_layer.32} parent=5 // pred_region
      %s1028 = ssub.s32 %s13, 2
      // Predicated region
      $region57: #{cross_pika_attention_layer.32} parent=55 // pred_check
        %p1029 = pneg %p214
      $region58: #{cross_pika_attention_layer.32} parent=55 // pred_check_branch
        %1031 = sbr.rel (%p1029) target = $region60
      $region59: #{cross_pika_attention_layer.32} parent=55 // pred_region
        %p1032 = scmp.lt.s32.totalorder %s19, 1
        %s1033 = scalar_select %p1032, %s19, 1
        %s1034 = smul.addr %s1033, 8
        %s1035 = scalar_lea.vmem %s7, %s1034
      $region60: #{cross_pika_attention_layer.32} parent=55 // pred_fallthru
        _
    $region56: #{cross_pika_attention_layer.32} parent=5 // pred_fallthru
      _
  $region6: #{cross_pika_attention_layer.32} parent=0 // loop_footer
    %s17 = sadd.s32 1, %s13
  $region7: #{cross_pika_attention_layer.32} parent=0 // loop_footer_branch
    %12 = sbr.rel target = $region3
  $region8: #{cross_pika_attention_layer.32} parent=0 // loop_exit
    _

// kernel: cross_pika_attention_layer.33
$region0: #{cross_pika_attention_layer.33}
  #allocation0 [shape = 'u32[]', space=smem, size = 0x4, offset = 0x4, fixed_abs, tag = 'smem constant byte address 0x4 - core index']
  #allocation1 [shape = 'u32[144,128]{1,0:T(1,128)}', space=vmem, size = 0x12000, scoped, tag = 'internal scratch']
  %s0 = inlined_call_operand.vmem [shape: f32[16,32], index: 0, kind: input, shape index: {}]
  %s1 = inlined_call_operand.vmem [shape: f32[1,32], index: 1, kind: input, shape index: {}]
  %s2 = inlined_call_operand.vmem [shape: f32[1,32], index: 2, kind: input, shape index: {}]
  %s3 = inlined_call_operand.vmem [shape: f32[32,128], index: 3, kind: input, shape index: {}]
  %s4 = inlined_call_operand.vmem [shape: f32[1,128], index: 4, kind: input, shape index: {}]
  %s5 = inlined_call_operand.vmem [shape: f32[128,32], index: 5, kind: input, shape index: {}]
  %s6 = inlined_call_operand.vmem [shape: f32[1,32], index: 6, kind: input, shape index: {}]
  %s7 = inlined_call_operand.hbm [shape: f32[16,32], index: 7, kind: output, shape index: {}]
  %s8 = sld [smem:[#allocation0]]
  $region61: #{cross_pika_attention_layer.33} parent=0
    _
  %s10 = ssub.s32 1, %s8
  %s11 = scalar_select 0, %s10, %s8
  $region1: #{cross_pika_attention_layer.33} parent=0
    #allocation2 [shape = 'u8[8192]{0}', space=vmem, size = 0x2000, scoped, tag = 'output window, operand 0']
    #allocation3 [shape = 's32[2]{0}', space=sflag, size = 0x8, scoped, tag = 'scoped memory for cross_pika_attention_layer.33']
    %12 = vsyncpa [#allocation3], 0
    %s13 = scalar_lea.sflag [#allocation3], 1
    %14 = vsyncpa %s13, 0
    loop: start=0, step=1, limit=4
    $region2: #{cross_pika_attention_layer.33} parent=1 // loop_pre_header
      _
    $region3: #{cross_pika_attention_layer.33} parent=1 // loop_header
      %s16 = sphi 0, %s20
      %p17 = scmp.ge.s32.totalorder %s16, 4
      %s26 = sphi 0, %s28
      %s29 = sphi 0, %s26
      %s30 = sphi 0, %s29
      %s46 = sphi 0, %s30
      %s50 = sphi 0, %s50
      %s52 = sphi 0, %s50
      %s53 = sphi 0, %s52
      %s67 = sphi 0, %s53
      %s71 = sphi 0, %s71
      %s73 = sphi 0, %s71
      %s74 = sphi 0, %s73
      %s88 = sphi 0, %s74
      %s92 = sphi 0, %s92
      %s94 = sphi 0, %s92
      %s95 = sphi 0, %s94
      %s109 = sphi 0, %s95
      %s113 = sphi 0, %s113
      %s115 = sphi 0, %s113
      %s116 = sphi 0, %s115
      %s130 = sphi 0, %s116
      %s134 = sphi 0, %s134
      %s136 = sphi 0, %s134
      %s137 = sphi 0, %s136
      %s151 = sphi 0, %s137
      %s155 = sphi 0, %s155
      %s157 = sphi 0, %s155
      %s158 = sphi 0, %s157
      %s172 = sphi 0, %s158
      %s178 = sphi 0, %s180
      %s181 = sphi 0, %s178
      %s182 = sphi 0, %s181
      %s198 = sphi 0, %s182
    $region4: #{cross_pika_attention_layer.33} parent=1 // loop_header_branch
      %19 = sbr.rel (%p17) target = $region8
    $region5: #{cross_pika_attention_layer.33} parent=1 // loop_body
      %s21 = ssub.s32 %s16, 1
      %s22 = ssub.s32 %s16, 2
      %s23 = sadd.s32 %s16, 1
      %s24 = ssub.s32 %s16, %s23
      %p25 = scmp.eq.s32.totalorder %s24, 0
      %s27 = sadd.s32 %s26, 1
      %s28 = scalar_select %p25, %s26, %s27
      %p31 = pneg %p25
      %p32 = scmp.eq.s32.totalorder %s16, 1
      %p33 = por %p31, %p32
      %p34 = scmp.ne.s32.totalorder %s26, %s29
      %p35 = scmp.eq.s32.totalorder %s16, 0
      %p36 = por %p34, %p35
      %p37 = scmp.ne.s32.totalorder %s26, %s29
      %p38 = scmp.eq.s32.totalorder %s21, 1
      %p39 = por %p37, %p38
      %p40 = scmp.ne.s32.totalorder %s29, %s30
      %p41 = scmp.eq.s32.totalorder %s21, 0
      %p42 = por %p40, %p41
      %p43 = scmp.ne.s32.totalorder %s29, %s30
      %p44 = scmp.eq.s32.totalorder %s22, 1
      %p45 = por %p43, %p44
      %p47 = scmp.ne.s32.totalorder %s30, %s46
      %p48 = scmp.eq.s32.totalorder %s22, 0
      %p49 = por %p47, %p48
      %s51 = sadd.s32 %s50, 1
      %p54 = scmp.eq.s32.totalorder %s16, 1
      %p55 = scmp.ne.s32.totalorder %s50, %s52
      %p56 = scmp.eq.s32.totalorder %s16, 0
      %p57 = por %p55, %p56
      %p58 = scmp.ne.s32.totalorder %s50, %s52
      %p59 = scmp.eq.s32.totalorder %s21, 1
      %p60 = por %p58, %p59
      %p61 = scmp.ne.s32.totalorder %s52, %s53
      %p62 = scmp.eq.s32.totalorder %s21, 0
      %p63 = por %p61, %p62
      %p64 = scmp.ne.s32.totalorder %s52, %s53
      %p65 = scmp.eq.s32.totalorder %s22, 1
      %p66 = por %p64, %p65
      %p68 = scmp.ne.s32.totalorder %s53, %s67
      %p69 = scmp.eq.s32.totalorder %s22, 0
      %p70 = por %p68, %p69
      %s72 = sadd.s32 %s71, 1
      %p75 = scmp.eq.s32.totalorder %s16, 1
      %p76 = scmp.ne.s32.totalorder %s71, %s73
      %p77 = scmp.eq.s32.totalorder %s16, 0
      %p78 = por %p76, %p77
      %p79 = scmp.ne.s32.totalorder %s71, %s73
      %p80 = scmp.eq.s32.totalorder %s21, 1
      %p81 = por %p79, %p80
      %p82 = scmp.ne.s32.totalorder %s73, %s74
      %p83 = scmp.eq.s32.totalorder %s21, 0
      %p84 = por %p82, %p83
      %p85 = scmp.ne.s32.totalorder %s73, %s74
      %p86 = scmp.eq.s32.totalorder %s22, 1
      %p87 = por %p85, %p86
      %p89 = scmp.ne.s32.totalorder %s74, %s88
      %p90 = scmp.eq.s32.totalorder %s22, 0
      %p91 = por %p89, %p90
      %s93 = sadd.s32 %s92, 1
      %p96 = scmp.eq.s32.totalorder %s16, 1
      %p97 = scmp.ne.s32.totalorder %s92, %s94
      %p98 = scmp.eq.s32.totalorder %s16, 0
      %p99 = por %p97, %p98
      %p100 = scmp.ne.s32.totalorder %s92, %s94
      %p101 = scmp.eq.s32.totalorder %s21, 1
      %p102 = por %p100, %p101
      %p103 = scmp.ne.s32.totalorder %s94, %s95
      %p104 = scmp.eq.s32.totalorder %s21, 0
      %p105 = por %p103, %p104
      %p106 = scmp.ne.s32.totalorder %s94, %s95
      %p107 = scmp.eq.s32.totalorder %s22, 1
      %p108 = por %p106, %p107
      %p110 = scmp.ne.s32.totalorder %s95, %s109
      %p111 = scmp.eq.s32.totalorder %s22, 0
      %p112 = por %p110, %p111
      %s114 = sadd.s32 %s113, 1
      %p117 = scmp.eq.s32.totalorder %s16, 1
      %p118 = scmp.ne.s32.totalorder %s113, %s115
      %p119 = scmp.eq.s32.totalorder %s16, 0
      %p120 = por %p118, %p119
      %p121 = scmp.ne.s32.totalorder %s113, %s115
      %p122 = scmp.eq.s32.totalorder %s21, 1
      %p123 = por %p121, %p122
      %p124 = scmp.ne.s32.totalorder %s115, %s116
      %p125 = scmp.eq.s32.totalorder %s21, 0
      %p126 = por %p124, %p125
      %p127 = scmp.ne.s32.totalorder %s115, %s116
      %p128 = scmp.eq.s32.totalorder %s22, 1
      %p129 = por %p127, %p128
      %p131 = scmp.ne.s32.totalorder %s116, %s130
      %p132 = scmp.eq.s32.totalorder %s22, 0
      %p133 = por %p131, %p132
      %s135 = sadd.s32 %s134, 1
      %p138 = scmp.eq.s32.totalorder %s16, 1
      %p139 = scmp.ne.s32.totalorder %s134, %s136
      %p140 = scmp.eq.s32.totalorder %s16, 0
      %p141 = por %p139, %p140
      %p142 = scmp.ne.s32.totalorder %s134, %s136
      %p143 = scmp.eq.s32.totalorder %s21, 1
      %p144 = por %p142, %p143
      %p145 = scmp.ne.s32.totalorder %s136, %s137
      %p146 = scmp.eq.s32.totalorder %s21, 0
      %p147 = por %p145, %p146
      %p148 = scmp.ne.s32.totalorder %s136, %s137
      %p149 = scmp.eq.s32.totalorder %s22, 1
      %p150 = por %p148, %p149
      %p152 = scmp.ne.s32.totalorder %s137, %s151
      %p153 = scmp.eq.s32.totalorder %s22, 0
      %p154 = por %p152, %p153
      %s156 = sadd.s32 %s155, 1
      %p159 = scmp.eq.s32.totalorder %s16, 1
      %p160 = scmp.ne.s32.totalorder %s155, %s157
      %p161 = scmp.eq.s32.totalorder %s16, 0
      %p162 = por %p160, %p161
      %p163 = scmp.ne.s32.totalorder %s155, %s157
      %p164 = scmp.eq.s32.totalorder %s21, 1
      %p165 = por %p163, %p164
      %p166 = scmp.ne.s32.totalorder %s157, %s158
      %p167 = scmp.eq.s32.totalorder %s21, 0
      %p168 = por %p166, %p167
      %p169 = scmp.ne.s32.totalorder %s157, %s158
      %p170 = scmp.eq.s32.totalorder %s22, 1
      %p171 = por %p169, %p170
      %p173 = scmp.ne.s32.totalorder %s158, %s172
      %p174 = scmp.eq.s32.totalorder %s22, 0
      %p175 = por %p173, %p174
      %s176 = ssub.s32 %s16, %s23
      %p177 = scmp.eq.s32.totalorder %s176, 0
      %s179 = sadd.s32 %s178, 1
      %s180 = scalar_select %p177, %s178, %s179
      %p183 = pneg %p177
      %p184 = scmp.eq.s32.totalorder %s16, 1
      %p185 = por %p183, %p184
      %p186 = scmp.ne.s32.totalorder %s178, %s181
      %p187 = scmp.eq.s32.totalorder %s16, 0
      %p188 = por %p186, %p187
      %p189 = scmp.ne.s32.totalorder %s178, %s181
      %p190 = scmp.eq.s32.totalorder %s21, 1
      %p191 = por %p189, %p190
      %p192 = scmp.ne.s32.totalorder %s181, %s182
      %p193 = scmp.eq.s32.totalorder %s21, 0
      %p194 = por %p192, %p193
      %p195 = scmp.ne.s32.totalorder %s181, %s182
      %p196 = scmp.eq.s32.totalorder %s22, 1
      %p197 = por %p195, %p196
      %p199 = scmp.ne.s32.totalorder %s182, %s198
      %p200 = scmp.eq.s32.totalorder %s22, 0
      %p201 = por %p199, %p200
      %p202 = scmp.le.s32.totalorder 1, %s16
      %p203 = scmp.lt.s32.totalorder %s16, 3
      %p204 = pnand %p202, %p203
      %p205 = pneg %p204
      // Predicated region
      $region9: #{cross_pika_attention_layer.33} parent=5 // pred_check
        _
      $region10: #{cross_pika_attention_layer.33} parent=5 // pred_check_branch
        %207 = sbr.rel (%p204) target = $region12
      $region11: #{cross_pika_attention_layer.33} parent=5 // pred_region
        %s208 = ssub.s32 %s16, 1
        // Predicated region
        $region13: #{cross_pika_attention_layer.33} parent=11 // pred_check
          %p209 = pneg %p63
        $region14: #{cross_pika_attention_layer.33} parent=11 // pred_check_branch
          %211 = sbr.rel (%p209) target = $region16
        $region15: #{cross_pika_attention_layer.33} parent=11 // pred_region
          _
        $region16: #{cross_pika_attention_layer.33} parent=11 // pred_fallthru
          _
        // Predicated region
        $region17: #{cross_pika_attention_layer.33} parent=11 // pred_check
          %p212 = pneg %p84
        $region18: #{cross_pika_attention_layer.33} parent=11 // pred_check_branch
          %214 = sbr.rel (%p212) target = $region20
        $region19: #{cross_pika_attention_layer.33} parent=11 // pred_region
          _
        $region20: #{cross_pika_attention_layer.33} parent=11 // pred_fallthru
          _
        // Predicated region
        $region21: #{cross_pika_attention_layer.33} parent=11 // pred_check
          %p215 = pneg %p105
        $region22: #{cross_pika_attention_layer.33} parent=11 // pred_check_branch
          %217 = sbr.rel (%p215) target = $region24
        $region23: #{cross_pika_attention_layer.33} parent=11 // pred_region
          _
        $region24: #{cross_pika_attention_layer.33} parent=11 // pred_fallthru
          _
        // Predicated region
        $region25: #{cross_pika_attention_layer.33} parent=11 // pred_check
          %p218 = pneg %p126
        $region26: #{cross_pika_attention_layer.33} parent=11 // pred_check_branch
          %220 = sbr.rel (%p218) target = $region28
        $region27: #{cross_pika_attention_layer.33} parent=11 // pred_region
          _
        $region28: #{cross_pika_attention_layer.33} parent=11 // pred_fallthru
          _
        // Predicated region
        $region29: #{cross_pika_attention_layer.33} parent=11 // pred_check
          %p221 = pneg %p147
        $region30: #{cross_pika_attention_layer.33} parent=11 // pred_check_branch
          %223 = sbr.rel (%p221) target = $region32
        $region31: #{cross_pika_attention_layer.33} parent=11 // pred_region
          _
        $region32: #{cross_pika_attention_layer.33} parent=11 // pred_fallthru
          _
        // Predicated region
        $region33: #{cross_pika_attention_layer.33} parent=11 // pred_check
          %p224 = pneg %p168
        $region34: #{cross_pika_attention_layer.33} parent=11 // pred_check_branch
          %226 = sbr.rel (%p224) target = $region36
        $region35: #{cross_pika_attention_layer.33} parent=11 // pred_region
          _
        $region36: #{cross_pika_attention_layer.33} parent=11 // pred_fallthru
          _
      $region12: #{cross_pika_attention_layer.33} parent=5 // pred_fallthru
        _
      %p227 = scmp.lt.s32.totalorder %s16, 2
      // Predicated region
      $region37: #{cross_pika_attention_layer.33} parent=5 // pred_check
        %p228 = pneg %p227
      $region38: #{cross_pika_attention_layer.33} parent=5 // pred_check_branch
        %230 = sbr.rel (%p228) target = $region40
      $region39: #{cross_pika_attention_layer.33} parent=5 // pred_region
        // Predicated region
        $region41: #{cross_pika_attention_layer.33} parent=39 // pred_check
          %p231 = pneg %p36
        $region42: #{cross_pika_attention_layer.33} parent=39 // pred_check_branch
          %233 = sbr.rel (%p231) target = $region44
        $region43: #{cross_pika_attention_layer.33} parent=39 // pred_region
          %p234 = scmp.lt.s32.totalorder %s16, 1
          %s235 = scalar_select %p234, %s16, 1
          %s236 = smul.addr %s235, 8
          %s237 = scalar_lea.vmem %s0, %s236
        $region44: #{cross_pika_attention_layer.33} parent=39 // pred_fallthru
          _
      $region40: #{cross_pika_attention_layer.33} parent=5 // pred_fallthru
        _
      %p238 = scmp.le.s32.totalorder 1, %s16
      %p239 = scmp.lt.s32.totalorder %s16, 3
      %p240 = pnand %p238, %p239
      %p241 = pneg %p240
      // Predicated region
      $region45: #{cross_pika_attention_layer.33} parent=5 // pred_check
        _
      $region46: #{cross_pika_attention_layer.33} parent=5 // pred_check_branch
        %243 = sbr.rel (%p240) target = $region48
      $region47: #{cross_pika_attention_layer.33} parent=5 // pred_region
        %s244 = ssub.s32 %s16, 1
        %p245 = scmp.lt.s32.totalorder %s21, 1
        %s246 = scalar_select %p245, %s21, 1
        %s247 = smul.addr %s246, 8
        %s248 = scalar_lea.vmem %s0, %s247
        %p249 = pneg %p42
        %p250 = pneg %p39
        %p251 = pneg %p63
        %p252 = pneg %p60
        %p253 = pneg %p84
        %p254 = pneg %p81
        %p255 = pneg %p105
        %p256 = pneg %p102
        %p257 = pneg %p126
        %p258 = pneg %p123
        %p259 = pneg %p147
        %p260 = pneg %p144
        %p261 = pneg %p168
        %p262 = pneg %p165
        %p263 = pneg %p194
        %p264 = pneg %p191
        %s265 = sand.u32 %s181, 1
        %s266 = scalar_lea.sflag [#allocation3], %s265
        %s267 = sand.u32 %s181, 1
        %s268 = smul.addr %s267, 8
        %s269 = scalar_lea.vmem [#allocation2], %s268
        %p270 = scmp.lt.s32.totalorder %s21, 1
        %s271 = scalar_select %p270, %s21, 1
        %s272 = smul.addr %s271, 8
        %s273 = scalar_lea.vmem %s0, %s272
        %v275 = vld [vmem:[%s273] sm:$0xff]
        %v276 = vld [vmem:[%s1] sm:$0x1]
        %v277 = vld [vmem:[%s2] sm:$0x1]
        %vm278 = vcmask 261120
        %v279 = vsel %vm278, %v275, 0.0
        %280 = vadd.xlane.f32.xlu0 %v279
        %v281 = vpop.xlane.xlu0 %280
        %v282 = vrcp.pop 32.0
        %v283 = vmul.f32 %v281, %v282
        %v284 = vsub.f32 %v275, %v283
        %v285 = vmul.f32 %v284, %v284
        %v286 = vsel %vm278, %v285, 0.0
        %287 = vadd.xlane.f32.xlu0 %v286
        %v288 = vpop.xlane.xlu0 %287
        %v289 = vmul.f32 %v288, %v282
        %v290 = vadd.f32 %v289, 1e-05
        %v291 = vrsqrt.pop %v290
        %v292 = vmul.f32 %v284, %v291
        %v294 = vlaneseq
        %v295 = vshrl.u32 %v294, 7
        %v296 = vsub.s32 0, %v295
        %v297 = vrot.slane %v276, %v296
        %v299 = vmul.f32 %v292, %v297
        %v301 = vlaneseq
        %v302 = vshrl.u32 %v301, 7
        %v303 = vsub.s32 0, %v302
        %v304 = vrot.slane %v277, %v303
        %v306 = vadd.f32 %v299, %v304
        %v307 = vpack.c.bf16 %v306, %v306
        %v308 = vld [vmem:[%s3] sm:$0xff]
        %v309 = vld [vmem:[%s3 + $0x8] sm:$0xff]
        %v310 = vld [vmem:[%s3 + $0x10] sm:$0xff]
        %v311 = vld [vmem:[%s3 + $0x18] sm:$0xff]
        %v312 = vpack.c.bf16 %v309, %v308
        %v313 = vpack.c.bf16 %v311, %v310
        %v314 = vld [vmem:[%s4] sm:$0x1]
        %v316 = vlaneseq
        %v317 = vshrl.u32 %v316, 7
        %v318 = vsub.s32 0, %v317
        %v319 = vrot.slane %v314, %v318
        %v322 = vsel %vm278, %v307, 0
        %324 = vmatprep.subr.bf16.mxu0 0
        %325 = vmatpush1.bf16.msra.mxu0 0
        %326 = vmatprep.subr.bf16.mxu0 0
        %327 = vmatpush1.bf16.msra.mxu0 0
        %328 = vmatprep.subr.bf16.mxu0 0
        %329 = vmatpush1.bf16.msra.mxu0 0
        %330 = vmatprep.subr.bf16.mxu0 0
        %331 = vmatpush1.bf16.msra.mxu0 0
        %332 = vmatprep.subr.bf16.mxu0 0
        %333 = vmatpush1.bf16.msra.mxu0 0
        %334 = vmatprep.subr.bf16.mxu0 0
        %335 = vmatpush1.bf16.msra.mxu0 0
        %336 = vmatprep.subr.bf16.mxu0 0
        %337 = vmatpush1.bf16.msra.mxu0 %v313
        %338 = vmatprep.subr.bf16.mxu0 0
        %339 = vmatpush1.bf16.msra.mxu0 %v312
        %340 = vmatprep.subr.bf16.mxu0 0
        %341 = vmatpush2.bf16.msra.mxu0 0
        %342 = vmatprep.subr.bf16.mxu0 0
        %343 = vmatpush2.bf16.msra.mxu0 0
        %344 = vmatprep.subr.bf16.mxu0 0
        %345 = vmatpush2.bf16.msra.mxu0 0
        %346 = vmatprep.subr.bf16.mxu0 0
        %347 = vmatpush2.bf16.msra.mxu0 0
        %348 = vmatprep.subr.bf16.mxu0 0
        %349 = vmatpush2.bf16.msra.mxu0 0
        %350 = vmatprep.subr.bf16.mxu0 0
        %351 = vmatpush2.bf16.msra.mxu0 0
        %352 = vmatprep.subr.bf16.mxu0 0
        %353 = vmatpush2.bf16.msra.mxu0 0
        %354 = vmatprep.subr.bf16.mxu0 0
        %355 = vmatpush2.bf16.msra.mxu0 0
        %356 = vmatprep.mubr.bf16.mxu0 0
        %357 = vmatmul.mubr.bf16.gmra.mxu0 %v322
        %v358 = vpop.f32.mrf.mxu0
        %v359 = vadd.f32 %v319, %v358
        %v360 = vpop.f32.mrf.mxu0
        %v361 = vpop.f32.mrf.mxu0
        %v362 = vpop.f32.mrf.mxu0
        %363 = vdwg.mxu0
        %v364 = vmul.f32 %v359, 0.5
        %v365 = vmul.f32 %v359, 0.044715
        %v366 = vmul.f32 %v365, %v359
        %v367 = vmul.f32 %v366, %v359
        %v368 = vadd.f32 %v359, %v367
        %v369 = vmul.f32 %v368, 0.7978846
        %v370 = vtanh.pop %v369
        %v371 = vadd.f32 %v370, 1.0
        %v372 = vmul.f32 %v364, %v371
        %v373 = vpack.c.bf16 %v372, %v372
        %v374 = vld [vmem:[%s5] sm:$0xff]
        %v375 = vld [vmem:[%s5 + $0x8] sm:$0xff]
        %v376 = vld [vmem:[%s5 + $0x10] sm:$0xff]
        %v377 = vld [vmem:[%s5 + $0x18] sm:$0xff]
        %v378 = vld [vmem:[%s5 + $0x20] sm:$0xff]
        %v379 = vld [vmem:[%s5 + $0x28] sm:$0xff]
        %v380 = vld [vmem:[%s5 + $0x30] sm:$0xff]
        %v381 = vld [vmem:[%s5 + $0x38] sm:$0xff]
        %v382 = vld [vmem:[%s5 + $0x40] sm:$0xff]
        %v383 = vld [vmem:[%s5 + $0x48] sm:$0xff]
        %v384 = vld [vmem:[%s5 + $0x50] sm:$0xff]
        %v385 = vld [vmem:[%s5 + $0x58] sm:$0xff]
        %v386 = vld [vmem:[%s5 + $0x60] sm:$0xff]
        %v387 = vld [vmem:[%s5 + $0x68] sm:$0xff]
        %v388 = vld [vmem:[%s5 + $0x70] sm:$0xff]
        %v389 = vld [vmem:[%s5 + $0x78] sm:$0xff]
        %v390 = vpack.c.bf16 %v375, %v374
        %v391 = vpack.c.bf16 %v377, %v376
        %v392 = vpack.c.bf16 %v379, %v378
        %v393 = vpack.c.bf16 %v381, %v380
        %v394 = vpack.c.bf16 %v383, %v382
        %v395 = vpack.c.bf16 %v385, %v384
        %v396 = vpack.c.bf16 %v387, %v386
        %v397 = vpack.c.bf16 %v389, %v388
        %v398 = vld [vmem:[%s6] sm:$0x1]
        %v400 = vlaneseq
        %v401 = vshrl.u32 %v400, 7
        %v402 = vsub.s32 0, %v401
        %v403 = vrot.slane %v398, %v402
        %405 = vmatprep.subr.bf16.mxu0 0
        %406 = vmatpush1.bf16.msra.mxu0 %v397
        %407 = vmatprep.subr.bf16.mxu0 0
        %408 = vmatpush1.bf16.msra.mxu0 %v396
        %409 = vmatprep.subr.bf16.mxu0 0
        %410 = vmatpush1.bf16.msra.mxu0 %v395
        %411 = vmatprep.subr.bf16.mxu0 0
        %412 = vmatpush1.bf16.msra.mxu0 %v394
        %413 = vmatprep.subr.bf16.mxu0 0
        %414 = vmatpush1.bf16.msra.mxu0 %v393
        %415 = vmatprep.subr.bf16.mxu0 0
        %416 = vmatpush1.bf16.msra.mxu0 %v392
        %417 = vmatprep.subr.bf16.mxu0 0
        %418 = vmatpush1.bf16.msra.mxu0 %v391
        %419 = vmatprep.subr.bf16.mxu0 0
        %420 = vmatpush1.bf16.msra.mxu0 %v390
        %421 = vmatprep.subr.bf16.mxu0 0
        %422 = vmatpush2.bf16.msra.mxu0 0
        %423 = vmatprep.subr.bf16.mxu0 0
        %424 = vmatpush2.bf16.msra.mxu0 0
        %425 = vmatprep.subr.bf16.mxu0 0
        %426 = vmatpush2.bf16.msra.mxu0 0
        %427 = vmatprep.subr.bf16.mxu0 0
        %428 = vmatpush2.bf16.msra.mxu0 0
        %429 = vmatprep.subr.bf16.mxu0 0
        %430 = vmatpush2.bf16.msra.mxu0 0
        %431 = vmatprep.subr.bf16.mxu0 0
        %432 = vmatpush2.bf16.msra.mxu0 0
        %433 = vmatprep.subr.bf16.mxu0 0
        %434 = vmatpush2.bf16.msra.mxu0 0
        %435 = vmatprep.subr.bf16.mxu0 0
        %436 = vmatpush2.bf16.msra.mxu0 0
        %437 = vmatprep.mubr.bf16.mxu0 0
        %438 = vmatmul.mubr.bf16.gmra.mxu0 %v373
        %v439 = vpop.f32.mrf.mxu0
        %v440 = vadd.f32 %v403, %v439
        %v441 = vpop.f32.mrf.mxu0
        %v442 = vpop.f32.mrf.mxu0
        %v443 = vpop.f32.mrf.mxu0
        %444 = vdwg.mxu0
        %v445 = vadd.f32 %v275, %v440
        %446 = vst.msk [vmem:[%s269] sm:$0xff] %vm278, %v445
        %s447 = sand.u32 %s181, 1
        %s448 = scalar_lea.sflag [#allocation3], %s447
        %s449 = sand.u32 %s181, 1
        %s450 = smul.addr %s449, 8
        %s451 = scalar_lea.vmem [#allocation2], %s450
        // Predicated region
        $region49: #{cross_pika_attention_layer.33} parent=47 // pred_check
          %p452 = pneg %p191
        $region50: #{cross_pika_attention_layer.33} parent=47 // pred_check_branch
          %454 = sbr.rel (%p452) target = $region52
        $region51: #{cross_pika_attention_layer.33} parent=47 // pred_region
          %s456 = ssub.s32 128, 128
          %457 = vsyncadd %s448, %s456
          %s458 = smul.addr %s21, 128
          %s459 = scalar_lea.hbm %s7, %s458
          %s461 = sshll.u32 %s451, 4
          %s462 = int_to_ptr.vmem [resolvable:$true] %s461
          %464 = dma.vmem_to_hbm [thread:$0]  %s462, 128, %s459, %s448
        $region52: #{cross_pika_attention_layer.33} parent=47 // pred_fallthru
          _
      $region48: #{cross_pika_attention_layer.33} parent=5 // pred_fallthru
        _
      %p465 = scmp.le.s32.totalorder 2, %s16
      // Predicated region
      $region53: #{cross_pika_attention_layer.33} parent=5 // pred_check
        %p466 = pneg %p465
      $region54: #{cross_pika_attention_layer.33} parent=5 // pred_check_branch
        %468 = sbr.rel (%p466) target = $region56
      $region55: #{cross_pika_attention_layer.33} parent=5 // pred_region
        %s469 = ssub.s32 %s16, 2
        // Predicated region
        $region57: #{cross_pika_attention_layer.33} parent=55 // pred_check
          %p470 = pneg %p197
        $region58: #{cross_pika_attention_layer.33} parent=55 // pred_check_branch
          %472 = sbr.rel (%p470) target = $region60
        $region59: #{cross_pika_attention_layer.33} parent=55 // pred_region
          %s473 = sand.u32 %s182, 1
          %s474 = scalar_lea.sflag [#allocation3], %s473
          %s475 = sand.u32 %s182, 1
          %s476 = smul.addr %s475, 8
          %s477 = scalar_lea.vmem [#allocation2], %s476
          %478 = dma.done %s474, 128
        $region60: #{cross_pika_attention_layer.33} parent=55 // pred_fallthru
          _
      $region56: #{cross_pika_attention_layer.33} parent=5 // pred_fallthru
        _
    $region6: #{cross_pika_attention_layer.33} parent=1 // loop_footer
      %s20 = sadd.s32 1, %s16
    $region7: #{cross_pika_attention_layer.33} parent=1 // loop_footer_branch
      %15 = sbr.rel target = $region3
    $region8: #{cross_pika_attention_layer.33} parent=1 // loop_exit
      _
    %479 = vsyncpa [#allocation3], 1
    %s480 = scalar_lea.sflag [#allocation3], 1
    %481 = vsyncpa %s480, 1

</llo_original>
